<compile_context>
chip_gen: v6e
topology: v6e:2x2x1
jax: 0.10.0
libtpu: 0.0.40
codegen_flags: <defaults>
</compile_context>

<pallas_src>
import functools

import jax
import jax.numpy as jnp
from jax import lax
from jax.experimental import pallas as pl
from jax.experimental.pallas import tpu as pltpu


def _lstm_kernel(x_ref, wx_ref, wh_ref, b_ref, o_ref, pre_sc, *, T, Bp, Hp):
    """Single-invocation row-wise LSTM.

    x_ref  : (T*Bp, D)    time-major rows, batch padded to Bp=8 sublanes
    wx_ref : (D,  4*Hp)   input->gate weights, per-gate lane-padded to Hp
    wh_ref : (Hp, 4*Hp)   hidden->gate weights, per-gate lane-padded to Hp
    b_ref  : (1,  4*Hp)   gate biases (zero in padded lanes)
    o_ref  : (Bp, Hp)     final hidden state (padded; caller slices to B, H)
    pre_sc : (T*Bp, 4*Hp) VMEM scratch for the hoisted input projection
    """
    # ---- Phase 1 (non-recurrent): project all T rows in one MXU call. -------
    pre_sc[...] = (
        jnp.dot(x_ref[...], wx_ref[...], preferred_element_type=jnp.float32)
        + b_ref[...]
    )

    def sig(v):
        # sigmoid(x) = 0.5*tanh(0.5*x) + 0.5 : single EUP push per gate.
        return 0.5 * jnp.tanh(0.5 * v) + 0.5

    def split_gates(gates):
        # Gate order: forget, input, new-cell candidate, output.
        # Slices are 128-lane aligned -> zero-cost vreg views, no masked ops.
        f = sig(gates[:, 0 * Hp:1 * Hp])
        i = sig(gates[:, 1 * Hp:2 * Hp])
        g = jnp.tanh(gates[:, 2 * Hp:3 * Hp])
        o = sig(gates[:, 3 * Hp:4 * Hp])
        return f, i, g, o

    # ---- Peeled step t=0: h0 == 0 => h0 @ Wh == 0, c0 == 0 => c*f == 0. -----
    g0 = pre_sc[pl.ds(0, Bp), :]
    _, i0, gg0, o0 = split_gates(g0)          # f0 is dead -> DCE'd
    c = i0 * gg0
    h = o0 * jnp.tanh(c)

    # ---- Steps 1..T-1: only h @ Wh remains on the serial dependency chain. --
    def step(t, carry):
        h, c = carry                                          # (Bp, Hp) each
        row = pl.multiple_of(t * Bp, Bp)                      # sublane-aligned load
        gates = pre_sc[pl.ds(row, Bp), :] + jnp.dot(
            h, wh_ref[...], preferred_element_type=jnp.float32
        )
        f, i, g, o = split_gates(gates)
        c_new = c * f + i * g
        h_new = o * jnp.tanh(c_new)
        return h_new, c_new

    h_final, _ = lax.fori_loop(1, T, step, (h, c), unroll=True)

    # Single lane+sublane-dense store of the final hidden state.
    o_ref[...] = h_final.astype(o_ref.dtype)


def _pack_gates(Wx, Wh, b, Hp):
    """Pack per-gate weights into lane-padded fused matrices (done ONCE).

    Wx: (4, D, H), Wh: (4, H, H), b: (4, H)  ->
    Wx_p: (D, 4*Hp), Wh_p: (Hp, 4*Hp), b_p: (1, 4*Hp).
    Gate g lives in columns [g*Hp, g*Hp + H); all padding is zero.
    """
    G, D, H = Wx.shape
    Wx_p = jnp.zeros((D, G * Hp), jnp.float32)
    Wh_p = jnp.zeros((Hp, G * Hp), jnp.float32)
    b_p = jnp.zeros((1, G * Hp), jnp.float32)
    for g in range(G):
        Wx_p = Wx_p.at[:, g * Hp:g * Hp + H].set(Wx[g])
        Wh_p = Wh_p.at[:H, g * Hp:g * Hp + H].set(Wh[g])
        b_p = b_p.at[0, g * Hp:g * Hp + H].set(b[g])
    return Wx_p, Wh_p, b_p


@functools.partial(jax.jit, static_argnames=("H", "Hp", "Bp"))
def lstm_forward(x, Wx_p, Wh_p, b_p, *, H, Hp=128, Bp=8):
    """x: (B, 28, 28) float32, pre-packed weights. Returns final hidden (B, H)."""
    B, T, D = x.shape
    assert B <= Bp

    # Time-major + pad batch to a full sublane tile (inside the same jit as the call).
    x_tm = jnp.transpose(x.astype(jnp.float32), (1, 0, 2))          # (T, B, D)
    x_tm = jnp.pad(x_tm, ((0, 0), (0, Bp - B), (0, 0)))             # (T, Bp, D)
    x_tm = x_tm.reshape(T * Bp, D)

    flops = 2 * T * Bp * D * (4 * Hp) + 2 * (T - 1) * Bp * Hp * (4 * Hp)
    transcendentals = 5 * T * Bp * Hp
    bytes_accessed = 4 * (T * Bp * D + D * 4 * Hp + Hp * 4 * Hp + 4 * Hp + Bp * Hp)

    kernel = functools.partial(_lstm_kernel, T=T, Bp=Bp, Hp=Hp)
    out_padded = pl.pallas_call(
        kernel,
        out_shape=jax.ShapeDtypeStruct((Bp, Hp), jnp.float32),
        in_specs=[
            pl.BlockSpec((T * Bp, D), lambda: (0, 0)),
            pl.BlockSpec((D, 4 * Hp), lambda: (0, 0)),
            pl.BlockSpec((Hp, 4 * Hp), lambda: (0, 0)),
            pl.BlockSpec((1, 4 * Hp), lambda: (0, 0)),
        ],
        out_specs=pl.BlockSpec((Bp, Hp), lambda: (0, 0)),
        scratch_shapes=[pltpu.VMEM((T * Bp, 4 * Hp), jnp.float32)],
        cost_estimate=pl.CostEstimate(
            flops=flops,
            transcendentals=transcendentals,
            bytes_accessed=bytes_accessed,
        ),
    )(x_tm, Wx_p, Wh_p, b_p)
    return out_padded[:B, :H]


def init_params(key, D=28, H=10):
    """Deterministic init mimicking nn.Linear(in=D+H, out=H) uniform init."""
    bound = 1.0 / float(jnp.sqrt(jnp.float32(D + H)))
    kw, kb = jax.random.split(key)
    # PyTorch Linear weight layout is [out, in] with input = cat([hidden, x]).
    W = jax.random.uniform(kw, (4, H, D + H), jnp.float32, -bound, bound)
    bias = jax.random.uniform(kb, (4, H), jnp.float32, -bound, bound)
    Wh = jnp.transpose(W[:, :, :H], (0, 2, 1))   # (4, H, H) — acts on hidden
    Wx = jnp.transpose(W[:, :, H:], (0, 2, 1))   # (4, D, H) — acts on x
    return Wx, Wh, bias                           # bias: (4, H)


def lstm_reference(x, Wx, Wh, b):
    """Pure-JAX reference of the same recurrence (for correctness check)."""
    B = x.shape[0]
    H = Wh.shape[-1]
    T = x.shape[1]
    h = jnp.zeros((B, H), jnp.float32)
    c = jnp.zeros((B, H), jnp.float32)
    for t in range(T):
        xt = x[:, t, :]
        pre = [xt @ Wx[k] + h @ Wh[k] + b[k] for k in range(4)]
        f = jax.nn.sigmoid(pre[0])
        i = jax.nn.sigmoid(pre[1])
        g = jnp.tanh(pre[2])
        o = jax.nn.sigmoid(pre[3])
        c = c * f + i * g
        h = o * jnp.tanh(c)
    return h


if __name__ == "__main__":
    key = jax.random.PRNGKey(0)
    kx, kp = jax.random.split(key)

    B, T, D, H = 2, 28, 28, 10   # the module implies MNIST-like 28x28 images
    x = jax.random.uniform(kx, (B, T, D), jnp.float32)
    Wx, Wh, b = init_params(kp, D, H)

    # Pack the fused, lane-padded weights ONCE (not per forward call).
    Wx_p, Wh_p, b_p = _pack_gates(Wx, Wh, b, Hp=128)

    out = lstm_forward(x, Wx_p, Wh_p, b_p, H=H)
    jax.block_until_ready(out)

    ref = lstm_reference(x, Wx, Wh, b)
    assert out.shape == (B, H)
    assert jnp.allclose(out, ref, atol=1e-4, rtol=1e-4), "mismatch vs reference"

    print("KERNEL_OK")
</pallas_src>

<mosaic_0001>
module attributes {stable_mosaic.version = 11 : i64} {
  func.func @_lstm_kernel(%arg0: memref<224x28xf32, #tpu.memory_space<vmem>>, %arg1: memref<28x512xf32, #tpu.memory_space<vmem>>, %arg2: memref<128x512xf32, #tpu.memory_space<vmem>>, %arg3: memref<1x512xf32, #tpu.memory_space<vmem>>, %arg4: memref<8x128xf32, #tpu.memory_space<vmem>>, %arg5: memref<224x512xf32, #tpu.memory_space<vmem>>) attributes {dimension_semantics = [], scalar_prefetch = 0 : i64, scratch_operands = 1 : i64, tpu.core_type = #tpu.core_type<tc>} {
    %c0 = arith.constant 0 : index
    %c0_0 = arith.constant 0 : index
    %0 = vector.load %arg0[%c0, %c0_0] : memref<224x28xf32, #tpu.memory_space<vmem>>, vector<224x28xf32>
    %c0_1 = arith.constant 0 : index
    %c0_2 = arith.constant 0 : index
    %1 = vector.load %arg1[%c0_1, %c0_2] : memref<28x512xf32, #tpu.memory_space<vmem>>, vector<28x512xf32>
    %cst = arith.constant dense<0.000000e+00> : vector<224x512xf32>
    %2 = tpu.matmul %0, %1, %cst {dimension_numbers = #tpu.dot_dimension_numbers<[1], [0], [0], [1], [0, 0, 1, 1], [], []>} : vector<224x28xf32>, vector<28x512xf32>, vector<224x512xf32> -> vector<224x512xf32>
    %c0_3 = arith.constant 0 : index
    %c0_4 = arith.constant 0 : index
    %3 = vector.load %arg3[%c0_3, %c0_4] : memref<1x512xf32, #tpu.memory_space<vmem>>, vector<1x512xf32>
    %4 = vector.broadcast %3 : vector<1x512xf32> to vector<224x512xf32>
    %5 = arith.addf %2, %4 : vector<224x512xf32>
    %c0_5 = arith.constant 0 : index
    %c0_6 = arith.constant 0 : index
    %6 = vector.load %arg5[%c0_5, %c0_6] : memref<224x512xf32, #tpu.memory_space<vmem>>, vector<224x512xf32>
    tpu.vector_store %arg5[%c0_5, %c0_6], %5 {strides = array<i32>} : memref<224x512xf32, #tpu.memory_space<vmem>>, vector<224x512xf32>,
    %c0_7 = arith.constant 0 : index
    %c0_8 = arith.constant 0 : index
    %7 = vector.load %arg5[%c0_7, %c0_8] : memref<224x512xf32, #tpu.memory_space<vmem>>, vector<8x512xf32>
    %8 = vector.extract_strided_slice %7 {offsets = [0, 128], sizes = [8, 128], strides = [1, 1]} : vector<8x512xf32> to vector<8x128xf32>
    %cst_9 = arith.constant 5.000000e-01 : f32
    %9 = vector.broadcast %cst_9 : f32 to vector<8x128xf32>
    %10 = arith.mulf %9, %8 : vector<8x128xf32>
    %11 = math.tanh %10 : vector<8x128xf32>
    %cst_10 = arith.constant 5.000000e-01 : f32
    %12 = vector.broadcast %cst_10 : f32 to vector<8x128xf32>
    %13 = arith.mulf %12, %11 : vector<8x128xf32>
    %cst_11 = arith.constant 5.000000e-01 : f32
    %14 = vector.broadcast %cst_11 : f32 to vector<8x128xf32>
    %15 = arith.addf %13, %14 : vector<8x128xf32>
    %16 = vector.extract_strided_slice %7 {offsets = [0, 256], sizes = [8, 128], strides = [1, 1]} : vector<8x512xf32> to vector<8x128xf32>
    %17 = math.tanh %16 : vector<8x128xf32>
    %18 = vector.extract_strided_slice %7 {offsets = [0, 384], sizes = [8, 128], strides = [1, 1]} : vector<8x512xf32> to vector<8x128xf32>
    %cst_12 = arith.constant 5.000000e-01 : f32
    %19 = vector.broadcast %cst_12 : f32 to vector<8x128xf32>
    %20 = arith.mulf %19, %18 : vector<8x128xf32>
    %21 = math.tanh %20 : vector<8x128xf32>
    %cst_13 = arith.constant 5.000000e-01 : f32
    %22 = vector.broadcast %cst_13 : f32 to vector<8x128xf32>
    %23 = arith.mulf %22, %21 : vector<8x128xf32>
    %cst_14 = arith.constant 5.000000e-01 : f32
    %24 = vector.broadcast %cst_14 : f32 to vector<8x128xf32>
    %25 = arith.addf %23, %24 : vector<8x128xf32>
    %26 = arith.mulf %15, %17 : vector<8x128xf32>
    %27 = math.tanh %26 : vector<8x128xf32>
    %28 = arith.mulf %25, %27 : vector<8x128xf32>
    %c1_i32 = arith.constant 1 : i32
    %c8_i32 = arith.constant 8 : i32
    %29 = arith.muli %c1_i32, %c8_i32 : i32
    %30 = tpu.assume_multiple %29, 8 : i32
    %31 = arith.index_cast %30 : i32 to index
    %c0_15 = arith.constant 0 : index
    %32 = vector.load %arg5[%31, %c0_15] : memref<224x512xf32, #tpu.memory_space<vmem>>, vector<8x512xf32>
    %c0_16 = arith.constant 0 : index
    %c0_17 = arith.constant 0 : index
    %33 = vector.load %arg2[%c0_16, %c0_17] : memref<128x512xf32, #tpu.memory_space<vmem>>, vector<128x512xf32>
    %cst_18 = arith.constant dense<0.000000e+00> : vector<8x512xf32>
    %34 = tpu.matmul %28, %33, %cst_18 {dimension_numbers = #tpu.dot_dimension_numbers<[1], [0], [0], [1], [0, 0, 1, 1], [], []>} : vector<8x128xf32>, vector<128x512xf32>, vector<8x512xf32> -> vector<8x512xf32>
    %35 = arith.addf %32, %34 : vector<8x512xf32>
    %36 = vector.extract_strided_slice %35 {offsets = [0, 0], sizes = [8, 128], strides = [1, 1]} : vector<8x512xf32> to vector<8x128xf32>
    %cst_19 = arith.constant 5.000000e-01 : f32
    %37 = vector.broadcast %cst_19 : f32 to vector<8x128xf32>
    %38 = arith.mulf %37, %36 : vector<8x128xf32>
    %39 = math.tanh %38 : vector<8x128xf32>
    %cst_20 = arith.constant 5.000000e-01 : f32
    %40 = vector.broadcast %cst_20 : f32 to vector<8x128xf32>
    %41 = arith.mulf %40, %39 : vector<8x128xf32>
    %cst_21 = arith.constant 5.000000e-01 : f32
    %42 = vector.broadcast %cst_21 : f32 to vector<8x128xf32>
    %43 = arith.addf %41, %42 : vector<8x128xf32>
    %44 = vector.extract_strided_slice %35 {offsets = [0, 128], sizes = [8, 128], strides = [1, 1]} : vector<8x512xf32> to vector<8x128xf32>
    %cst_22 = arith.constant 5.000000e-01 : f32
    %45 = vector.broadcast %cst_22 : f32 to vector<8x128xf32>
    %46 = arith.mulf %45, %44 : vector<8x128xf32>
    %47 = math.tanh %46 : vector<8x128xf32>
    %cst_23 = arith.constant 5.000000e-01 : f32
    %48 = vector.broadcast %cst_23 : f32 to vector<8x128xf32>
    %49 = arith.mulf %48, %47 : vector<8x128xf32>
    %cst_24 = arith.constant 5.000000e-01 : f32
    %50 = vector.broadcast %cst_24 : f32 to vector<8x128xf32>
    %51 = arith.addf %49, %50 : vector<8x128xf32>
    %52 = vector.extract_strided_slice %35 {offsets = [0, 256], sizes = [8, 128], strides = [1, 1]} : vector<8x512xf32> to vector<8x128xf32>
    %53 = math.tanh %52 : vector<8x128xf32>
    %54 = vector.extract_strided_slice %35 {offsets = [0, 384], sizes = [8, 128], strides = [1, 1]} : vector<8x512xf32> to vector<8x128xf32>
    %cst_25 = arith.constant 5.000000e-01 : f32
    %55 = vector.broadcast %cst_25 : f32 to vector<8x128xf32>
    %56 = arith.mulf %55, %54 : vector<8x128xf32>
    %57 = math.tanh %56 : vector<8x128xf32>
    %cst_26 = arith.constant 5.000000e-01 : f32
    %58 = vector.broadcast %cst_26 : f32 to vector<8x128xf32>
    %59 = arith.mulf %58, %57 : vector<8x128xf32>
    %cst_27 = arith.constant 5.000000e-01 : f32
    %60 = vector.broadcast %cst_27 : f32 to vector<8x128xf32>
    %61 = arith.addf %59, %60 : vector<8x128xf32>
    %62 = arith.mulf %26, %43 : vector<8x128xf32>
    %63 = arith.mulf %51, %53 : vector<8x128xf32>
    %64 = arith.addf %62, %63 : vector<8x128xf32>
    %65 = math.tanh %64 : vector<8x128xf32>
    %66 = arith.mulf %61, %65 : vector<8x128xf32>
    %c2_i32 = arith.constant 2 : i32
    %c8_i32_28 = arith.constant 8 : i32
    %67 = arith.muli %c2_i32, %c8_i32_28 : i32
    %68 = tpu.assume_multiple %67, 8 : i32
    %69 = arith.index_cast %68 : i32 to index
    %c0_29 = arith.constant 0 : index
    %70 = vector.load %arg5[%69, %c0_29] : memref<224x512xf32, #tpu.memory_space<vmem>>, vector<8x512xf32>
    %c0_30 = arith.constant 0 : index
    %c0_31 = arith.constant 0 : index
    %71 = vector.load %arg2[%c0_30, %c0_31] : memref<128x512xf32, #tpu.memory_space<vmem>>, vector<128x512xf32>
    %cst_32 = arith.constant dense<0.000000e+00> : vector<8x512xf32>
    %72 = tpu.matmul %66, %71, %cst_32 {dimension_numbers = #tpu.dot_dimension_numbers<[1], [0], [0], [1], [0, 0, 1, 1], [], []>} : vector<8x128xf32>, vector<128x512xf32>, vector<8x512xf32> -> vector<8x512xf32>
    %73 = arith.addf %70, %72 : vector<8x512xf32>
    %74 = vector.extract_strided_slice %73 {offsets = [0, 0], sizes = [8, 128], strides = [1, 1]} : vector<8x512xf32> to vector<8x128xf32>
    %cst_33 = arith.constant 5.000000e-01 : f32
    %75 = vector.broadcast %cst_33 : f32 to vector<8x128xf32>
    %76 = arith.mulf %75, %74 : vector<8x128xf32>
    %77 = math.tanh %76 : vector<8x128xf32>
    %cst_34 = arith.constant 5.000000e-01 : f32
    %78 = vector.broadcast %cst_34 : f32 to vector<8x128xf32>
    %79 = arith.mulf %78, %77 : vector<8x128xf32>
    %cst_35 = arith.constant 5.000000e-01 : f32
    %80 = vector.broadcast %cst_35 : f32 to vector<8x128xf32>
    %81 = arith.addf %79, %80 : vector<8x128xf32>
    %82 = vector.extract_strided_slice %73 {offsets = [0, 128], sizes = [8, 128], strides = [1, 1]} : vector<8x512xf32> to vector<8x128xf32>
    %cst_36 = arith.constant 5.000000e-01 : f32
    %83 = vector.broadcast %cst_36 : f32 to vector<8x128xf32>
    %84 = arith.mulf %83, %82 : vector<8x128xf32>
    %85 = math.tanh %84 : vector<8x128xf32>
    %cst_37 = arith.constant 5.000000e-01 : f32
    %86 = vector.broadcast %cst_37 : f32 to vector<8x128xf32>
    %87 = arith.mulf %86, %85 : vector<8x128xf32>
    %cst_38 = arith.constant 5.000000e-01 : f32
    %88 = vector.broadcast %cst_38 : f32 to vector<8x128xf32>
    %89 = arith.addf %87, %88 : vector<8x128xf32>
    %90 = vector.extract_strided_slice %73 {offsets = [0, 256], sizes = [8, 128], strides = [1, 1]} : vector<8x512xf32> to vector<8x128xf32>
    %91 = math.tanh %90 : vector<8x128xf32>
    %92 = vector.extract_strided_slice %73 {offsets = [0, 384], sizes = [8, 128], strides = [1, 1]} : vector<8x512xf32> to vector<8x128xf32>
    %cst_39 = arith.constant 5.000000e-01 : f32
    %93 = vector.broadcast %cst_39 : f32 to vector<8x128xf32>
    %94 = arith.mulf %93, %92 : vector<8x128xf32>
    %95 = math.tanh %94 : vector<8x128xf32>
    %cst_40 = arith.constant 5.000000e-01 : f32
    %96 = vector.broadcast %cst_40 : f32 to vector<8x128xf32>
    %97 = arith.mulf %96, %95 : vector<8x128xf32>
    %cst_41 = arith.constant 5.000000e-01 : f32
    %98 = vector.broadcast %cst_41 : f32 to vector<8x128xf32>
    %99 = arith.addf %97, %98 : vector<8x128xf32>
    %100 = arith.mulf %64, %81 : vector<8x128xf32>
    %101 = arith.mulf %89, %91 : vector<8x128xf32>
    %102 = arith.addf %100, %101 : vector<8x128xf32>
    %103 = math.tanh %102 : vector<8x128xf32>
    %104 = arith.mulf %99, %103 : vector<8x128xf32>
    %c3_i32 = arith.constant 3 : i32
    %c8_i32_42 = arith.constant 8 : i32
    %105 = arith.muli %c3_i32, %c8_i32_42 : i32
    %106 = tpu.assume_multiple %105, 8 : i32
    %107 = arith.index_cast %106 : i32 to index
    %c0_43 = arith.constant 0 : index
    %108 = vector.load %arg5[%107, %c0_43] : memref<224x512xf32, #tpu.memory_space<vmem>>, vector<8x512xf32>
    %c0_44 = arith.constant 0 : index
    %c0_45 = arith.constant 0 : index
    %109 = vector.load %arg2[%c0_44, %c0_45] : memref<128x512xf32, #tpu.memory_space<vmem>>, vector<128x512xf32>
    %cst_46 = arith.constant dense<0.000000e+00> : vector<8x512xf32>
    %110 = tpu.matmul %104, %109, %cst_46 {dimension_numbers = #tpu.dot_dimension_numbers<[1], [0], [0], [1], [0, 0, 1, 1], [], []>} : vector<8x128xf32>, vector<128x512xf32>, vector<8x512xf32> -> vector<8x512xf32>
    %111 = arith.addf %108, %110 : vector<8x512xf32>
    %112 = vector.extract_strided_slice %111 {offsets = [0, 0], sizes = [8, 128], strides = [1, 1]} : vector<8x512xf32> to vector<8x128xf32>
    %cst_47 = arith.constant 5.000000e-01 : f32
    %113 = vector.broadcast %cst_47 : f32 to vector<8x128xf32>
    %114 = arith.mulf %113, %112 : vector<8x128xf32>
    %115 = math.tanh %114 : vector<8x128xf32>
    %cst_48 = arith.constant 5.000000e-01 : f32
    %116 = vector.broadcast %cst_48 : f32 to vector<8x128xf32>
    %117 = arith.mulf %116, %115 : vector<8x128xf32>
    %cst_49 = arith.constant 5.000000e-01 : f32
    %118 = vector.broadcast %cst_49 : f32 to vector<8x128xf32>
    %119 = arith.addf %117, %118 : vector<8x128xf32>
    %120 = vector.extract_strided_slice %111 {offsets = [0, 128], sizes = [8, 128], strides = [1, 1]} : vector<8x512xf32> to vector<8x128xf32>
    %cst_50 = arith.constant 5.000000e-01 : f32
    %121 = vector.broadcast %cst_50 : f32 to vector<8x128xf32>
    %122 = arith.mulf %121, %120 : vector<8x128xf32>
    %123 = math.tanh %122 : vector<8x128xf32>
    %cst_51 = arith.constant 5.000000e-01 : f32
    %124 = vector.broadcast %cst_51 : f32 to vector<8x128xf32>
    %125 = arith.mulf %124, %123 : vector<8x128xf32>
    %cst_52 = arith.constant 5.000000e-01 : f32
    %126 = vector.broadcast %cst_52 : f32 to vector<8x128xf32>
    %127 = arith.addf %125, %126 : vector<8x128xf32>
    %128 = vector.extract_strided_slice %111 {offsets = [0, 256], sizes = [8, 128], strides = [1, 1]} : vector<8x512xf32> to vector<8x128xf32>
    %129 = math.tanh %128 : vector<8x128xf32>
    %130 = vector.extract_strided_slice %111 {offsets = [0, 384], sizes = [8, 128], strides = [1, 1]} : vector<8x512xf32> to vector<8x128xf32>
    %cst_53 = arith.constant 5.000000e-01 : f32
    %131 = vector.broadcast %cst_53 : f32 to vector<8x128xf32>
    %132 = arith.mulf %131, %130 : vector<8x128xf32>
    %133 = math.tanh %132 : vector<8x128xf32>
    %cst_54 = arith.constant 5.000000e-01 : f32
    %134 = vector.broadcast %cst_54 : f32 to vector<8x128xf32>
    %135 = arith.mulf %134, %133 : vector<8x128xf32>
    %cst_55 = arith.constant 5.000000e-01 : f32
    %136 = vector.broadcast %cst_55 : f32 to vector<8x128xf32>
    %137 = arith.addf %135, %136 : vector<8x128xf32>
    %138 = arith.mulf %102, %119 : vector<8x128xf32>
    %139 = arith.mulf %127, %129 : vector<8x128xf32>
    %140 = arith.addf %138, %139 : vector<8x128xf32>
    %141 = math.tanh %140 : vector<8x128xf32>
    %142 = arith.mulf %137, %141 : vector<8x128xf32>
    %c4_i32 = arith.constant 4 : i32
    %c8_i32_56 = arith.constant 8 : i32
    %143 = arith.muli %c4_i32, %c8_i32_56 : i32
    %144 = tpu.assume_multiple %143, 8 : i32
    %145 = arith.index_cast %144 : i32 to index
    %c0_57 = arith.constant 0 : index
    %146 = vector.load %arg5[%145, %c0_57] : memref<224x512xf32, #tpu.memory_space<vmem>>, vector<8x512xf32>
    %c0_58 = arith.constant 0 : index
    %c0_59 = arith.constant 0 : index
    %147 = vector.load %arg2[%c0_58, %c0_59] : memref<128x512xf32, #tpu.memory_space<vmem>>, vector<128x512xf32>
    %cst_60 = arith.constant dense<0.000000e+00> : vector<8x512xf32>
    %148 = tpu.matmul %142, %147, %cst_60 {dimension_numbers = #tpu.dot_dimension_numbers<[1], [0], [0], [1], [0, 0, 1, 1], [], []>} : vector<8x128xf32>, vector<128x512xf32>, vector<8x512xf32> -> vector<8x512xf32>
    %149 = arith.addf %146, %148 : vector<8x512xf32>
    %150 = vector.extract_strided_slice %149 {offsets = [0, 0], sizes = [8, 128], strides = [1, 1]} : vector<8x512xf32> to vector<8x128xf32>
    %cst_61 = arith.constant 5.000000e-01 : f32
    %151 = vector.broadcast %cst_61 : f32 to vector<8x128xf32>
    %152 = arith.mulf %151, %150 : vector<8x128xf32>
    %153 = math.tanh %152 : vector<8x128xf32>
    %cst_62 = arith.constant 5.000000e-01 : f32
    %154 = vector.broadcast %cst_62 : f32 to vector<8x128xf32>
    %155 = arith.mulf %154, %153 : vector<8x128xf32>
    %cst_63 = arith.constant 5.000000e-01 : f32
    %156 = vector.broadcast %cst_63 : f32 to vector<8x128xf32>
    %157 = arith.addf %155, %156 : vector<8x128xf32>
    %158 = vector.extract_strided_slice %149 {offsets = [0, 128], sizes = [8, 128], strides = [1, 1]} : vector<8x512xf32> to vector<8x128xf32>
    %cst_64 = arith.constant 5.000000e-01 : f32
    %159 = vector.broadcast %cst_64 : f32 to vector<8x128xf32>
    %160 = arith.mulf %159, %158 : vector<8x128xf32>
    %161 = math.tanh %160 : vector<8x128xf32>
    %cst_65 = arith.constant 5.000000e-01 : f32
    %162 = vector.broadcast %cst_65 : f32 to vector<8x128xf32>
    %163 = arith.mulf %162, %161 : vector<8x128xf32>
    %cst_66 = arith.constant 5.000000e-01 : f32
    %164 = vector.broadcast %cst_66 : f32 to vector<8x128xf32>
    %165 = arith.addf %163, %164 : vector<8x128xf32>
    %166 = vector.extract_strided_slice %149 {offsets = [0, 256], sizes = [8, 128], strides = [1, 1]} : vector<8x512xf32> to vector<8x128xf32>
    %167 = math.tanh %166 : vector<8x128xf32>
    %168 = vector.extract_strided_slice %149 {offsets = [0, 384], sizes = [8, 128], strides = [1, 1]} : vector<8x512xf32> to vector<8x128xf32>
    %cst_67 = arith.constant 5.000000e-01 : f32
    %169 = vector.broadcast %cst_67 : f32 to vector<8x128xf32>
    %170 = arith.mulf %169, %168 : vector<8x128xf32>
    %171 = math.tanh %170 : vector<8x128xf32>
    %cst_68 = arith.constant 5.000000e-01 : f32
    %172 = vector.broadcast %cst_68 : f32 to vector<8x128xf32>
    %173 = arith.mulf %172, %171 : vector<8x128xf32>
    %cst_69 = arith.constant 5.000000e-01 : f32
    %174 = vector.broadcast %cst_69 : f32 to vector<8x128xf32>
    %175 = arith.addf %173, %174 : vector<8x128xf32>
    %176 = arith.mulf %140, %157 : vector<8x128xf32>
    %177 = arith.mulf %165, %167 : vector<8x128xf32>
    %178 = arith.addf %176, %177 : vector<8x128xf32>
    %179 = math.tanh %178 : vector<8x128xf32>
    %180 = arith.mulf %175, %179 : vector<8x128xf32>
    %c5_i32 = arith.constant 5 : i32
    %c8_i32_70 = arith.constant 8 : i32
    %181 = arith.muli %c5_i32, %c8_i32_70 : i32
    %182 = tpu.assume_multiple %181, 8 : i32
    %183 = arith.index_cast %182 : i32 to index
    %c0_71 = arith.constant 0 : index
    %184 = vector.load %arg5[%183, %c0_71] : memref<224x512xf32, #tpu.memory_space<vmem>>, vector<8x512xf32>
    %c0_72 = arith.constant 0 : index
    %c0_73 = arith.constant 0 : index
    %185 = vector.load %arg2[%c0_72, %c0_73] : memref<128x512xf32, #tpu.memory_space<vmem>>, vector<128x512xf32>
    %cst_74 = arith.constant dense<0.000000e+00> : vector<8x512xf32>
    %186 = tpu.matmul %180, %185, %cst_74 {dimension_numbers = #tpu.dot_dimension_numbers<[1], [0], [0], [1], [0, 0, 1, 1], [], []>} : vector<8x128xf32>, vector<128x512xf32>, vector<8x512xf32> -> vector<8x512xf32>
    %187 = arith.addf %184, %186 : vector<8x512xf32>
    %188 = vector.extract_strided_slice %187 {offsets = [0, 0], sizes = [8, 128], strides = [1, 1]} : vector<8x512xf32> to vector<8x128xf32>
    %cst_75 = arith.constant 5.000000e-01 : f32
    %189 = vector.broadcast %cst_75 : f32 to vector<8x128xf32>
    %190 = arith.mulf %189, %188 : vector<8x128xf32>
    %191 = math.tanh %190 : vector<8x128xf32>
    %cst_76 = arith.constant 5.000000e-01 : f32
    %192 = vector.broadcast %cst_76 : f32 to vector<8x128xf32>
    %193 = arith.mulf %192, %191 : vector<8x128xf32>
    %cst_77 = arith.constant 5.000000e-01 : f32
    %194 = vector.broadcast %cst_77 : f32 to vector<8x128xf32>
    %195 = arith.addf %193, %194 : vector<8x128xf32>
    %196 = vector.extract_strided_slice %187 {offsets = [0, 128], sizes = [8, 128], strides = [1, 1]} : vector<8x512xf32> to vector<8x128xf32>
    %cst_78 = arith.constant 5.000000e-01 : f32
    %197 = vector.broadcast %cst_78 : f32 to vector<8x128xf32>
    %198 = arith.mulf %197, %196 : vector<8x128xf32>
    %199 = math.tanh %198 : vector<8x128xf32>
    %cst_79 = arith.constant 5.000000e-01 : f32
    %200 = vector.broadcast %cst_79 : f32 to vector<8x128xf32>
    %201 = arith.mulf %200, %199 : vector<8x128xf32>
    %cst_80 = arith.constant 5.000000e-01 : f32
    %202 = vector.broadcast %cst_80 : f32 to vector<8x128xf32>
    %203 = arith.addf %201, %202 : vector<8x128xf32>
    %204 = vector.extract_strided_slice %187 {offsets = [0, 256], sizes = [8, 128], strides = [1, 1]} : vector<8x512xf32> to vector<8x128xf32>
    %205 = math.tanh %204 : vector<8x128xf32>
    %206 = vector.extract_strided_slice %187 {offsets = [0, 384], sizes = [8, 128], strides = [1, 1]} : vector<8x512xf32> to vector<8x128xf32>
    %cst_81 = arith.constant 5.000000e-01 : f32
    %207 = vector.broadcast %cst_81 : f32 to vector<8x128xf32>
    %208 = arith.mulf %207, %206 : vector<8x128xf32>
    %209 = math.tanh %208 : vector<8x128xf32>
    %cst_82 = arith.constant 5.000000e-01 : f32
    %210 = vector.broadcast %cst_82 : f32 to vector<8x128xf32>
    %211 = arith.mulf %210, %209 : vector<8x128xf32>
    %cst_83 = arith.constant 5.000000e-01 : f32
    %212 = vector.broadcast %cst_83 : f32 to vector<8x128xf32>
    %213 = arith.addf %211, %212 : vector<8x128xf32>
    %214 = arith.mulf %178, %195 : vector<8x128xf32>
    %215 = arith.mulf %203, %205 : vector<8x128xf32>
    %216 = arith.addf %214, %215 : vector<8x128xf32>
    %217 = math.tanh %216 : vector<8x128xf32>
    %218 = arith.mulf %213, %217 : vector<8x128xf32>
    %c6_i32 = arith.constant 6 : i32
    %c8_i32_84 = arith.constant 8 : i32
    %219 = arith.muli %c6_i32, %c8_i32_84 : i32
    %220 = tpu.assume_multiple %219, 8 : i32
    %221 = arith.index_cast %220 : i32 to index
    %c0_85 = arith.constant 0 : index
    %222 = vector.load %arg5[%221, %c0_85] : memref<224x512xf32, #tpu.memory_space<vmem>>, vector<8x512xf32>
    %c0_86 = arith.constant 0 : index
    %c0_87 = arith.constant 0 : index
    %223 = vector.load %arg2[%c0_86, %c0_87] : memref<128x512xf32, #tpu.memory_space<vmem>>, vector<128x512xf32>
    %cst_88 = arith.constant dense<0.000000e+00> : vector<8x512xf32>
    %224 = tpu.matmul %218, %223, %cst_88 {dimension_numbers = #tpu.dot_dimension_numbers<[1], [0], [0], [1], [0, 0, 1, 1], [], []>} : vector<8x128xf32>, vector<128x512xf32>, vector<8x512xf32> -> vector<8x512xf32>
    %225 = arith.addf %222, %224 : vector<8x512xf32>
    %226 = vector.extract_strided_slice %225 {offsets = [0, 0], sizes = [8, 128], strides = [1, 1]} : vector<8x512xf32> to vector<8x128xf32>
    %cst_89 = arith.constant 5.000000e-01 : f32
    %227 = vector.broadcast %cst_89 : f32 to vector<8x128xf32>
    %228 = arith.mulf %227, %226 : vector<8x128xf32>
    %229 = math.tanh %228 : vector<8x128xf32>
    %cst_90 = arith.constant 5.000000e-01 : f32
    %230 = vector.broadcast %cst_90 : f32 to vector<8x128xf32>
    %231 = arith.mulf %230, %229 : vector<8x128xf32>
    %cst_91 = arith.constant 5.000000e-01 : f32
    %232 = vector.broadcast %cst_91 : f32 to vector<8x128xf32>
    %233 = arith.addf %231, %232 : vector<8x128xf32>
    %234 = vector.extract_strided_slice %225 {offsets = [0, 128], sizes = [8, 128], strides = [1, 1]} : vector<8x512xf32> to vector<8x128xf32>
    %cst_92 = arith.constant 5.000000e-01 : f32
    %235 = vector.broadcast %cst_92 : f32 to vector<8x128xf32>
    %236 = arith.mulf %235, %234 : vector<8x128xf32>
    %237 = math.tanh %236 : vector<8x128xf32>
    %cst_93 = arith.constant 5.000000e-01 : f32
    %238 = vector.broadcast %cst_93 : f32 to vector<8x128xf32>
    %239 = arith.mulf %238, %237 : vector<8x128xf32>
    %cst_94 = arith.constant 5.000000e-01 : f32
    %240 = vector.broadcast %cst_94 : f32 to vector<8x128xf32>
    %241 = arith.addf %239, %240 : vector<8x128xf32>
    %242 = vector.extract_strided_slice %225 {offsets = [0, 256], sizes = [8, 128], strides = [1, 1]} : vector<8x512xf32> to vector<8x128xf32>
    %243 = math.tanh %242 : vector<8x128xf32>
    %244 = vector.extract_strided_slice %225 {offsets = [0, 384], sizes = [8, 128], strides = [1, 1]} : vector<8x512xf32> to vector<8x128xf32>
    %cst_95 = arith.constant 5.000000e-01 : f32
    %245 = vector.broadcast %cst_95 : f32 to vector<8x128xf32>
    %246 = arith.mulf %245, %244 : vector<8x128xf32>
    %247 = math.tanh %246 : vector<8x128xf32>
    %cst_96 = arith.constant 5.000000e-01 : f32
    %248 = vector.broadcast %cst_96 : f32 to vector<8x128xf32>
    %249 = arith.mulf %248, %247 : vector<8x128xf32>
    %cst_97 = arith.constant 5.000000e-01 : f32
    %250 = vector.broadcast %cst_97 : f32 to vector<8x128xf32>
    %251 = arith.addf %249, %250 : vector<8x128xf32>
    %252 = arith.mulf %216, %233 : vector<8x128xf32>
    %253 = arith.mulf %241, %243 : vector<8x128xf32>
    %254 = arith.addf %252, %253 : vector<8x128xf32>
    %255 = math.tanh %254 : vector<8x128xf32>
    %256 = arith.mulf %251, %255 : vector<8x128xf32>
    %c7_i32 = arith.constant 7 : i32
    %c8_i32_98 = arith.constant 8 : i32
    %257 = arith.muli %c7_i32, %c8_i32_98 : i32
    %258 = tpu.assume_multiple %257, 8 : i32
    %259 = arith.index_cast %258 : i32 to index
    %c0_99 = arith.constant 0 : index
    %260 = vector.load %arg5[%259, %c0_99] : memref<224x512xf32, #tpu.memory_space<vmem>>, vector<8x512xf32>
    %c0_100 = arith.constant 0 : index
    %c0_101 = arith.constant 0 : index
    %261 = vector.load %arg2[%c0_100, %c0_101] : memref<128x512xf32, #tpu.memory_space<vmem>>, vector<128x512xf32>
    %cst_102 = arith.constant dense<0.000000e+00> : vector<8x512xf32>
    %262 = tpu.matmul %256, %261, %cst_102 {dimension_numbers = #tpu.dot_dimension_numbers<[1], [0], [0], [1], [0, 0, 1, 1], [], []>} : vector<8x128xf32>, vector<128x512xf32>, vector<8x512xf32> -> vector<8x512xf32>
    %263 = arith.addf %260, %262 : vector<8x512xf32>
    %264 = vector.extract_strided_slice %263 {offsets = [0, 0], sizes = [8, 128], strides = [1, 1]} : vector<8x512xf32> to vector<8x128xf32>
    %cst_103 = arith.constant 5.000000e-01 : f32
    %265 = vector.broadcast %cst_103 : f32 to vector<8x128xf32>
    %266 = arith.mulf %265, %264 : vector<8x128xf32>
    %267 = math.tanh %266 : vector<8x128xf32>
    %cst_104 = arith.constant 5.000000e-01 : f32
    %268 = vector.broadcast %cst_104 : f32 to vector<8x128xf32>
    %269 = arith.mulf %268, %267 : vector<8x128xf32>
    %cst_105 = arith.constant 5.000000e-01 : f32
    %270 = vector.broadcast %cst_105 : f32 to vector<8x128xf32>
    %271 = arith.addf %269, %270 : vector<8x128xf32>
    %272 = vector.extract_strided_slice %263 {offsets = [0, 128], sizes = [8, 128], strides = [1, 1]} : vector<8x512xf32> to vector<8x128xf32>
    %cst_106 = arith.constant 5.000000e-01 : f32
    %273 = vector.broadcast %cst_106 : f32 to vector<8x128xf32>
    %274 = arith.mulf %273, %272 : vector<8x128xf32>
    %275 = math.tanh %274 : vector<8x128xf32>
    %cst_107 = arith.constant 5.000000e-01 : f32
    %276 = vector.broadcast %cst_107 : f32 to vector<8x128xf32>
    %277 = arith.mulf %276, %275 : vector<8x128xf32>
    %cst_108 = arith.constant 5.000000e-01 : f32
    %278 = vector.broadcast %cst_108 : f32 to vector<8x128xf32>
    %279 = arith.addf %277, %278 : vector<8x128xf32>
    %280 = vector.extract_strided_slice %263 {offsets = [0, 256], sizes = [8, 128], strides = [1, 1]} : vector<8x512xf32> to vector<8x128xf32>
    %281 = math.tanh %280 : vector<8x128xf32>
    %282 = vector.extract_strided_slice %263 {offsets = [0, 384], sizes = [8, 128], strides = [1, 1]} : vector<8x512xf32> to vector<8x128xf32>
    %cst_109 = arith.constant 5.000000e-01 : f32
    %283 = vector.broadcast %cst_109 : f32 to vector<8x128xf32>
    %284 = arith.mulf %283, %282 : vector<8x128xf32>
    %285 = math.tanh %284 : vector<8x128xf32>
    %cst_110 = arith.constant 5.000000e-01 : f32
    %286 = vector.broadcast %cst_110 : f32 to vector<8x128xf32>
    %287 = arith.mulf %286, %285 : vector<8x128xf32>
    %cst_111 = arith.constant 5.000000e-01 : f32
    %288 = vector.broadcast %cst_111 : f32 to vector<8x128xf32>
    %289 = arith.addf %287, %288 : vector<8x128xf32>
    %290 = arith.mulf %254, %271 : vector<8x128xf32>
    %291 = arith.mulf %279, %281 : vector<8x128xf32>
    %292 = arith.addf %290, %291 : vector<8x128xf32>
    %293 = math.tanh %292 : vector<8x128xf32>
    %294 = arith.mulf %289, %293 : vector<8x128xf32>
    %c8_i32_112 = arith.constant 8 : i32
    %c8_i32_113 = arith.constant 8 : i32
    %295 = arith.muli %c8_i32_112, %c8_i32_113 : i32
    %296 = tpu.assume_multiple %295, 8 : i32
    %297 = arith.index_cast %296 : i32 to index
    %c0_114 = arith.constant 0 : index
    %298 = vector.load %arg5[%297, %c0_114] : memref<224x512xf32, #tpu.memory_space<vmem>>, vector<8x512xf32>
    %c0_115 = arith.constant 0 : index
    %c0_116 = arith.constant 0 : index
    %299 = vector.load %arg2[%c0_115, %c0_116] : memref<128x512xf32, #tpu.memory_space<vmem>>, vector<128x512xf32>
    %cst_117 = arith.constant dense<0.000000e+00> : vector<8x512xf32>
    %300 = tpu.matmul %294, %299, %cst_117 {dimension_numbers = #tpu.dot_dimension_numbers<[1], [0], [0], [1], [0, 0, 1, 1], [], []>} : vector<8x128xf32>, vector<128x512xf32>, vector<8x512xf32> -> vector<8x512xf32>
    %301 = arith.addf %298, %300 : vector<8x512xf32>
    %302 = vector.extract_strided_slice %301 {offsets = [0, 0], sizes = [8, 128], strides = [1, 1]} : vector<8x512xf32> to vector<8x128xf32>
    %cst_118 = arith.constant 5.000000e-01 : f32
    %303 = vector.broadcast %cst_118 : f32 to vector<8x128xf32>
    %304 = arith.mulf %303, %302 : vector<8x128xf32>
    %305 = math.tanh %304 : vector<8x128xf32>
    %cst_119 = arith.constant 5.000000e-01 : f32
    %306 = vector.broadcast %cst_119 : f32 to vector<8x128xf32>
    %307 = arith.mulf %306, %305 : vector<8x128xf32>
    %cst_120 = arith.constant 5.000000e-01 : f32
    %308 = vector.broadcast %cst_120 : f32 to vector<8x128xf32>
    %309 = arith.addf %307, %308 : vector<8x128xf32>
    %310 = vector.extract_strided_slice %301 {offsets = [0, 128], sizes = [8, 128], strides = [1, 1]} : vector<8x512xf32> to vector<8x128xf32>
    %cst_121 = arith.constant 5.000000e-01 : f32
    %311 = vector.broadcast %cst_121 : f32 to vector<8x128xf32>
    %312 = arith.mulf %311, %310 : vector<8x128xf32>
    %313 = math.tanh %312 : vector<8x128xf32>
    %cst_122 = arith.constant 5.000000e-01 : f32
    %314 = vector.broadcast %cst_122 : f32 to vector<8x128xf32>
    %315 = arith.mulf %314, %313 : vector<8x128xf32>
    %cst_123 = arith.constant 5.000000e-01 : f32
    %316 = vector.broadcast %cst_123 : f32 to vector<8x128xf32>
    %317 = arith.addf %315, %316 : vector<8x128xf32>
    %318 = vector.extract_strided_slice %301 {offsets = [0, 256], sizes = [8, 128], strides = [1, 1]} : vector<8x512xf32> to vector<8x128xf32>
    %319 = math.tanh %318 : vector<8x128xf32>
    %320 = vector.extract_strided_slice %301 {offsets = [0, 384], sizes = [8, 128], strides = [1, 1]} : vector<8x512xf32> to vector<8x128xf32>
    %cst_124 = arith.constant 5.000000e-01 : f32
    %321 = vector.broadcast %cst_124 : f32 to vector<8x128xf32>
    %322 = arith.mulf %321, %320 : vector<8x128xf32>
    %323 = math.tanh %322 : vector<8x128xf32>
    %cst_125 = arith.constant 5.000000e-01 : f32
    %324 = vector.broadcast %cst_125 : f32 to vector<8x128xf32>
    %325 = arith.mulf %324, %323 : vector<8x128xf32>
    %cst_126 = arith.constant 5.000000e-01 : f32
    %326 = vector.broadcast %cst_126 : f32 to vector<8x128xf32>
    %327 = arith.addf %325, %326 : vector<8x128xf32>
    %328 = arith.mulf %292, %309 : vector<8x128xf32>
    %329 = arith.mulf %317, %319 : vector<8x128xf32>
    %330 = arith.addf %328, %329 : vector<8x128xf32>
    %331 = math.tanh %330 : vector<8x128xf32>
    %332 = arith.mulf %327, %331 : vector<8x128xf32>
    %c9_i32 = arith.constant 9 : i32
    %c8_i32_127 = arith.constant 8 : i32
    %333 = arith.muli %c9_i32, %c8_i32_127 : i32
    %334 = tpu.assume_multiple %333, 8 : i32
    %335 = arith.index_cast %334 : i32 to index
    %c0_128 = arith.constant 0 : index
    %336 = vector.load %arg5[%335, %c0_128] : memref<224x512xf32, #tpu.memory_space<vmem>>, vector<8x512xf32>
    %c0_129 = arith.constant 0 : index
    %c0_130 = arith.constant 0 : index
    %337 = vector.load %arg2[%c0_129, %c0_130] : memref<128x512xf32, #tpu.memory_space<vmem>>, vector<128x512xf32>
    %cst_131 = arith.constant dense<0.000000e+00> : vector<8x512xf32>
    %338 = tpu.matmul %332, %337, %cst_131 {dimension_numbers = #tpu.dot_dimension_numbers<[1], [0], [0], [1], [0, 0, 1, 1], [], []>} : vector<8x128xf32>, vector<128x512xf32>, vector<8x512xf32> -> vector<8x512xf32>
    %339 = arith.addf %336, %338 : vector<8x512xf32>
    %340 = vector.extract_strided_slice %339 {offsets = [0, 0], sizes = [8, 128], strides = [1, 1]} : vector<8x512xf32> to vector<8x128xf32>
    %cst_132 = arith.constant 5.000000e-01 : f32
    %341 = vector.broadcast %cst_132 : f32 to vector<8x128xf32>
    %342 = arith.mulf %341, %340 : vector<8x128xf32>
    %343 = math.tanh %342 : vector<8x128xf32>
    %cst_133 = arith.constant 5.000000e-01 : f32
    %344 = vector.broadcast %cst_133 : f32 to vector<8x128xf32>
    %345 = arith.mulf %344, %343 : vector<8x128xf32>
    %cst_134 = arith.constant 5.000000e-01 : f32
    %346 = vector.broadcast %cst_134 : f32 to vector<8x128xf32>
    %347 = arith.addf %345, %346 : vector<8x128xf32>
    %348 = vector.extract_strided_slice %339 {offsets = [0, 128], sizes = [8, 128], strides = [1, 1]} : vector<8x512xf32> to vector<8x128xf32>
    %cst_135 = arith.constant 5.000000e-01 : f32
    %349 = vector.broadcast %cst_135 : f32 to vector<8x128xf32>
    %350 = arith.mulf %349, %348 : vector<8x128xf32>
    %351 = math.tanh %350 : vector<8x128xf32>
    %cst_136 = arith.constant 5.000000e-01 : f32
    %352 = vector.broadcast %cst_136 : f32 to vector<8x128xf32>
    %353 = arith.mulf %352, %351 : vector<8x128xf32>
    %cst_137 = arith.constant 5.000000e-01 : f32
    %354 = vector.broadcast %cst_137 : f32 to vector<8x128xf32>
    %355 = arith.addf %353, %354 : vector<8x128xf32>
    %356 = vector.extract_strided_slice %339 {offsets = [0, 256], sizes = [8, 128], strides = [1, 1]} : vector<8x512xf32> to vector<8x128xf32>
    %357 = math.tanh %356 : vector<8x128xf32>
    %358 = vector.extract_strided_slice %339 {offsets = [0, 384], sizes = [8, 128], strides = [1, 1]} : vector<8x512xf32> to vector<8x128xf32>
    %cst_138 = arith.constant 5.000000e-01 : f32
    %359 = vector.broadcast %cst_138 : f32 to vector<8x128xf32>
    %360 = arith.mulf %359, %358 : vector<8x128xf32>
    %361 = math.tanh %360 : vector<8x128xf32>
    %cst_139 = arith.constant 5.000000e-01 : f32
    %362 = vector.broadcast %cst_139 : f32 to vector<8x128xf32>
    %363 = arith.mulf %362, %361 : vector<8x128xf32>
    %cst_140 = arith.constant 5.000000e-01 : f32
    %364 = vector.broadcast %cst_140 : f32 to vector<8x128xf32>
    %365 = arith.addf %363, %364 : vector<8x128xf32>
    %366 = arith.mulf %330, %347 : vector<8x128xf32>
    %367 = arith.mulf %355, %357 : vector<8x128xf32>
    %368 = arith.addf %366, %367 : vector<8x128xf32>
    %369 = math.tanh %368 : vector<8x128xf32>
    %370 = arith.mulf %365, %369 : vector<8x128xf32>
    %c10_i32 = arith.constant 10 : i32
    %c8_i32_141 = arith.constant 8 : i32
    %371 = arith.muli %c10_i32, %c8_i32_141 : i32
    %372 = tpu.assume_multiple %371, 8 : i32
    %373 = arith.index_cast %372 : i32 to index
    %c0_142 = arith.constant 0 : index
    %374 = vector.load %arg5[%373, %c0_142] : memref<224x512xf32, #tpu.memory_space<vmem>>, vector<8x512xf32>
    %c0_143 = arith.constant 0 : index
    %c0_144 = arith.constant 0 : index
    %375 = vector.load %arg2[%c0_143, %c0_144] : memref<128x512xf32, #tpu.memory_space<vmem>>, vector<128x512xf32>
    %cst_145 = arith.constant dense<0.000000e+00> : vector<8x512xf32>
    %376 = tpu.matmul %370, %375, %cst_145 {dimension_numbers = #tpu.dot_dimension_numbers<[1], [0], [0], [1], [0, 0, 1, 1], [], []>} : vector<8x128xf32>, vector<128x512xf32>, vector<8x512xf32> -> vector<8x512xf32>
    %377 = arith.addf %374, %376 : vector<8x512xf32>
    %378 = vector.extract_strided_slice %377 {offsets = [0, 0], sizes = [8, 128], strides = [1, 1]} : vector<8x512xf32> to vector<8x128xf32>
    %cst_146 = arith.constant 5.000000e-01 : f32
    %379 = vector.broadcast %cst_146 : f32 to vector<8x128xf32>
    %380 = arith.mulf %379, %378 : vector<8x128xf32>
    %381 = math.tanh %380 : vector<8x128xf32>
    %cst_147 = arith.constant 5.000000e-01 : f32
    %382 = vector.broadcast %cst_147 : f32 to vector<8x128xf32>
    %383 = arith.mulf %382, %381 : vector<8x128xf32>
    %cst_148 = arith.constant 5.000000e-01 : f32
    %384 = vector.broadcast %cst_148 : f32 to vector<8x128xf32>
    %385 = arith.addf %383, %384 : vector<8x128xf32>
    %386 = vector.extract_strided_slice %377 {offsets = [0, 128], sizes = [8, 128], strides = [1, 1]} : vector<8x512xf32> to vector<8x128xf32>
    %cst_149 = arith.constant 5.000000e-01 : f32
    %387 = vector.broadcast %cst_149 : f32 to vector<8x128xf32>
    %388 = arith.mulf %387, %386 : vector<8x128xf32>
    %389 = math.tanh %388 : vector<8x128xf32>
    %cst_150 = arith.constant 5.000000e-01 : f32
    %390 = vector.broadcast %cst_150 : f32 to vector<8x128xf32>
    %391 = arith.mulf %390, %389 : vector<8x128xf32>
    %cst_151 = arith.constant 5.000000e-01 : f32
    %392 = vector.broadcast %cst_151 : f32 to vector<8x128xf32>
    %393 = arith.addf %391, %392 : vector<8x128xf32>
    %394 = vector.extract_strided_slice %377 {offsets = [0, 256], sizes = [8, 128], strides = [1, 1]} : vector<8x512xf32> to vector<8x128xf32>
    %395 = math.tanh %394 : vector<8x128xf32>
    %396 = vector.extract_strided_slice %377 {offsets = [0, 384], sizes = [8, 128], strides = [1, 1]} : vector<8x512xf32> to vector<8x128xf32>
    %cst_152 = arith.constant 5.000000e-01 : f32
    %397 = vector.broadcast %cst_152 : f32 to vector<8x128xf32>
    %398 = arith.mulf %397, %396 : vector<8x128xf32>
    %399 = math.tanh %398 : vector<8x128xf32>
    %cst_153 = arith.constant 5.000000e-01 : f32
    %400 = vector.broadcast %cst_153 : f32 to vector<8x128xf32>
    %401 = arith.mulf %400, %399 : vector<8x128xf32>
    %cst_154 = arith.constant 5.000000e-01 : f32
    %402 = vector.broadcast %cst_154 : f32 to vector<8x128xf32>
    %403 = arith.addf %401, %402 : vector<8x128xf32>
    %404 = arith.mulf %368, %385 : vector<8x128xf32>
    %405 = arith.mulf %393, %395 : vector<8x128xf32>
    %406 = arith.addf %404, %405 : vector<8x128xf32>
    %407 = math.tanh %406 : vector<8x128xf32>
    %408 = arith.mulf %403, %407 : vector<8x128xf32>
    %c11_i32 = arith.constant 11 : i32
    %c8_i32_155 = arith.constant 8 : i32
    %409 = arith.muli %c11_i32, %c8_i32_155 : i32
    %410 = tpu.assume_multiple %409, 8 : i32
    %411 = arith.index_cast %410 : i32 to index
    %c0_156 = arith.constant 0 : index
    %412 = vector.load %arg5[%411, %c0_156] : memref<224x512xf32, #tpu.memory_space<vmem>>, vector<8x512xf32>
    %c0_157 = arith.constant 0 : index
    %c0_158 = arith.constant 0 : index
    %413 = vector.load %arg2[%c0_157, %c0_158] : memref<128x512xf32, #tpu.memory_space<vmem>>, vector<128x512xf32>
    %cst_159 = arith.constant dense<0.000000e+00> : vector<8x512xf32>
    %414 = tpu.matmul %408, %413, %cst_159 {dimension_numbers = #tpu.dot_dimension_numbers<[1], [0], [0], [1], [0, 0, 1, 1], [], []>} : vector<8x128xf32>, vector<128x512xf32>, vector<8x512xf32> -> vector<8x512xf32>
    %415 = arith.addf %412, %414 : vector<8x512xf32>
    %416 = vector.extract_strided_slice %415 {offsets = [0, 0], sizes = [8, 128], strides = [1, 1]} : vector<8x512xf32> to vector<8x128xf32>
    %cst_160 = arith.constant 5.000000e-01 : f32
    %417 = vector.broadcast %cst_160 : f32 to vector<8x128xf32>
    %418 = arith.mulf %417, %416 : vector<8x128xf32>
    %419 = math.tanh %418 : vector<8x128xf32>
    %cst_161 = arith.constant 5.000000e-01 : f32
    %420 = vector.broadcast %cst_161 : f32 to vector<8x128xf32>
    %421 = arith.mulf %420, %419 : vector<8x128xf32>
    %cst_162 = arith.constant 5.000000e-01 : f32
    %422 = vector.broadcast %cst_162 : f32 to vector<8x128xf32>
    %423 = arith.addf %421, %422 : vector<8x128xf32>
    %424 = vector.extract_strided_slice %415 {offsets = [0, 128], sizes = [8, 128], strides = [1, 1]} : vector<8x512xf32> to vector<8x128xf32>
    %cst_163 = arith.constant 5.000000e-01 : f32
    %425 = vector.broadcast %cst_163 : f32 to vector<8x128xf32>
    %426 = arith.mulf %425, %424 : vector<8x128xf32>
    %427 = math.tanh %426 : vector<8x128xf32>
    %cst_164 = arith.constant 5.000000e-01 : f32
    %428 = vector.broadcast %cst_164 : f32 to vector<8x128xf32>
    %429 = arith.mulf %428, %427 : vector<8x128xf32>
    %cst_165 = arith.constant 5.000000e-01 : f32
    %430 = vector.broadcast %cst_165 : f32 to vector<8x128xf32>
    %431 = arith.addf %429, %430 : vector<8x128xf32>
    %432 = vector.extract_strided_slice %415 {offsets = [0, 256], sizes = [8, 128], strides = [1, 1]} : vector<8x512xf32> to vector<8x128xf32>
    %433 = math.tanh %432 : vector<8x128xf32>
    %434 = vector.extract_strided_slice %415 {offsets = [0, 384], sizes = [8, 128], strides = [1, 1]} : vector<8x512xf32> to vector<8x128xf32>
    %cst_166 = arith.constant 5.000000e-01 : f32
    %435 = vector.broadcast %cst_166 : f32 to vector<8x128xf32>
    %436 = arith.mulf %435, %434 : vector<8x128xf32>
    %437 = math.tanh %436 : vector<8x128xf32>
    %cst_167 = arith.constant 5.000000e-01 : f32
    %438 = vector.broadcast %cst_167 : f32 to vector<8x128xf32>
    %439 = arith.mulf %438, %437 : vector<8x128xf32>
    %cst_168 = arith.constant 5.000000e-01 : f32
    %440 = vector.broadcast %cst_168 : f32 to vector<8x128xf32>
    %441 = arith.addf %439, %440 : vector<8x128xf32>
    %442 = arith.mulf %406, %423 : vector<8x128xf32>
    %443 = arith.mulf %431, %433 : vector<8x128xf32>
    %444 = arith.addf %442, %443 : vector<8x128xf32>
    %445 = math.tanh %444 : vector<8x128xf32>
    %446 = arith.mulf %441, %445 : vector<8x128xf32>
    %c12_i32 = arith.constant 12 : i32
    %c8_i32_169 = arith.constant 8 : i32
    %447 = arith.muli %c12_i32, %c8_i32_169 : i32
    %448 = tpu.assume_multiple %447, 8 : i32
    %449 = arith.index_cast %448 : i32 to index
    %c0_170 = arith.constant 0 : index
    %450 = vector.load %arg5[%449, %c0_170] : memref<224x512xf32, #tpu.memory_space<vmem>>, vector<8x512xf32>
    %c0_171 = arith.constant 0 : index
    %c0_172 = arith.constant 0 : index
    %451 = vector.load %arg2[%c0_171, %c0_172] : memref<128x512xf32, #tpu.memory_space<vmem>>, vector<128x512xf32>
    %cst_173 = arith.constant dense<0.000000e+00> : vector<8x512xf32>
    %452 = tpu.matmul %446, %451, %cst_173 {dimension_numbers = #tpu.dot_dimension_numbers<[1], [0], [0], [1], [0, 0, 1, 1], [], []>} : vector<8x128xf32>, vector<128x512xf32>, vector<8x512xf32> -> vector<8x512xf32>
    %453 = arith.addf %450, %452 : vector<8x512xf32>
    %454 = vector.extract_strided_slice %453 {offsets = [0, 0], sizes = [8, 128], strides = [1, 1]} : vector<8x512xf32> to vector<8x128xf32>
    %cst_174 = arith.constant 5.000000e-01 : f32
    %455 = vector.broadcast %cst_174 : f32 to vector<8x128xf32>
    %456 = arith.mulf %455, %454 : vector<8x128xf32>
    %457 = math.tanh %456 : vector<8x128xf32>
    %cst_175 = arith.constant 5.000000e-01 : f32
    %458 = vector.broadcast %cst_175 : f32 to vector<8x128xf32>
    %459 = arith.mulf %458, %457 : vector<8x128xf32>
    %cst_176 = arith.constant 5.000000e-01 : f32
    %460 = vector.broadcast %cst_176 : f32 to vector<8x128xf32>
    %461 = arith.addf %459, %460 : vector<8x128xf32>
    %462 = vector.extract_strided_slice %453 {offsets = [0, 128], sizes = [8, 128], strides = [1, 1]} : vector<8x512xf32> to vector<8x128xf32>
    %cst_177 = arith.constant 5.000000e-01 : f32
    %463 = vector.broadcast %cst_177 : f32 to vector<8x128xf32>
    %464 = arith.mulf %463, %462 : vector<8x128xf32>
    %465 = math.tanh %464 : vector<8x128xf32>
    %cst_178 = arith.constant 5.000000e-01 : f32
    %466 = vector.broadcast %cst_178 : f32 to vector<8x128xf32>
    %467 = arith.mulf %466, %465 : vector<8x128xf32>
    %cst_179 = arith.constant 5.000000e-01 : f32
    %468 = vector.broadcast %cst_179 : f32 to vector<8x128xf32>
    %469 = arith.addf %467, %468 : vector<8x128xf32>
    %470 = vector.extract_strided_slice %453 {offsets = [0, 256], sizes = [8, 128], strides = [1, 1]} : vector<8x512xf32> to vector<8x128xf32>
    %471 = math.tanh %470 : vector<8x128xf32>
    %472 = vector.extract_strided_slice %453 {offsets = [0, 384], sizes = [8, 128], strides = [1, 1]} : vector<8x512xf32> to vector<8x128xf32>
    %cst_180 = arith.constant 5.000000e-01 : f32
    %473 = vector.broadcast %cst_180 : f32 to vector<8x128xf32>
    %474 = arith.mulf %473, %472 : vector<8x128xf32>
    %475 = math.tanh %474 : vector<8x128xf32>
    %cst_181 = arith.constant 5.000000e-01 : f32
    %476 = vector.broadcast %cst_181 : f32 to vector<8x128xf32>
    %477 = arith.mulf %476, %475 : vector<8x128xf32>
    %cst_182 = arith.constant 5.000000e-01 : f32
    %478 = vector.broadcast %cst_182 : f32 to vector<8x128xf32>
    %479 = arith.addf %477, %478 : vector<8x128xf32>
    %480 = arith.mulf %444, %461 : vector<8x128xf32>
    %481 = arith.mulf %469, %471 : vector<8x128xf32>
    %482 = arith.addf %480, %481 : vector<8x128xf32>
    %483 = math.tanh %482 : vector<8x128xf32>
    %484 = arith.mulf %479, %483 : vector<8x128xf32>
    %c13_i32 = arith.constant 13 : i32
    %c8_i32_183 = arith.constant 8 : i32
    %485 = arith.muli %c13_i32, %c8_i32_183 : i32
    %486 = tpu.assume_multiple %485, 8 : i32
    %487 = arith.index_cast %486 : i32 to index
    %c0_184 = arith.constant 0 : index
    %488 = vector.load %arg5[%487, %c0_184] : memref<224x512xf32, #tpu.memory_space<vmem>>, vector<8x512xf32>
    %c0_185 = arith.constant 0 : index
    %c0_186 = arith.constant 0 : index
    %489 = vector.load %arg2[%c0_185, %c0_186] : memref<128x512xf32, #tpu.memory_space<vmem>>, vector<128x512xf32>
    %cst_187 = arith.constant dense<0.000000e+00> : vector<8x512xf32>
    %490 = tpu.matmul %484, %489, %cst_187 {dimension_numbers = #tpu.dot_dimension_numbers<[1], [0], [0], [1], [0, 0, 1, 1], [], []>} : vector<8x128xf32>, vector<128x512xf32>, vector<8x512xf32> -> vector<8x512xf32>
    %491 = arith.addf %488, %490 : vector<8x512xf32>
    %492 = vector.extract_strided_slice %491 {offsets = [0, 0], sizes = [8, 128], strides = [1, 1]} : vector<8x512xf32> to vector<8x128xf32>
    %cst_188 = arith.constant 5.000000e-01 : f32
    %493 = vector.broadcast %cst_188 : f32 to vector<8x128xf32>
    %494 = arith.mulf %493, %492 : vector<8x128xf32>
    %495 = math.tanh %494 : vector<8x128xf32>
    %cst_189 = arith.constant 5.000000e-01 : f32
    %496 = vector.broadcast %cst_189 : f32 to vector<8x128xf32>
    %497 = arith.mulf %496, %495 : vector<8x128xf32>
    %cst_190 = arith.constant 5.000000e-01 : f32
    %498 = vector.broadcast %cst_190 : f32 to vector<8x128xf32>
    %499 = arith.addf %497, %498 : vector<8x128xf32>
    %500 = vector.extract_strided_slice %491 {offsets = [0, 128], sizes = [8, 128], strides = [1, 1]} : vector<8x512xf32> to vector<8x128xf32>
    %cst_191 = arith.constant 5.000000e-01 : f32
    %501 = vector.broadcast %cst_191 : f32 to vector<8x128xf32>
    %502 = arith.mulf %501, %500 : vector<8x128xf32>
    %503 = math.tanh %502 : vector<8x128xf32>
    %cst_192 = arith.constant 5.000000e-01 : f32
    %504 = vector.broadcast %cst_192 : f32 to vector<8x128xf32>
    %505 = arith.mulf %504, %503 : vector<8x128xf32>
    %cst_193 = arith.constant 5.000000e-01 : f32
    %506 = vector.broadcast %cst_193 : f32 to vector<8x128xf32>
    %507 = arith.addf %505, %506 : vector<8x128xf32>
    %508 = vector.extract_strided_slice %491 {offsets = [0, 256], sizes = [8, 128], strides = [1, 1]} : vector<8x512xf32> to vector<8x128xf32>
    %509 = math.tanh %508 : vector<8x128xf32>
    %510 = vector.extract_strided_slice %491 {offsets = [0, 384], sizes = [8, 128], strides = [1, 1]} : vector<8x512xf32> to vector<8x128xf32>
    %cst_194 = arith.constant 5.000000e-01 : f32
    %511 = vector.broadcast %cst_194 : f32 to vector<8x128xf32>
    %512 = arith.mulf %511, %510 : vector<8x128xf32>
    %513 = math.tanh %512 : vector<8x128xf32>
    %cst_195 = arith.constant 5.000000e-01 : f32
    %514 = vector.broadcast %cst_195 : f32 to vector<8x128xf32>
    %515 = arith.mulf %514, %513 : vector<8x128xf32>
    %cst_196 = arith.constant 5.000000e-01 : f32
    %516 = vector.broadcast %cst_196 : f32 to vector<8x128xf32>
    %517 = arith.addf %515, %516 : vector<8x128xf32>
    %518 = arith.mulf %482, %499 : vector<8x128xf32>
    %519 = arith.mulf %507, %509 : vector<8x128xf32>
    %520 = arith.addf %518, %519 : vector<8x128xf32>
    %521 = math.tanh %520 : vector<8x128xf32>
    %522 = arith.mulf %517, %521 : vector<8x128xf32>
    %c14_i32 = arith.constant 14 : i32
    %c8_i32_197 = arith.constant 8 : i32
    %523 = arith.muli %c14_i32, %c8_i32_197 : i32
    %524 = tpu.assume_multiple %523, 8 : i32
    %525 = arith.index_cast %524 : i32 to index
    %c0_198 = arith.constant 0 : index
    %526 = vector.load %arg5[%525, %c0_198] : memref<224x512xf32, #tpu.memory_space<vmem>>, vector<8x512xf32>
    %c0_199 = arith.constant 0 : index
    %c0_200 = arith.constant 0 : index
    %527 = vector.load %arg2[%c0_199, %c0_200] : memref<128x512xf32, #tpu.memory_space<vmem>>, vector<128x512xf32>
    %cst_201 = arith.constant dense<0.000000e+00> : vector<8x512xf32>
    %528 = tpu.matmul %522, %527, %cst_201 {dimension_numbers = #tpu.dot_dimension_numbers<[1], [0], [0], [1], [0, 0, 1, 1], [], []>} : vector<8x128xf32>, vector<128x512xf32>, vector<8x512xf32> -> vector<8x512xf32>
    %529 = arith.addf %526, %528 : vector<8x512xf32>
    %530 = vector.extract_strided_slice %529 {offsets = [0, 0], sizes = [8, 128], strides = [1, 1]} : vector<8x512xf32> to vector<8x128xf32>
    %cst_202 = arith.constant 5.000000e-01 : f32
    %531 = vector.broadcast %cst_202 : f32 to vector<8x128xf32>
    %532 = arith.mulf %531, %530 : vector<8x128xf32>
    %533 = math.tanh %532 : vector<8x128xf32>
    %cst_203 = arith.constant 5.000000e-01 : f32
    %534 = vector.broadcast %cst_203 : f32 to vector<8x128xf32>
    %535 = arith.mulf %534, %533 : vector<8x128xf32>
    %cst_204 = arith.constant 5.000000e-01 : f32
    %536 = vector.broadcast %cst_204 : f32 to vector<8x128xf32>
    %537 = arith.addf %535, %536 : vector<8x128xf32>
    %538 = vector.extract_strided_slice %529 {offsets = [0, 128], sizes = [8, 128], strides = [1, 1]} : vector<8x512xf32> to vector<8x128xf32>
    %cst_205 = arith.constant 5.000000e-01 : f32
    %539 = vector.broadcast %cst_205 : f32 to vector<8x128xf32>
    %540 = arith.mulf %539, %538 : vector<8x128xf32>
    %541 = math.tanh %540 : vector<8x128xf32>
    %cst_206 = arith.constant 5.000000e-01 : f32
    %542 = vector.broadcast %cst_206 : f32 to vector<8x128xf32>
    %543 = arith.mulf %542, %541 : vector<8x128xf32>
    %cst_207 = arith.constant 5.000000e-01 : f32
    %544 = vector.broadcast %cst_207 : f32 to vector<8x128xf32>
    %545 = arith.addf %543, %544 : vector<8x128xf32>
    %546 = vector.extract_strided_slice %529 {offsets = [0, 256], sizes = [8, 128], strides = [1, 1]} : vector<8x512xf32> to vector<8x128xf32>
    %547 = math.tanh %546 : vector<8x128xf32>
    %548 = vector.extract_strided_slice %529 {offsets = [0, 384], sizes = [8, 128], strides = [1, 1]} : vector<8x512xf32> to vector<8x128xf32>
    %cst_208 = arith.constant 5.000000e-01 : f32
    %549 = vector.broadcast %cst_208 : f32 to vector<8x128xf32>
    %550 = arith.mulf %549, %548 : vector<8x128xf32>
    %551 = math.tanh %550 : vector<8x128xf32>
    %cst_209 = arith.constant 5.000000e-01 : f32
    %552 = vector.broadcast %cst_209 : f32 to vector<8x128xf32>
    %553 = arith.mulf %552, %551 : vector<8x128xf32>
    %cst_210 = arith.constant 5.000000e-01 : f32
    %554 = vector.broadcast %cst_210 : f32 to vector<8x128xf32>
    %555 = arith.addf %553, %554 : vector<8x128xf32>
    %556 = arith.mulf %520, %537 : vector<8x128xf32>
    %557 = arith.mulf %545, %547 : vector<8x128xf32>
    %558 = arith.addf %556, %557 : vector<8x128xf32>
    %559 = math.tanh %558 : vector<8x128xf32>
    %560 = arith.mulf %555, %559 : vector<8x128xf32>
    %c15_i32 = arith.constant 15 : i32
    %c8_i32_211 = arith.constant 8 : i32
    %561 = arith.muli %c15_i32, %c8_i32_211 : i32
    %562 = tpu.assume_multiple %561, 8 : i32
    %563 = arith.index_cast %562 : i32 to index
    %c0_212 = arith.constant 0 : index
    %564 = vector.load %arg5[%563, %c0_212] : memref<224x512xf32, #tpu.memory_space<vmem>>, vector<8x512xf32>
    %c0_213 = arith.constant 0 : index
    %c0_214 = arith.constant 0 : index
    %565 = vector.load %arg2[%c0_213, %c0_214] : memref<128x512xf32, #tpu.memory_space<vmem>>, vector<128x512xf32>
    %cst_215 = arith.constant dense<0.000000e+00> : vector<8x512xf32>
    %566 = tpu.matmul %560, %565, %cst_215 {dimension_numbers = #tpu.dot_dimension_numbers<[1], [0], [0], [1], [0, 0, 1, 1], [], []>} : vector<8x128xf32>, vector<128x512xf32>, vector<8x512xf32> -> vector<8x512xf32>
    %567 = arith.addf %564, %566 : vector<8x512xf32>
    %568 = vector.extract_strided_slice %567 {offsets = [0, 0], sizes = [8, 128], strides = [1, 1]} : vector<8x512xf32> to vector<8x128xf32>
    %cst_216 = arith.constant 5.000000e-01 : f32
    %569 = vector.broadcast %cst_216 : f32 to vector<8x128xf32>
    %570 = arith.mulf %569, %568 : vector<8x128xf32>
    %571 = math.tanh %570 : vector<8x128xf32>
    %cst_217 = arith.constant 5.000000e-01 : f32
    %572 = vector.broadcast %cst_217 : f32 to vector<8x128xf32>
    %573 = arith.mulf %572, %571 : vector<8x128xf32>
    %cst_218 = arith.constant 5.000000e-01 : f32
    %574 = vector.broadcast %cst_218 : f32 to vector<8x128xf32>
    %575 = arith.addf %573, %574 : vector<8x128xf32>
    %576 = vector.extract_strided_slice %567 {offsets = [0, 128], sizes = [8, 128], strides = [1, 1]} : vector<8x512xf32> to vector<8x128xf32>
    %cst_219 = arith.constant 5.000000e-01 : f32
    %577 = vector.broadcast %cst_219 : f32 to vector<8x128xf32>
    %578 = arith.mulf %577, %576 : vector<8x128xf32>
    %579 = math.tanh %578 : vector<8x128xf32>
    %cst_220 = arith.constant 5.000000e-01 : f32
    %580 = vector.broadcast %cst_220 : f32 to vector<8x128xf32>
    %581 = arith.mulf %580, %579 : vector<8x128xf32>
    %cst_221 = arith.constant 5.000000e-01 : f32
    %582 = vector.broadcast %cst_221 : f32 to vector<8x128xf32>
    %583 = arith.addf %581, %582 : vector<8x128xf32>
    %584 = vector.extract_strided_slice %567 {offsets = [0, 256], sizes = [8, 128], strides = [1, 1]} : vector<8x512xf32> to vector<8x128xf32>
    %585 = math.tanh %584 : vector<8x128xf32>
    %586 = vector.extract_strided_slice %567 {offsets = [0, 384], sizes = [8, 128], strides = [1, 1]} : vector<8x512xf32> to vector<8x128xf32>
    %cst_222 = arith.constant 5.000000e-01 : f32
    %587 = vector.broadcast %cst_222 : f32 to vector<8x128xf32>
    %588 = arith.mulf %587, %586 : vector<8x128xf32>
    %589 = math.tanh %588 : vector<8x128xf32>
    %cst_223 = arith.constant 5.000000e-01 : f32
    %590 = vector.broadcast %cst_223 : f32 to vector<8x128xf32>
    %591 = arith.mulf %590, %589 : vector<8x128xf32>
    %cst_224 = arith.constant 5.000000e-01 : f32
    %592 = vector.broadcast %cst_224 : f32 to vector<8x128xf32>
    %593 = arith.addf %591, %592 : vector<8x128xf32>
    %594 = arith.mulf %558, %575 : vector<8x128xf32>
    %595 = arith.mulf %583, %585 : vector<8x128xf32>
    %596 = arith.addf %594, %595 : vector<8x128xf32>
    %597 = math.tanh %596 : vector<8x128xf32>
    %598 = arith.mulf %593, %597 : vector<8x128xf32>
    %c16_i32 = arith.constant 16 : i32
    %c8_i32_225 = arith.constant 8 : i32
    %599 = arith.muli %c16_i32, %c8_i32_225 : i32
    %600 = tpu.assume_multiple %599, 8 : i32
    %601 = arith.index_cast %600 : i32 to index
    %c0_226 = arith.constant 0 : index
    %602 = vector.load %arg5[%601, %c0_226] : memref<224x512xf32, #tpu.memory_space<vmem>>, vector<8x512xf32>
    %c0_227 = arith.constant 0 : index
    %c0_228 = arith.constant 0 : index
    %603 = vector.load %arg2[%c0_227, %c0_228] : memref<128x512xf32, #tpu.memory_space<vmem>>, vector<128x512xf32>
    %cst_229 = arith.constant dense<0.000000e+00> : vector<8x512xf32>
    %604 = tpu.matmul %598, %603, %cst_229 {dimension_numbers = #tpu.dot_dimension_numbers<[1], [0], [0], [1], [0, 0, 1, 1], [], []>} : vector<8x128xf32>, vector<128x512xf32>, vector<8x512xf32> -> vector<8x512xf32>
    %605 = arith.addf %602, %604 : vector<8x512xf32>
    %606 = vector.extract_strided_slice %605 {offsets = [0, 0], sizes = [8, 128], strides = [1, 1]} : vector<8x512xf32> to vector<8x128xf32>
    %cst_230 = arith.constant 5.000000e-01 : f32
    %607 = vector.broadcast %cst_230 : f32 to vector<8x128xf32>
    %608 = arith.mulf %607, %606 : vector<8x128xf32>
    %609 = math.tanh %608 : vector<8x128xf32>
    %cst_231 = arith.constant 5.000000e-01 : f32
    %610 = vector.broadcast %cst_231 : f32 to vector<8x128xf32>
    %611 = arith.mulf %610, %609 : vector<8x128xf32>
    %cst_232 = arith.constant 5.000000e-01 : f32
    %612 = vector.broadcast %cst_232 : f32 to vector<8x128xf32>
    %613 = arith.addf %611, %612 : vector<8x128xf32>
    %614 = vector.extract_strided_slice %605 {offsets = [0, 128], sizes = [8, 128], strides = [1, 1]} : vector<8x512xf32> to vector<8x128xf32>
    %cst_233 = arith.constant 5.000000e-01 : f32
    %615 = vector.broadcast %cst_233 : f32 to vector<8x128xf32>
    %616 = arith.mulf %615, %614 : vector<8x128xf32>
    %617 = math.tanh %616 : vector<8x128xf32>
    %cst_234 = arith.constant 5.000000e-01 : f32
    %618 = vector.broadcast %cst_234 : f32 to vector<8x128xf32>
    %619 = arith.mulf %618, %617 : vector<8x128xf32>
    %cst_235 = arith.constant 5.000000e-01 : f32
    %620 = vector.broadcast %cst_235 : f32 to vector<8x128xf32>
    %621 = arith.addf %619, %620 : vector<8x128xf32>
    %622 = vector.extract_strided_slice %605 {offsets = [0, 256], sizes = [8, 128], strides = [1, 1]} : vector<8x512xf32> to vector<8x128xf32>
    %623 = math.tanh %622 : vector<8x128xf32>
    %624 = vector.extract_strided_slice %605 {offsets = [0, 384], sizes = [8, 128], strides = [1, 1]} : vector<8x512xf32> to vector<8x128xf32>
    %cst_236 = arith.constant 5.000000e-01 : f32
    %625 = vector.broadcast %cst_236 : f32 to vector<8x128xf32>
    %626 = arith.mulf %625, %624 : vector<8x128xf32>
    %627 = math.tanh %626 : vector<8x128xf32>
    %cst_237 = arith.constant 5.000000e-01 : f32
    %628 = vector.broadcast %cst_237 : f32 to vector<8x128xf32>
    %629 = arith.mulf %628, %627 : vector<8x128xf32>
    %cst_238 = arith.constant 5.000000e-01 : f32
    %630 = vector.broadcast %cst_238 : f32 to vector<8x128xf32>
    %631 = arith.addf %629, %630 : vector<8x128xf32>
    %632 = arith.mulf %596, %613 : vector<8x128xf32>
    %633 = arith.mulf %621, %623 : vector<8x128xf32>
    %634 = arith.addf %632, %633 : vector<8x128xf32>
    %635 = math.tanh %634 : vector<8x128xf32>
    %636 = arith.mulf %631, %635 : vector<8x128xf32>
    %c17_i32 = arith.constant 17 : i32
    %c8_i32_239 = arith.constant 8 : i32
    %637 = arith.muli %c17_i32, %c8_i32_239 : i32
    %638 = tpu.assume_multiple %637, 8 : i32
    %639 = arith.index_cast %638 : i32 to index
    %c0_240 = arith.constant 0 : index
    %640 = vector.load %arg5[%639, %c0_240] : memref<224x512xf32, #tpu.memory_space<vmem>>, vector<8x512xf32>
    %c0_241 = arith.constant 0 : index
    %c0_242 = arith.constant 0 : index
    %641 = vector.load %arg2[%c0_241, %c0_242] : memref<128x512xf32, #tpu.memory_space<vmem>>, vector<128x512xf32>
    %cst_243 = arith.constant dense<0.000000e+00> : vector<8x512xf32>
    %642 = tpu.matmul %636, %641, %cst_243 {dimension_numbers = #tpu.dot_dimension_numbers<[1], [0], [0], [1], [0, 0, 1, 1], [], []>} : vector<8x128xf32>, vector<128x512xf32>, vector<8x512xf32> -> vector<8x512xf32>
    %643 = arith.addf %640, %642 : vector<8x512xf32>
    %644 = vector.extract_strided_slice %643 {offsets = [0, 0], sizes = [8, 128], strides = [1, 1]} : vector<8x512xf32> to vector<8x128xf32>
    %cst_244 = arith.constant 5.000000e-01 : f32
    %645 = vector.broadcast %cst_244 : f32 to vector<8x128xf32>
    %646 = arith.mulf %645, %644 : vector<8x128xf32>
    %647 = math.tanh %646 : vector<8x128xf32>
    %cst_245 = arith.constant 5.000000e-01 : f32
    %648 = vector.broadcast %cst_245 : f32 to vector<8x128xf32>
    %649 = arith.mulf %648, %647 : vector<8x128xf32>
    %cst_246 = arith.constant 5.000000e-01 : f32
    %650 = vector.broadcast %cst_246 : f32 to vector<8x128xf32>
    %651 = arith.addf %649, %650 : vector<8x128xf32>
    %652 = vector.extract_strided_slice %643 {offsets = [0, 128], sizes = [8, 128], strides = [1, 1]} : vector<8x512xf32> to vector<8x128xf32>
    %cst_247 = arith.constant 5.000000e-01 : f32
    %653 = vector.broadcast %cst_247 : f32 to vector<8x128xf32>
    %654 = arith.mulf %653, %652 : vector<8x128xf32>
    %655 = math.tanh %654 : vector<8x128xf32>
    %cst_248 = arith.constant 5.000000e-01 : f32
    %656 = vector.broadcast %cst_248 : f32 to vector<8x128xf32>
    %657 = arith.mulf %656, %655 : vector<8x128xf32>
    %cst_249 = arith.constant 5.000000e-01 : f32
    %658 = vector.broadcast %cst_249 : f32 to vector<8x128xf32>
    %659 = arith.addf %657, %658 : vector<8x128xf32>
    %660 = vector.extract_strided_slice %643 {offsets = [0, 256], sizes = [8, 128], strides = [1, 1]} : vector<8x512xf32> to vector<8x128xf32>
    %661 = math.tanh %660 : vector<8x128xf32>
    %662 = vector.extract_strided_slice %643 {offsets = [0, 384], sizes = [8, 128], strides = [1, 1]} : vector<8x512xf32> to vector<8x128xf32>
    %cst_250 = arith.constant 5.000000e-01 : f32
    %663 = vector.broadcast %cst_250 : f32 to vector<8x128xf32>
    %664 = arith.mulf %663, %662 : vector<8x128xf32>
    %665 = math.tanh %664 : vector<8x128xf32>
    %cst_251 = arith.constant 5.000000e-01 : f32
    %666 = vector.broadcast %cst_251 : f32 to vector<8x128xf32>
    %667 = arith.mulf %666, %665 : vector<8x128xf32>
    %cst_252 = arith.constant 5.000000e-01 : f32
    %668 = vector.broadcast %cst_252 : f32 to vector<8x128xf32>
    %669 = arith.addf %667, %668 : vector<8x128xf32>
    %670 = arith.mulf %634, %651 : vector<8x128xf32>
    %671 = arith.mulf %659, %661 : vector<8x128xf32>
    %672 = arith.addf %670, %671 : vector<8x128xf32>
    %673 = math.tanh %672 : vector<8x128xf32>
    %674 = arith.mulf %669, %673 : vector<8x128xf32>
    %c18_i32 = arith.constant 18 : i32
    %c8_i32_253 = arith.constant 8 : i32
    %675 = arith.muli %c18_i32, %c8_i32_253 : i32
    %676 = tpu.assume_multiple %675, 8 : i32
    %677 = arith.index_cast %676 : i32 to index
    %c0_254 = arith.constant 0 : index
    %678 = vector.load %arg5[%677, %c0_254] : memref<224x512xf32, #tpu.memory_space<vmem>>, vector<8x512xf32>
    %c0_255 = arith.constant 0 : index
    %c0_256 = arith.constant 0 : index
    %679 = vector.load %arg2[%c0_255, %c0_256] : memref<128x512xf32, #tpu.memory_space<vmem>>, vector<128x512xf32>
    %cst_257 = arith.constant dense<0.000000e+00> : vector<8x512xf32>
    %680 = tpu.matmul %674, %679, %cst_257 {dimension_numbers = #tpu.dot_dimension_numbers<[1], [0], [0], [1], [0, 0, 1, 1], [], []>} : vector<8x128xf32>, vector<128x512xf32>, vector<8x512xf32> -> vector<8x512xf32>
    %681 = arith.addf %678, %680 : vector<8x512xf32>
    %682 = vector.extract_strided_slice %681 {offsets = [0, 0], sizes = [8, 128], strides = [1, 1]} : vector<8x512xf32> to vector<8x128xf32>
    %cst_258 = arith.constant 5.000000e-01 : f32
    %683 = vector.broadcast %cst_258 : f32 to vector<8x128xf32>
    %684 = arith.mulf %683, %682 : vector<8x128xf32>
    %685 = math.tanh %684 : vector<8x128xf32>
    %cst_259 = arith.constant 5.000000e-01 : f32
    %686 = vector.broadcast %cst_259 : f32 to vector<8x128xf32>
    %687 = arith.mulf %686, %685 : vector<8x128xf32>
    %cst_260 = arith.constant 5.000000e-01 : f32
    %688 = vector.broadcast %cst_260 : f32 to vector<8x128xf32>
    %689 = arith.addf %687, %688 : vector<8x128xf32>
    %690 = vector.extract_strided_slice %681 {offsets = [0, 128], sizes = [8, 128], strides = [1, 1]} : vector<8x512xf32> to vector<8x128xf32>
    %cst_261 = arith.constant 5.000000e-01 : f32
    %691 = vector.broadcast %cst_261 : f32 to vector<8x128xf32>
    %692 = arith.mulf %691, %690 : vector<8x128xf32>
    %693 = math.tanh %692 : vector<8x128xf32>
    %cst_262 = arith.constant 5.000000e-01 : f32
    %694 = vector.broadcast %cst_262 : f32 to vector<8x128xf32>
    %695 = arith.mulf %694, %693 : vector<8x128xf32>
    %cst_263 = arith.constant 5.000000e-01 : f32
    %696 = vector.broadcast %cst_263 : f32 to vector<8x128xf32>
    %697 = arith.addf %695, %696 : vector<8x128xf32>
    %698 = vector.extract_strided_slice %681 {offsets = [0, 256], sizes = [8, 128], strides = [1, 1]} : vector<8x512xf32> to vector<8x128xf32>
    %699 = math.tanh %698 : vector<8x128xf32>
    %700 = vector.extract_strided_slice %681 {offsets = [0, 384], sizes = [8, 128], strides = [1, 1]} : vector<8x512xf32> to vector<8x128xf32>
    %cst_264 = arith.constant 5.000000e-01 : f32
    %701 = vector.broadcast %cst_264 : f32 to vector<8x128xf32>
    %702 = arith.mulf %701, %700 : vector<8x128xf32>
    %703 = math.tanh %702 : vector<8x128xf32>
    %cst_265 = arith.constant 5.000000e-01 : f32
    %704 = vector.broadcast %cst_265 : f32 to vector<8x128xf32>
    %705 = arith.mulf %704, %703 : vector<8x128xf32>
    %cst_266 = arith.constant 5.000000e-01 : f32
    %706 = vector.broadcast %cst_266 : f32 to vector<8x128xf32>
    %707 = arith.addf %705, %706 : vector<8x128xf32>
    %708 = arith.mulf %672, %689 : vector<8x128xf32>
    %709 = arith.mulf %697, %699 : vector<8x128xf32>
    %710 = arith.addf %708, %709 : vector<8x128xf32>
    %711 = math.tanh %710 : vector<8x128xf32>
    %712 = arith.mulf %707, %711 : vector<8x128xf32>
    %c19_i32 = arith.constant 19 : i32
    %c8_i32_267 = arith.constant 8 : i32
    %713 = arith.muli %c19_i32, %c8_i32_267 : i32
    %714 = tpu.assume_multiple %713, 8 : i32
    %715 = arith.index_cast %714 : i32 to index
    %c0_268 = arith.constant 0 : index
    %716 = vector.load %arg5[%715, %c0_268] : memref<224x512xf32, #tpu.memory_space<vmem>>, vector<8x512xf32>
    %c0_269 = arith.constant 0 : index
    %c0_270 = arith.constant 0 : index
    %717 = vector.load %arg2[%c0_269, %c0_270] : memref<128x512xf32, #tpu.memory_space<vmem>>, vector<128x512xf32>
    %cst_271 = arith.constant dense<0.000000e+00> : vector<8x512xf32>
    %718 = tpu.matmul %712, %717, %cst_271 {dimension_numbers = #tpu.dot_dimension_numbers<[1], [0], [0], [1], [0, 0, 1, 1], [], []>} : vector<8x128xf32>, vector<128x512xf32>, vector<8x512xf32> -> vector<8x512xf32>
    %719 = arith.addf %716, %718 : vector<8x512xf32>
    %720 = vector.extract_strided_slice %719 {offsets = [0, 0], sizes = [8, 128], strides = [1, 1]} : vector<8x512xf32> to vector<8x128xf32>
    %cst_272 = arith.constant 5.000000e-01 : f32
    %721 = vector.broadcast %cst_272 : f32 to vector<8x128xf32>
    %722 = arith.mulf %721, %720 : vector<8x128xf32>
    %723 = math.tanh %722 : vector<8x128xf32>
    %cst_273 = arith.constant 5.000000e-01 : f32
    %724 = vector.broadcast %cst_273 : f32 to vector<8x128xf32>
    %725 = arith.mulf %724, %723 : vector<8x128xf32>
    %cst_274 = arith.constant 5.000000e-01 : f32
    %726 = vector.broadcast %cst_274 : f32 to vector<8x128xf32>
    %727 = arith.addf %725, %726 : vector<8x128xf32>
    %728 = vector.extract_strided_slice %719 {offsets = [0, 128], sizes = [8, 128], strides = [1, 1]} : vector<8x512xf32> to vector<8x128xf32>
    %cst_275 = arith.constant 5.000000e-01 : f32
    %729 = vector.broadcast %cst_275 : f32 to vector<8x128xf32>
    %730 = arith.mulf %729, %728 : vector<8x128xf32>
    %731 = math.tanh %730 : vector<8x128xf32>
    %cst_276 = arith.constant 5.000000e-01 : f32
    %732 = vector.broadcast %cst_276 : f32 to vector<8x128xf32>
    %733 = arith.mulf %732, %731 : vector<8x128xf32>
    %cst_277 = arith.constant 5.000000e-01 : f32
    %734 = vector.broadcast %cst_277 : f32 to vector<8x128xf32>
    %735 = arith.addf %733, %734 : vector<8x128xf32>
    %736 = vector.extract_strided_slice %719 {offsets = [0, 256], sizes = [8, 128], strides = [1, 1]} : vector<8x512xf32> to vector<8x128xf32>
    %737 = math.tanh %736 : vector<8x128xf32>
    %738 = vector.extract_strided_slice %719 {offsets = [0, 384], sizes = [8, 128], strides = [1, 1]} : vector<8x512xf32> to vector<8x128xf32>
    %cst_278 = arith.constant 5.000000e-01 : f32
    %739 = vector.broadcast %cst_278 : f32 to vector<8x128xf32>
    %740 = arith.mulf %739, %738 : vector<8x128xf32>
    %741 = math.tanh %740 : vector<8x128xf32>
    %cst_279 = arith.constant 5.000000e-01 : f32
    %742 = vector.broadcast %cst_279 : f32 to vector<8x128xf32>
    %743 = arith.mulf %742, %741 : vector<8x128xf32>
    %cst_280 = arith.constant 5.000000e-01 : f32
    %744 = vector.broadcast %cst_280 : f32 to vector<8x128xf32>
    %745 = arith.addf %743, %744 : vector<8x128xf32>
    %746 = arith.mulf %710, %727 : vector<8x128xf32>
    %747 = arith.mulf %735, %737 : vector<8x128xf32>
    %748 = arith.addf %746, %747 : vector<8x128xf32>
    %749 = math.tanh %748 : vector<8x128xf32>
    %750 = arith.mulf %745, %749 : vector<8x128xf32>
    %c20_i32 = arith.constant 20 : i32
    %c8_i32_281 = arith.constant 8 : i32
    %751 = arith.muli %c20_i32, %c8_i32_281 : i32
    %752 = tpu.assume_multiple %751, 8 : i32
    %753 = arith.index_cast %752 : i32 to index
    %c0_282 = arith.constant 0 : index
    %754 = vector.load %arg5[%753, %c0_282] : memref<224x512xf32, #tpu.memory_space<vmem>>, vector<8x512xf32>
    %c0_283 = arith.constant 0 : index
    %c0_284 = arith.constant 0 : index
    %755 = vector.load %arg2[%c0_283, %c0_284] : memref<128x512xf32, #tpu.memory_space<vmem>>, vector<128x512xf32>
    %cst_285 = arith.constant dense<0.000000e+00> : vector<8x512xf32>
    %756 = tpu.matmul %750, %755, %cst_285 {dimension_numbers = #tpu.dot_dimension_numbers<[1], [0], [0], [1], [0, 0, 1, 1], [], []>} : vector<8x128xf32>, vector<128x512xf32>, vector<8x512xf32> -> vector<8x512xf32>
    %757 = arith.addf %754, %756 : vector<8x512xf32>
    %758 = vector.extract_strided_slice %757 {offsets = [0, 0], sizes = [8, 128], strides = [1, 1]} : vector<8x512xf32> to vector<8x128xf32>
    %cst_286 = arith.constant 5.000000e-01 : f32
    %759 = vector.broadcast %cst_286 : f32 to vector<8x128xf32>
    %760 = arith.mulf %759, %758 : vector<8x128xf32>
    %761 = math.tanh %760 : vector<8x128xf32>
    %cst_287 = arith.constant 5.000000e-01 : f32
    %762 = vector.broadcast %cst_287 : f32 to vector<8x128xf32>
    %763 = arith.mulf %762, %761 : vector<8x128xf32>
    %cst_288 = arith.constant 5.000000e-01 : f32
    %764 = vector.broadcast %cst_288 : f32 to vector<8x128xf32>
    %765 = arith.addf %763, %764 : vector<8x128xf32>
    %766 = vector.extract_strided_slice %757 {offsets = [0, 128], sizes = [8, 128], strides = [1, 1]} : vector<8x512xf32> to vector<8x128xf32>
    %cst_289 = arith.constant 5.000000e-01 : f32
    %767 = vector.broadcast %cst_289 : f32 to vector<8x128xf32>
    %768 = arith.mulf %767, %766 : vector<8x128xf32>
    %769 = math.tanh %768 : vector<8x128xf32>
    %cst_290 = arith.constant 5.000000e-01 : f32
    %770 = vector.broadcast %cst_290 : f32 to vector<8x128xf32>
    %771 = arith.mulf %770, %769 : vector<8x128xf32>
    %cst_291 = arith.constant 5.000000e-01 : f32
    %772 = vector.broadcast %cst_291 : f32 to vector<8x128xf32>
    %773 = arith.addf %771, %772 : vector<8x128xf32>
    %774 = vector.extract_strided_slice %757 {offsets = [0, 256], sizes = [8, 128], strides = [1, 1]} : vector<8x512xf32> to vector<8x128xf32>
    %775 = math.tanh %774 : vector<8x128xf32>
    %776 = vector.extract_strided_slice %757 {offsets = [0, 384], sizes = [8, 128], strides = [1, 1]} : vector<8x512xf32> to vector<8x128xf32>
    %cst_292 = arith.constant 5.000000e-01 : f32
    %777 = vector.broadcast %cst_292 : f32 to vector<8x128xf32>
    %778 = arith.mulf %777, %776 : vector<8x128xf32>
    %779 = math.tanh %778 : vector<8x128xf32>
    %cst_293 = arith.constant 5.000000e-01 : f32
    %780 = vector.broadcast %cst_293 : f32 to vector<8x128xf32>
    %781 = arith.mulf %780, %779 : vector<8x128xf32>
    %cst_294 = arith.constant 5.000000e-01 : f32
    %782 = vector.broadcast %cst_294 : f32 to vector<8x128xf32>
    %783 = arith.addf %781, %782 : vector<8x128xf32>
    %784 = arith.mulf %748, %765 : vector<8x128xf32>
    %785 = arith.mulf %773, %775 : vector<8x128xf32>
    %786 = arith.addf %784, %785 : vector<8x128xf32>
    %787 = math.tanh %786 : vector<8x128xf32>
    %788 = arith.mulf %783, %787 : vector<8x128xf32>
    %c21_i32 = arith.constant 21 : i32
    %c8_i32_295 = arith.constant 8 : i32
    %789 = arith.muli %c21_i32, %c8_i32_295 : i32
    %790 = tpu.assume_multiple %789, 8 : i32
    %791 = arith.index_cast %790 : i32 to index
    %c0_296 = arith.constant 0 : index
    %792 = vector.load %arg5[%791, %c0_296] : memref<224x512xf32, #tpu.memory_space<vmem>>, vector<8x512xf32>
    %c0_297 = arith.constant 0 : index
    %c0_298 = arith.constant 0 : index
    %793 = vector.load %arg2[%c0_297, %c0_298] : memref<128x512xf32, #tpu.memory_space<vmem>>, vector<128x512xf32>
    %cst_299 = arith.constant dense<0.000000e+00> : vector<8x512xf32>
    %794 = tpu.matmul %788, %793, %cst_299 {dimension_numbers = #tpu.dot_dimension_numbers<[1], [0], [0], [1], [0, 0, 1, 1], [], []>} : vector<8x128xf32>, vector<128x512xf32>, vector<8x512xf32> -> vector<8x512xf32>
    %795 = arith.addf %792, %794 : vector<8x512xf32>
    %796 = vector.extract_strided_slice %795 {offsets = [0, 0], sizes = [8, 128], strides = [1, 1]} : vector<8x512xf32> to vector<8x128xf32>
    %cst_300 = arith.constant 5.000000e-01 : f32
    %797 = vector.broadcast %cst_300 : f32 to vector<8x128xf32>
    %798 = arith.mulf %797, %796 : vector<8x128xf32>
    %799 = math.tanh %798 : vector<8x128xf32>
    %cst_301 = arith.constant 5.000000e-01 : f32
    %800 = vector.broadcast %cst_301 : f32 to vector<8x128xf32>
    %801 = arith.mulf %800, %799 : vector<8x128xf32>
    %cst_302 = arith.constant 5.000000e-01 : f32
    %802 = vector.broadcast %cst_302 : f32 to vector<8x128xf32>
    %803 = arith.addf %801, %802 : vector<8x128xf32>
    %804 = vector.extract_strided_slice %795 {offsets = [0, 128], sizes = [8, 128], strides = [1, 1]} : vector<8x512xf32> to vector<8x128xf32>
    %cst_303 = arith.constant 5.000000e-01 : f32
    %805 = vector.broadcast %cst_303 : f32 to vector<8x128xf32>
    %806 = arith.mulf %805, %804 : vector<8x128xf32>
    %807 = math.tanh %806 : vector<8x128xf32>
    %cst_304 = arith.constant 5.000000e-01 : f32
    %808 = vector.broadcast %cst_304 : f32 to vector<8x128xf32>
    %809 = arith.mulf %808, %807 : vector<8x128xf32>
    %cst_305 = arith.constant 5.000000e-01 : f32
    %810 = vector.broadcast %cst_305 : f32 to vector<8x128xf32>
    %811 = arith.addf %809, %810 : vector<8x128xf32>
    %812 = vector.extract_strided_slice %795 {offsets = [0, 256], sizes = [8, 128], strides = [1, 1]} : vector<8x512xf32> to vector<8x128xf32>
    %813 = math.tanh %812 : vector<8x128xf32>
    %814 = vector.extract_strided_slice %795 {offsets = [0, 384], sizes = [8, 128], strides = [1, 1]} : vector<8x512xf32> to vector<8x128xf32>
    %cst_306 = arith.constant 5.000000e-01 : f32
    %815 = vector.broadcast %cst_306 : f32 to vector<8x128xf32>
    %816 = arith.mulf %815, %814 : vector<8x128xf32>
    %817 = math.tanh %816 : vector<8x128xf32>
    %cst_307 = arith.constant 5.000000e-01 : f32
    %818 = vector.broadcast %cst_307 : f32 to vector<8x128xf32>
    %819 = arith.mulf %818, %817 : vector<8x128xf32>
    %cst_308 = arith.constant 5.000000e-01 : f32
    %820 = vector.broadcast %cst_308 : f32 to vector<8x128xf32>
    %821 = arith.addf %819, %820 : vector<8x128xf32>
    %822 = arith.mulf %786, %803 : vector<8x128xf32>
    %823 = arith.mulf %811, %813 : vector<8x128xf32>
    %824 = arith.addf %822, %823 : vector<8x128xf32>
    %825 = math.tanh %824 : vector<8x128xf32>
    %826 = arith.mulf %821, %825 : vector<8x128xf32>
    %c22_i32 = arith.constant 22 : i32
    %c8_i32_309 = arith.constant 8 : i32
    %827 = arith.muli %c22_i32, %c8_i32_309 : i32
    %828 = tpu.assume_multiple %827, 8 : i32
    %829 = arith.index_cast %828 : i32 to index
    %c0_310 = arith.constant 0 : index
    %830 = vector.load %arg5[%829, %c0_310] : memref<224x512xf32, #tpu.memory_space<vmem>>, vector<8x512xf32>
    %c0_311 = arith.constant 0 : index
    %c0_312 = arith.constant 0 : index
    %831 = vector.load %arg2[%c0_311, %c0_312] : memref<128x512xf32, #tpu.memory_space<vmem>>, vector<128x512xf32>
    %cst_313 = arith.constant dense<0.000000e+00> : vector<8x512xf32>
    %832 = tpu.matmul %826, %831, %cst_313 {dimension_numbers = #tpu.dot_dimension_numbers<[1], [0], [0], [1], [0, 0, 1, 1], [], []>} : vector<8x128xf32>, vector<128x512xf32>, vector<8x512xf32> -> vector<8x512xf32>
    %833 = arith.addf %830, %832 : vector<8x512xf32>
    %834 = vector.extract_strided_slice %833 {offsets = [0, 0], sizes = [8, 128], strides = [1, 1]} : vector<8x512xf32> to vector<8x128xf32>
    %cst_314 = arith.constant 5.000000e-01 : f32
    %835 = vector.broadcast %cst_314 : f32 to vector<8x128xf32>
    %836 = arith.mulf %835, %834 : vector<8x128xf32>
    %837 = math.tanh %836 : vector<8x128xf32>
    %cst_315 = arith.constant 5.000000e-01 : f32
    %838 = vector.broadcast %cst_315 : f32 to vector<8x128xf32>
    %839 = arith.mulf %838, %837 : vector<8x128xf32>
    %cst_316 = arith.constant 5.000000e-01 : f32
    %840 = vector.broadcast %cst_316 : f32 to vector<8x128xf32>
    %841 = arith.addf %839, %840 : vector<8x128xf32>
    %842 = vector.extract_strided_slice %833 {offsets = [0, 128], sizes = [8, 128], strides = [1, 1]} : vector<8x512xf32> to vector<8x128xf32>
    %cst_317 = arith.constant 5.000000e-01 : f32
    %843 = vector.broadcast %cst_317 : f32 to vector<8x128xf32>
    %844 = arith.mulf %843, %842 : vector<8x128xf32>
    %845 = math.tanh %844 : vector<8x128xf32>
    %cst_318 = arith.constant 5.000000e-01 : f32
    %846 = vector.broadcast %cst_318 : f32 to vector<8x128xf32>
    %847 = arith.mulf %846, %845 : vector<8x128xf32>
    %cst_319 = arith.constant 5.000000e-01 : f32
    %848 = vector.broadcast %cst_319 : f32 to vector<8x128xf32>
    %849 = arith.addf %847, %848 : vector<8x128xf32>
    %850 = vector.extract_strided_slice %833 {offsets = [0, 256], sizes = [8, 128], strides = [1, 1]} : vector<8x512xf32> to vector<8x128xf32>
    %851 = math.tanh %850 : vector<8x128xf32>
    %852 = vector.extract_strided_slice %833 {offsets = [0, 384], sizes = [8, 128], strides = [1, 1]} : vector<8x512xf32> to vector<8x128xf32>
    %cst_320 = arith.constant 5.000000e-01 : f32
    %853 = vector.broadcast %cst_320 : f32 to vector<8x128xf32>
    %854 = arith.mulf %853, %852 : vector<8x128xf32>
    %855 = math.tanh %854 : vector<8x128xf32>
    %cst_321 = arith.constant 5.000000e-01 : f32
    %856 = vector.broadcast %cst_321 : f32 to vector<8x128xf32>
    %857 = arith.mulf %856, %855 : vector<8x128xf32>
    %cst_322 = arith.constant 5.000000e-01 : f32
    %858 = vector.broadcast %cst_322 : f32 to vector<8x128xf32>
    %859 = arith.addf %857, %858 : vector<8x128xf32>
    %860 = arith.mulf %824, %841 : vector<8x128xf32>
    %861 = arith.mulf %849, %851 : vector<8x128xf32>
    %862 = arith.addf %860, %861 : vector<8x128xf32>
    %863 = math.tanh %862 : vector<8x128xf32>
    %864 = arith.mulf %859, %863 : vector<8x128xf32>
    %c23_i32 = arith.constant 23 : i32
    %c8_i32_323 = arith.constant 8 : i32
    %865 = arith.muli %c23_i32, %c8_i32_323 : i32
    %866 = tpu.assume_multiple %865, 8 : i32
    %867 = arith.index_cast %866 : i32 to index
    %c0_324 = arith.constant 0 : index
    %868 = vector.load %arg5[%867, %c0_324] : memref<224x512xf32, #tpu.memory_space<vmem>>, vector<8x512xf32>
    %c0_325 = arith.constant 0 : index
    %c0_326 = arith.constant 0 : index
    %869 = vector.load %arg2[%c0_325, %c0_326] : memref<128x512xf32, #tpu.memory_space<vmem>>, vector<128x512xf32>
    %cst_327 = arith.constant dense<0.000000e+00> : vector<8x512xf32>
    %870 = tpu.matmul %864, %869, %cst_327 {dimension_numbers = #tpu.dot_dimension_numbers<[1], [0], [0], [1], [0, 0, 1, 1], [], []>} : vector<8x128xf32>, vector<128x512xf32>, vector<8x512xf32> -> vector<8x512xf32>
    %871 = arith.addf %868, %870 : vector<8x512xf32>
    %872 = vector.extract_strided_slice %871 {offsets = [0, 0], sizes = [8, 128], strides = [1, 1]} : vector<8x512xf32> to vector<8x128xf32>
    %cst_328 = arith.constant 5.000000e-01 : f32
    %873 = vector.broadcast %cst_328 : f32 to vector<8x128xf32>
    %874 = arith.mulf %873, %872 : vector<8x128xf32>
    %875 = math.tanh %874 : vector<8x128xf32>
    %cst_329 = arith.constant 5.000000e-01 : f32
    %876 = vector.broadcast %cst_329 : f32 to vector<8x128xf32>
    %877 = arith.mulf %876, %875 : vector<8x128xf32>
    %cst_330 = arith.constant 5.000000e-01 : f32
    %878 = vector.broadcast %cst_330 : f32 to vector<8x128xf32>
    %879 = arith.addf %877, %878 : vector<8x128xf32>
    %880 = vector.extract_strided_slice %871 {offsets = [0, 128], sizes = [8, 128], strides = [1, 1]} : vector<8x512xf32> to vector<8x128xf32>
    %cst_331 = arith.constant 5.000000e-01 : f32
    %881 = vector.broadcast %cst_331 : f32 to vector<8x128xf32>
    %882 = arith.mulf %881, %880 : vector<8x128xf32>
    %883 = math.tanh %882 : vector<8x128xf32>
    %cst_332 = arith.constant 5.000000e-01 : f32
    %884 = vector.broadcast %cst_332 : f32 to vector<8x128xf32>
    %885 = arith.mulf %884, %883 : vector<8x128xf32>
    %cst_333 = arith.constant 5.000000e-01 : f32
    %886 = vector.broadcast %cst_333 : f32 to vector<8x128xf32>
    %887 = arith.addf %885, %886 : vector<8x128xf32>
    %888 = vector.extract_strided_slice %871 {offsets = [0, 256], sizes = [8, 128], strides = [1, 1]} : vector<8x512xf32> to vector<8x128xf32>
    %889 = math.tanh %888 : vector<8x128xf32>
    %890 = vector.extract_strided_slice %871 {offsets = [0, 384], sizes = [8, 128], strides = [1, 1]} : vector<8x512xf32> to vector<8x128xf32>
    %cst_334 = arith.constant 5.000000e-01 : f32
    %891 = vector.broadcast %cst_334 : f32 to vector<8x128xf32>
    %892 = arith.mulf %891, %890 : vector<8x128xf32>
    %893 = math.tanh %892 : vector<8x128xf32>
    %cst_335 = arith.constant 5.000000e-01 : f32
    %894 = vector.broadcast %cst_335 : f32 to vector<8x128xf32>
    %895 = arith.mulf %894, %893 : vector<8x128xf32>
    %cst_336 = arith.constant 5.000000e-01 : f32
    %896 = vector.broadcast %cst_336 : f32 to vector<8x128xf32>
    %897 = arith.addf %895, %896 : vector<8x128xf32>
    %898 = arith.mulf %862, %879 : vector<8x128xf32>
    %899 = arith.mulf %887, %889 : vector<8x128xf32>
    %900 = arith.addf %898, %899 : vector<8x128xf32>
    %901 = math.tanh %900 : vector<8x128xf32>
    %902 = arith.mulf %897, %901 : vector<8x128xf32>
    %c24_i32 = arith.constant 24 : i32
    %c8_i32_337 = arith.constant 8 : i32
    %903 = arith.muli %c24_i32, %c8_i32_337 : i32
    %904 = tpu.assume_multiple %903, 8 : i32
    %905 = arith.index_cast %904 : i32 to index
    %c0_338 = arith.constant 0 : index
    %906 = vector.load %arg5[%905, %c0_338] : memref<224x512xf32, #tpu.memory_space<vmem>>, vector<8x512xf32>
    %c0_339 = arith.constant 0 : index
    %c0_340 = arith.constant 0 : index
    %907 = vector.load %arg2[%c0_339, %c0_340] : memref<128x512xf32, #tpu.memory_space<vmem>>, vector<128x512xf32>
    %cst_341 = arith.constant dense<0.000000e+00> : vector<8x512xf32>
    %908 = tpu.matmul %902, %907, %cst_341 {dimension_numbers = #tpu.dot_dimension_numbers<[1], [0], [0], [1], [0, 0, 1, 1], [], []>} : vector<8x128xf32>, vector<128x512xf32>, vector<8x512xf32> -> vector<8x512xf32>
    %909 = arith.addf %906, %908 : vector<8x512xf32>
    %910 = vector.extract_strided_slice %909 {offsets = [0, 0], sizes = [8, 128], strides = [1, 1]} : vector<8x512xf32> to vector<8x128xf32>
    %cst_342 = arith.constant 5.000000e-01 : f32
    %911 = vector.broadcast %cst_342 : f32 to vector<8x128xf32>
    %912 = arith.mulf %911, %910 : vector<8x128xf32>
    %913 = math.tanh %912 : vector<8x128xf32>
    %cst_343 = arith.constant 5.000000e-01 : f32
    %914 = vector.broadcast %cst_343 : f32 to vector<8x128xf32>
    %915 = arith.mulf %914, %913 : vector<8x128xf32>
    %cst_344 = arith.constant 5.000000e-01 : f32
    %916 = vector.broadcast %cst_344 : f32 to vector<8x128xf32>
    %917 = arith.addf %915, %916 : vector<8x128xf32>
    %918 = vector.extract_strided_slice %909 {offsets = [0, 128], sizes = [8, 128], strides = [1, 1]} : vector<8x512xf32> to vector<8x128xf32>
    %cst_345 = arith.constant 5.000000e-01 : f32
    %919 = vector.broadcast %cst_345 : f32 to vector<8x128xf32>
    %920 = arith.mulf %919, %918 : vector<8x128xf32>
    %921 = math.tanh %920 : vector<8x128xf32>
    %cst_346 = arith.constant 5.000000e-01 : f32
    %922 = vector.broadcast %cst_346 : f32 to vector<8x128xf32>
    %923 = arith.mulf %922, %921 : vector<8x128xf32>
    %cst_347 = arith.constant 5.000000e-01 : f32
    %924 = vector.broadcast %cst_347 : f32 to vector<8x128xf32>
    %925 = arith.addf %923, %924 : vector<8x128xf32>
    %926 = vector.extract_strided_slice %909 {offsets = [0, 256], sizes = [8, 128], strides = [1, 1]} : vector<8x512xf32> to vector<8x128xf32>
    %927 = math.tanh %926 : vector<8x128xf32>
    %928 = vector.extract_strided_slice %909 {offsets = [0, 384], sizes = [8, 128], strides = [1, 1]} : vector<8x512xf32> to vector<8x128xf32>
    %cst_348 = arith.constant 5.000000e-01 : f32
    %929 = vector.broadcast %cst_348 : f32 to vector<8x128xf32>
    %930 = arith.mulf %929, %928 : vector<8x128xf32>
    %931 = math.tanh %930 : vector<8x128xf32>
    %cst_349 = arith.constant 5.000000e-01 : f32
    %932 = vector.broadcast %cst_349 : f32 to vector<8x128xf32>
    %933 = arith.mulf %932, %931 : vector<8x128xf32>
    %cst_350 = arith.constant 5.000000e-01 : f32
    %934 = vector.broadcast %cst_350 : f32 to vector<8x128xf32>
    %935 = arith.addf %933, %934 : vector<8x128xf32>
    %936 = arith.mulf %900, %917 : vector<8x128xf32>
    %937 = arith.mulf %925, %927 : vector<8x128xf32>
    %938 = arith.addf %936, %937 : vector<8x128xf32>
    %939 = math.tanh %938 : vector<8x128xf32>
    %940 = arith.mulf %935, %939 : vector<8x128xf32>
    %c25_i32 = arith.constant 25 : i32
    %c8_i32_351 = arith.constant 8 : i32
    %941 = arith.muli %c25_i32, %c8_i32_351 : i32
    %942 = tpu.assume_multiple %941, 8 : i32
    %943 = arith.index_cast %942 : i32 to index
    %c0_352 = arith.constant 0 : index
    %944 = vector.load %arg5[%943, %c0_352] : memref<224x512xf32, #tpu.memory_space<vmem>>, vector<8x512xf32>
    %c0_353 = arith.constant 0 : index
    %c0_354 = arith.constant 0 : index
    %945 = vector.load %arg2[%c0_353, %c0_354] : memref<128x512xf32, #tpu.memory_space<vmem>>, vector<128x512xf32>
    %cst_355 = arith.constant dense<0.000000e+00> : vector<8x512xf32>
    %946 = tpu.matmul %940, %945, %cst_355 {dimension_numbers = #tpu.dot_dimension_numbers<[1], [0], [0], [1], [0, 0, 1, 1], [], []>} : vector<8x128xf32>, vector<128x512xf32>, vector<8x512xf32> -> vector<8x512xf32>
    %947 = arith.addf %944, %946 : vector<8x512xf32>
    %948 = vector.extract_strided_slice %947 {offsets = [0, 0], sizes = [8, 128], strides = [1, 1]} : vector<8x512xf32> to vector<8x128xf32>
    %cst_356 = arith.constant 5.000000e-01 : f32
    %949 = vector.broadcast %cst_356 : f32 to vector<8x128xf32>
    %950 = arith.mulf %949, %948 : vector<8x128xf32>
    %951 = math.tanh %950 : vector<8x128xf32>
    %cst_357 = arith.constant 5.000000e-01 : f32
    %952 = vector.broadcast %cst_357 : f32 to vector<8x128xf32>
    %953 = arith.mulf %952, %951 : vector<8x128xf32>
    %cst_358 = arith.constant 5.000000e-01 : f32
    %954 = vector.broadcast %cst_358 : f32 to vector<8x128xf32>
    %955 = arith.addf %953, %954 : vector<8x128xf32>
    %956 = vector.extract_strided_slice %947 {offsets = [0, 128], sizes = [8, 128], strides = [1, 1]} : vector<8x512xf32> to vector<8x128xf32>
    %cst_359 = arith.constant 5.000000e-01 : f32
    %957 = vector.broadcast %cst_359 : f32 to vector<8x128xf32>
    %958 = arith.mulf %957, %956 : vector<8x128xf32>
    %959 = math.tanh %958 : vector<8x128xf32>
    %cst_360 = arith.constant 5.000000e-01 : f32
    %960 = vector.broadcast %cst_360 : f32 to vector<8x128xf32>
    %961 = arith.mulf %960, %959 : vector<8x128xf32>
    %cst_361 = arith.constant 5.000000e-01 : f32
    %962 = vector.broadcast %cst_361 : f32 to vector<8x128xf32>
    %963 = arith.addf %961, %962 : vector<8x128xf32>
    %964 = vector.extract_strided_slice %947 {offsets = [0, 256], sizes = [8, 128], strides = [1, 1]} : vector<8x512xf32> to vector<8x128xf32>
    %965 = math.tanh %964 : vector<8x128xf32>
    %966 = vector.extract_strided_slice %947 {offsets = [0, 384], sizes = [8, 128], strides = [1, 1]} : vector<8x512xf32> to vector<8x128xf32>
    %cst_362 = arith.constant 5.000000e-01 : f32
    %967 = vector.broadcast %cst_362 : f32 to vector<8x128xf32>
    %968 = arith.mulf %967, %966 : vector<8x128xf32>
    %969 = math.tanh %968 : vector<8x128xf32>
    %cst_363 = arith.constant 5.000000e-01 : f32
    %970 = vector.broadcast %cst_363 : f32 to vector<8x128xf32>
    %971 = arith.mulf %970, %969 : vector<8x128xf32>
    %cst_364 = arith.constant 5.000000e-01 : f32
    %972 = vector.broadcast %cst_364 : f32 to vector<8x128xf32>
    %973 = arith.addf %971, %972 : vector<8x128xf32>
    %974 = arith.mulf %938, %955 : vector<8x128xf32>
    %975 = arith.mulf %963, %965 : vector<8x128xf32>
    %976 = arith.addf %974, %975 : vector<8x128xf32>
    %977 = math.tanh %976 : vector<8x128xf32>
    %978 = arith.mulf %973, %977 : vector<8x128xf32>
    %c26_i32 = arith.constant 26 : i32
    %c8_i32_365 = arith.constant 8 : i32
    %979 = arith.muli %c26_i32, %c8_i32_365 : i32
    %980 = tpu.assume_multiple %979, 8 : i32
    %981 = arith.index_cast %980 : i32 to index
    %c0_366 = arith.constant 0 : index
    %982 = vector.load %arg5[%981, %c0_366] : memref<224x512xf32, #tpu.memory_space<vmem>>, vector<8x512xf32>
    %c0_367 = arith.constant 0 : index
    %c0_368 = arith.constant 0 : index
    %983 = vector.load %arg2[%c0_367, %c0_368] : memref<128x512xf32, #tpu.memory_space<vmem>>, vector<128x512xf32>
    %cst_369 = arith.constant dense<0.000000e+00> : vector<8x512xf32>
    %984 = tpu.matmul %978, %983, %cst_369 {dimension_numbers = #tpu.dot_dimension_numbers<[1], [0], [0], [1], [0, 0, 1, 1], [], []>} : vector<8x128xf32>, vector<128x512xf32>, vector<8x512xf32> -> vector<8x512xf32>
    %985 = arith.addf %982, %984 : vector<8x512xf32>
    %986 = vector.extract_strided_slice %985 {offsets = [0, 0], sizes = [8, 128], strides = [1, 1]} : vector<8x512xf32> to vector<8x128xf32>
    %cst_370 = arith.constant 5.000000e-01 : f32
    %987 = vector.broadcast %cst_370 : f32 to vector<8x128xf32>
    %988 = arith.mulf %987, %986 : vector<8x128xf32>
    %989 = math.tanh %988 : vector<8x128xf32>
    %cst_371 = arith.constant 5.000000e-01 : f32
    %990 = vector.broadcast %cst_371 : f32 to vector<8x128xf32>
    %991 = arith.mulf %990, %989 : vector<8x128xf32>
    %cst_372 = arith.constant 5.000000e-01 : f32
    %992 = vector.broadcast %cst_372 : f32 to vector<8x128xf32>
    %993 = arith.addf %991, %992 : vector<8x128xf32>
    %994 = vector.extract_strided_slice %985 {offsets = [0, 128], sizes = [8, 128], strides = [1, 1]} : vector<8x512xf32> to vector<8x128xf32>
    %cst_373 = arith.constant 5.000000e-01 : f32
    %995 = vector.broadcast %cst_373 : f32 to vector<8x128xf32>
    %996 = arith.mulf %995, %994 : vector<8x128xf32>
    %997 = math.tanh %996 : vector<8x128xf32>
    %cst_374 = arith.constant 5.000000e-01 : f32
    %998 = vector.broadcast %cst_374 : f32 to vector<8x128xf32>
    %999 = arith.mulf %998, %997 : vector<8x128xf32>
    %cst_375 = arith.constant 5.000000e-01 : f32
    %1000 = vector.broadcast %cst_375 : f32 to vector<8x128xf32>
    %1001 = arith.addf %999, %1000 : vector<8x128xf32>
    %1002 = vector.extract_strided_slice %985 {offsets = [0, 256], sizes = [8, 128], strides = [1, 1]} : vector<8x512xf32> to vector<8x128xf32>
    %1003 = math.tanh %1002 : vector<8x128xf32>
    %1004 = vector.extract_strided_slice %985 {offsets = [0, 384], sizes = [8, 128], strides = [1, 1]} : vector<8x512xf32> to vector<8x128xf32>
    %cst_376 = arith.constant 5.000000e-01 : f32
    %1005 = vector.broadcast %cst_376 : f32 to vector<8x128xf32>
    %1006 = arith.mulf %1005, %1004 : vector<8x128xf32>
    %1007 = math.tanh %1006 : vector<8x128xf32>
    %cst_377 = arith.constant 5.000000e-01 : f32
    %1008 = vector.broadcast %cst_377 : f32 to vector<8x128xf32>
    %1009 = arith.mulf %1008, %1007 : vector<8x128xf32>
    %cst_378 = arith.constant 5.000000e-01 : f32
    %1010 = vector.broadcast %cst_378 : f32 to vector<8x128xf32>
    %1011 = arith.addf %1009, %1010 : vector<8x128xf32>
    %1012 = arith.mulf %976, %993 : vector<8x128xf32>
    %1013 = arith.mulf %1001, %1003 : vector<8x128xf32>
    %1014 = arith.addf %1012, %1013 : vector<8x128xf32>
    %1015 = math.tanh %1014 : vector<8x128xf32>
    %1016 = arith.mulf %1011, %1015 : vector<8x128xf32>
    %c27_i32 = arith.constant 27 : i32
    %c8_i32_379 = arith.constant 8 : i32
    %1017 = arith.muli %c27_i32, %c8_i32_379 : i32
    %1018 = tpu.assume_multiple %1017, 8 : i32
    %1019 = arith.index_cast %1018 : i32 to index
    %c0_380 = arith.constant 0 : index
    %1020 = vector.load %arg5[%1019, %c0_380] : memref<224x512xf32, #tpu.memory_space<vmem>>, vector<8x512xf32>
    %c0_381 = arith.constant 0 : index
    %c0_382 = arith.constant 0 : index
    %1021 = vector.load %arg2[%c0_381, %c0_382] : memref<128x512xf32, #tpu.memory_space<vmem>>, vector<128x512xf32>
    %cst_383 = arith.constant dense<0.000000e+00> : vector<8x512xf32>
    %1022 = tpu.matmul %1016, %1021, %cst_383 {dimension_numbers = #tpu.dot_dimension_numbers<[1], [0], [0], [1], [0, 0, 1, 1], [], []>} : vector<8x128xf32>, vector<128x512xf32>, vector<8x512xf32> -> vector<8x512xf32>
    %1023 = arith.addf %1020, %1022 : vector<8x512xf32>
    %1024 = vector.extract_strided_slice %1023 {offsets = [0, 0], sizes = [8, 128], strides = [1, 1]} : vector<8x512xf32> to vector<8x128xf32>
    %cst_384 = arith.constant 5.000000e-01 : f32
    %1025 = vector.broadcast %cst_384 : f32 to vector<8x128xf32>
    %1026 = arith.mulf %1025, %1024 : vector<8x128xf32>
    %1027 = math.tanh %1026 : vector<8x128xf32>
    %cst_385 = arith.constant 5.000000e-01 : f32
    %1028 = vector.broadcast %cst_385 : f32 to vector<8x128xf32>
    %1029 = arith.mulf %1028, %1027 : vector<8x128xf32>
    %cst_386 = arith.constant 5.000000e-01 : f32
    %1030 = vector.broadcast %cst_386 : f32 to vector<8x128xf32>
    %1031 = arith.addf %1029, %1030 : vector<8x128xf32>
    %1032 = vector.extract_strided_slice %1023 {offsets = [0, 128], sizes = [8, 128], strides = [1, 1]} : vector<8x512xf32> to vector<8x128xf32>
    %cst_387 = arith.constant 5.000000e-01 : f32
    %1033 = vector.broadcast %cst_387 : f32 to vector<8x128xf32>
    %1034 = arith.mulf %1033, %1032 : vector<8x128xf32>
    %1035 = math.tanh %1034 : vector<8x128xf32>
    %cst_388 = arith.constant 5.000000e-01 : f32
    %1036 = vector.broadcast %cst_388 : f32 to vector<8x128xf32>
    %1037 = arith.mulf %1036, %1035 : vector<8x128xf32>
    %cst_389 = arith.constant 5.000000e-01 : f32
    %1038 = vector.broadcast %cst_389 : f32 to vector<8x128xf32>
    %1039 = arith.addf %1037, %1038 : vector<8x128xf32>
    %1040 = vector.extract_strided_slice %1023 {offsets = [0, 256], sizes = [8, 128], strides = [1, 1]} : vector<8x512xf32> to vector<8x128xf32>
    %1041 = math.tanh %1040 : vector<8x128xf32>
    %1042 = vector.extract_strided_slice %1023 {offsets = [0, 384], sizes = [8, 128], strides = [1, 1]} : vector<8x512xf32> to vector<8x128xf32>
    %cst_390 = arith.constant 5.000000e-01 : f32
    %1043 = vector.broadcast %cst_390 : f32 to vector<8x128xf32>
    %1044 = arith.mulf %1043, %1042 : vector<8x128xf32>
    %1045 = math.tanh %1044 : vector<8x128xf32>
    %cst_391 = arith.constant 5.000000e-01 : f32
    %1046 = vector.broadcast %cst_391 : f32 to vector<8x128xf32>
    %1047 = arith.mulf %1046, %1045 : vector<8x128xf32>
    %cst_392 = arith.constant 5.000000e-01 : f32
    %1048 = vector.broadcast %cst_392 : f32 to vector<8x128xf32>
    %1049 = arith.addf %1047, %1048 : vector<8x128xf32>
    %1050 = arith.mulf %1014, %1031 : vector<8x128xf32>
    %1051 = arith.mulf %1039, %1041 : vector<8x128xf32>
    %1052 = arith.addf %1050, %1051 : vector<8x128xf32>
    %1053 = math.tanh %1052 : vector<8x128xf32>
    %1054 = arith.mulf %1049, %1053 : vector<8x128xf32>
    %c27_i32_393 = arith.constant 27 : i32
    %c0_394 = arith.constant 0 : index
    %c0_395 = arith.constant 0 : index
    %1055 = vector.load %arg4[%c0_394, %c0_395] : memref<8x128xf32, #tpu.memory_space<vmem>>, vector<8x128xf32>
    tpu.vector_store %arg4[%c0_394, %c0_395], %1054 {strides = array<i32>} : memref<8x128xf32, #tpu.memory_space<vmem>>, vector<8x128xf32>,
    return
  }
}

</mosaic_0001>

<llo_original>
// kernel: lstm_forward.1
$region0: #{lstm_forward.1}
  #allocation0 [shape = 'u32[]', space=smem, size = 0x4, offset = 0x4, fixed_abs, tag = 'smem constant byte address 0x4 - core index']
  #allocation1 [shape = 'u32[144,128]{1,0:T(1,128)}', space=vmem, size = 0x12000, scoped, tag = 'internal scratch']
  #allocation2 [shape = 'f32[224,512]{1,0:T(8,128)}', space=vmem, size = 0x70000, scoped, tag = 'scratch operand']
  %s0 = inlined_call_operand.vmem [shape: f32[224,28], index: 0, kind: input, shape index: {}]
  %s1 = inlined_call_operand.vmem [shape: f32[28,512], index: 1, kind: input, shape index: {}]
  %s2 = inlined_call_operand.hbm [shape: f32[128,512], index: 2, kind: input, shape index: {}]
  %s3 = inlined_call_operand.vmem [shape: f32[1,512], index: 3, kind: input, shape index: {}]
  %s4 = inlined_call_operand.vmem [shape: f32[8,128], index: 4, kind: output, shape index: {}]
  %s5 = sld [smem:[#allocation0]]
  $region30: #{lstm_forward.1} parent=0
    _
  %s7 = ssub.s32 1, %s5
  %s8 = scalar_select 0, %s7, %s5
  $region1: #{lstm_forward.1} parent=0
    #allocation3 [shape = 'u8[262144]{0}', space=vmem, size = 0x40000, scoped, tag = 'input window, operand 2, single buffered']
    #allocation4 [shape = 's32[1]{0}', space=sflag, size = 0x4, scoped, tag = 'scoped memory for lstm_forward.1']
    %9 = vsyncpa [#allocation4], 0
    // Predicated region
    $region2: #{lstm_forward.1} parent=1 // pred_check
      _
    $region3: #{lstm_forward.1} parent=1 // pred_check_branch
      %11 = sbr.rel (0) target = $region5
    $region4: #{lstm_forward.1} parent=1 // pred_region
      _
    $region5: #{lstm_forward.1} parent=1 // pred_fallthru
      _
    // Predicated region
    $region6: #{lstm_forward.1} parent=1 // pred_check
      _
    $region7: #{lstm_forward.1} parent=1 // pred_check_branch
      %13 = sbr.rel (0) target = $region9
    $region8: #{lstm_forward.1} parent=1 // pred_region
      _
    $region9: #{lstm_forward.1} parent=1 // pred_fallthru
      _
    // Predicated region
    $region10: #{lstm_forward.1} parent=1 // pred_check
      _
    $region11: #{lstm_forward.1} parent=1 // pred_check_branch
      %15 = sbr.rel (0) target = $region13
    $region12: #{lstm_forward.1} parent=1 // pred_region
      %s17 = ssub.s32 8192, 8192
      %18 = vsyncadd [#allocation4], %s17
      %s19 = sshll.u32 [#allocation3], 4
      %s20 = int_to_ptr.vmem [resolvable:$true] %s19
      %25 = dma.hbm_to_vmem [thread:$0]  %s2, 8192, %s20, [#allocation4], 512, 512, 32
    $region13: #{lstm_forward.1} parent=1 // pred_fallthru
      _
    // Predicated region
    $region14: #{lstm_forward.1} parent=1 // pred_check
      _
    $region15: #{lstm_forward.1} parent=1 // pred_check_branch
      %27 = sbr.rel (0) target = $region17
    $region16: #{lstm_forward.1} parent=1 // pred_region
      _
    $region17: #{lstm_forward.1} parent=1 // pred_fallthru
      _
    // Predicated region
    $region18: #{lstm_forward.1} parent=1 // pred_check
      _
    $region19: #{lstm_forward.1} parent=1 // pred_check_branch
      %29 = sbr.rel (0) target = $region21
    $region20: #{lstm_forward.1} parent=1 // pred_region
      %30 = dma.done [#allocation4], 8192
    $region21: #{lstm_forward.1} parent=1 // pred_fallthru
      _
    %v31 = vld [vmem:[%s0] sm:$0xff]
    %v32 = vld [vmem:[%s0 + $0x8] sm:$0xff]
    %v33 = vld [vmem:[%s0 + $0x10] sm:$0xff]
    %v34 = vld [vmem:[%s0 + $0x18] sm:$0xff]
    %v35 = vld [vmem:[%s0 + $0x20] sm:$0xff]
    %v36 = vld [vmem:[%s0 + $0x28] sm:$0xff]
    %v37 = vld [vmem:[%s0 + $0x30] sm:$0xff]
    %v38 = vld [vmem:[%s0 + $0x38] sm:$0xff]
    %v39 = vld [vmem:[%s0 + $0x40] sm:$0xff]
    %v40 = vld [vmem:[%s0 + $0x48] sm:$0xff]
    %v41 = vld [vmem:[%s0 + $0x50] sm:$0xff]
    %v42 = vld [vmem:[%s0 + $0x58] sm:$0xff]
    %v43 = vld [vmem:[%s0 + $0x60] sm:$0xff]
    %v44 = vld [vmem:[%s0 + $0x68] sm:$0xff]
    %v45 = vld [vmem:[%s0 + $0x70] sm:$0xff]
    %v46 = vld [vmem:[%s0 + $0x78] sm:$0xff]
    %v47 = vld [vmem:[%s0 + $0x80] sm:$0xff]
    %v48 = vld [vmem:[%s0 + $0x88] sm:$0xff]
    %v49 = vld [vmem:[%s0 + $0x90] sm:$0xff]
    %v50 = vld [vmem:[%s0 + $0x98] sm:$0xff]
    %v51 = vld [vmem:[%s0 + $0xa0] sm:$0xff]
    %v52 = vld [vmem:[%s0 + $0xa8] sm:$0xff]
    %v53 = vld [vmem:[%s0 + $0xb0] sm:$0xff]
    %v54 = vld [vmem:[%s0 + $0xb8] sm:$0xff]
    %v55 = vld [vmem:[%s0 + $0xc0] sm:$0xff]
    %v56 = vld [vmem:[%s0 + $0xc8] sm:$0xff]
    %v57 = vld [vmem:[%s0 + $0xd0] sm:$0xff]
    %v58 = vld [vmem:[%s0 + $0xd8] sm:$0xff]
    %v59 = vld [vmem:[%s1] sm:$0xff]
    %v60 = vld [vmem:[%s1 + $0x8] sm:$0xff]
    %v61 = vld [vmem:[%s1 + $0x10] sm:$0xff]
    %v62 = vld [vmem:[%s1 + $0x18] sm:$0xff]
    %v63 = vld [vmem:[%s1 + $0x20] sm:$0xff]
    %v64 = vld [vmem:[%s1 + $0x28] sm:$0xff]
    %v65 = vld [vmem:[%s1 + $0x30] sm:$0xff]
    %v66 = vld [vmem:[%s1 + $0x38] sm:$0xff]
    %v67 = vld [vmem:[%s1 + $0x40] sm:$0xff]
    %v68 = vld [vmem:[%s1 + $0x48] sm:$0xff]
    %v69 = vld [vmem:[%s1 + $0x50] sm:$0xff]
    %v70 = vld [vmem:[%s1 + $0x58] sm:$0xff]
    %v71 = vld [vmem:[%s1 + $0x60] sm:$0xf]
    %v72 = vld [vmem:[%s1 + $0x68] sm:$0xf]
    %v73 = vld [vmem:[%s1 + $0x70] sm:$0xf]
    %v74 = vld [vmem:[%s1 + $0x78] sm:$0xf]
    %v75 = vld [vmem:[%s3] sm:$0xf]
    %v77 = vlaneseq
    %v78 = vshrl.u32 %v77, 7
    %v79 = vsub.s32 0, %v78
    %v80 = vrot.slane %v75, %v79
    %v81 = vlaneseq
    %v82 = vshrl.u32 %v81, 7
    %v83 = vsub.s32 1, %v82
    %v84 = vrot.slane %v75, %v83
    %v85 = vlaneseq
    %v86 = vshrl.u32 %v85, 7
    %v87 = vsub.s32 2, %v86
    %v88 = vrot.slane %v75, %v87
    %v89 = vlaneseq
    %v90 = vshrl.u32 %v89, 7
    %v91 = vsub.s32 3, %v90
    %v92 = vrot.slane %v75, %v91
    %vm97 = vcmask 228352
    %v99 = vsel %vm97, %v31, 0
    %v102 = vsel %vm97, %v32, 0
    %v105 = vsel %vm97, %v33, 0
    %v108 = vsel %vm97, %v34, 0
    %v111 = vsel %vm97, %v35, 0
    %v114 = vsel %vm97, %v36, 0
    %v117 = vsel %vm97, %v37, 0
    %v120 = vsel %vm97, %v38, 0
    %v123 = vsel %vm97, %v39, 0
    %v126 = vsel %vm97, %v40, 0
    %v129 = vsel %vm97, %v41, 0
    %v132 = vsel %vm97, %v42, 0
    %v135 = vsel %vm97, %v43, 0
    %v138 = vsel %vm97, %v44, 0
    %v141 = vsel %vm97, %v45, 0
    %v144 = vsel %vm97, %v46, 0
    %v147 = vsel %vm97, %v47, 0
    %v150 = vsel %vm97, %v48, 0
    %v153 = vsel %vm97, %v49, 0
    %v156 = vsel %vm97, %v50, 0
    %v159 = vsel %vm97, %v51, 0
    %v162 = vsel %vm97, %v52, 0
    %v165 = vsel %vm97, %v53, 0
    %v168 = vsel %vm97, %v54, 0
    %v171 = vsel %vm97, %v55, 0
    %v174 = vsel %vm97, %v56, 0
    %v177 = vsel %vm97, %v57, 0
    %v180 = vsel %vm97, %v58, 0
    %vm182 = vcmask 1043456
    %v184 = vsel %vm182, %v71, 0
    %v187 = vsel %vm182, %v72, 0
    %v190 = vsel %vm182, %v73, 0
    %v193 = vsel %vm182, %v74, 0
    %195 = vmatprep.subr.mxu0 0.0
    %196 = vmatpush1.msra.mxu0 0.0
    %197 = vmatprep.subr.mxu0 0.0
    %198 = vmatpush1.msra.mxu0 0.0
    %199 = vmatprep.subr.mxu0 0.0
    %200 = vmatpush1.msra.mxu0 0.0
    %201 = vmatprep.subr.mxu0 0.0
    %202 = vmatpush1.msra.mxu0 0.0
    %203 = vmatprep.subr.mxu0 0.0
    %204 = vmatpush1.msra.mxu0 0.0
    %205 = vmatprep.subr.mxu0 0.0
    %206 = vmatpush1.msra.mxu0 0.0
    %207 = vmatprep.subr.mxu0 0.0
    %208 = vmatpush1.msra.mxu0 0.0
    %209 = vmatprep.subr.mxu0 0.0
    %210 = vmatpush1.msra.mxu0 0.0
    %211 = vmatprep.subr.mxu0 0.0
    %212 = vmatpush1.msra.mxu0 0.0
    %213 = vmatprep.subr.mxu0 0.0
    %214 = vmatpush1.msra.mxu0 0.0
    %215 = vmatprep.subr.mxu0 0.0
    %216 = vmatpush1.msra.mxu0 0.0
    %217 = vmatprep.subr.mxu0 0.0
    %218 = vmatpush1.msra.mxu0 0.0
    %219 = vmatprep.subr.mxu0 %v187
    %220 = vmatpush1.msra.mxu0 %v184
    %221 = vmatprep.subr.mxu0 %v68
    %222 = vmatpush1.msra.mxu0 %v67
    %223 = vmatprep.subr.mxu0 %v64
    %224 = vmatpush1.msra.mxu0 %v63
    %225 = vmatprep.subr.mxu0 %v60
    %226 = vmatpush1.msra.mxu0 %v59
    %227 = vmatprep.subr.mxu0 0.0
    %228 = vmatpush2.msra.mxu0 0.0
    %229 = vmatprep.subr.mxu0 0.0
    %230 = vmatpush2.msra.mxu0 0.0
    %231 = vmatprep.subr.mxu0 0.0
    %232 = vmatpush2.msra.mxu0 0.0
    %233 = vmatprep.subr.mxu0 0.0
    %234 = vmatpush2.msra.mxu0 0.0
    %235 = vmatprep.subr.mxu0 0.0
    %236 = vmatpush2.msra.mxu0 0.0
    %237 = vmatprep.subr.mxu0 0.0
    %238 = vmatpush2.msra.mxu0 0.0
    %239 = vmatprep.subr.mxu0 0.0
    %240 = vmatpush2.msra.mxu0 0.0
    %241 = vmatprep.subr.mxu0 0.0
    %242 = vmatpush2.msra.mxu0 0.0
    %243 = vmatprep.subr.mxu0 0.0
    %244 = vmatpush2.msra.mxu0 0.0
    %245 = vmatprep.subr.mxu0 0.0
    %246 = vmatpush2.msra.mxu0 0.0
    %247 = vmatprep.subr.mxu0 0.0
    %248 = vmatpush2.msra.mxu0 0.0
    %249 = vmatprep.subr.mxu0 0.0
    %250 = vmatpush2.msra.mxu0 0.0
    %251 = vmatprep.subr.mxu0 0.0
    %252 = vmatpush2.msra.mxu0 0.0
    %253 = vmatprep.subr.mxu0 0.0
    %254 = vmatpush2.msra.mxu0 0.0
    %255 = vmatprep.subr.mxu0 0.0
    %256 = vmatpush2.msra.mxu0 0.0
    %257 = vmatprep.subr.mxu0 0.0
    %258 = vmatpush2.msra.mxu0 0.0
    %259 = vmatprep.mubr.f32.mxu0 0.0
    %260 = vmatmul.mubr.f32.gmra.mxu0 %v99
    %v261 = vpop.f32.mrf.mxu0
    %v262 = vadd.f32 %v80, %v261
    %v263 = vpop.f32.mrf.mxu0
    %v264 = vadd.f32 %v84, %v263
    %265 = vmatprep.mubr.f32.mxu0 0.0
    %266 = vmatmul.mubr.f32.gmra.mxu0 %v102
    %v267 = vpop.f32.mrf.mxu0
    %v268 = vadd.f32 %v80, %v267
    %v269 = vpop.f32.mrf.mxu0
    %v270 = vadd.f32 %v84, %v269
    %271 = vmatprep.mubr.f32.mxu0 0.0
    %272 = vmatmul.mubr.f32.gmra.mxu0 %v105
    %v273 = vpop.f32.mrf.mxu0
    %v274 = vadd.f32 %v80, %v273
    %v275 = vpop.f32.mrf.mxu0
    %v276 = vadd.f32 %v84, %v275
    %277 = vmatprep.mubr.f32.mxu0 0.0
    %278 = vmatmul.mubr.f32.gmra.mxu0 %v108
    %v279 = vpop.f32.mrf.mxu0
    %v280 = vadd.f32 %v80, %v279
    %v281 = vpop.f32.mrf.mxu0
    %v282 = vadd.f32 %v84, %v281
    %283 = vmatprep.mubr.f32.mxu0 0.0
    %284 = vmatmul.mubr.f32.gmra.mxu0 %v111
    %v285 = vpop.f32.mrf.mxu0
    %v286 = vadd.f32 %v80, %v285
    %v287 = vpop.f32.mrf.mxu0
    %v288 = vadd.f32 %v84, %v287
    %289 = vmatprep.mubr.f32.mxu0 0.0
    %290 = vmatmul.mubr.f32.gmra.mxu0 %v114
    %v291 = vpop.f32.mrf.mxu0
    %v292 = vadd.f32 %v80, %v291
    %v293 = vpop.f32.mrf.mxu0
    %v294 = vadd.f32 %v84, %v293
    %295 = vmatprep.mubr.f32.mxu0 0.0
    %296 = vmatmul.mubr.f32.gmra.mxu0 %v117
    %v297 = vpop.f32.mrf.mxu0
    %v298 = vadd.f32 %v80, %v297
    %v299 = vpop.f32.mrf.mxu0
    %v300 = vadd.f32 %v84, %v299
    %301 = vmatprep.mubr.f32.mxu0 0.0
    %302 = vmatmul.mubr.f32.gmra.mxu0 %v120
    %v303 = vpop.f32.mrf.mxu0
    %v304 = vadd.f32 %v80, %v303
    %v305 = vpop.f32.mrf.mxu0
    %v306 = vadd.f32 %v84, %v305
    %307 = vmatprep.mubr.f32.mxu0 0.0
    %308 = vmatmul.mubr.f32.gmra.mxu0 %v123
    %v309 = vpop.f32.mrf.mxu0
    %v310 = vadd.f32 %v80, %v309
    %v311 = vpop.f32.mrf.mxu0
    %v312 = vadd.f32 %v84, %v311
    %313 = vmatprep.mubr.f32.mxu0 0.0
    %314 = vmatmul.mubr.f32.gmra.mxu0 %v126
    %v315 = vpop.f32.mrf.mxu0
    %v316 = vadd.f32 %v80, %v315
    %v317 = vpop.f32.mrf.mxu0
    %v318 = vadd.f32 %v84, %v317
    %319 = vmatprep.mubr.f32.mxu0 0.0
    %320 = vmatmul.mubr.f32.gmra.mxu0 %v129
    %v321 = vpop.f32.mrf.mxu0
    %v322 = vadd.f32 %v80, %v321
    %v323 = vpop.f32.mrf.mxu0
    %v324 = vadd.f32 %v84, %v323
    %325 = vmatprep.mubr.f32.mxu0 0.0
    %326 = vmatmul.mubr.f32.gmra.mxu0 %v132
    %v327 = vpop.f32.mrf.mxu0
    %v328 = vadd.f32 %v80, %v327
    %v329 = vpop.f32.mrf.mxu0
    %v330 = vadd.f32 %v84, %v329
    %331 = vmatprep.mubr.f32.mxu0 0.0
    %332 = vmatmul.mubr.f32.gmra.mxu0 %v135
    %v333 = vpop.f32.mrf.mxu0
    %v334 = vadd.f32 %v80, %v333
    %v335 = vpop.f32.mrf.mxu0
    %v336 = vadd.f32 %v84, %v335
    %337 = vmatprep.mubr.f32.mxu0 0.0
    %338 = vmatmul.mubr.f32.gmra.mxu0 %v138
    %v339 = vpop.f32.mrf.mxu0
    %v340 = vadd.f32 %v80, %v339
    %v341 = vpop.f32.mrf.mxu0
    %v342 = vadd.f32 %v84, %v341
    %343 = vmatprep.mubr.f32.mxu0 0.0
    %344 = vmatmul.mubr.f32.gmra.mxu0 %v141
    %v345 = vpop.f32.mrf.mxu0
    %v346 = vadd.f32 %v80, %v345
    %v347 = vpop.f32.mrf.mxu0
    %v348 = vadd.f32 %v84, %v347
    %349 = vmatprep.mubr.f32.mxu0 0.0
    %350 = vmatmul.mubr.f32.gmra.mxu0 %v144
    %v351 = vpop.f32.mrf.mxu0
    %v352 = vadd.f32 %v80, %v351
    %v353 = vpop.f32.mrf.mxu0
    %v354 = vadd.f32 %v84, %v353
    %355 = vmatprep.mubr.f32.mxu0 0.0
    %356 = vmatmul.mubr.f32.gmra.mxu0 %v147
    %v357 = vpop.f32.mrf.mxu0
    %v358 = vadd.f32 %v80, %v357
    %v359 = vpop.f32.mrf.mxu0
    %v360 = vadd.f32 %v84, %v359
    %361 = vmatprep.mubr.f32.mxu0 0.0
    %362 = vmatmul.mubr.f32.gmra.mxu0 %v150
    %v363 = vpop.f32.mrf.mxu0
    %v364 = vadd.f32 %v80, %v363
    %v365 = vpop.f32.mrf.mxu0
    %v366 = vadd.f32 %v84, %v365
    %367 = vmatprep.mubr.f32.mxu0 0.0
    %368 = vmatmul.mubr.f32.gmra.mxu0 %v153
    %v369 = vpop.f32.mrf.mxu0
    %v370 = vadd.f32 %v80, %v369
    %v371 = vpop.f32.mrf.mxu0
    %v372 = vadd.f32 %v84, %v371
    %373 = vmatprep.mubr.f32.mxu0 0.0
    %374 = vmatmul.mubr.f32.gmra.mxu0 %v156
    %v375 = vpop.f32.mrf.mxu0
    %v376 = vadd.f32 %v80, %v375
    %v377 = vpop.f32.mrf.mxu0
    %v378 = vadd.f32 %v84, %v377
    %379 = vmatprep.mubr.f32.mxu0 0.0
    %380 = vmatmul.mubr.f32.gmra.mxu0 %v159
    %v381 = vpop.f32.mrf.mxu0
    %v382 = vadd.f32 %v80, %v381
    %v383 = vpop.f32.mrf.mxu0
    %v384 = vadd.f32 %v84, %v383
    %385 = vmatprep.mubr.f32.mxu0 0.0
    %386 = vmatmul.mubr.f32.gmra.mxu0 %v162
    %v387 = vpop.f32.mrf.mxu0
    %v388 = vadd.f32 %v80, %v387
    %v389 = vpop.f32.mrf.mxu0
    %v390 = vadd.f32 %v84, %v389
    %391 = vmatprep.mubr.f32.mxu0 0.0
    %392 = vmatmul.mubr.f32.gmra.mxu0 %v165
    %v393 = vpop.f32.mrf.mxu0
    %v394 = vadd.f32 %v80, %v393
    %v395 = vpop.f32.mrf.mxu0
    %v396 = vadd.f32 %v84, %v395
    %397 = vmatprep.mubr.f32.mxu0 0.0
    %398 = vmatmul.mubr.f32.gmra.mxu0 %v168
    %v399 = vpop.f32.mrf.mxu0
    %v400 = vadd.f32 %v80, %v399
    %v401 = vpop.f32.mrf.mxu0
    %v402 = vadd.f32 %v84, %v401
    %403 = vmatprep.mubr.f32.mxu0 0.0
    %404 = vmatmul.mubr.f32.gmra.mxu0 %v171
    %v405 = vpop.f32.mrf.mxu0
    %v406 = vadd.f32 %v80, %v405
    %v407 = vpop.f32.mrf.mxu0
    %v408 = vadd.f32 %v84, %v407
    %409 = vmatprep.mubr.f32.mxu0 0.0
    %410 = vmatmul.mubr.f32.gmra.mxu0 %v174
    %v411 = vpop.f32.mrf.mxu0
    %v412 = vadd.f32 %v80, %v411
    %v413 = vpop.f32.mrf.mxu0
    %v414 = vadd.f32 %v84, %v413
    %415 = vmatprep.mubr.f32.mxu0 0.0
    %416 = vmatmul.mubr.f32.gmra.mxu0 %v177
    %v417 = vpop.f32.mrf.mxu0
    %v418 = vadd.f32 %v80, %v417
    %v419 = vpop.f32.mrf.mxu0
    %v420 = vadd.f32 %v84, %v419
    %421 = vmatprep.mubr.f32.mxu0 0.0
    %422 = vmatmul.mubr.f32.gmra.mxu0 %v180
    %v423 = vpop.f32.mrf.mxu0
    %v424 = vadd.f32 %v80, %v423
    %v425 = vpop.f32.mrf.mxu0
    %v426 = vadd.f32 %v84, %v425
    %427 = vdwg.mxu0
    %428 = vmatprep.subr.mxu0 0.0
    %429 = vmatpush1.msra.mxu0 0.0
    %430 = vmatprep.subr.mxu0 0.0
    %431 = vmatpush1.msra.mxu0 0.0
    %432 = vmatprep.subr.mxu0 0.0
    %433 = vmatpush1.msra.mxu0 0.0
    %434 = vmatprep.subr.mxu0 0.0
    %435 = vmatpush1.msra.mxu0 0.0
    %436 = vmatprep.subr.mxu0 0.0
    %437 = vmatpush1.msra.mxu0 0.0
    %438 = vmatprep.subr.mxu0 0.0
    %439 = vmatpush1.msra.mxu0 0.0
    %440 = vmatprep.subr.mxu0 0.0
    %441 = vmatpush1.msra.mxu0 0.0
    %442 = vmatprep.subr.mxu0 0.0
    %443 = vmatpush1.msra.mxu0 0.0
    %444 = vmatprep.subr.mxu0 0.0
    %445 = vmatpush1.msra.mxu0 0.0
    %446 = vmatprep.subr.mxu0 0.0
    %447 = vmatpush1.msra.mxu0 0.0
    %448 = vmatprep.subr.mxu0 0.0
    %449 = vmatpush1.msra.mxu0 0.0
    %450 = vmatprep.subr.mxu0 0.0
    %451 = vmatpush1.msra.mxu0 0.0
    %452 = vmatprep.subr.mxu0 %v193
    %453 = vmatpush1.msra.mxu0 %v190
    %454 = vmatprep.subr.mxu0 %v70
    %455 = vmatpush1.msra.mxu0 %v69
    %456 = vmatprep.subr.mxu0 %v66
    %457 = vmatpush1.msra.mxu0 %v65
    %458 = vmatprep.subr.mxu0 %v62
    %459 = vmatpush1.msra.mxu0 %v61
    %460 = vmatprep.subr.mxu0 0.0
    %461 = vmatpush2.msra.mxu0 0.0
    %462 = vmatprep.subr.mxu0 0.0
    %463 = vmatpush2.msra.mxu0 0.0
    %464 = vmatprep.subr.mxu0 0.0
    %465 = vmatpush2.msra.mxu0 0.0
    %466 = vmatprep.subr.mxu0 0.0
    %467 = vmatpush2.msra.mxu0 0.0
    %468 = vmatprep.subr.mxu0 0.0
    %469 = vmatpush2.msra.mxu0 0.0
    %470 = vmatprep.subr.mxu0 0.0
    %471 = vmatpush2.msra.mxu0 0.0
    %472 = vmatprep.subr.mxu0 0.0
    %473 = vmatpush2.msra.mxu0 0.0
    %474 = vmatprep.subr.mxu0 0.0
    %475 = vmatpush2.msra.mxu0 0.0
    %476 = vmatprep.subr.mxu0 0.0
    %477 = vmatpush2.msra.mxu0 0.0
    %478 = vmatprep.subr.mxu0 0.0
    %479 = vmatpush2.msra.mxu0 0.0
    %480 = vmatprep.subr.mxu0 0.0
    %481 = vmatpush2.msra.mxu0 0.0
    %482 = vmatprep.subr.mxu0 0.0
    %483 = vmatpush2.msra.mxu0 0.0
    %484 = vmatprep.subr.mxu0 0.0
    %485 = vmatpush2.msra.mxu0 0.0
    %486 = vmatprep.subr.mxu0 0.0
    %487 = vmatpush2.msra.mxu0 0.0
    %488 = vmatprep.subr.mxu0 0.0
    %489 = vmatpush2.msra.mxu0 0.0
    %490 = vmatprep.subr.mxu0 0.0
    %491 = vmatpush2.msra.mxu0 0.0
    %492 = vmatprep.mubr.f32.mxu0 0.0
    %493 = vmatmul.mubr.f32.gmra.mxu0 %v99
    %v494 = vpop.f32.mrf.mxu0
    %v495 = vadd.f32 %v88, %v494
    %v496 = vpop.f32.mrf.mxu0
    %v497 = vadd.f32 %v92, %v496
    %498 = vmatprep.mubr.f32.mxu0 0.0
    %499 = vmatmul.mubr.f32.gmra.mxu0 %v102
    %v500 = vpop.f32.mrf.mxu0
    %v501 = vadd.f32 %v88, %v500
    %v502 = vpop.f32.mrf.mxu0
    %v503 = vadd.f32 %v92, %v502
    %504 = vmatprep.mubr.f32.mxu0 0.0
    %505 = vmatmul.mubr.f32.gmra.mxu0 %v105
    %v506 = vpop.f32.mrf.mxu0
    %v507 = vadd.f32 %v88, %v506
    %v508 = vpop.f32.mrf.mxu0
    %v509 = vadd.f32 %v92, %v508
    %510 = vmatprep.mubr.f32.mxu0 0.0
    %511 = vmatmul.mubr.f32.gmra.mxu0 %v108
    %v512 = vpop.f32.mrf.mxu0
    %v513 = vadd.f32 %v88, %v512
    %v514 = vpop.f32.mrf.mxu0
    %v515 = vadd.f32 %v92, %v514
    %516 = vmatprep.mubr.f32.mxu0 0.0
    %517 = vmatmul.mubr.f32.gmra.mxu0 %v111
    %v518 = vpop.f32.mrf.mxu0
    %v519 = vadd.f32 %v88, %v518
    %v520 = vpop.f32.mrf.mxu0
    %v521 = vadd.f32 %v92, %v520
    %522 = vmatprep.mubr.f32.mxu0 0.0
    %523 = vmatmul.mubr.f32.gmra.mxu0 %v114
    %v524 = vpop.f32.mrf.mxu0
    %v525 = vadd.f32 %v88, %v524
    %v526 = vpop.f32.mrf.mxu0
    %v527 = vadd.f32 %v92, %v526
    %528 = vmatprep.mubr.f32.mxu0 0.0
    %529 = vmatmul.mubr.f32.gmra.mxu0 %v117
    %v530 = vpop.f32.mrf.mxu0
    %v531 = vadd.f32 %v88, %v530
    %v532 = vpop.f32.mrf.mxu0
    %v533 = vadd.f32 %v92, %v532
    %534 = vmatprep.mubr.f32.mxu0 0.0
    %535 = vmatmul.mubr.f32.gmra.mxu0 %v120
    %v536 = vpop.f32.mrf.mxu0
    %v537 = vadd.f32 %v88, %v536
    %v538 = vpop.f32.mrf.mxu0
    %v539 = vadd.f32 %v92, %v538
    %540 = vmatprep.mubr.f32.mxu0 0.0
    %541 = vmatmul.mubr.f32.gmra.mxu0 %v123
    %v542 = vpop.f32.mrf.mxu0
    %v543 = vadd.f32 %v88, %v542
    %v544 = vpop.f32.mrf.mxu0
    %v545 = vadd.f32 %v92, %v544
    %546 = vmatprep.mubr.f32.mxu0 0.0
    %547 = vmatmul.mubr.f32.gmra.mxu0 %v126
    %v548 = vpop.f32.mrf.mxu0
    %v549 = vadd.f32 %v88, %v548
    %v550 = vpop.f32.mrf.mxu0
    %v551 = vadd.f32 %v92, %v550
    %552 = vmatprep.mubr.f32.mxu0 0.0
    %553 = vmatmul.mubr.f32.gmra.mxu0 %v129
    %v554 = vpop.f32.mrf.mxu0
    %v555 = vadd.f32 %v88, %v554
    %v556 = vpop.f32.mrf.mxu0
    %v557 = vadd.f32 %v92, %v556
    %558 = vmatprep.mubr.f32.mxu0 0.0
    %559 = vmatmul.mubr.f32.gmra.mxu0 %v132
    %v560 = vpop.f32.mrf.mxu0
    %v561 = vadd.f32 %v88, %v560
    %v562 = vpop.f32.mrf.mxu0
    %v563 = vadd.f32 %v92, %v562
    %564 = vmatprep.mubr.f32.mxu0 0.0
    %565 = vmatmul.mubr.f32.gmra.mxu0 %v135
    %v566 = vpop.f32.mrf.mxu0
    %v567 = vadd.f32 %v88, %v566
    %v568 = vpop.f32.mrf.mxu0
    %v569 = vadd.f32 %v92, %v568
    %570 = vmatprep.mubr.f32.mxu0 0.0
    %571 = vmatmul.mubr.f32.gmra.mxu0 %v138
    %v572 = vpop.f32.mrf.mxu0
    %v573 = vadd.f32 %v88, %v572
    %v574 = vpop.f32.mrf.mxu0
    %v575 = vadd.f32 %v92, %v574
    %576 = vmatprep.mubr.f32.mxu0 0.0
    %577 = vmatmul.mubr.f32.gmra.mxu0 %v141
    %v578 = vpop.f32.mrf.mxu0
    %v579 = vadd.f32 %v88, %v578
    %v580 = vpop.f32.mrf.mxu0
    %v581 = vadd.f32 %v92, %v580
    %582 = vmatprep.mubr.f32.mxu0 0.0
    %583 = vmatmul.mubr.f32.gmra.mxu0 %v144
    %v584 = vpop.f32.mrf.mxu0
    %v585 = vadd.f32 %v88, %v584
    %v586 = vpop.f32.mrf.mxu0
    %v587 = vadd.f32 %v92, %v586
    %588 = vmatprep.mubr.f32.mxu0 0.0
    %589 = vmatmul.mubr.f32.gmra.mxu0 %v147
    %v590 = vpop.f32.mrf.mxu0
    %v591 = vadd.f32 %v88, %v590
    %v592 = vpop.f32.mrf.mxu0
    %v593 = vadd.f32 %v92, %v592
    %594 = vmatprep.mubr.f32.mxu0 0.0
    %595 = vmatmul.mubr.f32.gmra.mxu0 %v150
    %v596 = vpop.f32.mrf.mxu0
    %v597 = vadd.f32 %v88, %v596
    %v598 = vpop.f32.mrf.mxu0
    %v599 = vadd.f32 %v92, %v598
    %600 = vmatprep.mubr.f32.mxu0 0.0
    %601 = vmatmul.mubr.f32.gmra.mxu0 %v153
    %v602 = vpop.f32.mrf.mxu0
    %v603 = vadd.f32 %v88, %v602
    %v604 = vpop.f32.mrf.mxu0
    %v605 = vadd.f32 %v92, %v604
    %606 = vmatprep.mubr.f32.mxu0 0.0
    %607 = vmatmul.mubr.f32.gmra.mxu0 %v156
    %v608 = vpop.f32.mrf.mxu0
    %v609 = vadd.f32 %v88, %v608
    %v610 = vpop.f32.mrf.mxu0
    %v611 = vadd.f32 %v92, %v610
    %612 = vmatprep.mubr.f32.mxu0 0.0
    %613 = vmatmul.mubr.f32.gmra.mxu0 %v159
    %v614 = vpop.f32.mrf.mxu0
    %v615 = vadd.f32 %v88, %v614
    %v616 = vpop.f32.mrf.mxu0
    %v617 = vadd.f32 %v92, %v616
    %618 = vmatprep.mubr.f32.mxu0 0.0
    %619 = vmatmul.mubr.f32.gmra.mxu0 %v162
    %v620 = vpop.f32.mrf.mxu0
    %v621 = vadd.f32 %v88, %v620
    %v622 = vpop.f32.mrf.mxu0
    %v623 = vadd.f32 %v92, %v622
    %624 = vmatprep.mubr.f32.mxu0 0.0
    %625 = vmatmul.mubr.f32.gmra.mxu0 %v165
    %v626 = vpop.f32.mrf.mxu0
    %v627 = vadd.f32 %v88, %v626
    %v628 = vpop.f32.mrf.mxu0
    %v629 = vadd.f32 %v92, %v628
    %630 = vmatprep.mubr.f32.mxu0 0.0
    %631 = vmatmul.mubr.f32.gmra.mxu0 %v168
    %v632 = vpop.f32.mrf.mxu0
    %v633 = vadd.f32 %v88, %v632
    %v634 = vpop.f32.mrf.mxu0
    %v635 = vadd.f32 %v92, %v634
    %636 = vmatprep.mubr.f32.mxu0 0.0
    %637 = vmatmul.mubr.f32.gmra.mxu0 %v171
    %v638 = vpop.f32.mrf.mxu0
    %v639 = vadd.f32 %v88, %v638
    %v640 = vpop.f32.mrf.mxu0
    %v641 = vadd.f32 %v92, %v640
    %642 = vmatprep.mubr.f32.mxu0 0.0
    %643 = vmatmul.mubr.f32.gmra.mxu0 %v174
    %v644 = vpop.f32.mrf.mxu0
    %v645 = vadd.f32 %v88, %v644
    %v646 = vpop.f32.mrf.mxu0
    %v647 = vadd.f32 %v92, %v646
    %648 = vmatprep.mubr.f32.mxu0 0.0
    %649 = vmatmul.mubr.f32.gmra.mxu0 %v177
    %v650 = vpop.f32.mrf.mxu0
    %v651 = vadd.f32 %v88, %v650
    %v652 = vpop.f32.mrf.mxu0
    %v653 = vadd.f32 %v92, %v652
    %654 = vmatprep.mubr.f32.mxu0 0.0
    %655 = vmatmul.mubr.f32.gmra.mxu0 %v180
    %v656 = vpop.f32.mrf.mxu0
    %v657 = vadd.f32 %v88, %v656
    %v658 = vpop.f32.mrf.mxu0
    %v659 = vadd.f32 %v92, %v658
    %660 = vdwg.mxu0
    %661 = vst [vmem:[#allocation2] sm:$0xff] %v262
    %662 = vst [vmem:[#allocation2 + $0x8] sm:$0xff] %v264
    %663 = vst [vmem:[#allocation2 + $0x10] sm:$0xff] %v495
    %664 = vst [vmem:[#allocation2 + $0x18] sm:$0xff] %v497
    %665 = vst [vmem:[#allocation2 + $0x20] sm:$0xff] %v268
    %666 = vst [vmem:[#allocation2 + $0x28] sm:$0xff] %v270
    %667 = vst [vmem:[#allocation2 + $0x30] sm:$0xff] %v501
    %668 = vst [vmem:[#allocation2 + $0x38] sm:$0xff] %v503
    %669 = vst [vmem:[#allocation2 + $0x40] sm:$0xff] %v274
    %670 = vst [vmem:[#allocation2 + $0x48] sm:$0xff] %v276
    %671 = vst [vmem:[#allocation2 + $0x50] sm:$0xff] %v507
    %672 = vst [vmem:[#allocation2 + $0x58] sm:$0xff] %v509
    %673 = vst [vmem:[#allocation2 + $0x60] sm:$0xff] %v280
    %674 = vst [vmem:[#allocation2 + $0x68] sm:$0xff] %v282
    %675 = vst [vmem:[#allocation2 + $0x70] sm:$0xff] %v513
    %676 = vst [vmem:[#allocation2 + $0x78] sm:$0xff] %v515
    %677 = vst [vmem:[#allocation2 + $0x80] sm:$0xff] %v286
    %678 = vst [vmem:[#allocation2 + $0x88] sm:$0xff] %v288
    %679 = vst [vmem:[#allocation2 + $0x90] sm:$0xff] %v519
    %680 = vst [vmem:[#allocation2 + $0x98] sm:$0xff] %v521
    %681 = vst [vmem:[#allocation2 + $0xa0] sm:$0xff] %v292
    %682 = vst [vmem:[#allocation2 + $0xa8] sm:$0xff] %v294
    %683 = vst [vmem:[#allocation2 + $0xb0] sm:$0xff] %v525
    %684 = vst [vmem:[#allocation2 + $0xb8] sm:$0xff] %v527
    %685 = vst [vmem:[#allocation2 + $0xc0] sm:$0xff] %v298
    %686 = vst [vmem:[#allocation2 + $0xc8] sm:$0xff] %v300
    %687 = vst [vmem:[#allocation2 + $0xd0] sm:$0xff] %v531
    %688 = vst [vmem:[#allocation2 + $0xd8] sm:$0xff] %v533
    %689 = vst [vmem:[#allocation2 + $0xe0] sm:$0xff] %v304
    %690 = vst [vmem:[#allocation2 + $0xe8] sm:$0xff] %v306
    %691 = vst [vmem:[#allocation2 + $0xf0] sm:$0xff] %v537
    %692 = vst [vmem:[#allocation2 + $0xf8] sm:$0xff] %v539
    %693 = vst [vmem:[#allocation2 + $0x100] sm:$0xff] %v310
    %694 = vst [vmem:[#allocation2 + $0x108] sm:$0xff] %v312
    %695 = vst [vmem:[#allocation2 + $0x110] sm:$0xff] %v543
    %696 = vst [vmem:[#allocation2 + $0x118] sm:$0xff] %v545
    %697 = vst [vmem:[#allocation2 + $0x120] sm:$0xff] %v316
    %698 = vst [vmem:[#allocation2 + $0x128] sm:$0xff] %v318
    %699 = vst [vmem:[#allocation2 + $0x130] sm:$0xff] %v549
    %700 = vst [vmem:[#allocation2 + $0x138] sm:$0xff] %v551
    %701 = vst [vmem:[#allocation2 + $0x140] sm:$0xff] %v322
    %702 = vst [vmem:[#allocation2 + $0x148] sm:$0xff] %v324
    %703 = vst [vmem:[#allocation2 + $0x150] sm:$0xff] %v555
    %704 = vst [vmem:[#allocation2 + $0x158] sm:$0xff] %v557
    %705 = vst [vmem:[#allocation2 + $0x160] sm:$0xff] %v328
    %706 = vst [vmem:[#allocation2 + $0x168] sm:$0xff] %v330
    %707 = vst [vmem:[#allocation2 + $0x170] sm:$0xff] %v561
    %708 = vst [vmem:[#allocation2 + $0x178] sm:$0xff] %v563
    %709 = vst [vmem:[#allocation2 + $0x180] sm:$0xff] %v334
    %710 = vst [vmem:[#allocation2 + $0x188] sm:$0xff] %v336
    %711 = vst [vmem:[#allocation2 + $0x190] sm:$0xff] %v567
    %712 = vst [vmem:[#allocation2 + $0x198] sm:$0xff] %v569
    %713 = vst [vmem:[#allocation2 + $0x1a0] sm:$0xff] %v340
    %714 = vst [vmem:[#allocation2 + $0x1a8] sm:$0xff] %v342
    %715 = vst [vmem:[#allocation2 + $0x1b0] sm:$0xff] %v573
    %716 = vst [vmem:[#allocation2 + $0x1b8] sm:$0xff] %v575
    %717 = vst [vmem:[#allocation2 + $0x1c0] sm:$0xff] %v346
    %718 = vst [vmem:[#allocation2 + $0x1c8] sm:$0xff] %v348
    %719 = vst [vmem:[#allocation2 + $0x1d0] sm:$0xff] %v579
    %720 = vst [vmem:[#allocation2 + $0x1d8] sm:$0xff] %v581
    %721 = vst [vmem:[#allocation2 + $0x1e0] sm:$0xff] %v352
    %722 = vst [vmem:[#allocation2 + $0x1e8] sm:$0xff] %v354
    %723 = vst [vmem:[#allocation2 + $0x1f0] sm:$0xff] %v585
    %724 = vst [vmem:[#allocation2 + $0x1f8] sm:$0xff] %v587
    %725 = vst [vmem:[#allocation2 + $0x200] sm:$0xff] %v358
    %726 = vst [vmem:[#allocation2 + $0x208] sm:$0xff] %v360
    %727 = vst [vmem:[#allocation2 + $0x210] sm:$0xff] %v591
    %728 = vst [vmem:[#allocation2 + $0x218] sm:$0xff] %v593
    %729 = vst [vmem:[#allocation2 + $0x220] sm:$0xff] %v364
    %730 = vst [vmem:[#allocation2 + $0x228] sm:$0xff] %v366
    %731 = vst [vmem:[#allocation2 + $0x230] sm:$0xff] %v597
    %732 = vst [vmem:[#allocation2 + $0x238] sm:$0xff] %v599
    %733 = vst [vmem:[#allocation2 + $0x240] sm:$0xff] %v370
    %734 = vst [vmem:[#allocation2 + $0x248] sm:$0xff] %v372
    %735 = vst [vmem:[#allocation2 + $0x250] sm:$0xff] %v603
    %736 = vst [vmem:[#allocation2 + $0x258] sm:$0xff] %v605
    %737 = vst [vmem:[#allocation2 + $0x260] sm:$0xff] %v376
    %738 = vst [vmem:[#allocation2 + $0x268] sm:$0xff] %v378
    %739 = vst [vmem:[#allocation2 + $0x270] sm:$0xff] %v609
    %740 = vst [vmem:[#allocation2 + $0x278] sm:$0xff] %v611
    %741 = vst [vmem:[#allocation2 + $0x280] sm:$0xff] %v382
    %742 = vst [vmem:[#allocation2 + $0x288] sm:$0xff] %v384
    %743 = vst [vmem:[#allocation2 + $0x290] sm:$0xff] %v615
    %744 = vst [vmem:[#allocation2 + $0x298] sm:$0xff] %v617
    %745 = vst [vmem:[#allocation2 + $0x2a0] sm:$0xff] %v388
    %746 = vst [vmem:[#allocation2 + $0x2a8] sm:$0xff] %v390
    %747 = vst [vmem:[#allocation2 + $0x2b0] sm:$0xff] %v621
    %748 = vst [vmem:[#allocation2 + $0x2b8] sm:$0xff] %v623
    %749 = vst [vmem:[#allocation2 + $0x2c0] sm:$0xff] %v394
    %750 = vst [vmem:[#allocation2 + $0x2c8] sm:$0xff] %v396
    %751 = vst [vmem:[#allocation2 + $0x2d0] sm:$0xff] %v627
    %752 = vst [vmem:[#allocation2 + $0x2d8] sm:$0xff] %v629
    %753 = vst [vmem:[#allocation2 + $0x2e0] sm:$0xff] %v400
    %754 = vst [vmem:[#allocation2 + $0x2e8] sm:$0xff] %v402
    %755 = vst [vmem:[#allocation2 + $0x2f0] sm:$0xff] %v633
    %756 = vst [vmem:[#allocation2 + $0x2f8] sm:$0xff] %v635
    %757 = vst [vmem:[#allocation2 + $0x300] sm:$0xff] %v406
    %758 = vst [vmem:[#allocation2 + $0x308] sm:$0xff] %v408
    %759 = vst [vmem:[#allocation2 + $0x310] sm:$0xff] %v639
    %760 = vst [vmem:[#allocation2 + $0x318] sm:$0xff] %v641
    %761 = vst [vmem:[#allocation2 + $0x320] sm:$0xff] %v412
    %762 = vst [vmem:[#allocation2 + $0x328] sm:$0xff] %v414
    %763 = vst [vmem:[#allocation2 + $0x330] sm:$0xff] %v645
    %764 = vst [vmem:[#allocation2 + $0x338] sm:$0xff] %v647
    %765 = vst [vmem:[#allocation2 + $0x340] sm:$0xff] %v418
    %766 = vst [vmem:[#allocation2 + $0x348] sm:$0xff] %v420
    %767 = vst [vmem:[#allocation2 + $0x350] sm:$0xff] %v651
    %768 = vst [vmem:[#allocation2 + $0x358] sm:$0xff] %v653
    %769 = vst [vmem:[#allocation2 + $0x360] sm:$0xff] %v424
    %770 = vst [vmem:[#allocation2 + $0x368] sm:$0xff] %v426
    %771 = vst [vmem:[#allocation2 + $0x370] sm:$0xff] %v657
    %772 = vst [vmem:[#allocation2 + $0x378] sm:$0xff] %v659
    %v773 = vld [vmem:[#allocation2 + $0x8] sm:$0xff]
    %v774 = vld [vmem:[#allocation2 + $0x10] sm:$0xff]
    %v775 = vld [vmem:[#allocation2 + $0x18] sm:$0xff]
    %v776 = vmul.f32 %v773, 0.5
    %v777 = vtanh.pop %v776
    %v778 = vmul.f32 %v777, 0.5
    %v779 = vadd.f32 %v778, 0.5
    %v780 = vtanh.pop %v774
    %v781 = vmul.f32 %v775, 0.5
    %v782 = vtanh.pop %v781
    %v783 = vmul.f32 %v782, 0.5
    %v784 = vadd.f32 %v783, 0.5
    %v785 = vmul.f32 %v779, %v780
    %v786 = vtanh.pop %v785
    %v787 = vmul.f32 %v784, %v786
    %s788 = smul.u32 1, 4
    %s789 = smul.addr %s788, 8
    %s790 = scalar_lea.vmem [#allocation2], %s789
    %v791 = vld [vmem:[%s790] sm:$0xff]
    %v792 = vld [vmem:[%s790 + $0x8] sm:$0xff]
    %v793 = vld [vmem:[%s790 + $0x10] sm:$0xff]
    %v794 = vld [vmem:[%s790 + $0x18] sm:$0xff]
    %v795 = vld [vmem:[#allocation3] sm:$0xff]
    %v796 = vld [vmem:[#allocation3 + $0x8] sm:$0xff]
    %v797 = vld [vmem:[#allocation3 + $0x10] sm:$0xff]
    %v798 = vld [vmem:[#allocation3 + $0x18] sm:$0xff]
    %v799 = vld [vmem:[#allocation3 + $0x20] sm:$0xff]
    %v800 = vld [vmem:[#allocation3 + $0x28] sm:$0xff]
    %v801 = vld [vmem:[#allocation3 + $0x30] sm:$0xff]
    %v802 = vld [vmem:[#allocation3 + $0x38] sm:$0xff]
    %v803 = vld [vmem:[#allocation3 + $0x40] sm:$0xff]
    %v804 = vld [vmem:[#allocation3 + $0x48] sm:$0xff]
    %v805 = vld [vmem:[#allocation3 + $0x50] sm:$0xff]
    %v806 = vld [vmem:[#allocation3 + $0x58] sm:$0xff]
    %v807 = vld [vmem:[#allocation3 + $0x60] sm:$0xff]
    %v808 = vld [vmem:[#allocation3 + $0x68] sm:$0xff]
    %v809 = vld [vmem:[#allocation3 + $0x70] sm:$0xff]
    %v810 = vld [vmem:[#allocation3 + $0x78] sm:$0xff]
    %v811 = vld [vmem:[#allocation3 + $0x80] sm:$0xff]
    %v812 = vld [vmem:[#allocation3 + $0x88] sm:$0xff]
    %v813 = vld [vmem:[#allocation3 + $0x90] sm:$0xff]
    %v814 = vld [vmem:[#allocation3 + $0x98] sm:$0xff]
    %v815 = vld [vmem:[#allocation3 + $0xa0] sm:$0xff]
    %v816 = vld [vmem:[#allocation3 + $0xa8] sm:$0xff]
    %v817 = vld [vmem:[#allocation3 + $0xb0] sm:$0xff]
    %v818 = vld [vmem:[#allocation3 + $0xb8] sm:$0xff]
    %v819 = vld [vmem:[#allocation3 + $0xc0] sm:$0xff]
    %v820 = vld [vmem:[#allocation3 + $0xc8] sm:$0xff]
    %v821 = vld [vmem:[#allocation3 + $0xd0] sm:$0xff]
    %v822 = vld [vmem:[#allocation3 + $0xd8] sm:$0xff]
    %v823 = vld [vmem:[#allocation3 + $0xe0] sm:$0xff]
    %v824 = vld [vmem:[#allocation3 + $0xe8] sm:$0xff]
    %v825 = vld [vmem:[#allocation3 + $0xf0] sm:$0xff]
    %v826 = vld [vmem:[#allocation3 + $0xf8] sm:$0xff]
    %v827 = vld [vmem:[#allocation3 + $0x100] sm:$0xff]
    %v828 = vld [vmem:[#allocation3 + $0x108] sm:$0xff]
    %v829 = vld [vmem:[#allocation3 + $0x110] sm:$0xff]
    %v830 = vld [vmem:[#allocation3 + $0x118] sm:$0xff]
    %v831 = vld [vmem:[#allocation3 + $0x120] sm:$0xff]
    %v832 = vld [vmem:[#allocation3 + $0x128] sm:$0xff]
    %v833 = vld [vmem:[#allocation3 + $0x130] sm:$0xff]
    %v834 = vld [vmem:[#allocation3 + $0x138] sm:$0xff]
    %v835 = vld [vmem:[#allocation3 + $0x140] sm:$0xff]
    %v836 = vld [vmem:[#allocation3 + $0x148] sm:$0xff]
    %v837 = vld [vmem:[#allocation3 + $0x150] sm:$0xff]
    %v838 = vld [vmem:[#allocation3 + $0x158] sm:$0xff]
    %v839 = vld [vmem:[#allocation3 + $0x160] sm:$0xff]
    %v840 = vld [vmem:[#allocation3 + $0x168] sm:$0xff]
    %v841 = vld [vmem:[#allocation3 + $0x170] sm:$0xff]
    %v842 = vld [vmem:[#allocation3 + $0x178] sm:$0xff]
    %v843 = vld [vmem:[#allocation3 + $0x180] sm:$0xff]
    %v844 = vld [vmem:[#allocation3 + $0x188] sm:$0xff]
    %v845 = vld [vmem:[#allocation3 + $0x190] sm:$0xff]
    %v846 = vld [vmem:[#allocation3 + $0x198] sm:$0xff]
    %v847 = vld [vmem:[#allocation3 + $0x1a0] sm:$0xff]
    %v848 = vld [vmem:[#allocation3 + $0x1a8] sm:$0xff]
    %v849 = vld [vmem:[#allocation3 + $0x1b0] sm:$0xff]
    %v850 = vld [vmem:[#allocation3 + $0x1b8] sm:$0xff]
    %v851 = vld [vmem:[#allocation3 + $0x1c0] sm:$0xff]
    %v852 = vld [vmem:[#allocation3 + $0x1c8] sm:$0xff]
    %v853 = vld [vmem:[#allocation3 + $0x1d0] sm:$0xff]
    %v854 = vld [vmem:[#allocation3 + $0x1d8] sm:$0xff]
    %v855 = vld [vmem:[#allocation3 + $0x1e0] sm:$0xff]
    %v856 = vld [vmem:[#allocation3 + $0x1e8] sm:$0xff]
    %v857 = vld [vmem:[#allocation3 + $0x1f0] sm:$0xff]
    %v858 = vld [vmem:[#allocation3 + $0x1f8] sm:$0xff]
    %859 = vmatprep.subr.mxu0 %v856
    %860 = vmatpush1.msra.mxu0 %v855
    %861 = vmatprep.subr.mxu0 %v852
    %862 = vmatpush1.msra.mxu0 %v851
    %863 = vmatprep.subr.mxu0 %v848
    %864 = vmatpush1.msra.mxu0 %v847
    %865 = vmatprep.subr.mxu0 %v844
    %866 = vmatpush1.msra.mxu0 %v843
    %867 = vmatprep.subr.mxu0 %v840
    %868 = vmatpush1.msra.mxu0 %v839
    %869 = vmatprep.subr.mxu0 %v836
    %870 = vmatpush1.msra.mxu0 %v835
    %871 = vmatprep.subr.mxu0 %v832
    %872 = vmatpush1.msra.mxu0 %v831
    %873 = vmatprep.subr.mxu0 %v828
    %874 = vmatpush1.msra.mxu0 %v827
    %875 = vmatprep.subr.mxu0 %v824
    %876 = vmatpush1.msra.mxu0 %v823
    %877 = vmatprep.subr.mxu0 %v820
    %878 = vmatpush1.msra.mxu0 %v819
    %879 = vmatprep.subr.mxu0 %v816
    %880 = vmatpush1.msra.mxu0 %v815
    %881 = vmatprep.subr.mxu0 %v812
    %882 = vmatpush1.msra.mxu0 %v811
    %883 = vmatprep.subr.mxu0 %v808
    %884 = vmatpush1.msra.mxu0 %v807
    %885 = vmatprep.subr.mxu0 %v804
    %886 = vmatpush1.msra.mxu0 %v803
    %887 = vmatprep.subr.mxu0 %v800
    %888 = vmatpush1.msra.mxu0 %v799
    %889 = vmatprep.subr.mxu0 %v796
    %890 = vmatpush1.msra.mxu0 %v795
    %891 = vmatprep.subr.mxu0 0.0
    %892 = vmatpush2.msra.mxu0 0.0
    %893 = vmatprep.subr.mxu0 0.0
    %894 = vmatpush2.msra.mxu0 0.0
    %895 = vmatprep.subr.mxu0 0.0
    %896 = vmatpush2.msra.mxu0 0.0
    %897 = vmatprep.subr.mxu0 0.0
    %898 = vmatpush2.msra.mxu0 0.0
    %899 = vmatprep.subr.mxu0 0.0
    %900 = vmatpush2.msra.mxu0 0.0
    %901 = vmatprep.subr.mxu0 0.0
    %902 = vmatpush2.msra.mxu0 0.0
    %903 = vmatprep.subr.mxu0 0.0
    %904 = vmatpush2.msra.mxu0 0.0
    %905 = vmatprep.subr.mxu0 0.0
    %906 = vmatpush2.msra.mxu0 0.0
    %907 = vmatprep.subr.mxu0 0.0
    %908 = vmatpush2.msra.mxu0 0.0
    %909 = vmatprep.subr.mxu0 0.0
    %910 = vmatpush2.msra.mxu0 0.0
    %911 = vmatprep.subr.mxu0 0.0
    %912 = vmatpush2.msra.mxu0 0.0
    %913 = vmatprep.subr.mxu0 0.0
    %914 = vmatpush2.msra.mxu0 0.0
    %915 = vmatprep.subr.mxu0 0.0
    %916 = vmatpush2.msra.mxu0 0.0
    %917 = vmatprep.subr.mxu0 0.0
    %918 = vmatpush2.msra.mxu0 0.0
    %919 = vmatprep.subr.mxu0 0.0
    %920 = vmatpush2.msra.mxu0 0.0
    %921 = vmatprep.subr.mxu0 0.0
    %922 = vmatpush2.msra.mxu0 0.0
    %923 = vmatprep.mubr.f32.mxu0 0.0
    %924 = vmatmul.mubr.f32.gmra.mxu0 %v787
    %v925 = vpop.f32.mrf.mxu0
    %v926 = vadd.f32 0.0, %v925
    %v927 = vpop.f32.mrf.mxu0
    %v928 = vadd.f32 0.0, %v927
    %929 = vdwg.mxu0
    %930 = vmatprep.subr.mxu0 %v858
    %931 = vmatpush1.msra.mxu0 %v857
    %932 = vmatprep.subr.mxu0 %v854
    %933 = vmatpush1.msra.mxu0 %v853
    %934 = vmatprep.subr.mxu0 %v850
    %935 = vmatpush1.msra.mxu0 %v849
    %936 = vmatprep.subr.mxu0 %v846
    %937 = vmatpush1.msra.mxu0 %v845
    %938 = vmatprep.subr.mxu0 %v842
    %939 = vmatpush1.msra.mxu0 %v841
    %940 = vmatprep.subr.mxu0 %v838
    %941 = vmatpush1.msra.mxu0 %v837
    %942 = vmatprep.subr.mxu0 %v834
    %943 = vmatpush1.msra.mxu0 %v833
    %944 = vmatprep.subr.mxu0 %v830
    %945 = vmatpush1.msra.mxu0 %v829
    %946 = vmatprep.subr.mxu0 %v826
    %947 = vmatpush1.msra.mxu0 %v825
    %948 = vmatprep.subr.mxu0 %v822
    %949 = vmatpush1.msra.mxu0 %v821
    %950 = vmatprep.subr.mxu0 %v818
    %951 = vmatpush1.msra.mxu0 %v817
    %952 = vmatprep.subr.mxu0 %v814
    %953 = vmatpush1.msra.mxu0 %v813
    %954 = vmatprep.subr.mxu0 %v810
    %955 = vmatpush1.msra.mxu0 %v809
    %956 = vmatprep.subr.mxu0 %v806
    %957 = vmatpush1.msra.mxu0 %v805
    %958 = vmatprep.subr.mxu0 %v802
    %959 = vmatpush1.msra.mxu0 %v801
    %960 = vmatprep.subr.mxu0 %v798
    %961 = vmatpush1.msra.mxu0 %v797
    %962 = vmatprep.subr.mxu0 0.0
    %963 = vmatpush2.msra.mxu0 0.0
    %964 = vmatprep.subr.mxu0 0.0
    %965 = vmatpush2.msra.mxu0 0.0
    %966 = vmatprep.subr.mxu0 0.0
    %967 = vmatpush2.msra.mxu0 0.0
    %968 = vmatprep.subr.mxu0 0.0
    %969 = vmatpush2.msra.mxu0 0.0
    %970 = vmatprep.subr.mxu0 0.0
    %971 = vmatpush2.msra.mxu0 0.0
    %972 = vmatprep.subr.mxu0 0.0
    %973 = vmatpush2.msra.mxu0 0.0
    %974 = vmatprep.subr.mxu0 0.0
    %975 = vmatpush2.msra.mxu0 0.0
    %976 = vmatprep.subr.mxu0 0.0
    %977 = vmatpush2.msra.mxu0 0.0
    %978 = vmatprep.subr.mxu0 0.0
    %979 = vmatpush2.msra.mxu0 0.0
    %980 = vmatprep.subr.mxu0 0.0
    %981 = vmatpush2.msra.mxu0 0.0
    %982 = vmatprep.subr.mxu0 0.0
    %983 = vmatpush2.msra.mxu0 0.0
    %984 = vmatprep.subr.mxu0 0.0
    %985 = vmatpush2.msra.mxu0 0.0
    %986 = vmatprep.subr.mxu0 0.0
    %987 = vmatpush2.msra.mxu0 0.0
    %988 = vmatprep.subr.mxu0 0.0
    %989 = vmatpush2.msra.mxu0 0.0
    %990 = vmatprep.subr.mxu0 0.0
    %991 = vmatpush2.msra.mxu0 0.0
    %992 = vmatprep.subr.mxu0 0.0
    %993 = vmatpush2.msra.mxu0 0.0
    %994 = vmatprep.mubr.f32.mxu0 0.0
    %995 = vmatmul.mubr.f32.gmra.mxu0 %v787
    %v996 = vpop.f32.mrf.mxu0
    %v997 = vadd.f32 0.0, %v996
    %v998 = vpop.f32.mrf.mxu0
    %v999 = vadd.f32 0.0, %v998
    %1000 = vdwg.mxu0
    %v1001 = vadd.f32 %v791, %v926
    %v1002 = vadd.f32 %v792, %v928
    %v1003 = vadd.f32 %v793, %v997
    %v1004 = vadd.f32 %v794, %v999
    %v1005 = vmul.f32 %v1001, 0.5
    %v1006 = vtanh.pop %v1005
    %v1007 = vmul.f32 %v1006, 0.5
    %v1008 = vadd.f32 %v1007, 0.5
    %v1009 = vmul.f32 %v1002, 0.5
    %v1010 = vtanh.pop %v1009
    %v1011 = vmul.f32 %v1010, 0.5
    %v1012 = vadd.f32 %v1011, 0.5
    %v1013 = vtanh.pop %v1003
    %v1014 = vmul.f32 %v1004, 0.5
    %v1015 = vtanh.pop %v1014
    %v1016 = vmul.f32 %v1015, 0.5
    %v1017 = vadd.f32 %v1016, 0.5
    %v1018 = vmul.f32 %v785, %v1008
    %v1019 = vmul.f32 %v1012, %v1013
    %v1020 = vadd.f32 %v1018, %v1019
    %v1021 = vtanh.pop %v1020
    %v1022 = vmul.f32 %v1017, %v1021
    %s1023 = smul.u32 2, 4
    %s1024 = smul.addr %s1023, 8
    %s1025 = scalar_lea.vmem [#allocation2], %s1024
    %v1026 = vld [vmem:[%s1025] sm:$0xff]
    %v1027 = vld [vmem:[%s1025 + $0x8] sm:$0xff]
    %v1028 = vld [vmem:[%s1025 + $0x10] sm:$0xff]
    %v1029 = vld [vmem:[%s1025 + $0x18] sm:$0xff]
    %1030 = vmatprep.subr.mxu0 %v856
    %1031 = vmatpush1.msra.mxu0 %v855
    %1032 = vmatprep.subr.mxu0 %v852
    %1033 = vmatpush1.msra.mxu0 %v851
    %1034 = vmatprep.subr.mxu0 %v848
    %1035 = vmatpush1.msra.mxu0 %v847
    %1036 = vmatprep.subr.mxu0 %v844
    %1037 = vmatpush1.msra.mxu0 %v843
    %1038 = vmatprep.subr.mxu0 %v840
    %1039 = vmatpush1.msra.mxu0 %v839
    %1040 = vmatprep.subr.mxu0 %v836
    %1041 = vmatpush1.msra.mxu0 %v835
    %1042 = vmatprep.subr.mxu0 %v832
    %1043 = vmatpush1.msra.mxu0 %v831
    %1044 = vmatprep.subr.mxu0 %v828
    %1045 = vmatpush1.msra.mxu0 %v827
    %1046 = vmatprep.subr.mxu0 %v824
    %1047 = vmatpush1.msra.mxu0 %v823
    %1048 = vmatprep.subr.mxu0 %v820
    %1049 = vmatpush1.msra.mxu0 %v819
    %1050 = vmatprep.subr.mxu0 %v816
    %1051 = vmatpush1.msra.mxu0 %v815
    %1052 = vmatprep.subr.mxu0 %v812
    %1053 = vmatpush1.msra.mxu0 %v811
    %1054 = vmatprep.subr.mxu0 %v808
    %1055 = vmatpush1.msra.mxu0 %v807
    %1056 = vmatprep.subr.mxu0 %v804
    %1057 = vmatpush1.msra.mxu0 %v803
    %1058 = vmatprep.subr.mxu0 %v800
    %1059 = vmatpush1.msra.mxu0 %v799
    %1060 = vmatprep.subr.mxu0 %v796
    %1061 = vmatpush1.msra.mxu0 %v795
    %1062 = vmatprep.subr.mxu0 0.0
    %1063 = vmatpush2.msra.mxu0 0.0
    %1064 = vmatprep.subr.mxu0 0.0
    %1065 = vmatpush2.msra.mxu0 0.0
    %1066 = vmatprep.subr.mxu0 0.0
    %1067 = vmatpush2.msra.mxu0 0.0
    %1068 = vmatprep.subr.mxu0 0.0
    %1069 = vmatpush2.msra.mxu0 0.0
    %1070 = vmatprep.subr.mxu0 0.0
    %1071 = vmatpush2.msra.mxu0 0.0
    %1072 = vmatprep.subr.mxu0 0.0
    %1073 = vmatpush2.msra.mxu0 0.0
    %1074 = vmatprep.subr.mxu0 0.0
    %1075 = vmatpush2.msra.mxu0 0.0
    %1076 = vmatprep.subr.mxu0 0.0
    %1077 = vmatpush2.msra.mxu0 0.0
    %1078 = vmatprep.subr.mxu0 0.0
    %1079 = vmatpush2.msra.mxu0 0.0
    %1080 = vmatprep.subr.mxu0 0.0
    %1081 = vmatpush2.msra.mxu0 0.0
    %1082 = vmatprep.subr.mxu0 0.0
    %1083 = vmatpush2.msra.mxu0 0.0
    %1084 = vmatprep.subr.mxu0 0.0
    %1085 = vmatpush2.msra.mxu0 0.0
    %1086 = vmatprep.subr.mxu0 0.0
    %1087 = vmatpush2.msra.mxu0 0.0
    %1088 = vmatprep.subr.mxu0 0.0
    %1089 = vmatpush2.msra.mxu0 0.0
    %1090 = vmatprep.subr.mxu0 0.0
    %1091 = vmatpush2.msra.mxu0 0.0
    %1092 = vmatprep.subr.mxu0 0.0
    %1093 = vmatpush2.msra.mxu0 0.0
    %1094 = vmatprep.mubr.f32.mxu0 0.0
    %1095 = vmatmul.mubr.f32.gmra.mxu0 %v1022
    %v1096 = vpop.f32.mrf.mxu0
    %v1097 = vadd.f32 0.0, %v1096
    %v1098 = vpop.f32.mrf.mxu0
    %v1099 = vadd.f32 0.0, %v1098
    %1100 = vdwg.mxu0
    %1101 = vmatprep.subr.mxu0 %v858
    %1102 = vmatpush1.msra.mxu0 %v857
    %1103 = vmatprep.subr.mxu0 %v854
    %1104 = vmatpush1.msra.mxu0 %v853
    %1105 = vmatprep.subr.mxu0 %v850
    %1106 = vmatpush1.msra.mxu0 %v849
    %1107 = vmatprep.subr.mxu0 %v846
    %1108 = vmatpush1.msra.mxu0 %v845
    %1109 = vmatprep.subr.mxu0 %v842
    %1110 = vmatpush1.msra.mxu0 %v841
    %1111 = vmatprep.subr.mxu0 %v838
    %1112 = vmatpush1.msra.mxu0 %v837
    %1113 = vmatprep.subr.mxu0 %v834
    %1114 = vmatpush1.msra.mxu0 %v833
    %1115 = vmatprep.subr.mxu0 %v830
    %1116 = vmatpush1.msra.mxu0 %v829
    %1117 = vmatprep.subr.mxu0 %v826
    %1118 = vmatpush1.msra.mxu0 %v825
    %1119 = vmatprep.subr.mxu0 %v822
    %1120 = vmatpush1.msra.mxu0 %v821
    %1121 = vmatprep.subr.mxu0 %v818
    %1122 = vmatpush1.msra.mxu0 %v817
    %1123 = vmatprep.subr.mxu0 %v814
    %1124 = vmatpush1.msra.mxu0 %v813
    %1125 = vmatprep.subr.mxu0 %v810
    %1126 = vmatpush1.msra.mxu0 %v809
    %1127 = vmatprep.subr.mxu0 %v806
    %1128 = vmatpush1.msra.mxu0 %v805
    %1129 = vmatprep.subr.mxu0 %v802
    %1130 = vmatpush1.msra.mxu0 %v801
    %1131 = vmatprep.subr.mxu0 %v798
    %1132 = vmatpush1.msra.mxu0 %v797
    %1133 = vmatprep.subr.mxu0 0.0
    %1134 = vmatpush2.msra.mxu0 0.0
    %1135 = vmatprep.subr.mxu0 0.0
    %1136 = vmatpush2.msra.mxu0 0.0
    %1137 = vmatprep.subr.mxu0 0.0
    %1138 = vmatpush2.msra.mxu0 0.0
    %1139 = vmatprep.subr.mxu0 0.0
    %1140 = vmatpush2.msra.mxu0 0.0
    %1141 = vmatprep.subr.mxu0 0.0
    %1142 = vmatpush2.msra.mxu0 0.0
    %1143 = vmatprep.subr.mxu0 0.0
    %1144 = vmatpush2.msra.mxu0 0.0
    %1145 = vmatprep.subr.mxu0 0.0
    %1146 = vmatpush2.msra.mxu0 0.0
    %1147 = vmatprep.subr.mxu0 0.0
    %1148 = vmatpush2.msra.mxu0 0.0
    %1149 = vmatprep.subr.mxu0 0.0
    %1150 = vmatpush2.msra.mxu0 0.0
    %1151 = vmatprep.subr.mxu0 0.0
    %1152 = vmatpush2.msra.mxu0 0.0
    %1153 = vmatprep.subr.mxu0 0.0
    %1154 = vmatpush2.msra.mxu0 0.0
    %1155 = vmatprep.subr.mxu0 0.0
    %1156 = vmatpush2.msra.mxu0 0.0
    %1157 = vmatprep.subr.mxu0 0.0
    %1158 = vmatpush2.msra.mxu0 0.0
    %1159 = vmatprep.subr.mxu0 0.0
    %1160 = vmatpush2.msra.mxu0 0.0
    %1161 = vmatprep.subr.mxu0 0.0
    %1162 = vmatpush2.msra.mxu0 0.0
    %1163 = vmatprep.subr.mxu0 0.0
    %1164 = vmatpush2.msra.mxu0 0.0
    %1165 = vmatprep.mubr.f32.mxu0 0.0
    %1166 = vmatmul.mubr.f32.gmra.mxu0 %v1022
    %v1167 = vpop.f32.mrf.mxu0
    %v1168 = vadd.f32 0.0, %v1167
    %v1169 = vpop.f32.mrf.mxu0
    %v1170 = vadd.f32 0.0, %v1169
    %1171 = vdwg.mxu0
    %v1172 = vadd.f32 %v1026, %v1097
    %v1173 = vadd.f32 %v1027, %v1099
    %v1174 = vadd.f32 %v1028, %v1168
    %v1175 = vadd.f32 %v1029, %v1170
    %v1176 = vmul.f32 %v1172, 0.5
    %v1177 = vtanh.pop %v1176
    %v1178 = vmul.f32 %v1177, 0.5
    %v1179 = vadd.f32 %v1178, 0.5
    %v1180 = vmul.f32 %v1173, 0.5
    %v1181 = vtanh.pop %v1180
    %v1182 = vmul.f32 %v1181, 0.5
    %v1183 = vadd.f32 %v1182, 0.5
    %v1184 = vtanh.pop %v1174
    %v1185 = vmul.f32 %v1175, 0.5
    %v1186 = vtanh.pop %v1185
    %v1187 = vmul.f32 %v1186, 0.5
    %v1188 = vadd.f32 %v1187, 0.5
    %v1189 = vmul.f32 %v1020, %v1179
    %v1190 = vmul.f32 %v1183, %v1184
    %v1191 = vadd.f32 %v1189, %v1190
    %v1192 = vtanh.pop %v1191
    %v1193 = vmul.f32 %v1188, %v1192
    %s1194 = smul.u32 3, 4
    %s1195 = smul.addr %s1194, 8
    %s1196 = scalar_lea.vmem [#allocation2], %s1195
    %v1197 = vld [vmem:[%s1196] sm:$0xff]
    %v1198 = vld [vmem:[%s1196 + $0x8] sm:$0xff]
    %v1199 = vld [vmem:[%s1196 + $0x10] sm:$0xff]
    %v1200 = vld [vmem:[%s1196 + $0x18] sm:$0xff]
    %1201 = vmatprep.subr.mxu0 %v856
    %1202 = vmatpush1.msra.mxu0 %v855
    %1203 = vmatprep.subr.mxu0 %v852
    %1204 = vmatpush1.msra.mxu0 %v851
    %1205 = vmatprep.subr.mxu0 %v848
    %1206 = vmatpush1.msra.mxu0 %v847
    %1207 = vmatprep.subr.mxu0 %v844
    %1208 = vmatpush1.msra.mxu0 %v843
    %1209 = vmatprep.subr.mxu0 %v840
    %1210 = vmatpush1.msra.mxu0 %v839
    %1211 = vmatprep.subr.mxu0 %v836
    %1212 = vmatpush1.msra.mxu0 %v835
    %1213 = vmatprep.subr.mxu0 %v832
    %1214 = vmatpush1.msra.mxu0 %v831
    %1215 = vmatprep.subr.mxu0 %v828
    %1216 = vmatpush1.msra.mxu0 %v827
    %1217 = vmatprep.subr.mxu0 %v824
    %1218 = vmatpush1.msra.mxu0 %v823
    %1219 = vmatprep.subr.mxu0 %v820
    %1220 = vmatpush1.msra.mxu0 %v819
    %1221 = vmatprep.subr.mxu0 %v816
    %1222 = vmatpush1.msra.mxu0 %v815
    %1223 = vmatprep.subr.mxu0 %v812
    %1224 = vmatpush1.msra.mxu0 %v811
    %1225 = vmatprep.subr.mxu0 %v808
    %1226 = vmatpush1.msra.mxu0 %v807
    %1227 = vmatprep.subr.mxu0 %v804
    %1228 = vmatpush1.msra.mxu0 %v803
    %1229 = vmatprep.subr.mxu0 %v800
    %1230 = vmatpush1.msra.mxu0 %v799
    %1231 = vmatprep.subr.mxu0 %v796
    %1232 = vmatpush1.msra.mxu0 %v795
    %1233 = vmatprep.subr.mxu0 0.0
    %1234 = vmatpush2.msra.mxu0 0.0
    %1235 = vmatprep.subr.mxu0 0.0
    %1236 = vmatpush2.msra.mxu0 0.0
    %1237 = vmatprep.subr.mxu0 0.0
    %1238 = vmatpush2.msra.mxu0 0.0
    %1239 = vmatprep.subr.mxu0 0.0
    %1240 = vmatpush2.msra.mxu0 0.0
    %1241 = vmatprep.subr.mxu0 0.0
    %1242 = vmatpush2.msra.mxu0 0.0
    %1243 = vmatprep.subr.mxu0 0.0
    %1244 = vmatpush2.msra.mxu0 0.0
    %1245 = vmatprep.subr.mxu0 0.0
    %1246 = vmatpush2.msra.mxu0 0.0
    %1247 = vmatprep.subr.mxu0 0.0
    %1248 = vmatpush2.msra.mxu0 0.0
    %1249 = vmatprep.subr.mxu0 0.0
    %1250 = vmatpush2.msra.mxu0 0.0
    %1251 = vmatprep.subr.mxu0 0.0
    %1252 = vmatpush2.msra.mxu0 0.0
    %1253 = vmatprep.subr.mxu0 0.0
    %1254 = vmatpush2.msra.mxu0 0.0
    %1255 = vmatprep.subr.mxu0 0.0
    %1256 = vmatpush2.msra.mxu0 0.0
    %1257 = vmatprep.subr.mxu0 0.0
    %1258 = vmatpush2.msra.mxu0 0.0
    %1259 = vmatprep.subr.mxu0 0.0
    %1260 = vmatpush2.msra.mxu0 0.0
    %1261 = vmatprep.subr.mxu0 0.0
    %1262 = vmatpush2.msra.mxu0 0.0
    %1263 = vmatprep.subr.mxu0 0.0
    %1264 = vmatpush2.msra.mxu0 0.0
    %1265 = vmatprep.mubr.f32.mxu0 0.0
    %1266 = vmatmul.mubr.f32.gmra.mxu0 %v1193
    %v1267 = vpop.f32.mrf.mxu0
    %v1268 = vadd.f32 0.0, %v1267
    %v1269 = vpop.f32.mrf.mxu0
    %v1270 = vadd.f32 0.0, %v1269
    %1271 = vdwg.mxu0
    %1272 = vmatprep.subr.mxu0 %v858
    %1273 = vmatpush1.msra.mxu0 %v857
    %1274 = vmatprep.subr.mxu0 %v854
    %1275 = vmatpush1.msra.mxu0 %v853
    %1276 = vmatprep.subr.mxu0 %v850
    %1277 = vmatpush1.msra.mxu0 %v849
    %1278 = vmatprep.subr.mxu0 %v846
    %1279 = vmatpush1.msra.mxu0 %v845
    %1280 = vmatprep.subr.mxu0 %v842
    %1281 = vmatpush1.msra.mxu0 %v841
    %1282 = vmatprep.subr.mxu0 %v838
    %1283 = vmatpush1.msra.mxu0 %v837
    %1284 = vmatprep.subr.mxu0 %v834
    %1285 = vmatpush1.msra.mxu0 %v833
    %1286 = vmatprep.subr.mxu0 %v830
    %1287 = vmatpush1.msra.mxu0 %v829
    %1288 = vmatprep.subr.mxu0 %v826
    %1289 = vmatpush1.msra.mxu0 %v825
    %1290 = vmatprep.subr.mxu0 %v822
    %1291 = vmatpush1.msra.mxu0 %v821
    %1292 = vmatprep.subr.mxu0 %v818
    %1293 = vmatpush1.msra.mxu0 %v817
    %1294 = vmatprep.subr.mxu0 %v814
    %1295 = vmatpush1.msra.mxu0 %v813
    %1296 = vmatprep.subr.mxu0 %v810
    %1297 = vmatpush1.msra.mxu0 %v809
    %1298 = vmatprep.subr.mxu0 %v806
    %1299 = vmatpush1.msra.mxu0 %v805
    %1300 = vmatprep.subr.mxu0 %v802
    %1301 = vmatpush1.msra.mxu0 %v801
    %1302 = vmatprep.subr.mxu0 %v798
    %1303 = vmatpush1.msra.mxu0 %v797
    %1304 = vmatprep.subr.mxu0 0.0
    %1305 = vmatpush2.msra.mxu0 0.0
    %1306 = vmatprep.subr.mxu0 0.0
    %1307 = vmatpush2.msra.mxu0 0.0
    %1308 = vmatprep.subr.mxu0 0.0
    %1309 = vmatpush2.msra.mxu0 0.0
    %1310 = vmatprep.subr.mxu0 0.0
    %1311 = vmatpush2.msra.mxu0 0.0
    %1312 = vmatprep.subr.mxu0 0.0
    %1313 = vmatpush2.msra.mxu0 0.0
    %1314 = vmatprep.subr.mxu0 0.0
    %1315 = vmatpush2.msra.mxu0 0.0
    %1316 = vmatprep.subr.mxu0 0.0
    %1317 = vmatpush2.msra.mxu0 0.0
    %1318 = vmatprep.subr.mxu0 0.0
    %1319 = vmatpush2.msra.mxu0 0.0
    %1320 = vmatprep.subr.mxu0 0.0
    %1321 = vmatpush2.msra.mxu0 0.0
    %1322 = vmatprep.subr.mxu0 0.0
    %1323 = vmatpush2.msra.mxu0 0.0
    %1324 = vmatprep.subr.mxu0 0.0
    %1325 = vmatpush2.msra.mxu0 0.0
    %1326 = vmatprep.subr.mxu0 0.0
    %1327 = vmatpush2.msra.mxu0 0.0
    %1328 = vmatprep.subr.mxu0 0.0
    %1329 = vmatpush2.msra.mxu0 0.0
    %1330 = vmatprep.subr.mxu0 0.0
    %1331 = vmatpush2.msra.mxu0 0.0
    %1332 = vmatprep.subr.mxu0 0.0
    %1333 = vmatpush2.msra.mxu0 0.0
    %1334 = vmatprep.subr.mxu0 0.0
    %1335 = vmatpush2.msra.mxu0 0.0
    %1336 = vmatprep.mubr.f32.mxu0 0.0
    %1337 = vmatmul.mubr.f32.gmra.mxu0 %v1193
    %v1338 = vpop.f32.mrf.mxu0
    %v1339 = vadd.f32 0.0, %v1338
    %v1340 = vpop.f32.mrf.mxu0
    %v1341 = vadd.f32 0.0, %v1340
    %1342 = vdwg.mxu0
    %v1343 = vadd.f32 %v1197, %v1268
    %v1344 = vadd.f32 %v1198, %v1270
    %v1345 = vadd.f32 %v1199, %v1339
    %v1346 = vadd.f32 %v1200, %v1341
    %v1347 = vmul.f32 %v1343, 0.5
    %v1348 = vtanh.pop %v1347
    %v1349 = vmul.f32 %v1348, 0.5
    %v1350 = vadd.f32 %v1349, 0.5
    %v1351 = vmul.f32 %v1344, 0.5
    %v1352 = vtanh.pop %v1351
    %v1353 = vmul.f32 %v1352, 0.5
    %v1354 = vadd.f32 %v1353, 0.5
    %v1355 = vtanh.pop %v1345
    %v1356 = vmul.f32 %v1346, 0.5
    %v1357 = vtanh.pop %v1356
    %v1358 = vmul.f32 %v1357, 0.5
    %v1359 = vadd.f32 %v1358, 0.5
    %v1360 = vmul.f32 %v1191, %v1350
    %v1361 = vmul.f32 %v1354, %v1355
    %v1362 = vadd.f32 %v1360, %v1361
    %v1363 = vtanh.pop %v1362
    %v1364 = vmul.f32 %v1359, %v1363
    %s1365 = smul.u32 4, 4
    %s1366 = smul.addr %s1365, 8
    %s1367 = scalar_lea.vmem [#allocation2], %s1366
    %v1368 = vld [vmem:[%s1367] sm:$0xff]
    %v1369 = vld [vmem:[%s1367 + $0x8] sm:$0xff]
    %v1370 = vld [vmem:[%s1367 + $0x10] sm:$0xff]
    %v1371 = vld [vmem:[%s1367 + $0x18] sm:$0xff]
    %1372 = vmatprep.subr.mxu0 %v856
    %1373 = vmatpush1.msra.mxu0 %v855
    %1374 = vmatprep.subr.mxu0 %v852
    %1375 = vmatpush1.msra.mxu0 %v851
    %1376 = vmatprep.subr.mxu0 %v848
    %1377 = vmatpush1.msra.mxu0 %v847
    %1378 = vmatprep.subr.mxu0 %v844
    %1379 = vmatpush1.msra.mxu0 %v843
    %1380 = vmatprep.subr.mxu0 %v840
    %1381 = vmatpush1.msra.mxu0 %v839
    %1382 = vmatprep.subr.mxu0 %v836
    %1383 = vmatpush1.msra.mxu0 %v835
    %1384 = vmatprep.subr.mxu0 %v832
    %1385 = vmatpush1.msra.mxu0 %v831
    %1386 = vmatprep.subr.mxu0 %v828
    %1387 = vmatpush1.msra.mxu0 %v827
    %1388 = vmatprep.subr.mxu0 %v824
    %1389 = vmatpush1.msra.mxu0 %v823
    %1390 = vmatprep.subr.mxu0 %v820
    %1391 = vmatpush1.msra.mxu0 %v819
    %1392 = vmatprep.subr.mxu0 %v816
    %1393 = vmatpush1.msra.mxu0 %v815
    %1394 = vmatprep.subr.mxu0 %v812
    %1395 = vmatpush1.msra.mxu0 %v811
    %1396 = vmatprep.subr.mxu0 %v808
    %1397 = vmatpush1.msra.mxu0 %v807
    %1398 = vmatprep.subr.mxu0 %v804
    %1399 = vmatpush1.msra.mxu0 %v803
    %1400 = vmatprep.subr.mxu0 %v800
    %1401 = vmatpush1.msra.mxu0 %v799
    %1402 = vmatprep.subr.mxu0 %v796
    %1403 = vmatpush1.msra.mxu0 %v795
    %1404 = vmatprep.subr.mxu0 0.0
    %1405 = vmatpush2.msra.mxu0 0.0
    %1406 = vmatprep.subr.mxu0 0.0
    %1407 = vmatpush2.msra.mxu0 0.0
    %1408 = vmatprep.subr.mxu0 0.0
    %1409 = vmatpush2.msra.mxu0 0.0
    %1410 = vmatprep.subr.mxu0 0.0
    %1411 = vmatpush2.msra.mxu0 0.0
    %1412 = vmatprep.subr.mxu0 0.0
    %1413 = vmatpush2.msra.mxu0 0.0
    %1414 = vmatprep.subr.mxu0 0.0
    %1415 = vmatpush2.msra.mxu0 0.0
    %1416 = vmatprep.subr.mxu0 0.0
    %1417 = vmatpush2.msra.mxu0 0.0
    %1418 = vmatprep.subr.mxu0 0.0
    %1419 = vmatpush2.msra.mxu0 0.0
    %1420 = vmatprep.subr.mxu0 0.0
    %1421 = vmatpush2.msra.mxu0 0.0
    %1422 = vmatprep.subr.mxu0 0.0
    %1423 = vmatpush2.msra.mxu0 0.0
    %1424 = vmatprep.subr.mxu0 0.0
    %1425 = vmatpush2.msra.mxu0 0.0
    %1426 = vmatprep.subr.mxu0 0.0
    %1427 = vmatpush2.msra.mxu0 0.0
    %1428 = vmatprep.subr.mxu0 0.0
    %1429 = vmatpush2.msra.mxu0 0.0
    %1430 = vmatprep.subr.mxu0 0.0
    %1431 = vmatpush2.msra.mxu0 0.0
    %1432 = vmatprep.subr.mxu0 0.0
    %1433 = vmatpush2.msra.mxu0 0.0
    %1434 = vmatprep.subr.mxu0 0.0
    %1435 = vmatpush2.msra.mxu0 0.0
    %1436 = vmatprep.mubr.f32.mxu0 0.0
    %1437 = vmatmul.mubr.f32.gmra.mxu0 %v1364
    %v1438 = vpop.f32.mrf.mxu0
    %v1439 = vadd.f32 0.0, %v1438
    %v1440 = vpop.f32.mrf.mxu0
    %v1441 = vadd.f32 0.0, %v1440
    %1442 = vdwg.mxu0
    %1443 = vmatprep.subr.mxu0 %v858
    %1444 = vmatpush1.msra.mxu0 %v857
    %1445 = vmatprep.subr.mxu0 %v854
    %1446 = vmatpush1.msra.mxu0 %v853
    %1447 = vmatprep.subr.mxu0 %v850
    %1448 = vmatpush1.msra.mxu0 %v849
    %1449 = vmatprep.subr.mxu0 %v846
    %1450 = vmatpush1.msra.mxu0 %v845
    %1451 = vmatprep.subr.mxu0 %v842
    %1452 = vmatpush1.msra.mxu0 %v841
    %1453 = vmatprep.subr.mxu0 %v838
    %1454 = vmatpush1.msra.mxu0 %v837
    %1455 = vmatprep.subr.mxu0 %v834
    %1456 = vmatpush1.msra.mxu0 %v833
    %1457 = vmatprep.subr.mxu0 %v830
    %1458 = vmatpush1.msra.mxu0 %v829
    %1459 = vmatprep.subr.mxu0 %v826
    %1460 = vmatpush1.msra.mxu0 %v825
    %1461 = vmatprep.subr.mxu0 %v822
    %1462 = vmatpush1.msra.mxu0 %v821
    %1463 = vmatprep.subr.mxu0 %v818
    %1464 = vmatpush1.msra.mxu0 %v817
    %1465 = vmatprep.subr.mxu0 %v814
    %1466 = vmatpush1.msra.mxu0 %v813
    %1467 = vmatprep.subr.mxu0 %v810
    %1468 = vmatpush1.msra.mxu0 %v809
    %1469 = vmatprep.subr.mxu0 %v806
    %1470 = vmatpush1.msra.mxu0 %v805
    %1471 = vmatprep.subr.mxu0 %v802
    %1472 = vmatpush1.msra.mxu0 %v801
    %1473 = vmatprep.subr.mxu0 %v798
    %1474 = vmatpush1.msra.mxu0 %v797
    %1475 = vmatprep.subr.mxu0 0.0
    %1476 = vmatpush2.msra.mxu0 0.0
    %1477 = vmatprep.subr.mxu0 0.0
    %1478 = vmatpush2.msra.mxu0 0.0
    %1479 = vmatprep.subr.mxu0 0.0
    %1480 = vmatpush2.msra.mxu0 0.0
    %1481 = vmatprep.subr.mxu0 0.0
    %1482 = vmatpush2.msra.mxu0 0.0
    %1483 = vmatprep.subr.mxu0 0.0
    %1484 = vmatpush2.msra.mxu0 0.0
    %1485 = vmatprep.subr.mxu0 0.0
    %1486 = vmatpush2.msra.mxu0 0.0
    %1487 = vmatprep.subr.mxu0 0.0
    %1488 = vmatpush2.msra.mxu0 0.0
    %1489 = vmatprep.subr.mxu0 0.0
    %1490 = vmatpush2.msra.mxu0 0.0
    %1491 = vmatprep.subr.mxu0 0.0
    %1492 = vmatpush2.msra.mxu0 0.0
    %1493 = vmatprep.subr.mxu0 0.0
    %1494 = vmatpush2.msra.mxu0 0.0
    %1495 = vmatprep.subr.mxu0 0.0
    %1496 = vmatpush2.msra.mxu0 0.0
    %1497 = vmatprep.subr.mxu0 0.0
    %1498 = vmatpush2.msra.mxu0 0.0
    %1499 = vmatprep.subr.mxu0 0.0
    %1500 = vmatpush2.msra.mxu0 0.0
    %1501 = vmatprep.subr.mxu0 0.0
    %1502 = vmatpush2.msra.mxu0 0.0
    %1503 = vmatprep.subr.mxu0 0.0
    %1504 = vmatpush2.msra.mxu0 0.0
    %1505 = vmatprep.subr.mxu0 0.0
    %1506 = vmatpush2.msra.mxu0 0.0
    %1507 = vmatprep.mubr.f32.mxu0 0.0
    %1508 = vmatmul.mubr.f32.gmra.mxu0 %v1364
    %v1509 = vpop.f32.mrf.mxu0
    %v1510 = vadd.f32 0.0, %v1509
    %v1511 = vpop.f32.mrf.mxu0
    %v1512 = vadd.f32 0.0, %v1511
    %1513 = vdwg.mxu0
    %v1514 = vadd.f32 %v1368, %v1439
    %v1515 = vadd.f32 %v1369, %v1441
    %v1516 = vadd.f32 %v1370, %v1510
    %v1517 = vadd.f32 %v1371, %v1512
    %v1518 = vmul.f32 %v1514, 0.5
    %v1519 = vtanh.pop %v1518
    %v1520 = vmul.f32 %v1519, 0.5
    %v1521 = vadd.f32 %v1520, 0.5
    %v1522 = vmul.f32 %v1515, 0.5
    %v1523 = vtanh.pop %v1522
    %v1524 = vmul.f32 %v1523, 0.5
    %v1525 = vadd.f32 %v1524, 0.5
    %v1526 = vtanh.pop %v1516
    %v1527 = vmul.f32 %v1517, 0.5
    %v1528 = vtanh.pop %v1527
    %v1529 = vmul.f32 %v1528, 0.5
    %v1530 = vadd.f32 %v1529, 0.5
    %v1531 = vmul.f32 %v1362, %v1521
    %v1532 = vmul.f32 %v1525, %v1526
    %v1533 = vadd.f32 %v1531, %v1532
    %v1534 = vtanh.pop %v1533
    %v1535 = vmul.f32 %v1530, %v1534
    %s1536 = smul.u32 5, 4
    %s1537 = smul.addr %s1536, 8
    %s1538 = scalar_lea.vmem [#allocation2], %s1537
    %v1539 = vld [vmem:[%s1538] sm:$0xff]
    %v1540 = vld [vmem:[%s1538 + $0x8] sm:$0xff]
    %v1541 = vld [vmem:[%s1538 + $0x10] sm:$0xff]
    %v1542 = vld [vmem:[%s1538 + $0x18] sm:$0xff]
    %1543 = vmatprep.subr.mxu0 %v856
    %1544 = vmatpush1.msra.mxu0 %v855
    %1545 = vmatprep.subr.mxu0 %v852
    %1546 = vmatpush1.msra.mxu0 %v851
    %1547 = vmatprep.subr.mxu0 %v848
    %1548 = vmatpush1.msra.mxu0 %v847
    %1549 = vmatprep.subr.mxu0 %v844
    %1550 = vmatpush1.msra.mxu0 %v843
    %1551 = vmatprep.subr.mxu0 %v840
    %1552 = vmatpush1.msra.mxu0 %v839
    %1553 = vmatprep.subr.mxu0 %v836
    %1554 = vmatpush1.msra.mxu0 %v835
    %1555 = vmatprep.subr.mxu0 %v832
    %1556 = vmatpush1.msra.mxu0 %v831
    %1557 = vmatprep.subr.mxu0 %v828
    %1558 = vmatpush1.msra.mxu0 %v827
    %1559 = vmatprep.subr.mxu0 %v824
    %1560 = vmatpush1.msra.mxu0 %v823
    %1561 = vmatprep.subr.mxu0 %v820
    %1562 = vmatpush1.msra.mxu0 %v819
    %1563 = vmatprep.subr.mxu0 %v816
    %1564 = vmatpush1.msra.mxu0 %v815
    %1565 = vmatprep.subr.mxu0 %v812
    %1566 = vmatpush1.msra.mxu0 %v811
    %1567 = vmatprep.subr.mxu0 %v808
    %1568 = vmatpush1.msra.mxu0 %v807
    %1569 = vmatprep.subr.mxu0 %v804
    %1570 = vmatpush1.msra.mxu0 %v803
    %1571 = vmatprep.subr.mxu0 %v800
    %1572 = vmatpush1.msra.mxu0 %v799
    %1573 = vmatprep.subr.mxu0 %v796
    %1574 = vmatpush1.msra.mxu0 %v795
    %1575 = vmatprep.subr.mxu0 0.0
    %1576 = vmatpush2.msra.mxu0 0.0
    %1577 = vmatprep.subr.mxu0 0.0
    %1578 = vmatpush2.msra.mxu0 0.0
    %1579 = vmatprep.subr.mxu0 0.0
    %1580 = vmatpush2.msra.mxu0 0.0
    %1581 = vmatprep.subr.mxu0 0.0
    %1582 = vmatpush2.msra.mxu0 0.0
    %1583 = vmatprep.subr.mxu0 0.0
    %1584 = vmatpush2.msra.mxu0 0.0
    %1585 = vmatprep.subr.mxu0 0.0
    %1586 = vmatpush2.msra.mxu0 0.0
    %1587 = vmatprep.subr.mxu0 0.0
    %1588 = vmatpush2.msra.mxu0 0.0
    %1589 = vmatprep.subr.mxu0 0.0
    %1590 = vmatpush2.msra.mxu0 0.0
    %1591 = vmatprep.subr.mxu0 0.0
    %1592 = vmatpush2.msra.mxu0 0.0
    %1593 = vmatprep.subr.mxu0 0.0
    %1594 = vmatpush2.msra.mxu0 0.0
    %1595 = vmatprep.subr.mxu0 0.0
    %1596 = vmatpush2.msra.mxu0 0.0
    %1597 = vmatprep.subr.mxu0 0.0
    %1598 = vmatpush2.msra.mxu0 0.0
    %1599 = vmatprep.subr.mxu0 0.0
    %1600 = vmatpush2.msra.mxu0 0.0
    %1601 = vmatprep.subr.mxu0 0.0
    %1602 = vmatpush2.msra.mxu0 0.0
    %1603 = vmatprep.subr.mxu0 0.0
    %1604 = vmatpush2.msra.mxu0 0.0
    %1605 = vmatprep.subr.mxu0 0.0
    %1606 = vmatpush2.msra.mxu0 0.0
    %1607 = vmatprep.mubr.f32.mxu0 0.0
    %1608 = vmatmul.mubr.f32.gmra.mxu0 %v1535
    %v1609 = vpop.f32.mrf.mxu0
    %v1610 = vadd.f32 0.0, %v1609
    %v1611 = vpop.f32.mrf.mxu0
    %v1612 = vadd.f32 0.0, %v1611
    %1613 = vdwg.mxu0
    %1614 = vmatprep.subr.mxu0 %v858
    %1615 = vmatpush1.msra.mxu0 %v857
    %1616 = vmatprep.subr.mxu0 %v854
    %1617 = vmatpush1.msra.mxu0 %v853
    %1618 = vmatprep.subr.mxu0 %v850
    %1619 = vmatpush1.msra.mxu0 %v849
    %1620 = vmatprep.subr.mxu0 %v846
    %1621 = vmatpush1.msra.mxu0 %v845
    %1622 = vmatprep.subr.mxu0 %v842
    %1623 = vmatpush1.msra.mxu0 %v841
    %1624 = vmatprep.subr.mxu0 %v838
    %1625 = vmatpush1.msra.mxu0 %v837
    %1626 = vmatprep.subr.mxu0 %v834
    %1627 = vmatpush1.msra.mxu0 %v833
    %1628 = vmatprep.subr.mxu0 %v830
    %1629 = vmatpush1.msra.mxu0 %v829
    %1630 = vmatprep.subr.mxu0 %v826
    %1631 = vmatpush1.msra.mxu0 %v825
    %1632 = vmatprep.subr.mxu0 %v822
    %1633 = vmatpush1.msra.mxu0 %v821
    %1634 = vmatprep.subr.mxu0 %v818
    %1635 = vmatpush1.msra.mxu0 %v817
    %1636 = vmatprep.subr.mxu0 %v814
    %1637 = vmatpush1.msra.mxu0 %v813
    %1638 = vmatprep.subr.mxu0 %v810
    %1639 = vmatpush1.msra.mxu0 %v809
    %1640 = vmatprep.subr.mxu0 %v806
    %1641 = vmatpush1.msra.mxu0 %v805
    %1642 = vmatprep.subr.mxu0 %v802
    %1643 = vmatpush1.msra.mxu0 %v801
    %1644 = vmatprep.subr.mxu0 %v798
    %1645 = vmatpush1.msra.mxu0 %v797
    %1646 = vmatprep.subr.mxu0 0.0
    %1647 = vmatpush2.msra.mxu0 0.0
    %1648 = vmatprep.subr.mxu0 0.0
    %1649 = vmatpush2.msra.mxu0 0.0
    %1650 = vmatprep.subr.mxu0 0.0
    %1651 = vmatpush2.msra.mxu0 0.0
    %1652 = vmatprep.subr.mxu0 0.0
    %1653 = vmatpush2.msra.mxu0 0.0
    %1654 = vmatprep.subr.mxu0 0.0
    %1655 = vmatpush2.msra.mxu0 0.0
    %1656 = vmatprep.subr.mxu0 0.0
    %1657 = vmatpush2.msra.mxu0 0.0
    %1658 = vmatprep.subr.mxu0 0.0
    %1659 = vmatpush2.msra.mxu0 0.0
    %1660 = vmatprep.subr.mxu0 0.0
    %1661 = vmatpush2.msra.mxu0 0.0
    %1662 = vmatprep.subr.mxu0 0.0
    %1663 = vmatpush2.msra.mxu0 0.0
    %1664 = vmatprep.subr.mxu0 0.0
    %1665 = vmatpush2.msra.mxu0 0.0
    %1666 = vmatprep.subr.mxu0 0.0
    %1667 = vmatpush2.msra.mxu0 0.0
    %1668 = vmatprep.subr.mxu0 0.0
    %1669 = vmatpush2.msra.mxu0 0.0
    %1670 = vmatprep.subr.mxu0 0.0
    %1671 = vmatpush2.msra.mxu0 0.0
    %1672 = vmatprep.subr.mxu0 0.0
    %1673 = vmatpush2.msra.mxu0 0.0
    %1674 = vmatprep.subr.mxu0 0.0
    %1675 = vmatpush2.msra.mxu0 0.0
    %1676 = vmatprep.subr.mxu0 0.0
    %1677 = vmatpush2.msra.mxu0 0.0
    %1678 = vmatprep.mubr.f32.mxu0 0.0
    %1679 = vmatmul.mubr.f32.gmra.mxu0 %v1535
    %v1680 = vpop.f32.mrf.mxu0
    %v1681 = vadd.f32 0.0, %v1680
    %v1682 = vpop.f32.mrf.mxu0
    %v1683 = vadd.f32 0.0, %v1682
    %1684 = vdwg.mxu0
    %v1685 = vadd.f32 %v1539, %v1610
    %v1686 = vadd.f32 %v1540, %v1612
    %v1687 = vadd.f32 %v1541, %v1681
    %v1688 = vadd.f32 %v1542, %v1683
    %v1689 = vmul.f32 %v1685, 0.5
    %v1690 = vtanh.pop %v1689
    %v1691 = vmul.f32 %v1690, 0.5
    %v1692 = vadd.f32 %v1691, 0.5
    %v1693 = vmul.f32 %v1686, 0.5
    %v1694 = vtanh.pop %v1693
    %v1695 = vmul.f32 %v1694, 0.5
    %v1696 = vadd.f32 %v1695, 0.5
    %v1697 = vtanh.pop %v1687
    %v1698 = vmul.f32 %v1688, 0.5
    %v1699 = vtanh.pop %v1698
    %v1700 = vmul.f32 %v1699, 0.5
    %v1701 = vadd.f32 %v1700, 0.5
    %v1702 = vmul.f32 %v1533, %v1692
    %v1703 = vmul.f32 %v1696, %v1697
    %v1704 = vadd.f32 %v1702, %v1703
    %v1705 = vtanh.pop %v1704
    %v1706 = vmul.f32 %v1701, %v1705
    %s1707 = smul.u32 6, 4
    %s1708 = smul.addr %s1707, 8
    %s1709 = scalar_lea.vmem [#allocation2], %s1708
    %v1710 = vld [vmem:[%s1709] sm:$0xff]
    %v1711 = vld [vmem:[%s1709 + $0x8] sm:$0xff]
    %v1712 = vld [vmem:[%s1709 + $0x10] sm:$0xff]
    %v1713 = vld [vmem:[%s1709 + $0x18] sm:$0xff]
    %1714 = vmatprep.subr.mxu0 %v856
    %1715 = vmatpush1.msra.mxu0 %v855
    %1716 = vmatprep.subr.mxu0 %v852
    %1717 = vmatpush1.msra.mxu0 %v851
    %1718 = vmatprep.subr.mxu0 %v848
    %1719 = vmatpush1.msra.mxu0 %v847
    %1720 = vmatprep.subr.mxu0 %v844
    %1721 = vmatpush1.msra.mxu0 %v843
    %1722 = vmatprep.subr.mxu0 %v840
    %1723 = vmatpush1.msra.mxu0 %v839
    %1724 = vmatprep.subr.mxu0 %v836
    %1725 = vmatpush1.msra.mxu0 %v835
    %1726 = vmatprep.subr.mxu0 %v832
    %1727 = vmatpush1.msra.mxu0 %v831
    %1728 = vmatprep.subr.mxu0 %v828
    %1729 = vmatpush1.msra.mxu0 %v827
    %1730 = vmatprep.subr.mxu0 %v824
    %1731 = vmatpush1.msra.mxu0 %v823
    %1732 = vmatprep.subr.mxu0 %v820
    %1733 = vmatpush1.msra.mxu0 %v819
    %1734 = vmatprep.subr.mxu0 %v816
    %1735 = vmatpush1.msra.mxu0 %v815
    %1736 = vmatprep.subr.mxu0 %v812
    %1737 = vmatpush1.msra.mxu0 %v811
    %1738 = vmatprep.subr.mxu0 %v808
    %1739 = vmatpush1.msra.mxu0 %v807
    %1740 = vmatprep.subr.mxu0 %v804
    %1741 = vmatpush1.msra.mxu0 %v803
    %1742 = vmatprep.subr.mxu0 %v800
    %1743 = vmatpush1.msra.mxu0 %v799
    %1744 = vmatprep.subr.mxu0 %v796
    %1745 = vmatpush1.msra.mxu0 %v795
    %1746 = vmatprep.subr.mxu0 0.0
    %1747 = vmatpush2.msra.mxu0 0.0
    %1748 = vmatprep.subr.mxu0 0.0
    %1749 = vmatpush2.msra.mxu0 0.0
    %1750 = vmatprep.subr.mxu0 0.0
    %1751 = vmatpush2.msra.mxu0 0.0
    %1752 = vmatprep.subr.mxu0 0.0
    %1753 = vmatpush2.msra.mxu0 0.0
    %1754 = vmatprep.subr.mxu0 0.0
    %1755 = vmatpush2.msra.mxu0 0.0
    %1756 = vmatprep.subr.mxu0 0.0
    %1757 = vmatpush2.msra.mxu0 0.0
    %1758 = vmatprep.subr.mxu0 0.0
    %1759 = vmatpush2.msra.mxu0 0.0
    %1760 = vmatprep.subr.mxu0 0.0
    %1761 = vmatpush2.msra.mxu0 0.0
    %1762 = vmatprep.subr.mxu0 0.0
    %1763 = vmatpush2.msra.mxu0 0.0
    %1764 = vmatprep.subr.mxu0 0.0
    %1765 = vmatpush2.msra.mxu0 0.0
    %1766 = vmatprep.subr.mxu0 0.0
    %1767 = vmatpush2.msra.mxu0 0.0
    %1768 = vmatprep.subr.mxu0 0.0
    %1769 = vmatpush2.msra.mxu0 0.0
    %1770 = vmatprep.subr.mxu0 0.0
    %1771 = vmatpush2.msra.mxu0 0.0
    %1772 = vmatprep.subr.mxu0 0.0
    %1773 = vmatpush2.msra.mxu0 0.0
    %1774 = vmatprep.subr.mxu0 0.0
    %1775 = vmatpush2.msra.mxu0 0.0
    %1776 = vmatprep.subr.mxu0 0.0
    %1777 = vmatpush2.msra.mxu0 0.0
    %1778 = vmatprep.mubr.f32.mxu0 0.0
    %1779 = vmatmul.mubr.f32.gmra.mxu0 %v1706
    %v1780 = vpop.f32.mrf.mxu0
    %v1781 = vadd.f32 0.0, %v1780
    %v1782 = vpop.f32.mrf.mxu0
    %v1783 = vadd.f32 0.0, %v1782
    %1784 = vdwg.mxu0
    %1785 = vmatprep.subr.mxu0 %v858
    %1786 = vmatpush1.msra.mxu0 %v857
    %1787 = vmatprep.subr.mxu0 %v854
    %1788 = vmatpush1.msra.mxu0 %v853
    %1789 = vmatprep.subr.mxu0 %v850
    %1790 = vmatpush1.msra.mxu0 %v849
    %1791 = vmatprep.subr.mxu0 %v846
    %1792 = vmatpush1.msra.mxu0 %v845
    %1793 = vmatprep.subr.mxu0 %v842
    %1794 = vmatpush1.msra.mxu0 %v841
    %1795 = vmatprep.subr.mxu0 %v838
    %1796 = vmatpush1.msra.mxu0 %v837
    %1797 = vmatprep.subr.mxu0 %v834
    %1798 = vmatpush1.msra.mxu0 %v833
    %1799 = vmatprep.subr.mxu0 %v830
    %1800 = vmatpush1.msra.mxu0 %v829
    %1801 = vmatprep.subr.mxu0 %v826
    %1802 = vmatpush1.msra.mxu0 %v825
    %1803 = vmatprep.subr.mxu0 %v822
    %1804 = vmatpush1.msra.mxu0 %v821
    %1805 = vmatprep.subr.mxu0 %v818
    %1806 = vmatpush1.msra.mxu0 %v817
    %1807 = vmatprep.subr.mxu0 %v814
    %1808 = vmatpush1.msra.mxu0 %v813
    %1809 = vmatprep.subr.mxu0 %v810
    %1810 = vmatpush1.msra.mxu0 %v809
    %1811 = vmatprep.subr.mxu0 %v806
    %1812 = vmatpush1.msra.mxu0 %v805
    %1813 = vmatprep.subr.mxu0 %v802
    %1814 = vmatpush1.msra.mxu0 %v801
    %1815 = vmatprep.subr.mxu0 %v798
    %1816 = vmatpush1.msra.mxu0 %v797
    %1817 = vmatprep.subr.mxu0 0.0
    %1818 = vmatpush2.msra.mxu0 0.0
    %1819 = vmatprep.subr.mxu0 0.0
    %1820 = vmatpush2.msra.mxu0 0.0
    %1821 = vmatprep.subr.mxu0 0.0
    %1822 = vmatpush2.msra.mxu0 0.0
    %1823 = vmatprep.subr.mxu0 0.0
    %1824 = vmatpush2.msra.mxu0 0.0
    %1825 = vmatprep.subr.mxu0 0.0
    %1826 = vmatpush2.msra.mxu0 0.0
    %1827 = vmatprep.subr.mxu0 0.0
    %1828 = vmatpush2.msra.mxu0 0.0
    %1829 = vmatprep.subr.mxu0 0.0
    %1830 = vmatpush2.msra.mxu0 0.0
    %1831 = vmatprep.subr.mxu0 0.0
    %1832 = vmatpush2.msra.mxu0 0.0
    %1833 = vmatprep.subr.mxu0 0.0
    %1834 = vmatpush2.msra.mxu0 0.0
    %1835 = vmatprep.subr.mxu0 0.0
    %1836 = vmatpush2.msra.mxu0 0.0
    %1837 = vmatprep.subr.mxu0 0.0
    %1838 = vmatpush2.msra.mxu0 0.0
    %1839 = vmatprep.subr.mxu0 0.0
    %1840 = vmatpush2.msra.mxu0 0.0
    %1841 = vmatprep.subr.mxu0 0.0
    %1842 = vmatpush2.msra.mxu0 0.0
    %1843 = vmatprep.subr.mxu0 0.0
    %1844 = vmatpush2.msra.mxu0 0.0
    %1845 = vmatprep.subr.mxu0 0.0
    %1846 = vmatpush2.msra.mxu0 0.0
    %1847 = vmatprep.subr.mxu0 0.0
    %1848 = vmatpush2.msra.mxu0 0.0
    %1849 = vmatprep.mubr.f32.mxu0 0.0
    %1850 = vmatmul.mubr.f32.gmra.mxu0 %v1706
    %v1851 = vpop.f32.mrf.mxu0
    %v1852 = vadd.f32 0.0, %v1851
    %v1853 = vpop.f32.mrf.mxu0
    %v1854 = vadd.f32 0.0, %v1853
    %1855 = vdwg.mxu0
    %v1856 = vadd.f32 %v1710, %v1781
    %v1857 = vadd.f32 %v1711, %v1783
    %v1858 = vadd.f32 %v1712, %v1852
    %v1859 = vadd.f32 %v1713, %v1854
    %v1860 = vmul.f32 %v1856, 0.5
    %v1861 = vtanh.pop %v1860
    %v1862 = vmul.f32 %v1861, 0.5
    %v1863 = vadd.f32 %v1862, 0.5
    %v1864 = vmul.f32 %v1857, 0.5
    %v1865 = vtanh.pop %v1864
    %v1866 = vmul.f32 %v1865, 0.5
    %v1867 = vadd.f32 %v1866, 0.5
    %v1868 = vtanh.pop %v1858
    %v1869 = vmul.f32 %v1859, 0.5
    %v1870 = vtanh.pop %v1869
    %v1871 = vmul.f32 %v1870, 0.5
    %v1872 = vadd.f32 %v1871, 0.5
    %v1873 = vmul.f32 %v1704, %v1863
    %v1874 = vmul.f32 %v1867, %v1868
    %v1875 = vadd.f32 %v1873, %v1874
    %v1876 = vtanh.pop %v1875
    %v1877 = vmul.f32 %v1872, %v1876
    %s1878 = smul.u32 7, 4
    %s1879 = smul.addr %s1878, 8
    %s1880 = scalar_lea.vmem [#allocation2], %s1879
    %v1881 = vld [vmem:[%s1880] sm:$0xff]
    %v1882 = vld [vmem:[%s1880 + $0x8] sm:$0xff]
    %v1883 = vld [vmem:[%s1880 + $0x10] sm:$0xff]
    %v1884 = vld [vmem:[%s1880 + $0x18] sm:$0xff]
    %1885 = vmatprep.subr.mxu0 %v856
    %1886 = vmatpush1.msra.mxu0 %v855
    %1887 = vmatprep.subr.mxu0 %v852
    %1888 = vmatpush1.msra.mxu0 %v851
    %1889 = vmatprep.subr.mxu0 %v848
    %1890 = vmatpush1.msra.mxu0 %v847
    %1891 = vmatprep.subr.mxu0 %v844
    %1892 = vmatpush1.msra.mxu0 %v843
    %1893 = vmatprep.subr.mxu0 %v840
    %1894 = vmatpush1.msra.mxu0 %v839
    %1895 = vmatprep.subr.mxu0 %v836
    %1896 = vmatpush1.msra.mxu0 %v835
    %1897 = vmatprep.subr.mxu0 %v832
    %1898 = vmatpush1.msra.mxu0 %v831
    %1899 = vmatprep.subr.mxu0 %v828
    %1900 = vmatpush1.msra.mxu0 %v827
    %1901 = vmatprep.subr.mxu0 %v824
    %1902 = vmatpush1.msra.mxu0 %v823
    %1903 = vmatprep.subr.mxu0 %v820
    %1904 = vmatpush1.msra.mxu0 %v819
    %1905 = vmatprep.subr.mxu0 %v816
    %1906 = vmatpush1.msra.mxu0 %v815
    %1907 = vmatprep.subr.mxu0 %v812
    %1908 = vmatpush1.msra.mxu0 %v811
    %1909 = vmatprep.subr.mxu0 %v808
    %1910 = vmatpush1.msra.mxu0 %v807
    %1911 = vmatprep.subr.mxu0 %v804
    %1912 = vmatpush1.msra.mxu0 %v803
    %1913 = vmatprep.subr.mxu0 %v800
    %1914 = vmatpush1.msra.mxu0 %v799
    %1915 = vmatprep.subr.mxu0 %v796
    %1916 = vmatpush1.msra.mxu0 %v795
    %1917 = vmatprep.subr.mxu0 0.0
    %1918 = vmatpush2.msra.mxu0 0.0
    %1919 = vmatprep.subr.mxu0 0.0
    %1920 = vmatpush2.msra.mxu0 0.0
    %1921 = vmatprep.subr.mxu0 0.0
    %1922 = vmatpush2.msra.mxu0 0.0
    %1923 = vmatprep.subr.mxu0 0.0
    %1924 = vmatpush2.msra.mxu0 0.0
    %1925 = vmatprep.subr.mxu0 0.0
    %1926 = vmatpush2.msra.mxu0 0.0
    %1927 = vmatprep.subr.mxu0 0.0
    %1928 = vmatpush2.msra.mxu0 0.0
    %1929 = vmatprep.subr.mxu0 0.0
    %1930 = vmatpush2.msra.mxu0 0.0
    %1931 = vmatprep.subr.mxu0 0.0
    %1932 = vmatpush2.msra.mxu0 0.0
    %1933 = vmatprep.subr.mxu0 0.0
    %1934 = vmatpush2.msra.mxu0 0.0
    %1935 = vmatprep.subr.mxu0 0.0
    %1936 = vmatpush2.msra.mxu0 0.0
    %1937 = vmatprep.subr.mxu0 0.0
    %1938 = vmatpush2.msra.mxu0 0.0
    %1939 = vmatprep.subr.mxu0 0.0
    %1940 = vmatpush2.msra.mxu0 0.0
    %1941 = vmatprep.subr.mxu0 0.0
    %1942 = vmatpush2.msra.mxu0 0.0
    %1943 = vmatprep.subr.mxu0 0.0
    %1944 = vmatpush2.msra.mxu0 0.0
    %1945 = vmatprep.subr.mxu0 0.0
    %1946 = vmatpush2.msra.mxu0 0.0
    %1947 = vmatprep.subr.mxu0 0.0
    %1948 = vmatpush2.msra.mxu0 0.0
    %1949 = vmatprep.mubr.f32.mxu0 0.0
    %1950 = vmatmul.mubr.f32.gmra.mxu0 %v1877
    %v1951 = vpop.f32.mrf.mxu0
    %v1952 = vadd.f32 0.0, %v1951
    %v1953 = vpop.f32.mrf.mxu0
    %v1954 = vadd.f32 0.0, %v1953
    %1955 = vdwg.mxu0
    %1956 = vmatprep.subr.mxu0 %v858
    %1957 = vmatpush1.msra.mxu0 %v857
    %1958 = vmatprep.subr.mxu0 %v854
    %1959 = vmatpush1.msra.mxu0 %v853
    %1960 = vmatprep.subr.mxu0 %v850
    %1961 = vmatpush1.msra.mxu0 %v849
    %1962 = vmatprep.subr.mxu0 %v846
    %1963 = vmatpush1.msra.mxu0 %v845
    %1964 = vmatprep.subr.mxu0 %v842
    %1965 = vmatpush1.msra.mxu0 %v841
    %1966 = vmatprep.subr.mxu0 %v838
    %1967 = vmatpush1.msra.mxu0 %v837
    %1968 = vmatprep.subr.mxu0 %v834
    %1969 = vmatpush1.msra.mxu0 %v833
    %1970 = vmatprep.subr.mxu0 %v830
    %1971 = vmatpush1.msra.mxu0 %v829
    %1972 = vmatprep.subr.mxu0 %v826
    %1973 = vmatpush1.msra.mxu0 %v825
    %1974 = vmatprep.subr.mxu0 %v822
    %1975 = vmatpush1.msra.mxu0 %v821
    %1976 = vmatprep.subr.mxu0 %v818
    %1977 = vmatpush1.msra.mxu0 %v817
    %1978 = vmatprep.subr.mxu0 %v814
    %1979 = vmatpush1.msra.mxu0 %v813
    %1980 = vmatprep.subr.mxu0 %v810
    %1981 = vmatpush1.msra.mxu0 %v809
    %1982 = vmatprep.subr.mxu0 %v806
    %1983 = vmatpush1.msra.mxu0 %v805
    %1984 = vmatprep.subr.mxu0 %v802
    %1985 = vmatpush1.msra.mxu0 %v801
    %1986 = vmatprep.subr.mxu0 %v798
    %1987 = vmatpush1.msra.mxu0 %v797
    %1988 = vmatprep.subr.mxu0 0.0
    %1989 = vmatpush2.msra.mxu0 0.0
    %1990 = vmatprep.subr.mxu0 0.0
    %1991 = vmatpush2.msra.mxu0 0.0
    %1992 = vmatprep.subr.mxu0 0.0
    %1993 = vmatpush2.msra.mxu0 0.0
    %1994 = vmatprep.subr.mxu0 0.0
    %1995 = vmatpush2.msra.mxu0 0.0
    %1996 = vmatprep.subr.mxu0 0.0
    %1997 = vmatpush2.msra.mxu0 0.0
    %1998 = vmatprep.subr.mxu0 0.0
    %1999 = vmatpush2.msra.mxu0 0.0
    %2000 = vmatprep.subr.mxu0 0.0
    %2001 = vmatpush2.msra.mxu0 0.0
    %2002 = vmatprep.subr.mxu0 0.0
    %2003 = vmatpush2.msra.mxu0 0.0
    %2004 = vmatprep.subr.mxu0 0.0
    %2005 = vmatpush2.msra.mxu0 0.0
    %2006 = vmatprep.subr.mxu0 0.0
    %2007 = vmatpush2.msra.mxu0 0.0
    %2008 = vmatprep.subr.mxu0 0.0
    %2009 = vmatpush2.msra.mxu0 0.0
    %2010 = vmatprep.subr.mxu0 0.0
    %2011 = vmatpush2.msra.mxu0 0.0
    %2012 = vmatprep.subr.mxu0 0.0
    %2013 = vmatpush2.msra.mxu0 0.0
    %2014 = vmatprep.subr.mxu0 0.0
    %2015 = vmatpush2.msra.mxu0 0.0
    %2016 = vmatprep.subr.mxu0 0.0
    %2017 = vmatpush2.msra.mxu0 0.0
    %2018 = vmatprep.subr.mxu0 0.0
    %2019 = vmatpush2.msra.mxu0 0.0
    %2020 = vmatprep.mubr.f32.mxu0 0.0
    %2021 = vmatmul.mubr.f32.gmra.mxu0 %v1877
    %v2022 = vpop.f32.mrf.mxu0
    %v2023 = vadd.f32 0.0, %v2022
    %v2024 = vpop.f32.mrf.mxu0
    %v2025 = vadd.f32 0.0, %v2024
    %2026 = vdwg.mxu0
    %v2027 = vadd.f32 %v1881, %v1952
    %v2028 = vadd.f32 %v1882, %v1954
    %v2029 = vadd.f32 %v1883, %v2023
    %v2030 = vadd.f32 %v1884, %v2025
    %v2031 = vmul.f32 %v2027, 0.5
    %v2032 = vtanh.pop %v2031
    %v2033 = vmul.f32 %v2032, 0.5
    %v2034 = vadd.f32 %v2033, 0.5
    %v2035 = vmul.f32 %v2028, 0.5
    %v2036 = vtanh.pop %v2035
    %v2037 = vmul.f32 %v2036, 0.5
    %v2038 = vadd.f32 %v2037, 0.5
    %v2039 = vtanh.pop %v2029
    %v2040 = vmul.f32 %v2030, 0.5
    %v2041 = vtanh.pop %v2040
    %v2042 = vmul.f32 %v2041, 0.5
    %v2043 = vadd.f32 %v2042, 0.5
    %v2044 = vmul.f32 %v1875, %v2034
    %v2045 = vmul.f32 %v2038, %v2039
    %v2046 = vadd.f32 %v2044, %v2045
    %v2047 = vtanh.pop %v2046
    %v2048 = vmul.f32 %v2043, %v2047
    %s2049 = smul.u32 8, 4
    %s2050 = smul.addr %s2049, 8
    %s2051 = scalar_lea.vmem [#allocation2], %s2050
    %v2052 = vld [vmem:[%s2051] sm:$0xff]
    %v2053 = vld [vmem:[%s2051 + $0x8] sm:$0xff]
    %v2054 = vld [vmem:[%s2051 + $0x10] sm:$0xff]
    %v2055 = vld [vmem:[%s2051 + $0x18] sm:$0xff]
    %2056 = vmatprep.subr.mxu0 %v856
    %2057 = vmatpush1.msra.mxu0 %v855
    %2058 = vmatprep.subr.mxu0 %v852
    %2059 = vmatpush1.msra.mxu0 %v851
    %2060 = vmatprep.subr.mxu0 %v848
    %2061 = vmatpush1.msra.mxu0 %v847
    %2062 = vmatprep.subr.mxu0 %v844
    %2063 = vmatpush1.msra.mxu0 %v843
    %2064 = vmatprep.subr.mxu0 %v840
    %2065 = vmatpush1.msra.mxu0 %v839
    %2066 = vmatprep.subr.mxu0 %v836
    %2067 = vmatpush1.msra.mxu0 %v835
    %2068 = vmatprep.subr.mxu0 %v832
    %2069 = vmatpush1.msra.mxu0 %v831
    %2070 = vmatprep.subr.mxu0 %v828
    %2071 = vmatpush1.msra.mxu0 %v827
    %2072 = vmatprep.subr.mxu0 %v824
    %2073 = vmatpush1.msra.mxu0 %v823
    %2074 = vmatprep.subr.mxu0 %v820
    %2075 = vmatpush1.msra.mxu0 %v819
    %2076 = vmatprep.subr.mxu0 %v816
    %2077 = vmatpush1.msra.mxu0 %v815
    %2078 = vmatprep.subr.mxu0 %v812
    %2079 = vmatpush1.msra.mxu0 %v811
    %2080 = vmatprep.subr.mxu0 %v808
    %2081 = vmatpush1.msra.mxu0 %v807
    %2082 = vmatprep.subr.mxu0 %v804
    %2083 = vmatpush1.msra.mxu0 %v803
    %2084 = vmatprep.subr.mxu0 %v800
    %2085 = vmatpush1.msra.mxu0 %v799
    %2086 = vmatprep.subr.mxu0 %v796
    %2087 = vmatpush1.msra.mxu0 %v795
    %2088 = vmatprep.subr.mxu0 0.0
    %2089 = vmatpush2.msra.mxu0 0.0
    %2090 = vmatprep.subr.mxu0 0.0
    %2091 = vmatpush2.msra.mxu0 0.0
    %2092 = vmatprep.subr.mxu0 0.0
    %2093 = vmatpush2.msra.mxu0 0.0
    %2094 = vmatprep.subr.mxu0 0.0
    %2095 = vmatpush2.msra.mxu0 0.0
    %2096 = vmatprep.subr.mxu0 0.0
    %2097 = vmatpush2.msra.mxu0 0.0
    %2098 = vmatprep.subr.mxu0 0.0
    %2099 = vmatpush2.msra.mxu0 0.0
    %2100 = vmatprep.subr.mxu0 0.0
    %2101 = vmatpush2.msra.mxu0 0.0
    %2102 = vmatprep.subr.mxu0 0.0
    %2103 = vmatpush2.msra.mxu0 0.0
    %2104 = vmatprep.subr.mxu0 0.0
    %2105 = vmatpush2.msra.mxu0 0.0
    %2106 = vmatprep.subr.mxu0 0.0
    %2107 = vmatpush2.msra.mxu0 0.0
    %2108 = vmatprep.subr.mxu0 0.0
    %2109 = vmatpush2.msra.mxu0 0.0
    %2110 = vmatprep.subr.mxu0 0.0
    %2111 = vmatpush2.msra.mxu0 0.0
    %2112 = vmatprep.subr.mxu0 0.0
    %2113 = vmatpush2.msra.mxu0 0.0
    %2114 = vmatprep.subr.mxu0 0.0
    %2115 = vmatpush2.msra.mxu0 0.0
    %2116 = vmatprep.subr.mxu0 0.0
    %2117 = vmatpush2.msra.mxu0 0.0
    %2118 = vmatprep.subr.mxu0 0.0
    %2119 = vmatpush2.msra.mxu0 0.0
    %2120 = vmatprep.mubr.f32.mxu0 0.0
    %2121 = vmatmul.mubr.f32.gmra.mxu0 %v2048
    %v2122 = vpop.f32.mrf.mxu0
    %v2123 = vadd.f32 0.0, %v2122
    %v2124 = vpop.f32.mrf.mxu0
    %v2125 = vadd.f32 0.0, %v2124
    %2126 = vdwg.mxu0
    %2127 = vmatprep.subr.mxu0 %v858
    %2128 = vmatpush1.msra.mxu0 %v857
    %2129 = vmatprep.subr.mxu0 %v854
    %2130 = vmatpush1.msra.mxu0 %v853
    %2131 = vmatprep.subr.mxu0 %v850
    %2132 = vmatpush1.msra.mxu0 %v849
    %2133 = vmatprep.subr.mxu0 %v846
    %2134 = vmatpush1.msra.mxu0 %v845
    %2135 = vmatprep.subr.mxu0 %v842
    %2136 = vmatpush1.msra.mxu0 %v841
    %2137 = vmatprep.subr.mxu0 %v838
    %2138 = vmatpush1.msra.mxu0 %v837
    %2139 = vmatprep.subr.mxu0 %v834
    %2140 = vmatpush1.msra.mxu0 %v833
    %2141 = vmatprep.subr.mxu0 %v830
    %2142 = vmatpush1.msra.mxu0 %v829
    %2143 = vmatprep.subr.mxu0 %v826
    %2144 = vmatpush1.msra.mxu0 %v825
    %2145 = vmatprep.subr.mxu0 %v822
    %2146 = vmatpush1.msra.mxu0 %v821
    %2147 = vmatprep.subr.mxu0 %v818
    %2148 = vmatpush1.msra.mxu0 %v817
    %2149 = vmatprep.subr.mxu0 %v814
    %2150 = vmatpush1.msra.mxu0 %v813
    %2151 = vmatprep.subr.mxu0 %v810
    %2152 = vmatpush1.msra.mxu0 %v809
    %2153 = vmatprep.subr.mxu0 %v806
    %2154 = vmatpush1.msra.mxu0 %v805
    %2155 = vmatprep.subr.mxu0 %v802
    %2156 = vmatpush1.msra.mxu0 %v801
    %2157 = vmatprep.subr.mxu0 %v798
    %2158 = vmatpush1.msra.mxu0 %v797
    %2159 = vmatprep.subr.mxu0 0.0
    %2160 = vmatpush2.msra.mxu0 0.0
    %2161 = vmatprep.subr.mxu0 0.0
    %2162 = vmatpush2.msra.mxu0 0.0
    %2163 = vmatprep.subr.mxu0 0.0
    %2164 = vmatpush2.msra.mxu0 0.0
    %2165 = vmatprep.subr.mxu0 0.0
    %2166 = vmatpush2.msra.mxu0 0.0
    %2167 = vmatprep.subr.mxu0 0.0
    %2168 = vmatpush2.msra.mxu0 0.0
    %2169 = vmatprep.subr.mxu0 0.0
    %2170 = vmatpush2.msra.mxu0 0.0
    %2171 = vmatprep.subr.mxu0 0.0
    %2172 = vmatpush2.msra.mxu0 0.0
    %2173 = vmatprep.subr.mxu0 0.0
    %2174 = vmatpush2.msra.mxu0 0.0
    %2175 = vmatprep.subr.mxu0 0.0
    %2176 = vmatpush2.msra.mxu0 0.0
    %2177 = vmatprep.subr.mxu0 0.0
    %2178 = vmatpush2.msra.mxu0 0.0
    %2179 = vmatprep.subr.mxu0 0.0
    %2180 = vmatpush2.msra.mxu0 0.0
    %2181 = vmatprep.subr.mxu0 0.0
    %2182 = vmatpush2.msra.mxu0 0.0
    %2183 = vmatprep.subr.mxu0 0.0
    %2184 = vmatpush2.msra.mxu0 0.0
    %2185 = vmatprep.subr.mxu0 0.0
    %2186 = vmatpush2.msra.mxu0 0.0
    %2187 = vmatprep.subr.mxu0 0.0
    %2188 = vmatpush2.msra.mxu0 0.0
    %2189 = vmatprep.subr.mxu0 0.0
    %2190 = vmatpush2.msra.mxu0 0.0
    %2191 = vmatprep.mubr.f32.mxu0 0.0
    %2192 = vmatmul.mubr.f32.gmra.mxu0 %v2048
    %v2193 = vpop.f32.mrf.mxu0
    %v2194 = vadd.f32 0.0, %v2193
    %v2195 = vpop.f32.mrf.mxu0
    %v2196 = vadd.f32 0.0, %v2195
    %2197 = vdwg.mxu0
    %v2198 = vadd.f32 %v2052, %v2123
    %v2199 = vadd.f32 %v2053, %v2125
    %v2200 = vadd.f32 %v2054, %v2194
    %v2201 = vadd.f32 %v2055, %v2196
    %v2202 = vmul.f32 %v2198, 0.5
    %v2203 = vtanh.pop %v2202
    %v2204 = vmul.f32 %v2203, 0.5
    %v2205 = vadd.f32 %v2204, 0.5
    %v2206 = vmul.f32 %v2199, 0.5
    %v2207 = vtanh.pop %v2206
    %v2208 = vmul.f32 %v2207, 0.5
    %v2209 = vadd.f32 %v2208, 0.5
    %v2210 = vtanh.pop %v2200
    %v2211 = vmul.f32 %v2201, 0.5
    %v2212 = vtanh.pop %v2211
    %v2213 = vmul.f32 %v2212, 0.5
    %v2214 = vadd.f32 %v2213, 0.5
    %v2215 = vmul.f32 %v2046, %v2205
    %v2216 = vmul.f32 %v2209, %v2210
    %v2217 = vadd.f32 %v2215, %v2216
    %v2218 = vtanh.pop %v2217
    %v2219 = vmul.f32 %v2214, %v2218
    %s2220 = smul.u32 9, 4
    %s2221 = smul.addr %s2220, 8
    %s2222 = scalar_lea.vmem [#allocation2], %s2221
    %v2223 = vld [vmem:[%s2222] sm:$0xff]
    %v2224 = vld [vmem:[%s2222 + $0x8] sm:$0xff]
    %v2225 = vld [vmem:[%s2222 + $0x10] sm:$0xff]
    %v2226 = vld [vmem:[%s2222 + $0x18] sm:$0xff]
    %2227 = vmatprep.subr.mxu0 %v856
    %2228 = vmatpush1.msra.mxu0 %v855
    %2229 = vmatprep.subr.mxu0 %v852
    %2230 = vmatpush1.msra.mxu0 %v851
    %2231 = vmatprep.subr.mxu0 %v848
    %2232 = vmatpush1.msra.mxu0 %v847
    %2233 = vmatprep.subr.mxu0 %v844
    %2234 = vmatpush1.msra.mxu0 %v843
    %2235 = vmatprep.subr.mxu0 %v840
    %2236 = vmatpush1.msra.mxu0 %v839
    %2237 = vmatprep.subr.mxu0 %v836
    %2238 = vmatpush1.msra.mxu0 %v835
    %2239 = vmatprep.subr.mxu0 %v832
    %2240 = vmatpush1.msra.mxu0 %v831
    %2241 = vmatprep.subr.mxu0 %v828
    %2242 = vmatpush1.msra.mxu0 %v827
    %2243 = vmatprep.subr.mxu0 %v824
    %2244 = vmatpush1.msra.mxu0 %v823
    %2245 = vmatprep.subr.mxu0 %v820
    %2246 = vmatpush1.msra.mxu0 %v819
    %2247 = vmatprep.subr.mxu0 %v816
    %2248 = vmatpush1.msra.mxu0 %v815
    %2249 = vmatprep.subr.mxu0 %v812
    %2250 = vmatpush1.msra.mxu0 %v811
    %2251 = vmatprep.subr.mxu0 %v808
    %2252 = vmatpush1.msra.mxu0 %v807
    %2253 = vmatprep.subr.mxu0 %v804
    %2254 = vmatpush1.msra.mxu0 %v803
    %2255 = vmatprep.subr.mxu0 %v800
    %2256 = vmatpush1.msra.mxu0 %v799
    %2257 = vmatprep.subr.mxu0 %v796
    %2258 = vmatpush1.msra.mxu0 %v795
    %2259 = vmatprep.subr.mxu0 0.0
    %2260 = vmatpush2.msra.mxu0 0.0
    %2261 = vmatprep.subr.mxu0 0.0
    %2262 = vmatpush2.msra.mxu0 0.0
    %2263 = vmatprep.subr.mxu0 0.0
    %2264 = vmatpush2.msra.mxu0 0.0
    %2265 = vmatprep.subr.mxu0 0.0
    %2266 = vmatpush2.msra.mxu0 0.0
    %2267 = vmatprep.subr.mxu0 0.0
    %2268 = vmatpush2.msra.mxu0 0.0
    %2269 = vmatprep.subr.mxu0 0.0
    %2270 = vmatpush2.msra.mxu0 0.0
    %2271 = vmatprep.subr.mxu0 0.0
    %2272 = vmatpush2.msra.mxu0 0.0
    %2273 = vmatprep.subr.mxu0 0.0
    %2274 = vmatpush2.msra.mxu0 0.0
    %2275 = vmatprep.subr.mxu0 0.0
    %2276 = vmatpush2.msra.mxu0 0.0
    %2277 = vmatprep.subr.mxu0 0.0
    %2278 = vmatpush2.msra.mxu0 0.0
    %2279 = vmatprep.subr.mxu0 0.0
    %2280 = vmatpush2.msra.mxu0 0.0
    %2281 = vmatprep.subr.mxu0 0.0
    %2282 = vmatpush2.msra.mxu0 0.0
    %2283 = vmatprep.subr.mxu0 0.0
    %2284 = vmatpush2.msra.mxu0 0.0
    %2285 = vmatprep.subr.mxu0 0.0
    %2286 = vmatpush2.msra.mxu0 0.0
    %2287 = vmatprep.subr.mxu0 0.0
    %2288 = vmatpush2.msra.mxu0 0.0
    %2289 = vmatprep.subr.mxu0 0.0
    %2290 = vmatpush2.msra.mxu0 0.0
    %2291 = vmatprep.mubr.f32.mxu0 0.0
    %2292 = vmatmul.mubr.f32.gmra.mxu0 %v2219
    %v2293 = vpop.f32.mrf.mxu0
    %v2294 = vadd.f32 0.0, %v2293
    %v2295 = vpop.f32.mrf.mxu0
    %v2296 = vadd.f32 0.0, %v2295
    %2297 = vdwg.mxu0
    %2298 = vmatprep.subr.mxu0 %v858
    %2299 = vmatpush1.msra.mxu0 %v857
    %2300 = vmatprep.subr.mxu0 %v854
    %2301 = vmatpush1.msra.mxu0 %v853
    %2302 = vmatprep.subr.mxu0 %v850
    %2303 = vmatpush1.msra.mxu0 %v849
    %2304 = vmatprep.subr.mxu0 %v846
    %2305 = vmatpush1.msra.mxu0 %v845
    %2306 = vmatprep.subr.mxu0 %v842
    %2307 = vmatpush1.msra.mxu0 %v841
    %2308 = vmatprep.subr.mxu0 %v838
    %2309 = vmatpush1.msra.mxu0 %v837
    %2310 = vmatprep.subr.mxu0 %v834
    %2311 = vmatpush1.msra.mxu0 %v833
    %2312 = vmatprep.subr.mxu0 %v830
    %2313 = vmatpush1.msra.mxu0 %v829
    %2314 = vmatprep.subr.mxu0 %v826
    %2315 = vmatpush1.msra.mxu0 %v825
    %2316 = vmatprep.subr.mxu0 %v822
    %2317 = vmatpush1.msra.mxu0 %v821
    %2318 = vmatprep.subr.mxu0 %v818
    %2319 = vmatpush1.msra.mxu0 %v817
    %2320 = vmatprep.subr.mxu0 %v814
    %2321 = vmatpush1.msra.mxu0 %v813
    %2322 = vmatprep.subr.mxu0 %v810
    %2323 = vmatpush1.msra.mxu0 %v809
    %2324 = vmatprep.subr.mxu0 %v806
    %2325 = vmatpush1.msra.mxu0 %v805
    %2326 = vmatprep.subr.mxu0 %v802
    %2327 = vmatpush1.msra.mxu0 %v801
    %2328 = vmatprep.subr.mxu0 %v798
    %2329 = vmatpush1.msra.mxu0 %v797
    %2330 = vmatprep.subr.mxu0 0.0
    %2331 = vmatpush2.msra.mxu0 0.0
    %2332 = vmatprep.subr.mxu0 0.0
    %2333 = vmatpush2.msra.mxu0 0.0
    %2334 = vmatprep.subr.mxu0 0.0
    %2335 = vmatpush2.msra.mxu0 0.0
    %2336 = vmatprep.subr.mxu0 0.0
    %2337 = vmatpush2.msra.mxu0 0.0
    %2338 = vmatprep.subr.mxu0 0.0
    %2339 = vmatpush2.msra.mxu0 0.0
    %2340 = vmatprep.subr.mxu0 0.0
    %2341 = vmatpush2.msra.mxu0 0.0
    %2342 = vmatprep.subr.mxu0 0.0
    %2343 = vmatpush2.msra.mxu0 0.0
    %2344 = vmatprep.subr.mxu0 0.0
    %2345 = vmatpush2.msra.mxu0 0.0
    %2346 = vmatprep.subr.mxu0 0.0
    %2347 = vmatpush2.msra.mxu0 0.0
    %2348 = vmatprep.subr.mxu0 0.0
    %2349 = vmatpush2.msra.mxu0 0.0
    %2350 = vmatprep.subr.mxu0 0.0
    %2351 = vmatpush2.msra.mxu0 0.0
    %2352 = vmatprep.subr.mxu0 0.0
    %2353 = vmatpush2.msra.mxu0 0.0
    %2354 = vmatprep.subr.mxu0 0.0
    %2355 = vmatpush2.msra.mxu0 0.0
    %2356 = vmatprep.subr.mxu0 0.0
    %2357 = vmatpush2.msra.mxu0 0.0
    %2358 = vmatprep.subr.mxu0 0.0
    %2359 = vmatpush2.msra.mxu0 0.0
    %2360 = vmatprep.subr.mxu0 0.0
    %2361 = vmatpush2.msra.mxu0 0.0
    %2362 = vmatprep.mubr.f32.mxu0 0.0
    %2363 = vmatmul.mubr.f32.gmra.mxu0 %v2219
    %v2364 = vpop.f32.mrf.mxu0
    %v2365 = vadd.f32 0.0, %v2364
    %v2366 = vpop.f32.mrf.mxu0
    %v2367 = vadd.f32 0.0, %v2366
    %2368 = vdwg.mxu0
    %v2369 = vadd.f32 %v2223, %v2294
    %v2370 = vadd.f32 %v2224, %v2296
    %v2371 = vadd.f32 %v2225, %v2365
    %v2372 = vadd.f32 %v2226, %v2367
    %v2373 = vmul.f32 %v2369, 0.5
    %v2374 = vtanh.pop %v2373
    %v2375 = vmul.f32 %v2374, 0.5
    %v2376 = vadd.f32 %v2375, 0.5
    %v2377 = vmul.f32 %v2370, 0.5
    %v2378 = vtanh.pop %v2377
    %v2379 = vmul.f32 %v2378, 0.5
    %v2380 = vadd.f32 %v2379, 0.5
    %v2381 = vtanh.pop %v2371
    %v2382 = vmul.f32 %v2372, 0.5
    %v2383 = vtanh.pop %v2382
    %v2384 = vmul.f32 %v2383, 0.5
    %v2385 = vadd.f32 %v2384, 0.5
    %v2386 = vmul.f32 %v2217, %v2376
    %v2387 = vmul.f32 %v2380, %v2381
    %v2388 = vadd.f32 %v2386, %v2387
    %v2389 = vtanh.pop %v2388
    %v2390 = vmul.f32 %v2385, %v2389
    %s2391 = smul.u32 10, 4
    %s2392 = smul.addr %s2391, 8
    %s2393 = scalar_lea.vmem [#allocation2], %s2392
    %v2394 = vld [vmem:[%s2393] sm:$0xff]
    %v2395 = vld [vmem:[%s2393 + $0x8] sm:$0xff]
    %v2396 = vld [vmem:[%s2393 + $0x10] sm:$0xff]
    %v2397 = vld [vmem:[%s2393 + $0x18] sm:$0xff]
    %2398 = vmatprep.subr.mxu0 %v856
    %2399 = vmatpush1.msra.mxu0 %v855
    %2400 = vmatprep.subr.mxu0 %v852
    %2401 = vmatpush1.msra.mxu0 %v851
    %2402 = vmatprep.subr.mxu0 %v848
    %2403 = vmatpush1.msra.mxu0 %v847
    %2404 = vmatprep.subr.mxu0 %v844
    %2405 = vmatpush1.msra.mxu0 %v843
    %2406 = vmatprep.subr.mxu0 %v840
    %2407 = vmatpush1.msra.mxu0 %v839
    %2408 = vmatprep.subr.mxu0 %v836
    %2409 = vmatpush1.msra.mxu0 %v835
    %2410 = vmatprep.subr.mxu0 %v832
    %2411 = vmatpush1.msra.mxu0 %v831
    %2412 = vmatprep.subr.mxu0 %v828
    %2413 = vmatpush1.msra.mxu0 %v827
    %2414 = vmatprep.subr.mxu0 %v824
    %2415 = vmatpush1.msra.mxu0 %v823
    %2416 = vmatprep.subr.mxu0 %v820
    %2417 = vmatpush1.msra.mxu0 %v819
    %2418 = vmatprep.subr.mxu0 %v816
    %2419 = vmatpush1.msra.mxu0 %v815
    %2420 = vmatprep.subr.mxu0 %v812
    %2421 = vmatpush1.msra.mxu0 %v811
    %2422 = vmatprep.subr.mxu0 %v808
    %2423 = vmatpush1.msra.mxu0 %v807
    %2424 = vmatprep.subr.mxu0 %v804
    %2425 = vmatpush1.msra.mxu0 %v803
    %2426 = vmatprep.subr.mxu0 %v800
    %2427 = vmatpush1.msra.mxu0 %v799
    %2428 = vmatprep.subr.mxu0 %v796
    %2429 = vmatpush1.msra.mxu0 %v795
    %2430 = vmatprep.subr.mxu0 0.0
    %2431 = vmatpush2.msra.mxu0 0.0
    %2432 = vmatprep.subr.mxu0 0.0
    %2433 = vmatpush2.msra.mxu0 0.0
    %2434 = vmatprep.subr.mxu0 0.0
    %2435 = vmatpush2.msra.mxu0 0.0
    %2436 = vmatprep.subr.mxu0 0.0
    %2437 = vmatpush2.msra.mxu0 0.0
    %2438 = vmatprep.subr.mxu0 0.0
    %2439 = vmatpush2.msra.mxu0 0.0
    %2440 = vmatprep.subr.mxu0 0.0
    %2441 = vmatpush2.msra.mxu0 0.0
    %2442 = vmatprep.subr.mxu0 0.0
    %2443 = vmatpush2.msra.mxu0 0.0
    %2444 = vmatprep.subr.mxu0 0.0
    %2445 = vmatpush2.msra.mxu0 0.0
    %2446 = vmatprep.subr.mxu0 0.0
    %2447 = vmatpush2.msra.mxu0 0.0
    %2448 = vmatprep.subr.mxu0 0.0
    %2449 = vmatpush2.msra.mxu0 0.0
    %2450 = vmatprep.subr.mxu0 0.0
    %2451 = vmatpush2.msra.mxu0 0.0
    %2452 = vmatprep.subr.mxu0 0.0
    %2453 = vmatpush2.msra.mxu0 0.0
    %2454 = vmatprep.subr.mxu0 0.0
    %2455 = vmatpush2.msra.mxu0 0.0
    %2456 = vmatprep.subr.mxu0 0.0
    %2457 = vmatpush2.msra.mxu0 0.0
    %2458 = vmatprep.subr.mxu0 0.0
    %2459 = vmatpush2.msra.mxu0 0.0
    %2460 = vmatprep.subr.mxu0 0.0
    %2461 = vmatpush2.msra.mxu0 0.0
    %2462 = vmatprep.mubr.f32.mxu0 0.0
    %2463 = vmatmul.mubr.f32.gmra.mxu0 %v2390
    %v2464 = vpop.f32.mrf.mxu0
    %v2465 = vadd.f32 0.0, %v2464
    %v2466 = vpop.f32.mrf.mxu0
    %v2467 = vadd.f32 0.0, %v2466
    %2468 = vdwg.mxu0
    %2469 = vmatprep.subr.mxu0 %v858
    %2470 = vmatpush1.msra.mxu0 %v857
    %2471 = vmatprep.subr.mxu0 %v854
    %2472 = vmatpush1.msra.mxu0 %v853
    %2473 = vmatprep.subr.mxu0 %v850
    %2474 = vmatpush1.msra.mxu0 %v849
    %2475 = vmatprep.subr.mxu0 %v846
    %2476 = vmatpush1.msra.mxu0 %v845
    %2477 = vmatprep.subr.mxu0 %v842
    %2478 = vmatpush1.msra.mxu0 %v841
    %2479 = vmatprep.subr.mxu0 %v838
    %2480 = vmatpush1.msra.mxu0 %v837
    %2481 = vmatprep.subr.mxu0 %v834
    %2482 = vmatpush1.msra.mxu0 %v833
    %2483 = vmatprep.subr.mxu0 %v830
    %2484 = vmatpush1.msra.mxu0 %v829
    %2485 = vmatprep.subr.mxu0 %v826
    %2486 = vmatpush1.msra.mxu0 %v825
    %2487 = vmatprep.subr.mxu0 %v822
    %2488 = vmatpush1.msra.mxu0 %v821
    %2489 = vmatprep.subr.mxu0 %v818
    %2490 = vmatpush1.msra.mxu0 %v817
    %2491 = vmatprep.subr.mxu0 %v814
    %2492 = vmatpush1.msra.mxu0 %v813
    %2493 = vmatprep.subr.mxu0 %v810
    %2494 = vmatpush1.msra.mxu0 %v809
    %2495 = vmatprep.subr.mxu0 %v806
    %2496 = vmatpush1.msra.mxu0 %v805
    %2497 = vmatprep.subr.mxu0 %v802
    %2498 = vmatpush1.msra.mxu0 %v801
    %2499 = vmatprep.subr.mxu0 %v798
    %2500 = vmatpush1.msra.mxu0 %v797
    %2501 = vmatprep.subr.mxu0 0.0
    %2502 = vmatpush2.msra.mxu0 0.0
    %2503 = vmatprep.subr.mxu0 0.0
    %2504 = vmatpush2.msra.mxu0 0.0
    %2505 = vmatprep.subr.mxu0 0.0
    %2506 = vmatpush2.msra.mxu0 0.0
    %2507 = vmatprep.subr.mxu0 0.0
    %2508 = vmatpush2.msra.mxu0 0.0
    %2509 = vmatprep.subr.mxu0 0.0
    %2510 = vmatpush2.msra.mxu0 0.0
    %2511 = vmatprep.subr.mxu0 0.0
    %2512 = vmatpush2.msra.mxu0 0.0
    %2513 = vmatprep.subr.mxu0 0.0
    %2514 = vmatpush2.msra.mxu0 0.0
    %2515 = vmatprep.subr.mxu0 0.0
    %2516 = vmatpush2.msra.mxu0 0.0
    %2517 = vmatprep.subr.mxu0 0.0
    %2518 = vmatpush2.msra.mxu0 0.0
    %2519 = vmatprep.subr.mxu0 0.0
    %2520 = vmatpush2.msra.mxu0 0.0
    %2521 = vmatprep.subr.mxu0 0.0
    %2522 = vmatpush2.msra.mxu0 0.0
    %2523 = vmatprep.subr.mxu0 0.0
    %2524 = vmatpush2.msra.mxu0 0.0
    %2525 = vmatprep.subr.mxu0 0.0
    %2526 = vmatpush2.msra.mxu0 0.0
    %2527 = vmatprep.subr.mxu0 0.0
    %2528 = vmatpush2.msra.mxu0 0.0
    %2529 = vmatprep.subr.mxu0 0.0
    %2530 = vmatpush2.msra.mxu0 0.0
    %2531 = vmatprep.subr.mxu0 0.0
    %2532 = vmatpush2.msra.mxu0 0.0
    %2533 = vmatprep.mubr.f32.mxu0 0.0
    %2534 = vmatmul.mubr.f32.gmra.mxu0 %v2390
    %v2535 = vpop.f32.mrf.mxu0
    %v2536 = vadd.f32 0.0, %v2535
    %v2537 = vpop.f32.mrf.mxu0
    %v2538 = vadd.f32 0.0, %v2537
    %2539 = vdwg.mxu0
    %v2540 = vadd.f32 %v2394, %v2465
    %v2541 = vadd.f32 %v2395, %v2467
    %v2542 = vadd.f32 %v2396, %v2536
    %v2543 = vadd.f32 %v2397, %v2538
    %v2544 = vmul.f32 %v2540, 0.5
    %v2545 = vtanh.pop %v2544
    %v2546 = vmul.f32 %v2545, 0.5
    %v2547 = vadd.f32 %v2546, 0.5
    %v2548 = vmul.f32 %v2541, 0.5
    %v2549 = vtanh.pop %v2548
    %v2550 = vmul.f32 %v2549, 0.5
    %v2551 = vadd.f32 %v2550, 0.5
    %v2552 = vtanh.pop %v2542
    %v2553 = vmul.f32 %v2543, 0.5
    %v2554 = vtanh.pop %v2553
    %v2555 = vmul.f32 %v2554, 0.5
    %v2556 = vadd.f32 %v2555, 0.5
    %v2557 = vmul.f32 %v2388, %v2547
    %v2558 = vmul.f32 %v2551, %v2552
    %v2559 = vadd.f32 %v2557, %v2558
    %v2560 = vtanh.pop %v2559
    %v2561 = vmul.f32 %v2556, %v2560
    %s2562 = smul.u32 11, 4
    %s2563 = smul.addr %s2562, 8
    %s2564 = scalar_lea.vmem [#allocation2], %s2563
    %v2565 = vld [vmem:[%s2564] sm:$0xff]
    %v2566 = vld [vmem:[%s2564 + $0x8] sm:$0xff]
    %v2567 = vld [vmem:[%s2564 + $0x10] sm:$0xff]
    %v2568 = vld [vmem:[%s2564 + $0x18] sm:$0xff]
    %2569 = vmatprep.subr.mxu0 %v856
    %2570 = vmatpush1.msra.mxu0 %v855
    %2571 = vmatprep.subr.mxu0 %v852
    %2572 = vmatpush1.msra.mxu0 %v851
    %2573 = vmatprep.subr.mxu0 %v848
    %2574 = vmatpush1.msra.mxu0 %v847
    %2575 = vmatprep.subr.mxu0 %v844
    %2576 = vmatpush1.msra.mxu0 %v843
    %2577 = vmatprep.subr.mxu0 %v840
    %2578 = vmatpush1.msra.mxu0 %v839
    %2579 = vmatprep.subr.mxu0 %v836
    %2580 = vmatpush1.msra.mxu0 %v835
    %2581 = vmatprep.subr.mxu0 %v832
    %2582 = vmatpush1.msra.mxu0 %v831
    %2583 = vmatprep.subr.mxu0 %v828
    %2584 = vmatpush1.msra.mxu0 %v827
    %2585 = vmatprep.subr.mxu0 %v824
    %2586 = vmatpush1.msra.mxu0 %v823
    %2587 = vmatprep.subr.mxu0 %v820
    %2588 = vmatpush1.msra.mxu0 %v819
    %2589 = vmatprep.subr.mxu0 %v816
    %2590 = vmatpush1.msra.mxu0 %v815
    %2591 = vmatprep.subr.mxu0 %v812
    %2592 = vmatpush1.msra.mxu0 %v811
    %2593 = vmatprep.subr.mxu0 %v808
    %2594 = vmatpush1.msra.mxu0 %v807
    %2595 = vmatprep.subr.mxu0 %v804
    %2596 = vmatpush1.msra.mxu0 %v803
    %2597 = vmatprep.subr.mxu0 %v800
    %2598 = vmatpush1.msra.mxu0 %v799
    %2599 = vmatprep.subr.mxu0 %v796
    %2600 = vmatpush1.msra.mxu0 %v795
    %2601 = vmatprep.subr.mxu0 0.0
    %2602 = vmatpush2.msra.mxu0 0.0
    %2603 = vmatprep.subr.mxu0 0.0
    %2604 = vmatpush2.msra.mxu0 0.0
    %2605 = vmatprep.subr.mxu0 0.0
    %2606 = vmatpush2.msra.mxu0 0.0
    %2607 = vmatprep.subr.mxu0 0.0
    %2608 = vmatpush2.msra.mxu0 0.0
    %2609 = vmatprep.subr.mxu0 0.0
    %2610 = vmatpush2.msra.mxu0 0.0
    %2611 = vmatprep.subr.mxu0 0.0
    %2612 = vmatpush2.msra.mxu0 0.0
    %2613 = vmatprep.subr.mxu0 0.0
    %2614 = vmatpush2.msra.mxu0 0.0
    %2615 = vmatprep.subr.mxu0 0.0
    %2616 = vmatpush2.msra.mxu0 0.0
    %2617 = vmatprep.subr.mxu0 0.0
    %2618 = vmatpush2.msra.mxu0 0.0
    %2619 = vmatprep.subr.mxu0 0.0
    %2620 = vmatpush2.msra.mxu0 0.0
    %2621 = vmatprep.subr.mxu0 0.0
    %2622 = vmatpush2.msra.mxu0 0.0
    %2623 = vmatprep.subr.mxu0 0.0
    %2624 = vmatpush2.msra.mxu0 0.0
    %2625 = vmatprep.subr.mxu0 0.0
    %2626 = vmatpush2.msra.mxu0 0.0
    %2627 = vmatprep.subr.mxu0 0.0
    %2628 = vmatpush2.msra.mxu0 0.0
    %2629 = vmatprep.subr.mxu0 0.0
    %2630 = vmatpush2.msra.mxu0 0.0
    %2631 = vmatprep.subr.mxu0 0.0
    %2632 = vmatpush2.msra.mxu0 0.0
    %2633 = vmatprep.mubr.f32.mxu0 0.0
    %2634 = vmatmul.mubr.f32.gmra.mxu0 %v2561
    %v2635 = vpop.f32.mrf.mxu0
    %v2636 = vadd.f32 0.0, %v2635
    %v2637 = vpop.f32.mrf.mxu0
    %v2638 = vadd.f32 0.0, %v2637
    %2639 = vdwg.mxu0
    %2640 = vmatprep.subr.mxu0 %v858
    %2641 = vmatpush1.msra.mxu0 %v857
    %2642 = vmatprep.subr.mxu0 %v854
    %2643 = vmatpush1.msra.mxu0 %v853
    %2644 = vmatprep.subr.mxu0 %v850
    %2645 = vmatpush1.msra.mxu0 %v849
    %2646 = vmatprep.subr.mxu0 %v846
    %2647 = vmatpush1.msra.mxu0 %v845
    %2648 = vmatprep.subr.mxu0 %v842
    %2649 = vmatpush1.msra.mxu0 %v841
    %2650 = vmatprep.subr.mxu0 %v838
    %2651 = vmatpush1.msra.mxu0 %v837
    %2652 = vmatprep.subr.mxu0 %v834
    %2653 = vmatpush1.msra.mxu0 %v833
    %2654 = vmatprep.subr.mxu0 %v830
    %2655 = vmatpush1.msra.mxu0 %v829
    %2656 = vmatprep.subr.mxu0 %v826
    %2657 = vmatpush1.msra.mxu0 %v825
    %2658 = vmatprep.subr.mxu0 %v822
    %2659 = vmatpush1.msra.mxu0 %v821
    %2660 = vmatprep.subr.mxu0 %v818
    %2661 = vmatpush1.msra.mxu0 %v817
    %2662 = vmatprep.subr.mxu0 %v814
    %2663 = vmatpush1.msra.mxu0 %v813
    %2664 = vmatprep.subr.mxu0 %v810
    %2665 = vmatpush1.msra.mxu0 %v809
    %2666 = vmatprep.subr.mxu0 %v806
    %2667 = vmatpush1.msra.mxu0 %v805
    %2668 = vmatprep.subr.mxu0 %v802
    %2669 = vmatpush1.msra.mxu0 %v801
    %2670 = vmatprep.subr.mxu0 %v798
    %2671 = vmatpush1.msra.mxu0 %v797
    %2672 = vmatprep.subr.mxu0 0.0
    %2673 = vmatpush2.msra.mxu0 0.0
    %2674 = vmatprep.subr.mxu0 0.0
    %2675 = vmatpush2.msra.mxu0 0.0
    %2676 = vmatprep.subr.mxu0 0.0
    %2677 = vmatpush2.msra.mxu0 0.0
    %2678 = vmatprep.subr.mxu0 0.0
    %2679 = vmatpush2.msra.mxu0 0.0
    %2680 = vmatprep.subr.mxu0 0.0
    %2681 = vmatpush2.msra.mxu0 0.0
    %2682 = vmatprep.subr.mxu0 0.0
    %2683 = vmatpush2.msra.mxu0 0.0
    %2684 = vmatprep.subr.mxu0 0.0
    %2685 = vmatpush2.msra.mxu0 0.0
    %2686 = vmatprep.subr.mxu0 0.0
    %2687 = vmatpush2.msra.mxu0 0.0
    %2688 = vmatprep.subr.mxu0 0.0
    %2689 = vmatpush2.msra.mxu0 0.0
    %2690 = vmatprep.subr.mxu0 0.0
    %2691 = vmatpush2.msra.mxu0 0.0
    %2692 = vmatprep.subr.mxu0 0.0
    %2693 = vmatpush2.msra.mxu0 0.0
    %2694 = vmatprep.subr.mxu0 0.0
    %2695 = vmatpush2.msra.mxu0 0.0
    %2696 = vmatprep.subr.mxu0 0.0
    %2697 = vmatpush2.msra.mxu0 0.0
    %2698 = vmatprep.subr.mxu0 0.0
    %2699 = vmatpush2.msra.mxu0 0.0
    %2700 = vmatprep.subr.mxu0 0.0
    %2701 = vmatpush2.msra.mxu0 0.0
    %2702 = vmatprep.subr.mxu0 0.0
    %2703 = vmatpush2.msra.mxu0 0.0
    %2704 = vmatprep.mubr.f32.mxu0 0.0
    %2705 = vmatmul.mubr.f32.gmra.mxu0 %v2561
    %v2706 = vpop.f32.mrf.mxu0
    %v2707 = vadd.f32 0.0, %v2706
    %v2708 = vpop.f32.mrf.mxu0
    %v2709 = vadd.f32 0.0, %v2708
    %2710 = vdwg.mxu0
    %v2711 = vadd.f32 %v2565, %v2636
    %v2712 = vadd.f32 %v2566, %v2638
    %v2713 = vadd.f32 %v2567, %v2707
    %v2714 = vadd.f32 %v2568, %v2709
    %v2715 = vmul.f32 %v2711, 0.5
    %v2716 = vtanh.pop %v2715
    %v2717 = vmul.f32 %v2716, 0.5
    %v2718 = vadd.f32 %v2717, 0.5
    %v2719 = vmul.f32 %v2712, 0.5
    %v2720 = vtanh.pop %v2719
    %v2721 = vmul.f32 %v2720, 0.5
    %v2722 = vadd.f32 %v2721, 0.5
    %v2723 = vtanh.pop %v2713
    %v2724 = vmul.f32 %v2714, 0.5
    %v2725 = vtanh.pop %v2724
    %v2726 = vmul.f32 %v2725, 0.5
    %v2727 = vadd.f32 %v2726, 0.5
    %v2728 = vmul.f32 %v2559, %v2718
    %v2729 = vmul.f32 %v2722, %v2723
    %v2730 = vadd.f32 %v2728, %v2729
    %v2731 = vtanh.pop %v2730
    %v2732 = vmul.f32 %v2727, %v2731
    %s2733 = smul.u32 12, 4
    %s2734 = smul.addr %s2733, 8
    %s2735 = scalar_lea.vmem [#allocation2], %s2734
    %v2736 = vld [vmem:[%s2735] sm:$0xff]
    %v2737 = vld [vmem:[%s2735 + $0x8] sm:$0xff]
    %v2738 = vld [vmem:[%s2735 + $0x10] sm:$0xff]
    %v2739 = vld [vmem:[%s2735 + $0x18] sm:$0xff]
    %2740 = vmatprep.subr.mxu0 %v856
    %2741 = vmatpush1.msra.mxu0 %v855
    %2742 = vmatprep.subr.mxu0 %v852
    %2743 = vmatpush1.msra.mxu0 %v851
    %2744 = vmatprep.subr.mxu0 %v848
    %2745 = vmatpush1.msra.mxu0 %v847
    %2746 = vmatprep.subr.mxu0 %v844
    %2747 = vmatpush1.msra.mxu0 %v843
    %2748 = vmatprep.subr.mxu0 %v840
    %2749 = vmatpush1.msra.mxu0 %v839
    %2750 = vmatprep.subr.mxu0 %v836
    %2751 = vmatpush1.msra.mxu0 %v835
    %2752 = vmatprep.subr.mxu0 %v832
    %2753 = vmatpush1.msra.mxu0 %v831
    %2754 = vmatprep.subr.mxu0 %v828
    %2755 = vmatpush1.msra.mxu0 %v827
    %2756 = vmatprep.subr.mxu0 %v824
    %2757 = vmatpush1.msra.mxu0 %v823
    %2758 = vmatprep.subr.mxu0 %v820
    %2759 = vmatpush1.msra.mxu0 %v819
    %2760 = vmatprep.subr.mxu0 %v816
    %2761 = vmatpush1.msra.mxu0 %v815
    %2762 = vmatprep.subr.mxu0 %v812
    %2763 = vmatpush1.msra.mxu0 %v811
    %2764 = vmatprep.subr.mxu0 %v808
    %2765 = vmatpush1.msra.mxu0 %v807
    %2766 = vmatprep.subr.mxu0 %v804
    %2767 = vmatpush1.msra.mxu0 %v803
    %2768 = vmatprep.subr.mxu0 %v800
    %2769 = vmatpush1.msra.mxu0 %v799
    %2770 = vmatprep.subr.mxu0 %v796
    %2771 = vmatpush1.msra.mxu0 %v795
    %2772 = vmatprep.subr.mxu0 0.0
    %2773 = vmatpush2.msra.mxu0 0.0
    %2774 = vmatprep.subr.mxu0 0.0
    %2775 = vmatpush2.msra.mxu0 0.0
    %2776 = vmatprep.subr.mxu0 0.0
    %2777 = vmatpush2.msra.mxu0 0.0
    %2778 = vmatprep.subr.mxu0 0.0
    %2779 = vmatpush2.msra.mxu0 0.0
    %2780 = vmatprep.subr.mxu0 0.0
    %2781 = vmatpush2.msra.mxu0 0.0
    %2782 = vmatprep.subr.mxu0 0.0
    %2783 = vmatpush2.msra.mxu0 0.0
    %2784 = vmatprep.subr.mxu0 0.0
    %2785 = vmatpush2.msra.mxu0 0.0
    %2786 = vmatprep.subr.mxu0 0.0
    %2787 = vmatpush2.msra.mxu0 0.0
    %2788 = vmatprep.subr.mxu0 0.0
    %2789 = vmatpush2.msra.mxu0 0.0
    %2790 = vmatprep.subr.mxu0 0.0
    %2791 = vmatpush2.msra.mxu0 0.0
    %2792 = vmatprep.subr.mxu0 0.0
    %2793 = vmatpush2.msra.mxu0 0.0
    %2794 = vmatprep.subr.mxu0 0.0
    %2795 = vmatpush2.msra.mxu0 0.0
    %2796 = vmatprep.subr.mxu0 0.0
    %2797 = vmatpush2.msra.mxu0 0.0
    %2798 = vmatprep.subr.mxu0 0.0
    %2799 = vmatpush2.msra.mxu0 0.0
    %2800 = vmatprep.subr.mxu0 0.0
    %2801 = vmatpush2.msra.mxu0 0.0
    %2802 = vmatprep.subr.mxu0 0.0
    %2803 = vmatpush2.msra.mxu0 0.0
    %2804 = vmatprep.mubr.f32.mxu0 0.0
    %2805 = vmatmul.mubr.f32.gmra.mxu0 %v2732
    %v2806 = vpop.f32.mrf.mxu0
    %v2807 = vadd.f32 0.0, %v2806
    %v2808 = vpop.f32.mrf.mxu0
    %v2809 = vadd.f32 0.0, %v2808
    %2810 = vdwg.mxu0
    %2811 = vmatprep.subr.mxu0 %v858
    %2812 = vmatpush1.msra.mxu0 %v857
    %2813 = vmatprep.subr.mxu0 %v854
    %2814 = vmatpush1.msra.mxu0 %v853
    %2815 = vmatprep.subr.mxu0 %v850
    %2816 = vmatpush1.msra.mxu0 %v849
    %2817 = vmatprep.subr.mxu0 %v846
    %2818 = vmatpush1.msra.mxu0 %v845
    %2819 = vmatprep.subr.mxu0 %v842
    %2820 = vmatpush1.msra.mxu0 %v841
    %2821 = vmatprep.subr.mxu0 %v838
    %2822 = vmatpush1.msra.mxu0 %v837
    %2823 = vmatprep.subr.mxu0 %v834
    %2824 = vmatpush1.msra.mxu0 %v833
    %2825 = vmatprep.subr.mxu0 %v830
    %2826 = vmatpush1.msra.mxu0 %v829
    %2827 = vmatprep.subr.mxu0 %v826
    %2828 = vmatpush1.msra.mxu0 %v825
    %2829 = vmatprep.subr.mxu0 %v822
    %2830 = vmatpush1.msra.mxu0 %v821
    %2831 = vmatprep.subr.mxu0 %v818
    %2832 = vmatpush1.msra.mxu0 %v817
    %2833 = vmatprep.subr.mxu0 %v814
    %2834 = vmatpush1.msra.mxu0 %v813
    %2835 = vmatprep.subr.mxu0 %v810
    %2836 = vmatpush1.msra.mxu0 %v809
    %2837 = vmatprep.subr.mxu0 %v806
    %2838 = vmatpush1.msra.mxu0 %v805
    %2839 = vmatprep.subr.mxu0 %v802
    %2840 = vmatpush1.msra.mxu0 %v801
    %2841 = vmatprep.subr.mxu0 %v798
    %2842 = vmatpush1.msra.mxu0 %v797
    %2843 = vmatprep.subr.mxu0 0.0
    %2844 = vmatpush2.msra.mxu0 0.0
    %2845 = vmatprep.subr.mxu0 0.0
    %2846 = vmatpush2.msra.mxu0 0.0
    %2847 = vmatprep.subr.mxu0 0.0
    %2848 = vmatpush2.msra.mxu0 0.0
    %2849 = vmatprep.subr.mxu0 0.0
    %2850 = vmatpush2.msra.mxu0 0.0
    %2851 = vmatprep.subr.mxu0 0.0
    %2852 = vmatpush2.msra.mxu0 0.0
    %2853 = vmatprep.subr.mxu0 0.0
    %2854 = vmatpush2.msra.mxu0 0.0
    %2855 = vmatprep.subr.mxu0 0.0
    %2856 = vmatpush2.msra.mxu0 0.0
    %2857 = vmatprep.subr.mxu0 0.0
    %2858 = vmatpush2.msra.mxu0 0.0
    %2859 = vmatprep.subr.mxu0 0.0
    %2860 = vmatpush2.msra.mxu0 0.0
    %2861 = vmatprep.subr.mxu0 0.0
    %2862 = vmatpush2.msra.mxu0 0.0
    %2863 = vmatprep.subr.mxu0 0.0
    %2864 = vmatpush2.msra.mxu0 0.0
    %2865 = vmatprep.subr.mxu0 0.0
    %2866 = vmatpush2.msra.mxu0 0.0
    %2867 = vmatprep.subr.mxu0 0.0
    %2868 = vmatpush2.msra.mxu0 0.0
    %2869 = vmatprep.subr.mxu0 0.0
    %2870 = vmatpush2.msra.mxu0 0.0
    %2871 = vmatprep.subr.mxu0 0.0
    %2872 = vmatpush2.msra.mxu0 0.0
    %2873 = vmatprep.subr.mxu0 0.0
    %2874 = vmatpush2.msra.mxu0 0.0
    %2875 = vmatprep.mubr.f32.mxu0 0.0
    %2876 = vmatmul.mubr.f32.gmra.mxu0 %v2732
    %v2877 = vpop.f32.mrf.mxu0
    %v2878 = vadd.f32 0.0, %v2877
    %v2879 = vpop.f32.mrf.mxu0
    %v2880 = vadd.f32 0.0, %v2879
    %2881 = vdwg.mxu0
    %v2882 = vadd.f32 %v2736, %v2807
    %v2883 = vadd.f32 %v2737, %v2809
    %v2884 = vadd.f32 %v2738, %v2878
    %v2885 = vadd.f32 %v2739, %v2880
    %v2886 = vmul.f32 %v2882, 0.5
    %v2887 = vtanh.pop %v2886
    %v2888 = vmul.f32 %v2887, 0.5
    %v2889 = vadd.f32 %v2888, 0.5
    %v2890 = vmul.f32 %v2883, 0.5
    %v2891 = vtanh.pop %v2890
    %v2892 = vmul.f32 %v2891, 0.5
    %v2893 = vadd.f32 %v2892, 0.5
    %v2894 = vtanh.pop %v2884
    %v2895 = vmul.f32 %v2885, 0.5
    %v2896 = vtanh.pop %v2895
    %v2897 = vmul.f32 %v2896, 0.5
    %v2898 = vadd.f32 %v2897, 0.5
    %v2899 = vmul.f32 %v2730, %v2889
    %v2900 = vmul.f32 %v2893, %v2894
    %v2901 = vadd.f32 %v2899, %v2900
    %v2902 = vtanh.pop %v2901
    %v2903 = vmul.f32 %v2898, %v2902
    %s2904 = smul.u32 13, 4
    %s2905 = smul.addr %s2904, 8
    %s2906 = scalar_lea.vmem [#allocation2], %s2905
    %v2907 = vld [vmem:[%s2906] sm:$0xff]
    %v2908 = vld [vmem:[%s2906 + $0x8] sm:$0xff]
    %v2909 = vld [vmem:[%s2906 + $0x10] sm:$0xff]
    %v2910 = vld [vmem:[%s2906 + $0x18] sm:$0xff]
    %2911 = vmatprep.subr.mxu0 %v856
    %2912 = vmatpush1.msra.mxu0 %v855
    %2913 = vmatprep.subr.mxu0 %v852
    %2914 = vmatpush1.msra.mxu0 %v851
    %2915 = vmatprep.subr.mxu0 %v848
    %2916 = vmatpush1.msra.mxu0 %v847
    %2917 = vmatprep.subr.mxu0 %v844
    %2918 = vmatpush1.msra.mxu0 %v843
    %2919 = vmatprep.subr.mxu0 %v840
    %2920 = vmatpush1.msra.mxu0 %v839
    %2921 = vmatprep.subr.mxu0 %v836
    %2922 = vmatpush1.msra.mxu0 %v835
    %2923 = vmatprep.subr.mxu0 %v832
    %2924 = vmatpush1.msra.mxu0 %v831
    %2925 = vmatprep.subr.mxu0 %v828
    %2926 = vmatpush1.msra.mxu0 %v827
    %2927 = vmatprep.subr.mxu0 %v824
    %2928 = vmatpush1.msra.mxu0 %v823
    %2929 = vmatprep.subr.mxu0 %v820
    %2930 = vmatpush1.msra.mxu0 %v819
    %2931 = vmatprep.subr.mxu0 %v816
    %2932 = vmatpush1.msra.mxu0 %v815
    %2933 = vmatprep.subr.mxu0 %v812
    %2934 = vmatpush1.msra.mxu0 %v811
    %2935 = vmatprep.subr.mxu0 %v808
    %2936 = vmatpush1.msra.mxu0 %v807
    %2937 = vmatprep.subr.mxu0 %v804
    %2938 = vmatpush1.msra.mxu0 %v803
    %2939 = vmatprep.subr.mxu0 %v800
    %2940 = vmatpush1.msra.mxu0 %v799
    %2941 = vmatprep.subr.mxu0 %v796
    %2942 = vmatpush1.msra.mxu0 %v795
    %2943 = vmatprep.subr.mxu0 0.0
    %2944 = vmatpush2.msra.mxu0 0.0
    %2945 = vmatprep.subr.mxu0 0.0
    %2946 = vmatpush2.msra.mxu0 0.0
    %2947 = vmatprep.subr.mxu0 0.0
    %2948 = vmatpush2.msra.mxu0 0.0
    %2949 = vmatprep.subr.mxu0 0.0
    %2950 = vmatpush2.msra.mxu0 0.0
    %2951 = vmatprep.subr.mxu0 0.0
    %2952 = vmatpush2.msra.mxu0 0.0
    %2953 = vmatprep.subr.mxu0 0.0
    %2954 = vmatpush2.msra.mxu0 0.0
    %2955 = vmatprep.subr.mxu0 0.0
    %2956 = vmatpush2.msra.mxu0 0.0
    %2957 = vmatprep.subr.mxu0 0.0
    %2958 = vmatpush2.msra.mxu0 0.0
    %2959 = vmatprep.subr.mxu0 0.0
    %2960 = vmatpush2.msra.mxu0 0.0
    %2961 = vmatprep.subr.mxu0 0.0
    %2962 = vmatpush2.msra.mxu0 0.0
    %2963 = vmatprep.subr.mxu0 0.0
    %2964 = vmatpush2.msra.mxu0 0.0
    %2965 = vmatprep.subr.mxu0 0.0
    %2966 = vmatpush2.msra.mxu0 0.0
    %2967 = vmatprep.subr.mxu0 0.0
    %2968 = vmatpush2.msra.mxu0 0.0
    %2969 = vmatprep.subr.mxu0 0.0
    %2970 = vmatpush2.msra.mxu0 0.0
    %2971 = vmatprep.subr.mxu0 0.0
    %2972 = vmatpush2.msra.mxu0 0.0
    %2973 = vmatprep.subr.mxu0 0.0
    %2974 = vmatpush2.msra.mxu0 0.0
    %2975 = vmatprep.mubr.f32.mxu0 0.0
    %2976 = vmatmul.mubr.f32.gmra.mxu0 %v2903
    %v2977 = vpop.f32.mrf.mxu0
    %v2978 = vadd.f32 0.0, %v2977
    %v2979 = vpop.f32.mrf.mxu0
    %v2980 = vadd.f32 0.0, %v2979
    %2981 = vdwg.mxu0
    %2982 = vmatprep.subr.mxu0 %v858
    %2983 = vmatpush1.msra.mxu0 %v857
    %2984 = vmatprep.subr.mxu0 %v854
    %2985 = vmatpush1.msra.mxu0 %v853
    %2986 = vmatprep.subr.mxu0 %v850
    %2987 = vmatpush1.msra.mxu0 %v849
    %2988 = vmatprep.subr.mxu0 %v846
    %2989 = vmatpush1.msra.mxu0 %v845
    %2990 = vmatprep.subr.mxu0 %v842
    %2991 = vmatpush1.msra.mxu0 %v841
    %2992 = vmatprep.subr.mxu0 %v838
    %2993 = vmatpush1.msra.mxu0 %v837
    %2994 = vmatprep.subr.mxu0 %v834
    %2995 = vmatpush1.msra.mxu0 %v833
    %2996 = vmatprep.subr.mxu0 %v830
    %2997 = vmatpush1.msra.mxu0 %v829
    %2998 = vmatprep.subr.mxu0 %v826
    %2999 = vmatpush1.msra.mxu0 %v825
    %3000 = vmatprep.subr.mxu0 %v822
    %3001 = vmatpush1.msra.mxu0 %v821
    %3002 = vmatprep.subr.mxu0 %v818
    %3003 = vmatpush1.msra.mxu0 %v817
    %3004 = vmatprep.subr.mxu0 %v814
    %3005 = vmatpush1.msra.mxu0 %v813
    %3006 = vmatprep.subr.mxu0 %v810
    %3007 = vmatpush1.msra.mxu0 %v809
    %3008 = vmatprep.subr.mxu0 %v806
    %3009 = vmatpush1.msra.mxu0 %v805
    %3010 = vmatprep.subr.mxu0 %v802
    %3011 = vmatpush1.msra.mxu0 %v801
    %3012 = vmatprep.subr.mxu0 %v798
    %3013 = vmatpush1.msra.mxu0 %v797
    %3014 = vmatprep.subr.mxu0 0.0
    %3015 = vmatpush2.msra.mxu0 0.0
    %3016 = vmatprep.subr.mxu0 0.0
    %3017 = vmatpush2.msra.mxu0 0.0
    %3018 = vmatprep.subr.mxu0 0.0
    %3019 = vmatpush2.msra.mxu0 0.0
    %3020 = vmatprep.subr.mxu0 0.0
    %3021 = vmatpush2.msra.mxu0 0.0
    %3022 = vmatprep.subr.mxu0 0.0
    %3023 = vmatpush2.msra.mxu0 0.0
    %3024 = vmatprep.subr.mxu0 0.0
    %3025 = vmatpush2.msra.mxu0 0.0
    %3026 = vmatprep.subr.mxu0 0.0
    %3027 = vmatpush2.msra.mxu0 0.0
    %3028 = vmatprep.subr.mxu0 0.0
    %3029 = vmatpush2.msra.mxu0 0.0
    %3030 = vmatprep.subr.mxu0 0.0
    %3031 = vmatpush2.msra.mxu0 0.0
    %3032 = vmatprep.subr.mxu0 0.0
    %3033 = vmatpush2.msra.mxu0 0.0
    %3034 = vmatprep.subr.mxu0 0.0
    %3035 = vmatpush2.msra.mxu0 0.0
    %3036 = vmatprep.subr.mxu0 0.0
    %3037 = vmatpush2.msra.mxu0 0.0
    %3038 = vmatprep.subr.mxu0 0.0
    %3039 = vmatpush2.msra.mxu0 0.0
    %3040 = vmatprep.subr.mxu0 0.0
    %3041 = vmatpush2.msra.mxu0 0.0
    %3042 = vmatprep.subr.mxu0 0.0
    %3043 = vmatpush2.msra.mxu0 0.0
    %3044 = vmatprep.subr.mxu0 0.0
    %3045 = vmatpush2.msra.mxu0 0.0
    %3046 = vmatprep.mubr.f32.mxu0 0.0
    %3047 = vmatmul.mubr.f32.gmra.mxu0 %v2903
    %v3048 = vpop.f32.mrf.mxu0
    %v3049 = vadd.f32 0.0, %v3048
    %v3050 = vpop.f32.mrf.mxu0
    %v3051 = vadd.f32 0.0, %v3050
    %3052 = vdwg.mxu0
    %v3053 = vadd.f32 %v2907, %v2978
    %v3054 = vadd.f32 %v2908, %v2980
    %v3055 = vadd.f32 %v2909, %v3049
    %v3056 = vadd.f32 %v2910, %v3051
    %v3057 = vmul.f32 %v3053, 0.5
    %v3058 = vtanh.pop %v3057
    %v3059 = vmul.f32 %v3058, 0.5
    %v3060 = vadd.f32 %v3059, 0.5
    %v3061 = vmul.f32 %v3054, 0.5
    %v3062 = vtanh.pop %v3061
    %v3063 = vmul.f32 %v3062, 0.5
    %v3064 = vadd.f32 %v3063, 0.5
    %v3065 = vtanh.pop %v3055
    %v3066 = vmul.f32 %v3056, 0.5
    %v3067 = vtanh.pop %v3066
    %v3068 = vmul.f32 %v3067, 0.5
    %v3069 = vadd.f32 %v3068, 0.5
    %v3070 = vmul.f32 %v2901, %v3060
    %v3071 = vmul.f32 %v3064, %v3065
    %v3072 = vadd.f32 %v3070, %v3071
    %v3073 = vtanh.pop %v3072
    %v3074 = vmul.f32 %v3069, %v3073
    %s3075 = smul.u32 14, 4
    %s3076 = smul.addr %s3075, 8
    %s3077 = scalar_lea.vmem [#allocation2], %s3076
    %v3078 = vld [vmem:[%s3077] sm:$0xff]
    %v3079 = vld [vmem:[%s3077 + $0x8] sm:$0xff]
    %v3080 = vld [vmem:[%s3077 + $0x10] sm:$0xff]
    %v3081 = vld [vmem:[%s3077 + $0x18] sm:$0xff]
    %3082 = vmatprep.subr.mxu0 %v856
    %3083 = vmatpush1.msra.mxu0 %v855
    %3084 = vmatprep.subr.mxu0 %v852
    %3085 = vmatpush1.msra.mxu0 %v851
    %3086 = vmatprep.subr.mxu0 %v848
    %3087 = vmatpush1.msra.mxu0 %v847
    %3088 = vmatprep.subr.mxu0 %v844
    %3089 = vmatpush1.msra.mxu0 %v843
    %3090 = vmatprep.subr.mxu0 %v840
    %3091 = vmatpush1.msra.mxu0 %v839
    %3092 = vmatprep.subr.mxu0 %v836
    %3093 = vmatpush1.msra.mxu0 %v835
    %3094 = vmatprep.subr.mxu0 %v832
    %3095 = vmatpush1.msra.mxu0 %v831
    %3096 = vmatprep.subr.mxu0 %v828
    %3097 = vmatpush1.msra.mxu0 %v827
    %3098 = vmatprep.subr.mxu0 %v824
    %3099 = vmatpush1.msra.mxu0 %v823
    %3100 = vmatprep.subr.mxu0 %v820
    %3101 = vmatpush1.msra.mxu0 %v819
    %3102 = vmatprep.subr.mxu0 %v816
    %3103 = vmatpush1.msra.mxu0 %v815
    %3104 = vmatprep.subr.mxu0 %v812
    %3105 = vmatpush1.msra.mxu0 %v811
    %3106 = vmatprep.subr.mxu0 %v808
    %3107 = vmatpush1.msra.mxu0 %v807
    %3108 = vmatprep.subr.mxu0 %v804
    %3109 = vmatpush1.msra.mxu0 %v803
    %3110 = vmatprep.subr.mxu0 %v800
    %3111 = vmatpush1.msra.mxu0 %v799
    %3112 = vmatprep.subr.mxu0 %v796
    %3113 = vmatpush1.msra.mxu0 %v795
    %3114 = vmatprep.subr.mxu0 0.0
    %3115 = vmatpush2.msra.mxu0 0.0
    %3116 = vmatprep.subr.mxu0 0.0
    %3117 = vmatpush2.msra.mxu0 0.0
    %3118 = vmatprep.subr.mxu0 0.0
    %3119 = vmatpush2.msra.mxu0 0.0
    %3120 = vmatprep.subr.mxu0 0.0
    %3121 = vmatpush2.msra.mxu0 0.0
    %3122 = vmatprep.subr.mxu0 0.0
    %3123 = vmatpush2.msra.mxu0 0.0
    %3124 = vmatprep.subr.mxu0 0.0
    %3125 = vmatpush2.msra.mxu0 0.0
    %3126 = vmatprep.subr.mxu0 0.0
    %3127 = vmatpush2.msra.mxu0 0.0
    %3128 = vmatprep.subr.mxu0 0.0
    %3129 = vmatpush2.msra.mxu0 0.0
    %3130 = vmatprep.subr.mxu0 0.0
    %3131 = vmatpush2.msra.mxu0 0.0
    %3132 = vmatprep.subr.mxu0 0.0
    %3133 = vmatpush2.msra.mxu0 0.0
    %3134 = vmatprep.subr.mxu0 0.0
    %3135 = vmatpush2.msra.mxu0 0.0
    %3136 = vmatprep.subr.mxu0 0.0
    %3137 = vmatpush2.msra.mxu0 0.0
    %3138 = vmatprep.subr.mxu0 0.0
    %3139 = vmatpush2.msra.mxu0 0.0
    %3140 = vmatprep.subr.mxu0 0.0
    %3141 = vmatpush2.msra.mxu0 0.0
    %3142 = vmatprep.subr.mxu0 0.0
    %3143 = vmatpush2.msra.mxu0 0.0
    %3144 = vmatprep.subr.mxu0 0.0
    %3145 = vmatpush2.msra.mxu0 0.0
    %3146 = vmatprep.mubr.f32.mxu0 0.0
    %3147 = vmatmul.mubr.f32.gmra.mxu0 %v3074
    %v3148 = vpop.f32.mrf.mxu0
    %v3149 = vadd.f32 0.0, %v3148
    %v3150 = vpop.f32.mrf.mxu0
    %v3151 = vadd.f32 0.0, %v3150
    %3152 = vdwg.mxu0
    %3153 = vmatprep.subr.mxu0 %v858
    %3154 = vmatpush1.msra.mxu0 %v857
    %3155 = vmatprep.subr.mxu0 %v854
    %3156 = vmatpush1.msra.mxu0 %v853
    %3157 = vmatprep.subr.mxu0 %v850
    %3158 = vmatpush1.msra.mxu0 %v849
    %3159 = vmatprep.subr.mxu0 %v846
    %3160 = vmatpush1.msra.mxu0 %v845
    %3161 = vmatprep.subr.mxu0 %v842
    %3162 = vmatpush1.msra.mxu0 %v841
    %3163 = vmatprep.subr.mxu0 %v838
    %3164 = vmatpush1.msra.mxu0 %v837
    %3165 = vmatprep.subr.mxu0 %v834
    %3166 = vmatpush1.msra.mxu0 %v833
    %3167 = vmatprep.subr.mxu0 %v830
    %3168 = vmatpush1.msra.mxu0 %v829
    %3169 = vmatprep.subr.mxu0 %v826
    %3170 = vmatpush1.msra.mxu0 %v825
    %3171 = vmatprep.subr.mxu0 %v822
    %3172 = vmatpush1.msra.mxu0 %v821
    %3173 = vmatprep.subr.mxu0 %v818
    %3174 = vmatpush1.msra.mxu0 %v817
    %3175 = vmatprep.subr.mxu0 %v814
    %3176 = vmatpush1.msra.mxu0 %v813
    %3177 = vmatprep.subr.mxu0 %v810
    %3178 = vmatpush1.msra.mxu0 %v809
    %3179 = vmatprep.subr.mxu0 %v806
    %3180 = vmatpush1.msra.mxu0 %v805
    %3181 = vmatprep.subr.mxu0 %v802
    %3182 = vmatpush1.msra.mxu0 %v801
    %3183 = vmatprep.subr.mxu0 %v798
    %3184 = vmatpush1.msra.mxu0 %v797
    %3185 = vmatprep.subr.mxu0 0.0
    %3186 = vmatpush2.msra.mxu0 0.0
    %3187 = vmatprep.subr.mxu0 0.0
    %3188 = vmatpush2.msra.mxu0 0.0
    %3189 = vmatprep.subr.mxu0 0.0
    %3190 = vmatpush2.msra.mxu0 0.0
    %3191 = vmatprep.subr.mxu0 0.0
    %3192 = vmatpush2.msra.mxu0 0.0
    %3193 = vmatprep.subr.mxu0 0.0
    %3194 = vmatpush2.msra.mxu0 0.0
    %3195 = vmatprep.subr.mxu0 0.0
    %3196 = vmatpush2.msra.mxu0 0.0
    %3197 = vmatprep.subr.mxu0 0.0
    %3198 = vmatpush2.msra.mxu0 0.0
    %3199 = vmatprep.subr.mxu0 0.0
    %3200 = vmatpush2.msra.mxu0 0.0
    %3201 = vmatprep.subr.mxu0 0.0
    %3202 = vmatpush2.msra.mxu0 0.0
    %3203 = vmatprep.subr.mxu0 0.0
    %3204 = vmatpush2.msra.mxu0 0.0
    %3205 = vmatprep.subr.mxu0 0.0
    %3206 = vmatpush2.msra.mxu0 0.0
    %3207 = vmatprep.subr.mxu0 0.0
    %3208 = vmatpush2.msra.mxu0 0.0
    %3209 = vmatprep.subr.mxu0 0.0
    %3210 = vmatpush2.msra.mxu0 0.0
    %3211 = vmatprep.subr.mxu0 0.0
    %3212 = vmatpush2.msra.mxu0 0.0
    %3213 = vmatprep.subr.mxu0 0.0
    %3214 = vmatpush2.msra.mxu0 0.0
    %3215 = vmatprep.subr.mxu0 0.0
    %3216 = vmatpush2.msra.mxu0 0.0
    %3217 = vmatprep.mubr.f32.mxu0 0.0
    %3218 = vmatmul.mubr.f32.gmra.mxu0 %v3074
    %v3219 = vpop.f32.mrf.mxu0
    %v3220 = vadd.f32 0.0, %v3219
    %v3221 = vpop.f32.mrf.mxu0
    %v3222 = vadd.f32 0.0, %v3221
    %3223 = vdwg.mxu0
    %v3224 = vadd.f32 %v3078, %v3149
    %v3225 = vadd.f32 %v3079, %v3151
    %v3226 = vadd.f32 %v3080, %v3220
    %v3227 = vadd.f32 %v3081, %v3222
    %v3228 = vmul.f32 %v3224, 0.5
    %v3229 = vtanh.pop %v3228
    %v3230 = vmul.f32 %v3229, 0.5
    %v3231 = vadd.f32 %v3230, 0.5
    %v3232 = vmul.f32 %v3225, 0.5
    %v3233 = vtanh.pop %v3232
    %v3234 = vmul.f32 %v3233, 0.5
    %v3235 = vadd.f32 %v3234, 0.5
    %v3236 = vtanh.pop %v3226
    %v3237 = vmul.f32 %v3227, 0.5
    %v3238 = vtanh.pop %v3237
    %v3239 = vmul.f32 %v3238, 0.5
    %v3240 = vadd.f32 %v3239, 0.5
    %v3241 = vmul.f32 %v3072, %v3231
    %v3242 = vmul.f32 %v3235, %v3236
    %v3243 = vadd.f32 %v3241, %v3242
    %v3244 = vtanh.pop %v3243
    %v3245 = vmul.f32 %v3240, %v3244
    %s3246 = smul.u32 15, 4
    %s3247 = smul.addr %s3246, 8
    %s3248 = scalar_lea.vmem [#allocation2], %s3247
    %v3249 = vld [vmem:[%s3248] sm:$0xff]
    %v3250 = vld [vmem:[%s3248 + $0x8] sm:$0xff]
    %v3251 = vld [vmem:[%s3248 + $0x10] sm:$0xff]
    %v3252 = vld [vmem:[%s3248 + $0x18] sm:$0xff]
    %3253 = vmatprep.subr.mxu0 %v856
    %3254 = vmatpush1.msra.mxu0 %v855
    %3255 = vmatprep.subr.mxu0 %v852
    %3256 = vmatpush1.msra.mxu0 %v851
    %3257 = vmatprep.subr.mxu0 %v848
    %3258 = vmatpush1.msra.mxu0 %v847
    %3259 = vmatprep.subr.mxu0 %v844
    %3260 = vmatpush1.msra.mxu0 %v843
    %3261 = vmatprep.subr.mxu0 %v840
    %3262 = vmatpush1.msra.mxu0 %v839
    %3263 = vmatprep.subr.mxu0 %v836
    %3264 = vmatpush1.msra.mxu0 %v835
    %3265 = vmatprep.subr.mxu0 %v832
    %3266 = vmatpush1.msra.mxu0 %v831
    %3267 = vmatprep.subr.mxu0 %v828
    %3268 = vmatpush1.msra.mxu0 %v827
    %3269 = vmatprep.subr.mxu0 %v824
    %3270 = vmatpush1.msra.mxu0 %v823
    %3271 = vmatprep.subr.mxu0 %v820
    %3272 = vmatpush1.msra.mxu0 %v819
    %3273 = vmatprep.subr.mxu0 %v816
    %3274 = vmatpush1.msra.mxu0 %v815
    %3275 = vmatprep.subr.mxu0 %v812
    %3276 = vmatpush1.msra.mxu0 %v811
    %3277 = vmatprep.subr.mxu0 %v808
    %3278 = vmatpush1.msra.mxu0 %v807
    %3279 = vmatprep.subr.mxu0 %v804
    %3280 = vmatpush1.msra.mxu0 %v803
    %3281 = vmatprep.subr.mxu0 %v800
    %3282 = vmatpush1.msra.mxu0 %v799
    %3283 = vmatprep.subr.mxu0 %v796
    %3284 = vmatpush1.msra.mxu0 %v795
    %3285 = vmatprep.subr.mxu0 0.0
    %3286 = vmatpush2.msra.mxu0 0.0
    %3287 = vmatprep.subr.mxu0 0.0
    %3288 = vmatpush2.msra.mxu0 0.0
    %3289 = vmatprep.subr.mxu0 0.0
    %3290 = vmatpush2.msra.mxu0 0.0
    %3291 = vmatprep.subr.mxu0 0.0
    %3292 = vmatpush2.msra.mxu0 0.0
    %3293 = vmatprep.subr.mxu0 0.0
    %3294 = vmatpush2.msra.mxu0 0.0
    %3295 = vmatprep.subr.mxu0 0.0
    %3296 = vmatpush2.msra.mxu0 0.0
    %3297 = vmatprep.subr.mxu0 0.0
    %3298 = vmatpush2.msra.mxu0 0.0
    %3299 = vmatprep.subr.mxu0 0.0
    %3300 = vmatpush2.msra.mxu0 0.0
    %3301 = vmatprep.subr.mxu0 0.0
    %3302 = vmatpush2.msra.mxu0 0.0
    %3303 = vmatprep.subr.mxu0 0.0
    %3304 = vmatpush2.msra.mxu0 0.0
    %3305 = vmatprep.subr.mxu0 0.0
    %3306 = vmatpush2.msra.mxu0 0.0
    %3307 = vmatprep.subr.mxu0 0.0
    %3308 = vmatpush2.msra.mxu0 0.0
    %3309 = vmatprep.subr.mxu0 0.0
    %3310 = vmatpush2.msra.mxu0 0.0
    %3311 = vmatprep.subr.mxu0 0.0
    %3312 = vmatpush2.msra.mxu0 0.0
    %3313 = vmatprep.subr.mxu0 0.0
    %3314 = vmatpush2.msra.mxu0 0.0
    %3315 = vmatprep.subr.mxu0 0.0
    %3316 = vmatpush2.msra.mxu0 0.0
    %3317 = vmatprep.mubr.f32.mxu0 0.0
    %3318 = vmatmul.mubr.f32.gmra.mxu0 %v3245
    %v3319 = vpop.f32.mrf.mxu0
    %v3320 = vadd.f32 0.0, %v3319
    %v3321 = vpop.f32.mrf.mxu0
    %v3322 = vadd.f32 0.0, %v3321
    %3323 = vdwg.mxu0
    %3324 = vmatprep.subr.mxu0 %v858
    %3325 = vmatpush1.msra.mxu0 %v857
    %3326 = vmatprep.subr.mxu0 %v854
    %3327 = vmatpush1.msra.mxu0 %v853
    %3328 = vmatprep.subr.mxu0 %v850
    %3329 = vmatpush1.msra.mxu0 %v849
    %3330 = vmatprep.subr.mxu0 %v846
    %3331 = vmatpush1.msra.mxu0 %v845
    %3332 = vmatprep.subr.mxu0 %v842
    %3333 = vmatpush1.msra.mxu0 %v841
    %3334 = vmatprep.subr.mxu0 %v838
    %3335 = vmatpush1.msra.mxu0 %v837
    %3336 = vmatprep.subr.mxu0 %v834
    %3337 = vmatpush1.msra.mxu0 %v833
    %3338 = vmatprep.subr.mxu0 %v830
    %3339 = vmatpush1.msra.mxu0 %v829
    %3340 = vmatprep.subr.mxu0 %v826
    %3341 = vmatpush1.msra.mxu0 %v825
    %3342 = vmatprep.subr.mxu0 %v822
    %3343 = vmatpush1.msra.mxu0 %v821
    %3344 = vmatprep.subr.mxu0 %v818
    %3345 = vmatpush1.msra.mxu0 %v817
    %3346 = vmatprep.subr.mxu0 %v814
    %3347 = vmatpush1.msra.mxu0 %v813
    %3348 = vmatprep.subr.mxu0 %v810
    %3349 = vmatpush1.msra.mxu0 %v809
    %3350 = vmatprep.subr.mxu0 %v806
    %3351 = vmatpush1.msra.mxu0 %v805
    %3352 = vmatprep.subr.mxu0 %v802
    %3353 = vmatpush1.msra.mxu0 %v801
    %3354 = vmatprep.subr.mxu0 %v798
    %3355 = vmatpush1.msra.mxu0 %v797
    %3356 = vmatprep.subr.mxu0 0.0
    %3357 = vmatpush2.msra.mxu0 0.0
    %3358 = vmatprep.subr.mxu0 0.0
    %3359 = vmatpush2.msra.mxu0 0.0
    %3360 = vmatprep.subr.mxu0 0.0
    %3361 = vmatpush2.msra.mxu0 0.0
    %3362 = vmatprep.subr.mxu0 0.0
    %3363 = vmatpush2.msra.mxu0 0.0
    %3364 = vmatprep.subr.mxu0 0.0
    %3365 = vmatpush2.msra.mxu0 0.0
    %3366 = vmatprep.subr.mxu0 0.0
    %3367 = vmatpush2.msra.mxu0 0.0
    %3368 = vmatprep.subr.mxu0 0.0
    %3369 = vmatpush2.msra.mxu0 0.0
    %3370 = vmatprep.subr.mxu0 0.0
    %3371 = vmatpush2.msra.mxu0 0.0
    %3372 = vmatprep.subr.mxu0 0.0
    %3373 = vmatpush2.msra.mxu0 0.0
    %3374 = vmatprep.subr.mxu0 0.0
    %3375 = vmatpush2.msra.mxu0 0.0
    %3376 = vmatprep.subr.mxu0 0.0
    %3377 = vmatpush2.msra.mxu0 0.0
    %3378 = vmatprep.subr.mxu0 0.0
    %3379 = vmatpush2.msra.mxu0 0.0
    %3380 = vmatprep.subr.mxu0 0.0
    %3381 = vmatpush2.msra.mxu0 0.0
    %3382 = vmatprep.subr.mxu0 0.0
    %3383 = vmatpush2.msra.mxu0 0.0
    %3384 = vmatprep.subr.mxu0 0.0
    %3385 = vmatpush2.msra.mxu0 0.0
    %3386 = vmatprep.subr.mxu0 0.0
    %3387 = vmatpush2.msra.mxu0 0.0
    %3388 = vmatprep.mubr.f32.mxu0 0.0
    %3389 = vmatmul.mubr.f32.gmra.mxu0 %v3245
    %v3390 = vpop.f32.mrf.mxu0
    %v3391 = vadd.f32 0.0, %v3390
    %v3392 = vpop.f32.mrf.mxu0
    %v3393 = vadd.f32 0.0, %v3392
    %3394 = vdwg.mxu0
    %v3395 = vadd.f32 %v3249, %v3320
    %v3396 = vadd.f32 %v3250, %v3322
    %v3397 = vadd.f32 %v3251, %v3391
    %v3398 = vadd.f32 %v3252, %v3393
    %v3399 = vmul.f32 %v3395, 0.5
    %v3400 = vtanh.pop %v3399
    %v3401 = vmul.f32 %v3400, 0.5
    %v3402 = vadd.f32 %v3401, 0.5
    %v3403 = vmul.f32 %v3396, 0.5
    %v3404 = vtanh.pop %v3403
    %v3405 = vmul.f32 %v3404, 0.5
    %v3406 = vadd.f32 %v3405, 0.5
    %v3407 = vtanh.pop %v3397
    %v3408 = vmul.f32 %v3398, 0.5
    %v3409 = vtanh.pop %v3408
    %v3410 = vmul.f32 %v3409, 0.5
    %v3411 = vadd.f32 %v3410, 0.5
    %v3412 = vmul.f32 %v3243, %v3402
    %v3413 = vmul.f32 %v3406, %v3407
    %v3414 = vadd.f32 %v3412, %v3413
    %v3415 = vtanh.pop %v3414
    %v3416 = vmul.f32 %v3411, %v3415
    %s3417 = smul.u32 16, 4
    %s3418 = smul.addr %s3417, 8
    %s3419 = scalar_lea.vmem [#allocation2], %s3418
    %v3420 = vld [vmem:[%s3419] sm:$0xff]
    %v3421 = vld [vmem:[%s3419 + $0x8] sm:$0xff]
    %v3422 = vld [vmem:[%s3419 + $0x10] sm:$0xff]
    %v3423 = vld [vmem:[%s3419 + $0x18] sm:$0xff]
    %3424 = vmatprep.subr.mxu0 %v856
    %3425 = vmatpush1.msra.mxu0 %v855
    %3426 = vmatprep.subr.mxu0 %v852
    %3427 = vmatpush1.msra.mxu0 %v851
    %3428 = vmatprep.subr.mxu0 %v848
    %3429 = vmatpush1.msra.mxu0 %v847
    %3430 = vmatprep.subr.mxu0 %v844
    %3431 = vmatpush1.msra.mxu0 %v843
    %3432 = vmatprep.subr.mxu0 %v840
    %3433 = vmatpush1.msra.mxu0 %v839
    %3434 = vmatprep.subr.mxu0 %v836
    %3435 = vmatpush1.msra.mxu0 %v835
    %3436 = vmatprep.subr.mxu0 %v832
    %3437 = vmatpush1.msra.mxu0 %v831
    %3438 = vmatprep.subr.mxu0 %v828
    %3439 = vmatpush1.msra.mxu0 %v827
    %3440 = vmatprep.subr.mxu0 %v824
    %3441 = vmatpush1.msra.mxu0 %v823
    %3442 = vmatprep.subr.mxu0 %v820
    %3443 = vmatpush1.msra.mxu0 %v819
    %3444 = vmatprep.subr.mxu0 %v816
    %3445 = vmatpush1.msra.mxu0 %v815
    %3446 = vmatprep.subr.mxu0 %v812
    %3447 = vmatpush1.msra.mxu0 %v811
    %3448 = vmatprep.subr.mxu0 %v808
    %3449 = vmatpush1.msra.mxu0 %v807
    %3450 = vmatprep.subr.mxu0 %v804
    %3451 = vmatpush1.msra.mxu0 %v803
    %3452 = vmatprep.subr.mxu0 %v800
    %3453 = vmatpush1.msra.mxu0 %v799
    %3454 = vmatprep.subr.mxu0 %v796
    %3455 = vmatpush1.msra.mxu0 %v795
    %3456 = vmatprep.subr.mxu0 0.0
    %3457 = vmatpush2.msra.mxu0 0.0
    %3458 = vmatprep.subr.mxu0 0.0
    %3459 = vmatpush2.msra.mxu0 0.0
    %3460 = vmatprep.subr.mxu0 0.0
    %3461 = vmatpush2.msra.mxu0 0.0
    %3462 = vmatprep.subr.mxu0 0.0
    %3463 = vmatpush2.msra.mxu0 0.0
    %3464 = vmatprep.subr.mxu0 0.0
    %3465 = vmatpush2.msra.mxu0 0.0
    %3466 = vmatprep.subr.mxu0 0.0
    %3467 = vmatpush2.msra.mxu0 0.0
    %3468 = vmatprep.subr.mxu0 0.0
    %3469 = vmatpush2.msra.mxu0 0.0
    %3470 = vmatprep.subr.mxu0 0.0
    %3471 = vmatpush2.msra.mxu0 0.0
    %3472 = vmatprep.subr.mxu0 0.0
    %3473 = vmatpush2.msra.mxu0 0.0
    %3474 = vmatprep.subr.mxu0 0.0
    %3475 = vmatpush2.msra.mxu0 0.0
    %3476 = vmatprep.subr.mxu0 0.0
    %3477 = vmatpush2.msra.mxu0 0.0
    %3478 = vmatprep.subr.mxu0 0.0
    %3479 = vmatpush2.msra.mxu0 0.0
    %3480 = vmatprep.subr.mxu0 0.0
    %3481 = vmatpush2.msra.mxu0 0.0
    %3482 = vmatprep.subr.mxu0 0.0
    %3483 = vmatpush2.msra.mxu0 0.0
    %3484 = vmatprep.subr.mxu0 0.0
    %3485 = vmatpush2.msra.mxu0 0.0
    %3486 = vmatprep.subr.mxu0 0.0
    %3487 = vmatpush2.msra.mxu0 0.0
    %3488 = vmatprep.mubr.f32.mxu0 0.0
    %3489 = vmatmul.mubr.f32.gmra.mxu0 %v3416
    %v3490 = vpop.f32.mrf.mxu0
    %v3491 = vadd.f32 0.0, %v3490
    %v3492 = vpop.f32.mrf.mxu0
    %v3493 = vadd.f32 0.0, %v3492
    %3494 = vdwg.mxu0
    %3495 = vmatprep.subr.mxu0 %v858
    %3496 = vmatpush1.msra.mxu0 %v857
    %3497 = vmatprep.subr.mxu0 %v854
    %3498 = vmatpush1.msra.mxu0 %v853
    %3499 = vmatprep.subr.mxu0 %v850
    %3500 = vmatpush1.msra.mxu0 %v849
    %3501 = vmatprep.subr.mxu0 %v846
    %3502 = vmatpush1.msra.mxu0 %v845
    %3503 = vmatprep.subr.mxu0 %v842
    %3504 = vmatpush1.msra.mxu0 %v841
    %3505 = vmatprep.subr.mxu0 %v838
    %3506 = vmatpush1.msra.mxu0 %v837
    %3507 = vmatprep.subr.mxu0 %v834
    %3508 = vmatpush1.msra.mxu0 %v833
    %3509 = vmatprep.subr.mxu0 %v830
    %3510 = vmatpush1.msra.mxu0 %v829
    %3511 = vmatprep.subr.mxu0 %v826
    %3512 = vmatpush1.msra.mxu0 %v825
    %3513 = vmatprep.subr.mxu0 %v822
    %3514 = vmatpush1.msra.mxu0 %v821
    %3515 = vmatprep.subr.mxu0 %v818
    %3516 = vmatpush1.msra.mxu0 %v817
    %3517 = vmatprep.subr.mxu0 %v814
    %3518 = vmatpush1.msra.mxu0 %v813
    %3519 = vmatprep.subr.mxu0 %v810
    %3520 = vmatpush1.msra.mxu0 %v809
    %3521 = vmatprep.subr.mxu0 %v806
    %3522 = vmatpush1.msra.mxu0 %v805
    %3523 = vmatprep.subr.mxu0 %v802
    %3524 = vmatpush1.msra.mxu0 %v801
    %3525 = vmatprep.subr.mxu0 %v798
    %3526 = vmatpush1.msra.mxu0 %v797
    %3527 = vmatprep.subr.mxu0 0.0
    %3528 = vmatpush2.msra.mxu0 0.0
    %3529 = vmatprep.subr.mxu0 0.0
    %3530 = vmatpush2.msra.mxu0 0.0
    %3531 = vmatprep.subr.mxu0 0.0
    %3532 = vmatpush2.msra.mxu0 0.0
    %3533 = vmatprep.subr.mxu0 0.0
    %3534 = vmatpush2.msra.mxu0 0.0
    %3535 = vmatprep.subr.mxu0 0.0
    %3536 = vmatpush2.msra.mxu0 0.0
    %3537 = vmatprep.subr.mxu0 0.0
    %3538 = vmatpush2.msra.mxu0 0.0
    %3539 = vmatprep.subr.mxu0 0.0
    %3540 = vmatpush2.msra.mxu0 0.0
    %3541 = vmatprep.subr.mxu0 0.0
    %3542 = vmatpush2.msra.mxu0 0.0
    %3543 = vmatprep.subr.mxu0 0.0
    %3544 = vmatpush2.msra.mxu0 0.0
    %3545 = vmatprep.subr.mxu0 0.0
    %3546 = vmatpush2.msra.mxu0 0.0
    %3547 = vmatprep.subr.mxu0 0.0
    %3548 = vmatpush2.msra.mxu0 0.0
    %3549 = vmatprep.subr.mxu0 0.0
    %3550 = vmatpush2.msra.mxu0 0.0
    %3551 = vmatprep.subr.mxu0 0.0
    %3552 = vmatpush2.msra.mxu0 0.0
    %3553 = vmatprep.subr.mxu0 0.0
    %3554 = vmatpush2.msra.mxu0 0.0
    %3555 = vmatprep.subr.mxu0 0.0
    %3556 = vmatpush2.msra.mxu0 0.0
    %3557 = vmatprep.subr.mxu0 0.0
    %3558 = vmatpush2.msra.mxu0 0.0
    %3559 = vmatprep.mubr.f32.mxu0 0.0
    %3560 = vmatmul.mubr.f32.gmra.mxu0 %v3416
    %v3561 = vpop.f32.mrf.mxu0
    %v3562 = vadd.f32 0.0, %v3561
    %v3563 = vpop.f32.mrf.mxu0
    %v3564 = vadd.f32 0.0, %v3563
    %3565 = vdwg.mxu0
    %v3566 = vadd.f32 %v3420, %v3491
    %v3567 = vadd.f32 %v3421, %v3493
    %v3568 = vadd.f32 %v3422, %v3562
    %v3569 = vadd.f32 %v3423, %v3564
    %v3570 = vmul.f32 %v3566, 0.5
    %v3571 = vtanh.pop %v3570
    %v3572 = vmul.f32 %v3571, 0.5
    %v3573 = vadd.f32 %v3572, 0.5
    %v3574 = vmul.f32 %v3567, 0.5
    %v3575 = vtanh.pop %v3574
    %v3576 = vmul.f32 %v3575, 0.5
    %v3577 = vadd.f32 %v3576, 0.5
    %v3578 = vtanh.pop %v3568
    %v3579 = vmul.f32 %v3569, 0.5
    %v3580 = vtanh.pop %v3579
    %v3581 = vmul.f32 %v3580, 0.5
    %v3582 = vadd.f32 %v3581, 0.5
    %v3583 = vmul.f32 %v3414, %v3573
    %v3584 = vmul.f32 %v3577, %v3578
    %v3585 = vadd.f32 %v3583, %v3584
    %v3586 = vtanh.pop %v3585
    %v3587 = vmul.f32 %v3582, %v3586
    %s3588 = smul.u32 17, 4
    %s3589 = smul.addr %s3588, 8
    %s3590 = scalar_lea.vmem [#allocation2], %s3589
    %v3591 = vld [vmem:[%s3590] sm:$0xff]
    %v3592 = vld [vmem:[%s3590 + $0x8] sm:$0xff]
    %v3593 = vld [vmem:[%s3590 + $0x10] sm:$0xff]
    %v3594 = vld [vmem:[%s3590 + $0x18] sm:$0xff]
    %3595 = vmatprep.subr.mxu0 %v856
    %3596 = vmatpush1.msra.mxu0 %v855
    %3597 = vmatprep.subr.mxu0 %v852
    %3598 = vmatpush1.msra.mxu0 %v851
    %3599 = vmatprep.subr.mxu0 %v848
    %3600 = vmatpush1.msra.mxu0 %v847
    %3601 = vmatprep.subr.mxu0 %v844
    %3602 = vmatpush1.msra.mxu0 %v843
    %3603 = vmatprep.subr.mxu0 %v840
    %3604 = vmatpush1.msra.mxu0 %v839
    %3605 = vmatprep.subr.mxu0 %v836
    %3606 = vmatpush1.msra.mxu0 %v835
    %3607 = vmatprep.subr.mxu0 %v832
    %3608 = vmatpush1.msra.mxu0 %v831
    %3609 = vmatprep.subr.mxu0 %v828
    %3610 = vmatpush1.msra.mxu0 %v827
    %3611 = vmatprep.subr.mxu0 %v824
    %3612 = vmatpush1.msra.mxu0 %v823
    %3613 = vmatprep.subr.mxu0 %v820
    %3614 = vmatpush1.msra.mxu0 %v819
    %3615 = vmatprep.subr.mxu0 %v816
    %3616 = vmatpush1.msra.mxu0 %v815
    %3617 = vmatprep.subr.mxu0 %v812
    %3618 = vmatpush1.msra.mxu0 %v811
    %3619 = vmatprep.subr.mxu0 %v808
    %3620 = vmatpush1.msra.mxu0 %v807
    %3621 = vmatprep.subr.mxu0 %v804
    %3622 = vmatpush1.msra.mxu0 %v803
    %3623 = vmatprep.subr.mxu0 %v800
    %3624 = vmatpush1.msra.mxu0 %v799
    %3625 = vmatprep.subr.mxu0 %v796
    %3626 = vmatpush1.msra.mxu0 %v795
    %3627 = vmatprep.subr.mxu0 0.0
    %3628 = vmatpush2.msra.mxu0 0.0
    %3629 = vmatprep.subr.mxu0 0.0
    %3630 = vmatpush2.msra.mxu0 0.0
    %3631 = vmatprep.subr.mxu0 0.0
    %3632 = vmatpush2.msra.mxu0 0.0
    %3633 = vmatprep.subr.mxu0 0.0
    %3634 = vmatpush2.msra.mxu0 0.0
    %3635 = vmatprep.subr.mxu0 0.0
    %3636 = vmatpush2.msra.mxu0 0.0
    %3637 = vmatprep.subr.mxu0 0.0
    %3638 = vmatpush2.msra.mxu0 0.0
    %3639 = vmatprep.subr.mxu0 0.0
    %3640 = vmatpush2.msra.mxu0 0.0
    %3641 = vmatprep.subr.mxu0 0.0
    %3642 = vmatpush2.msra.mxu0 0.0
    %3643 = vmatprep.subr.mxu0 0.0
    %3644 = vmatpush2.msra.mxu0 0.0
    %3645 = vmatprep.subr.mxu0 0.0
    %3646 = vmatpush2.msra.mxu0 0.0
    %3647 = vmatprep.subr.mxu0 0.0
    %3648 = vmatpush2.msra.mxu0 0.0
    %3649 = vmatprep.subr.mxu0 0.0
    %3650 = vmatpush2.msra.mxu0 0.0
    %3651 = vmatprep.subr.mxu0 0.0
    %3652 = vmatpush2.msra.mxu0 0.0
    %3653 = vmatprep.subr.mxu0 0.0
    %3654 = vmatpush2.msra.mxu0 0.0
    %3655 = vmatprep.subr.mxu0 0.0
    %3656 = vmatpush2.msra.mxu0 0.0
    %3657 = vmatprep.subr.mxu0 0.0
    %3658 = vmatpush2.msra.mxu0 0.0
    %3659 = vmatprep.mubr.f32.mxu0 0.0
    %3660 = vmatmul.mubr.f32.gmra.mxu0 %v3587
    %v3661 = vpop.f32.mrf.mxu0
    %v3662 = vadd.f32 0.0, %v3661
    %v3663 = vpop.f32.mrf.mxu0
    %v3664 = vadd.f32 0.0, %v3663
    %3665 = vdwg.mxu0
    %3666 = vmatprep.subr.mxu0 %v858
    %3667 = vmatpush1.msra.mxu0 %v857
    %3668 = vmatprep.subr.mxu0 %v854
    %3669 = vmatpush1.msra.mxu0 %v853
    %3670 = vmatprep.subr.mxu0 %v850
    %3671 = vmatpush1.msra.mxu0 %v849
    %3672 = vmatprep.subr.mxu0 %v846
    %3673 = vmatpush1.msra.mxu0 %v845
    %3674 = vmatprep.subr.mxu0 %v842
    %3675 = vmatpush1.msra.mxu0 %v841
    %3676 = vmatprep.subr.mxu0 %v838
    %3677 = vmatpush1.msra.mxu0 %v837
    %3678 = vmatprep.subr.mxu0 %v834
    %3679 = vmatpush1.msra.mxu0 %v833
    %3680 = vmatprep.subr.mxu0 %v830
    %3681 = vmatpush1.msra.mxu0 %v829
    %3682 = vmatprep.subr.mxu0 %v826
    %3683 = vmatpush1.msra.mxu0 %v825
    %3684 = vmatprep.subr.mxu0 %v822
    %3685 = vmatpush1.msra.mxu0 %v821
    %3686 = vmatprep.subr.mxu0 %v818
    %3687 = vmatpush1.msra.mxu0 %v817
    %3688 = vmatprep.subr.mxu0 %v814
    %3689 = vmatpush1.msra.mxu0 %v813
    %3690 = vmatprep.subr.mxu0 %v810
    %3691 = vmatpush1.msra.mxu0 %v809
    %3692 = vmatprep.subr.mxu0 %v806
    %3693 = vmatpush1.msra.mxu0 %v805
    %3694 = vmatprep.subr.mxu0 %v802
    %3695 = vmatpush1.msra.mxu0 %v801
    %3696 = vmatprep.subr.mxu0 %v798
    %3697 = vmatpush1.msra.mxu0 %v797
    %3698 = vmatprep.subr.mxu0 0.0
    %3699 = vmatpush2.msra.mxu0 0.0
    %3700 = vmatprep.subr.mxu0 0.0
    %3701 = vmatpush2.msra.mxu0 0.0
    %3702 = vmatprep.subr.mxu0 0.0
    %3703 = vmatpush2.msra.mxu0 0.0
    %3704 = vmatprep.subr.mxu0 0.0
    %3705 = vmatpush2.msra.mxu0 0.0
    %3706 = vmatprep.subr.mxu0 0.0
    %3707 = vmatpush2.msra.mxu0 0.0
    %3708 = vmatprep.subr.mxu0 0.0
    %3709 = vmatpush2.msra.mxu0 0.0
    %3710 = vmatprep.subr.mxu0 0.0
    %3711 = vmatpush2.msra.mxu0 0.0
    %3712 = vmatprep.subr.mxu0 0.0
    %3713 = vmatpush2.msra.mxu0 0.0
    %3714 = vmatprep.subr.mxu0 0.0
    %3715 = vmatpush2.msra.mxu0 0.0
    %3716 = vmatprep.subr.mxu0 0.0
    %3717 = vmatpush2.msra.mxu0 0.0
    %3718 = vmatprep.subr.mxu0 0.0
    %3719 = vmatpush2.msra.mxu0 0.0
    %3720 = vmatprep.subr.mxu0 0.0
    %3721 = vmatpush2.msra.mxu0 0.0
    %3722 = vmatprep.subr.mxu0 0.0
    %3723 = vmatpush2.msra.mxu0 0.0
    %3724 = vmatprep.subr.mxu0 0.0
    %3725 = vmatpush2.msra.mxu0 0.0
    %3726 = vmatprep.subr.mxu0 0.0
    %3727 = vmatpush2.msra.mxu0 0.0
    %3728 = vmatprep.subr.mxu0 0.0
    %3729 = vmatpush2.msra.mxu0 0.0
    %3730 = vmatprep.mubr.f32.mxu0 0.0
    %3731 = vmatmul.mubr.f32.gmra.mxu0 %v3587
    %v3732 = vpop.f32.mrf.mxu0
    %v3733 = vadd.f32 0.0, %v3732
    %v3734 = vpop.f32.mrf.mxu0
    %v3735 = vadd.f32 0.0, %v3734
    %3736 = vdwg.mxu0
    %v3737 = vadd.f32 %v3591, %v3662
    %v3738 = vadd.f32 %v3592, %v3664
    %v3739 = vadd.f32 %v3593, %v3733
    %v3740 = vadd.f32 %v3594, %v3735
    %v3741 = vmul.f32 %v3737, 0.5
    %v3742 = vtanh.pop %v3741
    %v3743 = vmul.f32 %v3742, 0.5
    %v3744 = vadd.f32 %v3743, 0.5
    %v3745 = vmul.f32 %v3738, 0.5
    %v3746 = vtanh.pop %v3745
    %v3747 = vmul.f32 %v3746, 0.5
    %v3748 = vadd.f32 %v3747, 0.5
    %v3749 = vtanh.pop %v3739
    %v3750 = vmul.f32 %v3740, 0.5
    %v3751 = vtanh.pop %v3750
    %v3752 = vmul.f32 %v3751, 0.5
    %v3753 = vadd.f32 %v3752, 0.5
    %v3754 = vmul.f32 %v3585, %v3744
    %v3755 = vmul.f32 %v3748, %v3749
    %v3756 = vadd.f32 %v3754, %v3755
    %v3757 = vtanh.pop %v3756
    %v3758 = vmul.f32 %v3753, %v3757
    %s3759 = smul.u32 18, 4
    %s3760 = smul.addr %s3759, 8
    %s3761 = scalar_lea.vmem [#allocation2], %s3760
    %v3762 = vld [vmem:[%s3761] sm:$0xff]
    %v3763 = vld [vmem:[%s3761 + $0x8] sm:$0xff]
    %v3764 = vld [vmem:[%s3761 + $0x10] sm:$0xff]
    %v3765 = vld [vmem:[%s3761 + $0x18] sm:$0xff]
    %3766 = vmatprep.subr.mxu0 %v856
    %3767 = vmatpush1.msra.mxu0 %v855
    %3768 = vmatprep.subr.mxu0 %v852
    %3769 = vmatpush1.msra.mxu0 %v851
    %3770 = vmatprep.subr.mxu0 %v848
    %3771 = vmatpush1.msra.mxu0 %v847
    %3772 = vmatprep.subr.mxu0 %v844
    %3773 = vmatpush1.msra.mxu0 %v843
    %3774 = vmatprep.subr.mxu0 %v840
    %3775 = vmatpush1.msra.mxu0 %v839
    %3776 = vmatprep.subr.mxu0 %v836
    %3777 = vmatpush1.msra.mxu0 %v835
    %3778 = vmatprep.subr.mxu0 %v832
    %3779 = vmatpush1.msra.mxu0 %v831
    %3780 = vmatprep.subr.mxu0 %v828
    %3781 = vmatpush1.msra.mxu0 %v827
    %3782 = vmatprep.subr.mxu0 %v824
    %3783 = vmatpush1.msra.mxu0 %v823
    %3784 = vmatprep.subr.mxu0 %v820
    %3785 = vmatpush1.msra.mxu0 %v819
    %3786 = vmatprep.subr.mxu0 %v816
    %3787 = vmatpush1.msra.mxu0 %v815
    %3788 = vmatprep.subr.mxu0 %v812
    %3789 = vmatpush1.msra.mxu0 %v811
    %3790 = vmatprep.subr.mxu0 %v808
    %3791 = vmatpush1.msra.mxu0 %v807
    %3792 = vmatprep.subr.mxu0 %v804
    %3793 = vmatpush1.msra.mxu0 %v803
    %3794 = vmatprep.subr.mxu0 %v800
    %3795 = vmatpush1.msra.mxu0 %v799
    %3796 = vmatprep.subr.mxu0 %v796
    %3797 = vmatpush1.msra.mxu0 %v795
    %3798 = vmatprep.subr.mxu0 0.0
    %3799 = vmatpush2.msra.mxu0 0.0
    %3800 = vmatprep.subr.mxu0 0.0
    %3801 = vmatpush2.msra.mxu0 0.0
    %3802 = vmatprep.subr.mxu0 0.0
    %3803 = vmatpush2.msra.mxu0 0.0
    %3804 = vmatprep.subr.mxu0 0.0
    %3805 = vmatpush2.msra.mxu0 0.0
    %3806 = vmatprep.subr.mxu0 0.0
    %3807 = vmatpush2.msra.mxu0 0.0
    %3808 = vmatprep.subr.mxu0 0.0
    %3809 = vmatpush2.msra.mxu0 0.0
    %3810 = vmatprep.subr.mxu0 0.0
    %3811 = vmatpush2.msra.mxu0 0.0
    %3812 = vmatprep.subr.mxu0 0.0
    %3813 = vmatpush2.msra.mxu0 0.0
    %3814 = vmatprep.subr.mxu0 0.0
    %3815 = vmatpush2.msra.mxu0 0.0
    %3816 = vmatprep.subr.mxu0 0.0
    %3817 = vmatpush2.msra.mxu0 0.0
    %3818 = vmatprep.subr.mxu0 0.0
    %3819 = vmatpush2.msra.mxu0 0.0
    %3820 = vmatprep.subr.mxu0 0.0
    %3821 = vmatpush2.msra.mxu0 0.0
    %3822 = vmatprep.subr.mxu0 0.0
    %3823 = vmatpush2.msra.mxu0 0.0
    %3824 = vmatprep.subr.mxu0 0.0
    %3825 = vmatpush2.msra.mxu0 0.0
    %3826 = vmatprep.subr.mxu0 0.0
    %3827 = vmatpush2.msra.mxu0 0.0
    %3828 = vmatprep.subr.mxu0 0.0
    %3829 = vmatpush2.msra.mxu0 0.0
    %3830 = vmatprep.mubr.f32.mxu0 0.0
    %3831 = vmatmul.mubr.f32.gmra.mxu0 %v3758
    %v3832 = vpop.f32.mrf.mxu0
    %v3833 = vadd.f32 0.0, %v3832
    %v3834 = vpop.f32.mrf.mxu0
    %v3835 = vadd.f32 0.0, %v3834
    %3836 = vdwg.mxu0
    %3837 = vmatprep.subr.mxu0 %v858
    %3838 = vmatpush1.msra.mxu0 %v857
    %3839 = vmatprep.subr.mxu0 %v854
    %3840 = vmatpush1.msra.mxu0 %v853
    %3841 = vmatprep.subr.mxu0 %v850
    %3842 = vmatpush1.msra.mxu0 %v849
    %3843 = vmatprep.subr.mxu0 %v846
    %3844 = vmatpush1.msra.mxu0 %v845
    %3845 = vmatprep.subr.mxu0 %v842
    %3846 = vmatpush1.msra.mxu0 %v841
    %3847 = vmatprep.subr.mxu0 %v838
    %3848 = vmatpush1.msra.mxu0 %v837
    %3849 = vmatprep.subr.mxu0 %v834
    %3850 = vmatpush1.msra.mxu0 %v833
    %3851 = vmatprep.subr.mxu0 %v830
    %3852 = vmatpush1.msra.mxu0 %v829
    %3853 = vmatprep.subr.mxu0 %v826
    %3854 = vmatpush1.msra.mxu0 %v825
    %3855 = vmatprep.subr.mxu0 %v822
    %3856 = vmatpush1.msra.mxu0 %v821
    %3857 = vmatprep.subr.mxu0 %v818
    %3858 = vmatpush1.msra.mxu0 %v817
    %3859 = vmatprep.subr.mxu0 %v814
    %3860 = vmatpush1.msra.mxu0 %v813
    %3861 = vmatprep.subr.mxu0 %v810
    %3862 = vmatpush1.msra.mxu0 %v809
    %3863 = vmatprep.subr.mxu0 %v806
    %3864 = vmatpush1.msra.mxu0 %v805
    %3865 = vmatprep.subr.mxu0 %v802
    %3866 = vmatpush1.msra.mxu0 %v801
    %3867 = vmatprep.subr.mxu0 %v798
    %3868 = vmatpush1.msra.mxu0 %v797
    %3869 = vmatprep.subr.mxu0 0.0
    %3870 = vmatpush2.msra.mxu0 0.0
    %3871 = vmatprep.subr.mxu0 0.0
    %3872 = vmatpush2.msra.mxu0 0.0
    %3873 = vmatprep.subr.mxu0 0.0
    %3874 = vmatpush2.msra.mxu0 0.0
    %3875 = vmatprep.subr.mxu0 0.0
    %3876 = vmatpush2.msra.mxu0 0.0
    %3877 = vmatprep.subr.mxu0 0.0
    %3878 = vmatpush2.msra.mxu0 0.0
    %3879 = vmatprep.subr.mxu0 0.0
    %3880 = vmatpush2.msra.mxu0 0.0
    %3881 = vmatprep.subr.mxu0 0.0
    %3882 = vmatpush2.msra.mxu0 0.0
    %3883 = vmatprep.subr.mxu0 0.0
    %3884 = vmatpush2.msra.mxu0 0.0
    %3885 = vmatprep.subr.mxu0 0.0
    %3886 = vmatpush2.msra.mxu0 0.0
    %3887 = vmatprep.subr.mxu0 0.0
    %3888 = vmatpush2.msra.mxu0 0.0
    %3889 = vmatprep.subr.mxu0 0.0
    %3890 = vmatpush2.msra.mxu0 0.0
    %3891 = vmatprep.subr.mxu0 0.0
    %3892 = vmatpush2.msra.mxu0 0.0
    %3893 = vmatprep.subr.mxu0 0.0
    %3894 = vmatpush2.msra.mxu0 0.0
    %3895 = vmatprep.subr.mxu0 0.0
    %3896 = vmatpush2.msra.mxu0 0.0
    %3897 = vmatprep.subr.mxu0 0.0
    %3898 = vmatpush2.msra.mxu0 0.0
    %3899 = vmatprep.subr.mxu0 0.0
    %3900 = vmatpush2.msra.mxu0 0.0
    %3901 = vmatprep.mubr.f32.mxu0 0.0
    %3902 = vmatmul.mubr.f32.gmra.mxu0 %v3758
    %v3903 = vpop.f32.mrf.mxu0
    %v3904 = vadd.f32 0.0, %v3903
    %v3905 = vpop.f32.mrf.mxu0
    %v3906 = vadd.f32 0.0, %v3905
    %3907 = vdwg.mxu0
    %v3908 = vadd.f32 %v3762, %v3833
    %v3909 = vadd.f32 %v3763, %v3835
    %v3910 = vadd.f32 %v3764, %v3904
    %v3911 = vadd.f32 %v3765, %v3906
    %v3912 = vmul.f32 %v3908, 0.5
    %v3913 = vtanh.pop %v3912
    %v3914 = vmul.f32 %v3913, 0.5
    %v3915 = vadd.f32 %v3914, 0.5
    %v3916 = vmul.f32 %v3909, 0.5
    %v3917 = vtanh.pop %v3916
    %v3918 = vmul.f32 %v3917, 0.5
    %v3919 = vadd.f32 %v3918, 0.5
    %v3920 = vtanh.pop %v3910
    %v3921 = vmul.f32 %v3911, 0.5
    %v3922 = vtanh.pop %v3921
    %v3923 = vmul.f32 %v3922, 0.5
    %v3924 = vadd.f32 %v3923, 0.5
    %v3925 = vmul.f32 %v3756, %v3915
    %v3926 = vmul.f32 %v3919, %v3920
    %v3927 = vadd.f32 %v3925, %v3926
    %v3928 = vtanh.pop %v3927
    %v3929 = vmul.f32 %v3924, %v3928
    %s3930 = smul.u32 19, 4
    %s3931 = smul.addr %s3930, 8
    %s3932 = scalar_lea.vmem [#allocation2], %s3931
    %v3933 = vld [vmem:[%s3932] sm:$0xff]
    %v3934 = vld [vmem:[%s3932 + $0x8] sm:$0xff]
    %v3935 = vld [vmem:[%s3932 + $0x10] sm:$0xff]
    %v3936 = vld [vmem:[%s3932 + $0x18] sm:$0xff]
    %3937 = vmatprep.subr.mxu0 %v856
    %3938 = vmatpush1.msra.mxu0 %v855
    %3939 = vmatprep.subr.mxu0 %v852
    %3940 = vmatpush1.msra.mxu0 %v851
    %3941 = vmatprep.subr.mxu0 %v848
    %3942 = vmatpush1.msra.mxu0 %v847
    %3943 = vmatprep.subr.mxu0 %v844
    %3944 = vmatpush1.msra.mxu0 %v843
    %3945 = vmatprep.subr.mxu0 %v840
    %3946 = vmatpush1.msra.mxu0 %v839
    %3947 = vmatprep.subr.mxu0 %v836
    %3948 = vmatpush1.msra.mxu0 %v835
    %3949 = vmatprep.subr.mxu0 %v832
    %3950 = vmatpush1.msra.mxu0 %v831
    %3951 = vmatprep.subr.mxu0 %v828
    %3952 = vmatpush1.msra.mxu0 %v827
    %3953 = vmatprep.subr.mxu0 %v824
    %3954 = vmatpush1.msra.mxu0 %v823
    %3955 = vmatprep.subr.mxu0 %v820
    %3956 = vmatpush1.msra.mxu0 %v819
    %3957 = vmatprep.subr.mxu0 %v816
    %3958 = vmatpush1.msra.mxu0 %v815
    %3959 = vmatprep.subr.mxu0 %v812
    %3960 = vmatpush1.msra.mxu0 %v811
    %3961 = vmatprep.subr.mxu0 %v808
    %3962 = vmatpush1.msra.mxu0 %v807
    %3963 = vmatprep.subr.mxu0 %v804
    %3964 = vmatpush1.msra.mxu0 %v803
    %3965 = vmatprep.subr.mxu0 %v800
    %3966 = vmatpush1.msra.mxu0 %v799
    %3967 = vmatprep.subr.mxu0 %v796
    %3968 = vmatpush1.msra.mxu0 %v795
    %3969 = vmatprep.subr.mxu0 0.0
    %3970 = vmatpush2.msra.mxu0 0.0
    %3971 = vmatprep.subr.mxu0 0.0
    %3972 = vmatpush2.msra.mxu0 0.0
    %3973 = vmatprep.subr.mxu0 0.0
    %3974 = vmatpush2.msra.mxu0 0.0
    %3975 = vmatprep.subr.mxu0 0.0
    %3976 = vmatpush2.msra.mxu0 0.0
    %3977 = vmatprep.subr.mxu0 0.0
    %3978 = vmatpush2.msra.mxu0 0.0
    %3979 = vmatprep.subr.mxu0 0.0
    %3980 = vmatpush2.msra.mxu0 0.0
    %3981 = vmatprep.subr.mxu0 0.0
    %3982 = vmatpush2.msra.mxu0 0.0
    %3983 = vmatprep.subr.mxu0 0.0
    %3984 = vmatpush2.msra.mxu0 0.0
    %3985 = vmatprep.subr.mxu0 0.0
    %3986 = vmatpush2.msra.mxu0 0.0
    %3987 = vmatprep.subr.mxu0 0.0
    %3988 = vmatpush2.msra.mxu0 0.0
    %3989 = vmatprep.subr.mxu0 0.0
    %3990 = vmatpush2.msra.mxu0 0.0
    %3991 = vmatprep.subr.mxu0 0.0
    %3992 = vmatpush2.msra.mxu0 0.0
    %3993 = vmatprep.subr.mxu0 0.0
    %3994 = vmatpush2.msra.mxu0 0.0
    %3995 = vmatprep.subr.mxu0 0.0
    %3996 = vmatpush2.msra.mxu0 0.0
    %3997 = vmatprep.subr.mxu0 0.0
    %3998 = vmatpush2.msra.mxu0 0.0
    %3999 = vmatprep.subr.mxu0 0.0
    %4000 = vmatpush2.msra.mxu0 0.0
    %4001 = vmatprep.mubr.f32.mxu0 0.0
    %4002 = vmatmul.mubr.f32.gmra.mxu0 %v3929
    %v4003 = vpop.f32.mrf.mxu0
    %v4004 = vadd.f32 0.0, %v4003
    %v4005 = vpop.f32.mrf.mxu0
    %v4006 = vadd.f32 0.0, %v4005
    %4007 = vdwg.mxu0
    %4008 = vmatprep.subr.mxu0 %v858
    %4009 = vmatpush1.msra.mxu0 %v857
    %4010 = vmatprep.subr.mxu0 %v854
    %4011 = vmatpush1.msra.mxu0 %v853
    %4012 = vmatprep.subr.mxu0 %v850
    %4013 = vmatpush1.msra.mxu0 %v849
    %4014 = vmatprep.subr.mxu0 %v846
    %4015 = vmatpush1.msra.mxu0 %v845
    %4016 = vmatprep.subr.mxu0 %v842
    %4017 = vmatpush1.msra.mxu0 %v841
    %4018 = vmatprep.subr.mxu0 %v838
    %4019 = vmatpush1.msra.mxu0 %v837
    %4020 = vmatprep.subr.mxu0 %v834
    %4021 = vmatpush1.msra.mxu0 %v833
    %4022 = vmatprep.subr.mxu0 %v830
    %4023 = vmatpush1.msra.mxu0 %v829
    %4024 = vmatprep.subr.mxu0 %v826
    %4025 = vmatpush1.msra.mxu0 %v825
    %4026 = vmatprep.subr.mxu0 %v822
    %4027 = vmatpush1.msra.mxu0 %v821
    %4028 = vmatprep.subr.mxu0 %v818
    %4029 = vmatpush1.msra.mxu0 %v817
    %4030 = vmatprep.subr.mxu0 %v814
    %4031 = vmatpush1.msra.mxu0 %v813
    %4032 = vmatprep.subr.mxu0 %v810
    %4033 = vmatpush1.msra.mxu0 %v809
    %4034 = vmatprep.subr.mxu0 %v806
    %4035 = vmatpush1.msra.mxu0 %v805
    %4036 = vmatprep.subr.mxu0 %v802
    %4037 = vmatpush1.msra.mxu0 %v801
    %4038 = vmatprep.subr.mxu0 %v798
    %4039 = vmatpush1.msra.mxu0 %v797
    %4040 = vmatprep.subr.mxu0 0.0
    %4041 = vmatpush2.msra.mxu0 0.0
    %4042 = vmatprep.subr.mxu0 0.0
    %4043 = vmatpush2.msra.mxu0 0.0
    %4044 = vmatprep.subr.mxu0 0.0
    %4045 = vmatpush2.msra.mxu0 0.0
    %4046 = vmatprep.subr.mxu0 0.0
    %4047 = vmatpush2.msra.mxu0 0.0
    %4048 = vmatprep.subr.mxu0 0.0
    %4049 = vmatpush2.msra.mxu0 0.0
    %4050 = vmatprep.subr.mxu0 0.0
    %4051 = vmatpush2.msra.mxu0 0.0
    %4052 = vmatprep.subr.mxu0 0.0
    %4053 = vmatpush2.msra.mxu0 0.0
    %4054 = vmatprep.subr.mxu0 0.0
    %4055 = vmatpush2.msra.mxu0 0.0
    %4056 = vmatprep.subr.mxu0 0.0
    %4057 = vmatpush2.msra.mxu0 0.0
    %4058 = vmatprep.subr.mxu0 0.0
    %4059 = vmatpush2.msra.mxu0 0.0
    %4060 = vmatprep.subr.mxu0 0.0
    %4061 = vmatpush2.msra.mxu0 0.0
    %4062 = vmatprep.subr.mxu0 0.0
    %4063 = vmatpush2.msra.mxu0 0.0
    %4064 = vmatprep.subr.mxu0 0.0
    %4065 = vmatpush2.msra.mxu0 0.0
    %4066 = vmatprep.subr.mxu0 0.0
    %4067 = vmatpush2.msra.mxu0 0.0
    %4068 = vmatprep.subr.mxu0 0.0
    %4069 = vmatpush2.msra.mxu0 0.0
    %4070 = vmatprep.subr.mxu0 0.0
    %4071 = vmatpush2.msra.mxu0 0.0
    %4072 = vmatprep.mubr.f32.mxu0 0.0
    %4073 = vmatmul.mubr.f32.gmra.mxu0 %v3929
    %v4074 = vpop.f32.mrf.mxu0
    %v4075 = vadd.f32 0.0, %v4074
    %v4076 = vpop.f32.mrf.mxu0
    %v4077 = vadd.f32 0.0, %v4076
    %4078 = vdwg.mxu0
    %v4079 = vadd.f32 %v3933, %v4004
    %v4080 = vadd.f32 %v3934, %v4006
    %v4081 = vadd.f32 %v3935, %v4075
    %v4082 = vadd.f32 %v3936, %v4077
    %v4083 = vmul.f32 %v4079, 0.5
    %v4084 = vtanh.pop %v4083
    %v4085 = vmul.f32 %v4084, 0.5
    %v4086 = vadd.f32 %v4085, 0.5
    %v4087 = vmul.f32 %v4080, 0.5
    %v4088 = vtanh.pop %v4087
    %v4089 = vmul.f32 %v4088, 0.5
    %v4090 = vadd.f32 %v4089, 0.5
    %v4091 = vtanh.pop %v4081
    %v4092 = vmul.f32 %v4082, 0.5
    %v4093 = vtanh.pop %v4092
    %v4094 = vmul.f32 %v4093, 0.5
    %v4095 = vadd.f32 %v4094, 0.5
    %v4096 = vmul.f32 %v3927, %v4086
    %v4097 = vmul.f32 %v4090, %v4091
    %v4098 = vadd.f32 %v4096, %v4097
    %v4099 = vtanh.pop %v4098
    %v4100 = vmul.f32 %v4095, %v4099
    %s4101 = smul.u32 20, 4
    %s4102 = smul.addr %s4101, 8
    %s4103 = scalar_lea.vmem [#allocation2], %s4102
    %v4104 = vld [vmem:[%s4103] sm:$0xff]
    %v4105 = vld [vmem:[%s4103 + $0x8] sm:$0xff]
    %v4106 = vld [vmem:[%s4103 + $0x10] sm:$0xff]
    %v4107 = vld [vmem:[%s4103 + $0x18] sm:$0xff]
    %4108 = vmatprep.subr.mxu0 %v856
    %4109 = vmatpush1.msra.mxu0 %v855
    %4110 = vmatprep.subr.mxu0 %v852
    %4111 = vmatpush1.msra.mxu0 %v851
    %4112 = vmatprep.subr.mxu0 %v848
    %4113 = vmatpush1.msra.mxu0 %v847
    %4114 = vmatprep.subr.mxu0 %v844
    %4115 = vmatpush1.msra.mxu0 %v843
    %4116 = vmatprep.subr.mxu0 %v840
    %4117 = vmatpush1.msra.mxu0 %v839
    %4118 = vmatprep.subr.mxu0 %v836
    %4119 = vmatpush1.msra.mxu0 %v835
    %4120 = vmatprep.subr.mxu0 %v832
    %4121 = vmatpush1.msra.mxu0 %v831
    %4122 = vmatprep.subr.mxu0 %v828
    %4123 = vmatpush1.msra.mxu0 %v827
    %4124 = vmatprep.subr.mxu0 %v824
    %4125 = vmatpush1.msra.mxu0 %v823
    %4126 = vmatprep.subr.mxu0 %v820
    %4127 = vmatpush1.msra.mxu0 %v819
    %4128 = vmatprep.subr.mxu0 %v816
    %4129 = vmatpush1.msra.mxu0 %v815
    %4130 = vmatprep.subr.mxu0 %v812
    %4131 = vmatpush1.msra.mxu0 %v811
    %4132 = vmatprep.subr.mxu0 %v808
    %4133 = vmatpush1.msra.mxu0 %v807
    %4134 = vmatprep.subr.mxu0 %v804
    %4135 = vmatpush1.msra.mxu0 %v803
    %4136 = vmatprep.subr.mxu0 %v800
    %4137 = vmatpush1.msra.mxu0 %v799
    %4138 = vmatprep.subr.mxu0 %v796
    %4139 = vmatpush1.msra.mxu0 %v795
    %4140 = vmatprep.subr.mxu0 0.0
    %4141 = vmatpush2.msra.mxu0 0.0
    %4142 = vmatprep.subr.mxu0 0.0
    %4143 = vmatpush2.msra.mxu0 0.0
    %4144 = vmatprep.subr.mxu0 0.0
    %4145 = vmatpush2.msra.mxu0 0.0
    %4146 = vmatprep.subr.mxu0 0.0
    %4147 = vmatpush2.msra.mxu0 0.0
    %4148 = vmatprep.subr.mxu0 0.0
    %4149 = vmatpush2.msra.mxu0 0.0
    %4150 = vmatprep.subr.mxu0 0.0
    %4151 = vmatpush2.msra.mxu0 0.0
    %4152 = vmatprep.subr.mxu0 0.0
    %4153 = vmatpush2.msra.mxu0 0.0
    %4154 = vmatprep.subr.mxu0 0.0
    %4155 = vmatpush2.msra.mxu0 0.0
    %4156 = vmatprep.subr.mxu0 0.0
    %4157 = vmatpush2.msra.mxu0 0.0
    %4158 = vmatprep.subr.mxu0 0.0
    %4159 = vmatpush2.msra.mxu0 0.0
    %4160 = vmatprep.subr.mxu0 0.0
    %4161 = vmatpush2.msra.mxu0 0.0
    %4162 = vmatprep.subr.mxu0 0.0
    %4163 = vmatpush2.msra.mxu0 0.0
    %4164 = vmatprep.subr.mxu0 0.0
    %4165 = vmatpush2.msra.mxu0 0.0
    %4166 = vmatprep.subr.mxu0 0.0
    %4167 = vmatpush2.msra.mxu0 0.0
    %4168 = vmatprep.subr.mxu0 0.0
    %4169 = vmatpush2.msra.mxu0 0.0
    %4170 = vmatprep.subr.mxu0 0.0
    %4171 = vmatpush2.msra.mxu0 0.0
    %4172 = vmatprep.mubr.f32.mxu0 0.0
    %4173 = vmatmul.mubr.f32.gmra.mxu0 %v4100
    %v4174 = vpop.f32.mrf.mxu0
    %v4175 = vadd.f32 0.0, %v4174
    %v4176 = vpop.f32.mrf.mxu0
    %v4177 = vadd.f32 0.0, %v4176
    %4178 = vdwg.mxu0
    %4179 = vmatprep.subr.mxu0 %v858
    %4180 = vmatpush1.msra.mxu0 %v857
    %4181 = vmatprep.subr.mxu0 %v854
    %4182 = vmatpush1.msra.mxu0 %v853
    %4183 = vmatprep.subr.mxu0 %v850
    %4184 = vmatpush1.msra.mxu0 %v849
    %4185 = vmatprep.subr.mxu0 %v846
    %4186 = vmatpush1.msra.mxu0 %v845
    %4187 = vmatprep.subr.mxu0 %v842
    %4188 = vmatpush1.msra.mxu0 %v841
    %4189 = vmatprep.subr.mxu0 %v838
    %4190 = vmatpush1.msra.mxu0 %v837
    %4191 = vmatprep.subr.mxu0 %v834
    %4192 = vmatpush1.msra.mxu0 %v833
    %4193 = vmatprep.subr.mxu0 %v830
    %4194 = vmatpush1.msra.mxu0 %v829
    %4195 = vmatprep.subr.mxu0 %v826
    %4196 = vmatpush1.msra.mxu0 %v825
    %4197 = vmatprep.subr.mxu0 %v822
    %4198 = vmatpush1.msra.mxu0 %v821
    %4199 = vmatprep.subr.mxu0 %v818
    %4200 = vmatpush1.msra.mxu0 %v817
    %4201 = vmatprep.subr.mxu0 %v814
    %4202 = vmatpush1.msra.mxu0 %v813
    %4203 = vmatprep.subr.mxu0 %v810
    %4204 = vmatpush1.msra.mxu0 %v809
    %4205 = vmatprep.subr.mxu0 %v806
    %4206 = vmatpush1.msra.mxu0 %v805
    %4207 = vmatprep.subr.mxu0 %v802
    %4208 = vmatpush1.msra.mxu0 %v801
    %4209 = vmatprep.subr.mxu0 %v798
    %4210 = vmatpush1.msra.mxu0 %v797
    %4211 = vmatprep.subr.mxu0 0.0
    %4212 = vmatpush2.msra.mxu0 0.0
    %4213 = vmatprep.subr.mxu0 0.0
    %4214 = vmatpush2.msra.mxu0 0.0
    %4215 = vmatprep.subr.mxu0 0.0
    %4216 = vmatpush2.msra.mxu0 0.0
    %4217 = vmatprep.subr.mxu0 0.0
    %4218 = vmatpush2.msra.mxu0 0.0
    %4219 = vmatprep.subr.mxu0 0.0
    %4220 = vmatpush2.msra.mxu0 0.0
    %4221 = vmatprep.subr.mxu0 0.0
    %4222 = vmatpush2.msra.mxu0 0.0
    %4223 = vmatprep.subr.mxu0 0.0
    %4224 = vmatpush2.msra.mxu0 0.0
    %4225 = vmatprep.subr.mxu0 0.0
    %4226 = vmatpush2.msra.mxu0 0.0
    %4227 = vmatprep.subr.mxu0 0.0
    %4228 = vmatpush2.msra.mxu0 0.0
    %4229 = vmatprep.subr.mxu0 0.0
    %4230 = vmatpush2.msra.mxu0 0.0
    %4231 = vmatprep.subr.mxu0 0.0
    %4232 = vmatpush2.msra.mxu0 0.0
    %4233 = vmatprep.subr.mxu0 0.0
    %4234 = vmatpush2.msra.mxu0 0.0
    %4235 = vmatprep.subr.mxu0 0.0
    %4236 = vmatpush2.msra.mxu0 0.0
    %4237 = vmatprep.subr.mxu0 0.0
    %4238 = vmatpush2.msra.mxu0 0.0
    %4239 = vmatprep.subr.mxu0 0.0
    %4240 = vmatpush2.msra.mxu0 0.0
    %4241 = vmatprep.subr.mxu0 0.0
    %4242 = vmatpush2.msra.mxu0 0.0
    %4243 = vmatprep.mubr.f32.mxu0 0.0
    %4244 = vmatmul.mubr.f32.gmra.mxu0 %v4100
    %v4245 = vpop.f32.mrf.mxu0
    %v4246 = vadd.f32 0.0, %v4245
    %v4247 = vpop.f32.mrf.mxu0
    %v4248 = vadd.f32 0.0, %v4247
    %4249 = vdwg.mxu0
    %v4250 = vadd.f32 %v4104, %v4175
    %v4251 = vadd.f32 %v4105, %v4177
    %v4252 = vadd.f32 %v4106, %v4246
    %v4253 = vadd.f32 %v4107, %v4248
    %v4254 = vmul.f32 %v4250, 0.5
    %v4255 = vtanh.pop %v4254
    %v4256 = vmul.f32 %v4255, 0.5
    %v4257 = vadd.f32 %v4256, 0.5
    %v4258 = vmul.f32 %v4251, 0.5
    %v4259 = vtanh.pop %v4258
    %v4260 = vmul.f32 %v4259, 0.5
    %v4261 = vadd.f32 %v4260, 0.5
    %v4262 = vtanh.pop %v4252
    %v4263 = vmul.f32 %v4253, 0.5
    %v4264 = vtanh.pop %v4263
    %v4265 = vmul.f32 %v4264, 0.5
    %v4266 = vadd.f32 %v4265, 0.5
    %v4267 = vmul.f32 %v4098, %v4257
    %v4268 = vmul.f32 %v4261, %v4262
    %v4269 = vadd.f32 %v4267, %v4268
    %v4270 = vtanh.pop %v4269
    %v4271 = vmul.f32 %v4266, %v4270
    %s4272 = smul.u32 21, 4
    %s4273 = smul.addr %s4272, 8
    %s4274 = scalar_lea.vmem [#allocation2], %s4273
    %v4275 = vld [vmem:[%s4274] sm:$0xff]
    %v4276 = vld [vmem:[%s4274 + $0x8] sm:$0xff]
    %v4277 = vld [vmem:[%s4274 + $0x10] sm:$0xff]
    %v4278 = vld [vmem:[%s4274 + $0x18] sm:$0xff]
    %4279 = vmatprep.subr.mxu0 %v856
    %4280 = vmatpush1.msra.mxu0 %v855
    %4281 = vmatprep.subr.mxu0 %v852
    %4282 = vmatpush1.msra.mxu0 %v851
    %4283 = vmatprep.subr.mxu0 %v848
    %4284 = vmatpush1.msra.mxu0 %v847
    %4285 = vmatprep.subr.mxu0 %v844
    %4286 = vmatpush1.msra.mxu0 %v843
    %4287 = vmatprep.subr.mxu0 %v840
    %4288 = vmatpush1.msra.mxu0 %v839
    %4289 = vmatprep.subr.mxu0 %v836
    %4290 = vmatpush1.msra.mxu0 %v835
    %4291 = vmatprep.subr.mxu0 %v832
    %4292 = vmatpush1.msra.mxu0 %v831
    %4293 = vmatprep.subr.mxu0 %v828
    %4294 = vmatpush1.msra.mxu0 %v827
    %4295 = vmatprep.subr.mxu0 %v824
    %4296 = vmatpush1.msra.mxu0 %v823
    %4297 = vmatprep.subr.mxu0 %v820
    %4298 = vmatpush1.msra.mxu0 %v819
    %4299 = vmatprep.subr.mxu0 %v816
    %4300 = vmatpush1.msra.mxu0 %v815
    %4301 = vmatprep.subr.mxu0 %v812
    %4302 = vmatpush1.msra.mxu0 %v811
    %4303 = vmatprep.subr.mxu0 %v808
    %4304 = vmatpush1.msra.mxu0 %v807
    %4305 = vmatprep.subr.mxu0 %v804
    %4306 = vmatpush1.msra.mxu0 %v803
    %4307 = vmatprep.subr.mxu0 %v800
    %4308 = vmatpush1.msra.mxu0 %v799
    %4309 = vmatprep.subr.mxu0 %v796
    %4310 = vmatpush1.msra.mxu0 %v795
    %4311 = vmatprep.subr.mxu0 0.0
    %4312 = vmatpush2.msra.mxu0 0.0
    %4313 = vmatprep.subr.mxu0 0.0
    %4314 = vmatpush2.msra.mxu0 0.0
    %4315 = vmatprep.subr.mxu0 0.0
    %4316 = vmatpush2.msra.mxu0 0.0
    %4317 = vmatprep.subr.mxu0 0.0
    %4318 = vmatpush2.msra.mxu0 0.0
    %4319 = vmatprep.subr.mxu0 0.0
    %4320 = vmatpush2.msra.mxu0 0.0
    %4321 = vmatprep.subr.mxu0 0.0
    %4322 = vmatpush2.msra.mxu0 0.0
    %4323 = vmatprep.subr.mxu0 0.0
    %4324 = vmatpush2.msra.mxu0 0.0
    %4325 = vmatprep.subr.mxu0 0.0
    %4326 = vmatpush2.msra.mxu0 0.0
    %4327 = vmatprep.subr.mxu0 0.0
    %4328 = vmatpush2.msra.mxu0 0.0
    %4329 = vmatprep.subr.mxu0 0.0
    %4330 = vmatpush2.msra.mxu0 0.0
    %4331 = vmatprep.subr.mxu0 0.0
    %4332 = vmatpush2.msra.mxu0 0.0
    %4333 = vmatprep.subr.mxu0 0.0
    %4334 = vmatpush2.msra.mxu0 0.0
    %4335 = vmatprep.subr.mxu0 0.0
    %4336 = vmatpush2.msra.mxu0 0.0
    %4337 = vmatprep.subr.mxu0 0.0
    %4338 = vmatpush2.msra.mxu0 0.0
    %4339 = vmatprep.subr.mxu0 0.0
    %4340 = vmatpush2.msra.mxu0 0.0
    %4341 = vmatprep.subr.mxu0 0.0
    %4342 = vmatpush2.msra.mxu0 0.0
    %4343 = vmatprep.mubr.f32.mxu0 0.0
    %4344 = vmatmul.mubr.f32.gmra.mxu0 %v4271
    %v4345 = vpop.f32.mrf.mxu0
    %v4346 = vadd.f32 0.0, %v4345
    %v4347 = vpop.f32.mrf.mxu0
    %v4348 = vadd.f32 0.0, %v4347
    %4349 = vdwg.mxu0
    %4350 = vmatprep.subr.mxu0 %v858
    %4351 = vmatpush1.msra.mxu0 %v857
    %4352 = vmatprep.subr.mxu0 %v854
    %4353 = vmatpush1.msra.mxu0 %v853
    %4354 = vmatprep.subr.mxu0 %v850
    %4355 = vmatpush1.msra.mxu0 %v849
    %4356 = vmatprep.subr.mxu0 %v846
    %4357 = vmatpush1.msra.mxu0 %v845
    %4358 = vmatprep.subr.mxu0 %v842
    %4359 = vmatpush1.msra.mxu0 %v841
    %4360 = vmatprep.subr.mxu0 %v838
    %4361 = vmatpush1.msra.mxu0 %v837
    %4362 = vmatprep.subr.mxu0 %v834
    %4363 = vmatpush1.msra.mxu0 %v833
    %4364 = vmatprep.subr.mxu0 %v830
    %4365 = vmatpush1.msra.mxu0 %v829
    %4366 = vmatprep.subr.mxu0 %v826
    %4367 = vmatpush1.msra.mxu0 %v825
    %4368 = vmatprep.subr.mxu0 %v822
    %4369 = vmatpush1.msra.mxu0 %v821
    %4370 = vmatprep.subr.mxu0 %v818
    %4371 = vmatpush1.msra.mxu0 %v817
    %4372 = vmatprep.subr.mxu0 %v814
    %4373 = vmatpush1.msra.mxu0 %v813
    %4374 = vmatprep.subr.mxu0 %v810
    %4375 = vmatpush1.msra.mxu0 %v809
    %4376 = vmatprep.subr.mxu0 %v806
    %4377 = vmatpush1.msra.mxu0 %v805
    %4378 = vmatprep.subr.mxu0 %v802
    %4379 = vmatpush1.msra.mxu0 %v801
    %4380 = vmatprep.subr.mxu0 %v798
    %4381 = vmatpush1.msra.mxu0 %v797
    %4382 = vmatprep.subr.mxu0 0.0
    %4383 = vmatpush2.msra.mxu0 0.0
    %4384 = vmatprep.subr.mxu0 0.0
    %4385 = vmatpush2.msra.mxu0 0.0
    %4386 = vmatprep.subr.mxu0 0.0
    %4387 = vmatpush2.msra.mxu0 0.0
    %4388 = vmatprep.subr.mxu0 0.0
    %4389 = vmatpush2.msra.mxu0 0.0
    %4390 = vmatprep.subr.mxu0 0.0
    %4391 = vmatpush2.msra.mxu0 0.0
    %4392 = vmatprep.subr.mxu0 0.0
    %4393 = vmatpush2.msra.mxu0 0.0
    %4394 = vmatprep.subr.mxu0 0.0
    %4395 = vmatpush2.msra.mxu0 0.0
    %4396 = vmatprep.subr.mxu0 0.0
    %4397 = vmatpush2.msra.mxu0 0.0
    %4398 = vmatprep.subr.mxu0 0.0
    %4399 = vmatpush2.msra.mxu0 0.0
    %4400 = vmatprep.subr.mxu0 0.0
    %4401 = vmatpush2.msra.mxu0 0.0
    %4402 = vmatprep.subr.mxu0 0.0
    %4403 = vmatpush2.msra.mxu0 0.0
    %4404 = vmatprep.subr.mxu0 0.0
    %4405 = vmatpush2.msra.mxu0 0.0
    %4406 = vmatprep.subr.mxu0 0.0
    %4407 = vmatpush2.msra.mxu0 0.0
    %4408 = vmatprep.subr.mxu0 0.0
    %4409 = vmatpush2.msra.mxu0 0.0
    %4410 = vmatprep.subr.mxu0 0.0
    %4411 = vmatpush2.msra.mxu0 0.0
    %4412 = vmatprep.subr.mxu0 0.0
    %4413 = vmatpush2.msra.mxu0 0.0
    %4414 = vmatprep.mubr.f32.mxu0 0.0
    %4415 = vmatmul.mubr.f32.gmra.mxu0 %v4271
    %v4416 = vpop.f32.mrf.mxu0
    %v4417 = vadd.f32 0.0, %v4416
    %v4418 = vpop.f32.mrf.mxu0
    %v4419 = vadd.f32 0.0, %v4418
    %4420 = vdwg.mxu0
    %v4421 = vadd.f32 %v4275, %v4346
    %v4422 = vadd.f32 %v4276, %v4348
    %v4423 = vadd.f32 %v4277, %v4417
    %v4424 = vadd.f32 %v4278, %v4419
    %v4425 = vmul.f32 %v4421, 0.5
    %v4426 = vtanh.pop %v4425
    %v4427 = vmul.f32 %v4426, 0.5
    %v4428 = vadd.f32 %v4427, 0.5
    %v4429 = vmul.f32 %v4422, 0.5
    %v4430 = vtanh.pop %v4429
    %v4431 = vmul.f32 %v4430, 0.5
    %v4432 = vadd.f32 %v4431, 0.5
    %v4433 = vtanh.pop %v4423
    %v4434 = vmul.f32 %v4424, 0.5
    %v4435 = vtanh.pop %v4434
    %v4436 = vmul.f32 %v4435, 0.5
    %v4437 = vadd.f32 %v4436, 0.5
    %v4438 = vmul.f32 %v4269, %v4428
    %v4439 = vmul.f32 %v4432, %v4433
    %v4440 = vadd.f32 %v4438, %v4439
    %v4441 = vtanh.pop %v4440
    %v4442 = vmul.f32 %v4437, %v4441
    %s4443 = smul.u32 22, 4
    %s4444 = smul.addr %s4443, 8
    %s4445 = scalar_lea.vmem [#allocation2], %s4444
    %v4446 = vld [vmem:[%s4445] sm:$0xff]
    %v4447 = vld [vmem:[%s4445 + $0x8] sm:$0xff]
    %v4448 = vld [vmem:[%s4445 + $0x10] sm:$0xff]
    %v4449 = vld [vmem:[%s4445 + $0x18] sm:$0xff]
    %4450 = vmatprep.subr.mxu0 %v856
    %4451 = vmatpush1.msra.mxu0 %v855
    %4452 = vmatprep.subr.mxu0 %v852
    %4453 = vmatpush1.msra.mxu0 %v851
    %4454 = vmatprep.subr.mxu0 %v848
    %4455 = vmatpush1.msra.mxu0 %v847
    %4456 = vmatprep.subr.mxu0 %v844
    %4457 = vmatpush1.msra.mxu0 %v843
    %4458 = vmatprep.subr.mxu0 %v840
    %4459 = vmatpush1.msra.mxu0 %v839
    %4460 = vmatprep.subr.mxu0 %v836
    %4461 = vmatpush1.msra.mxu0 %v835
    %4462 = vmatprep.subr.mxu0 %v832
    %4463 = vmatpush1.msra.mxu0 %v831
    %4464 = vmatprep.subr.mxu0 %v828
    %4465 = vmatpush1.msra.mxu0 %v827
    %4466 = vmatprep.subr.mxu0 %v824
    %4467 = vmatpush1.msra.mxu0 %v823
    %4468 = vmatprep.subr.mxu0 %v820
    %4469 = vmatpush1.msra.mxu0 %v819
    %4470 = vmatprep.subr.mxu0 %v816
    %4471 = vmatpush1.msra.mxu0 %v815
    %4472 = vmatprep.subr.mxu0 %v812
    %4473 = vmatpush1.msra.mxu0 %v811
    %4474 = vmatprep.subr.mxu0 %v808
    %4475 = vmatpush1.msra.mxu0 %v807
    %4476 = vmatprep.subr.mxu0 %v804
    %4477 = vmatpush1.msra.mxu0 %v803
    %4478 = vmatprep.subr.mxu0 %v800
    %4479 = vmatpush1.msra.mxu0 %v799
    %4480 = vmatprep.subr.mxu0 %v796
    %4481 = vmatpush1.msra.mxu0 %v795
    %4482 = vmatprep.subr.mxu0 0.0
    %4483 = vmatpush2.msra.mxu0 0.0
    %4484 = vmatprep.subr.mxu0 0.0
    %4485 = vmatpush2.msra.mxu0 0.0
    %4486 = vmatprep.subr.mxu0 0.0
    %4487 = vmatpush2.msra.mxu0 0.0
    %4488 = vmatprep.subr.mxu0 0.0
    %4489 = vmatpush2.msra.mxu0 0.0
    %4490 = vmatprep.subr.mxu0 0.0
    %4491 = vmatpush2.msra.mxu0 0.0
    %4492 = vmatprep.subr.mxu0 0.0
    %4493 = vmatpush2.msra.mxu0 0.0
    %4494 = vmatprep.subr.mxu0 0.0
    %4495 = vmatpush2.msra.mxu0 0.0
    %4496 = vmatprep.subr.mxu0 0.0
    %4497 = vmatpush2.msra.mxu0 0.0
    %4498 = vmatprep.subr.mxu0 0.0
    %4499 = vmatpush2.msra.mxu0 0.0
    %4500 = vmatprep.subr.mxu0 0.0
    %4501 = vmatpush2.msra.mxu0 0.0
    %4502 = vmatprep.subr.mxu0 0.0
    %4503 = vmatpush2.msra.mxu0 0.0
    %4504 = vmatprep.subr.mxu0 0.0
    %4505 = vmatpush2.msra.mxu0 0.0
    %4506 = vmatprep.subr.mxu0 0.0
    %4507 = vmatpush2.msra.mxu0 0.0
    %4508 = vmatprep.subr.mxu0 0.0
    %4509 = vmatpush2.msra.mxu0 0.0
    %4510 = vmatprep.subr.mxu0 0.0
    %4511 = vmatpush2.msra.mxu0 0.0
    %4512 = vmatprep.subr.mxu0 0.0
    %4513 = vmatpush2.msra.mxu0 0.0
    %4514 = vmatprep.mubr.f32.mxu0 0.0
    %4515 = vmatmul.mubr.f32.gmra.mxu0 %v4442
    %v4516 = vpop.f32.mrf.mxu0
    %v4517 = vadd.f32 0.0, %v4516
    %v4518 = vpop.f32.mrf.mxu0
    %v4519 = vadd.f32 0.0, %v4518
    %4520 = vdwg.mxu0
    %4521 = vmatprep.subr.mxu0 %v858
    %4522 = vmatpush1.msra.mxu0 %v857
    %4523 = vmatprep.subr.mxu0 %v854
    %4524 = vmatpush1.msra.mxu0 %v853
    %4525 = vmatprep.subr.mxu0 %v850
    %4526 = vmatpush1.msra.mxu0 %v849
    %4527 = vmatprep.subr.mxu0 %v846
    %4528 = vmatpush1.msra.mxu0 %v845
    %4529 = vmatprep.subr.mxu0 %v842
    %4530 = vmatpush1.msra.mxu0 %v841
    %4531 = vmatprep.subr.mxu0 %v838
    %4532 = vmatpush1.msra.mxu0 %v837
    %4533 = vmatprep.subr.mxu0 %v834
    %4534 = vmatpush1.msra.mxu0 %v833
    %4535 = vmatprep.subr.mxu0 %v830
    %4536 = vmatpush1.msra.mxu0 %v829
    %4537 = vmatprep.subr.mxu0 %v826
    %4538 = vmatpush1.msra.mxu0 %v825
    %4539 = vmatprep.subr.mxu0 %v822
    %4540 = vmatpush1.msra.mxu0 %v821
    %4541 = vmatprep.subr.mxu0 %v818
    %4542 = vmatpush1.msra.mxu0 %v817
    %4543 = vmatprep.subr.mxu0 %v814
    %4544 = vmatpush1.msra.mxu0 %v813
    %4545 = vmatprep.subr.mxu0 %v810
    %4546 = vmatpush1.msra.mxu0 %v809
    %4547 = vmatprep.subr.mxu0 %v806
    %4548 = vmatpush1.msra.mxu0 %v805
    %4549 = vmatprep.subr.mxu0 %v802
    %4550 = vmatpush1.msra.mxu0 %v801
    %4551 = vmatprep.subr.mxu0 %v798
    %4552 = vmatpush1.msra.mxu0 %v797
    %4553 = vmatprep.subr.mxu0 0.0
    %4554 = vmatpush2.msra.mxu0 0.0
    %4555 = vmatprep.subr.mxu0 0.0
    %4556 = vmatpush2.msra.mxu0 0.0
    %4557 = vmatprep.subr.mxu0 0.0
    %4558 = vmatpush2.msra.mxu0 0.0
    %4559 = vmatprep.subr.mxu0 0.0
    %4560 = vmatpush2.msra.mxu0 0.0
    %4561 = vmatprep.subr.mxu0 0.0
    %4562 = vmatpush2.msra.mxu0 0.0
    %4563 = vmatprep.subr.mxu0 0.0
    %4564 = vmatpush2.msra.mxu0 0.0
    %4565 = vmatprep.subr.mxu0 0.0
    %4566 = vmatpush2.msra.mxu0 0.0
    %4567 = vmatprep.subr.mxu0 0.0
    %4568 = vmatpush2.msra.mxu0 0.0
    %4569 = vmatprep.subr.mxu0 0.0
    %4570 = vmatpush2.msra.mxu0 0.0
    %4571 = vmatprep.subr.mxu0 0.0
    %4572 = vmatpush2.msra.mxu0 0.0
    %4573 = vmatprep.subr.mxu0 0.0
    %4574 = vmatpush2.msra.mxu0 0.0
    %4575 = vmatprep.subr.mxu0 0.0
    %4576 = vmatpush2.msra.mxu0 0.0
    %4577 = vmatprep.subr.mxu0 0.0
    %4578 = vmatpush2.msra.mxu0 0.0
    %4579 = vmatprep.subr.mxu0 0.0
    %4580 = vmatpush2.msra.mxu0 0.0
    %4581 = vmatprep.subr.mxu0 0.0
    %4582 = vmatpush2.msra.mxu0 0.0
    %4583 = vmatprep.subr.mxu0 0.0
    %4584 = vmatpush2.msra.mxu0 0.0
    %4585 = vmatprep.mubr.f32.mxu0 0.0
    %4586 = vmatmul.mubr.f32.gmra.mxu0 %v4442
    %v4587 = vpop.f32.mrf.mxu0
    %v4588 = vadd.f32 0.0, %v4587
    %v4589 = vpop.f32.mrf.mxu0
    %v4590 = vadd.f32 0.0, %v4589
    %4591 = vdwg.mxu0
    %v4592 = vadd.f32 %v4446, %v4517
    %v4593 = vadd.f32 %v4447, %v4519
    %v4594 = vadd.f32 %v4448, %v4588
    %v4595 = vadd.f32 %v4449, %v4590
    %v4596 = vmul.f32 %v4592, 0.5
    %v4597 = vtanh.pop %v4596
    %v4598 = vmul.f32 %v4597, 0.5
    %v4599 = vadd.f32 %v4598, 0.5
    %v4600 = vmul.f32 %v4593, 0.5
    %v4601 = vtanh.pop %v4600
    %v4602 = vmul.f32 %v4601, 0.5
    %v4603 = vadd.f32 %v4602, 0.5
    %v4604 = vtanh.pop %v4594
    %v4605 = vmul.f32 %v4595, 0.5
    %v4606 = vtanh.pop %v4605
    %v4607 = vmul.f32 %v4606, 0.5
    %v4608 = vadd.f32 %v4607, 0.5
    %v4609 = vmul.f32 %v4440, %v4599
    %v4610 = vmul.f32 %v4603, %v4604
    %v4611 = vadd.f32 %v4609, %v4610
    %v4612 = vtanh.pop %v4611
    %v4613 = vmul.f32 %v4608, %v4612
    %s4614 = smul.u32 23, 4
    %s4615 = smul.addr %s4614, 8
    %s4616 = scalar_lea.vmem [#allocation2], %s4615
    %v4617 = vld [vmem:[%s4616] sm:$0xff]
    %v4618 = vld [vmem:[%s4616 + $0x8] sm:$0xff]
    %v4619 = vld [vmem:[%s4616 + $0x10] sm:$0xff]
    %v4620 = vld [vmem:[%s4616 + $0x18] sm:$0xff]
    %4621 = vmatprep.subr.mxu0 %v856
    %4622 = vmatpush1.msra.mxu0 %v855
    %4623 = vmatprep.subr.mxu0 %v852
    %4624 = vmatpush1.msra.mxu0 %v851
    %4625 = vmatprep.subr.mxu0 %v848
    %4626 = vmatpush1.msra.mxu0 %v847
    %4627 = vmatprep.subr.mxu0 %v844
    %4628 = vmatpush1.msra.mxu0 %v843
    %4629 = vmatprep.subr.mxu0 %v840
    %4630 = vmatpush1.msra.mxu0 %v839
    %4631 = vmatprep.subr.mxu0 %v836
    %4632 = vmatpush1.msra.mxu0 %v835
    %4633 = vmatprep.subr.mxu0 %v832
    %4634 = vmatpush1.msra.mxu0 %v831
    %4635 = vmatprep.subr.mxu0 %v828
    %4636 = vmatpush1.msra.mxu0 %v827
    %4637 = vmatprep.subr.mxu0 %v824
    %4638 = vmatpush1.msra.mxu0 %v823
    %4639 = vmatprep.subr.mxu0 %v820
    %4640 = vmatpush1.msra.mxu0 %v819
    %4641 = vmatprep.subr.mxu0 %v816
    %4642 = vmatpush1.msra.mxu0 %v815
    %4643 = vmatprep.subr.mxu0 %v812
    %4644 = vmatpush1.msra.mxu0 %v811
    %4645 = vmatprep.subr.mxu0 %v808
    %4646 = vmatpush1.msra.mxu0 %v807
    %4647 = vmatprep.subr.mxu0 %v804
    %4648 = vmatpush1.msra.mxu0 %v803
    %4649 = vmatprep.subr.mxu0 %v800
    %4650 = vmatpush1.msra.mxu0 %v799
    %4651 = vmatprep.subr.mxu0 %v796
    %4652 = vmatpush1.msra.mxu0 %v795
    %4653 = vmatprep.subr.mxu0 0.0
    %4654 = vmatpush2.msra.mxu0 0.0
    %4655 = vmatprep.subr.mxu0 0.0
    %4656 = vmatpush2.msra.mxu0 0.0
    %4657 = vmatprep.subr.mxu0 0.0
    %4658 = vmatpush2.msra.mxu0 0.0
    %4659 = vmatprep.subr.mxu0 0.0
    %4660 = vmatpush2.msra.mxu0 0.0
    %4661 = vmatprep.subr.mxu0 0.0
    %4662 = vmatpush2.msra.mxu0 0.0
    %4663 = vmatprep.subr.mxu0 0.0
    %4664 = vmatpush2.msra.mxu0 0.0
    %4665 = vmatprep.subr.mxu0 0.0
    %4666 = vmatpush2.msra.mxu0 0.0
    %4667 = vmatprep.subr.mxu0 0.0
    %4668 = vmatpush2.msra.mxu0 0.0
    %4669 = vmatprep.subr.mxu0 0.0
    %4670 = vmatpush2.msra.mxu0 0.0
    %4671 = vmatprep.subr.mxu0 0.0
    %4672 = vmatpush2.msra.mxu0 0.0
    %4673 = vmatprep.subr.mxu0 0.0
    %4674 = vmatpush2.msra.mxu0 0.0
    %4675 = vmatprep.subr.mxu0 0.0
    %4676 = vmatpush2.msra.mxu0 0.0
    %4677 = vmatprep.subr.mxu0 0.0
    %4678 = vmatpush2.msra.mxu0 0.0
    %4679 = vmatprep.subr.mxu0 0.0
    %4680 = vmatpush2.msra.mxu0 0.0
    %4681 = vmatprep.subr.mxu0 0.0
    %4682 = vmatpush2.msra.mxu0 0.0
    %4683 = vmatprep.subr.mxu0 0.0
    %4684 = vmatpush2.msra.mxu0 0.0
    %4685 = vmatprep.mubr.f32.mxu0 0.0
    %4686 = vmatmul.mubr.f32.gmra.mxu0 %v4613
    %v4687 = vpop.f32.mrf.mxu0
    %v4688 = vadd.f32 0.0, %v4687
    %v4689 = vpop.f32.mrf.mxu0
    %v4690 = vadd.f32 0.0, %v4689
    %4691 = vdwg.mxu0
    %4692 = vmatprep.subr.mxu0 %v858
    %4693 = vmatpush1.msra.mxu0 %v857
    %4694 = vmatprep.subr.mxu0 %v854
    %4695 = vmatpush1.msra.mxu0 %v853
    %4696 = vmatprep.subr.mxu0 %v850
    %4697 = vmatpush1.msra.mxu0 %v849
    %4698 = vmatprep.subr.mxu0 %v846
    %4699 = vmatpush1.msra.mxu0 %v845
    %4700 = vmatprep.subr.mxu0 %v842
    %4701 = vmatpush1.msra.mxu0 %v841
    %4702 = vmatprep.subr.mxu0 %v838
    %4703 = vmatpush1.msra.mxu0 %v837
    %4704 = vmatprep.subr.mxu0 %v834
    %4705 = vmatpush1.msra.mxu0 %v833
    %4706 = vmatprep.subr.mxu0 %v830
    %4707 = vmatpush1.msra.mxu0 %v829
    %4708 = vmatprep.subr.mxu0 %v826
    %4709 = vmatpush1.msra.mxu0 %v825
    %4710 = vmatprep.subr.mxu0 %v822
    %4711 = vmatpush1.msra.mxu0 %v821
    %4712 = vmatprep.subr.mxu0 %v818
    %4713 = vmatpush1.msra.mxu0 %v817
    %4714 = vmatprep.subr.mxu0 %v814
    %4715 = vmatpush1.msra.mxu0 %v813
    %4716 = vmatprep.subr.mxu0 %v810
    %4717 = vmatpush1.msra.mxu0 %v809
    %4718 = vmatprep.subr.mxu0 %v806
    %4719 = vmatpush1.msra.mxu0 %v805
    %4720 = vmatprep.subr.mxu0 %v802
    %4721 = vmatpush1.msra.mxu0 %v801
    %4722 = vmatprep.subr.mxu0 %v798
    %4723 = vmatpush1.msra.mxu0 %v797
    %4724 = vmatprep.subr.mxu0 0.0
    %4725 = vmatpush2.msra.mxu0 0.0
    %4726 = vmatprep.subr.mxu0 0.0
    %4727 = vmatpush2.msra.mxu0 0.0
    %4728 = vmatprep.subr.mxu0 0.0
    %4729 = vmatpush2.msra.mxu0 0.0
    %4730 = vmatprep.subr.mxu0 0.0
    %4731 = vmatpush2.msra.mxu0 0.0
    %4732 = vmatprep.subr.mxu0 0.0
    %4733 = vmatpush2.msra.mxu0 0.0
    %4734 = vmatprep.subr.mxu0 0.0
    %4735 = vmatpush2.msra.mxu0 0.0
    %4736 = vmatprep.subr.mxu0 0.0
    %4737 = vmatpush2.msra.mxu0 0.0
    %4738 = vmatprep.subr.mxu0 0.0
    %4739 = vmatpush2.msra.mxu0 0.0
    %4740 = vmatprep.subr.mxu0 0.0
    %4741 = vmatpush2.msra.mxu0 0.0
    %4742 = vmatprep.subr.mxu0 0.0
    %4743 = vmatpush2.msra.mxu0 0.0
    %4744 = vmatprep.subr.mxu0 0.0
    %4745 = vmatpush2.msra.mxu0 0.0
    %4746 = vmatprep.subr.mxu0 0.0
    %4747 = vmatpush2.msra.mxu0 0.0
    %4748 = vmatprep.subr.mxu0 0.0
    %4749 = vmatpush2.msra.mxu0 0.0
    %4750 = vmatprep.subr.mxu0 0.0
    %4751 = vmatpush2.msra.mxu0 0.0
    %4752 = vmatprep.subr.mxu0 0.0
    %4753 = vmatpush2.msra.mxu0 0.0
    %4754 = vmatprep.subr.mxu0 0.0
    %4755 = vmatpush2.msra.mxu0 0.0
    %4756 = vmatprep.mubr.f32.mxu0 0.0
    %4757 = vmatmul.mubr.f32.gmra.mxu0 %v4613
    %v4758 = vpop.f32.mrf.mxu0
    %v4759 = vadd.f32 0.0, %v4758
    %v4760 = vpop.f32.mrf.mxu0
    %v4761 = vadd.f32 0.0, %v4760
    %4762 = vdwg.mxu0
    %v4763 = vadd.f32 %v4617, %v4688
    %v4764 = vadd.f32 %v4618, %v4690
    %v4765 = vadd.f32 %v4619, %v4759
    %v4766 = vadd.f32 %v4620, %v4761
    %v4767 = vmul.f32 %v4763, 0.5
    %v4768 = vtanh.pop %v4767
    %v4769 = vmul.f32 %v4768, 0.5
    %v4770 = vadd.f32 %v4769, 0.5
    %v4771 = vmul.f32 %v4764, 0.5
    %v4772 = vtanh.pop %v4771
    %v4773 = vmul.f32 %v4772, 0.5
    %v4774 = vadd.f32 %v4773, 0.5
    %v4775 = vtanh.pop %v4765
    %v4776 = vmul.f32 %v4766, 0.5
    %v4777 = vtanh.pop %v4776
    %v4778 = vmul.f32 %v4777, 0.5
    %v4779 = vadd.f32 %v4778, 0.5
    %v4780 = vmul.f32 %v4611, %v4770
    %v4781 = vmul.f32 %v4774, %v4775
    %v4782 = vadd.f32 %v4780, %v4781
    %v4783 = vtanh.pop %v4782
    %v4784 = vmul.f32 %v4779, %v4783
    %s4785 = smul.u32 24, 4
    %s4786 = smul.addr %s4785, 8
    %s4787 = scalar_lea.vmem [#allocation2], %s4786
    %v4788 = vld [vmem:[%s4787] sm:$0xff]
    %v4789 = vld [vmem:[%s4787 + $0x8] sm:$0xff]
    %v4790 = vld [vmem:[%s4787 + $0x10] sm:$0xff]
    %v4791 = vld [vmem:[%s4787 + $0x18] sm:$0xff]
    %4792 = vmatprep.subr.mxu0 %v856
    %4793 = vmatpush1.msra.mxu0 %v855
    %4794 = vmatprep.subr.mxu0 %v852
    %4795 = vmatpush1.msra.mxu0 %v851
    %4796 = vmatprep.subr.mxu0 %v848
    %4797 = vmatpush1.msra.mxu0 %v847
    %4798 = vmatprep.subr.mxu0 %v844
    %4799 = vmatpush1.msra.mxu0 %v843
    %4800 = vmatprep.subr.mxu0 %v840
    %4801 = vmatpush1.msra.mxu0 %v839
    %4802 = vmatprep.subr.mxu0 %v836
    %4803 = vmatpush1.msra.mxu0 %v835
    %4804 = vmatprep.subr.mxu0 %v832
    %4805 = vmatpush1.msra.mxu0 %v831
    %4806 = vmatprep.subr.mxu0 %v828
    %4807 = vmatpush1.msra.mxu0 %v827
    %4808 = vmatprep.subr.mxu0 %v824
    %4809 = vmatpush1.msra.mxu0 %v823
    %4810 = vmatprep.subr.mxu0 %v820
    %4811 = vmatpush1.msra.mxu0 %v819
    %4812 = vmatprep.subr.mxu0 %v816
    %4813 = vmatpush1.msra.mxu0 %v815
    %4814 = vmatprep.subr.mxu0 %v812
    %4815 = vmatpush1.msra.mxu0 %v811
    %4816 = vmatprep.subr.mxu0 %v808
    %4817 = vmatpush1.msra.mxu0 %v807
    %4818 = vmatprep.subr.mxu0 %v804
    %4819 = vmatpush1.msra.mxu0 %v803
    %4820 = vmatprep.subr.mxu0 %v800
    %4821 = vmatpush1.msra.mxu0 %v799
    %4822 = vmatprep.subr.mxu0 %v796
    %4823 = vmatpush1.msra.mxu0 %v795
    %4824 = vmatprep.subr.mxu0 0.0
    %4825 = vmatpush2.msra.mxu0 0.0
    %4826 = vmatprep.subr.mxu0 0.0
    %4827 = vmatpush2.msra.mxu0 0.0
    %4828 = vmatprep.subr.mxu0 0.0
    %4829 = vmatpush2.msra.mxu0 0.0
    %4830 = vmatprep.subr.mxu0 0.0
    %4831 = vmatpush2.msra.mxu0 0.0
    %4832 = vmatprep.subr.mxu0 0.0
    %4833 = vmatpush2.msra.mxu0 0.0
    %4834 = vmatprep.subr.mxu0 0.0
    %4835 = vmatpush2.msra.mxu0 0.0
    %4836 = vmatprep.subr.mxu0 0.0
    %4837 = vmatpush2.msra.mxu0 0.0
    %4838 = vmatprep.subr.mxu0 0.0
    %4839 = vmatpush2.msra.mxu0 0.0
    %4840 = vmatprep.subr.mxu0 0.0
    %4841 = vmatpush2.msra.mxu0 0.0
    %4842 = vmatprep.subr.mxu0 0.0
    %4843 = vmatpush2.msra.mxu0 0.0
    %4844 = vmatprep.subr.mxu0 0.0
    %4845 = vmatpush2.msra.mxu0 0.0
    %4846 = vmatprep.subr.mxu0 0.0
    %4847 = vmatpush2.msra.mxu0 0.0
    %4848 = vmatprep.subr.mxu0 0.0
    %4849 = vmatpush2.msra.mxu0 0.0
    %4850 = vmatprep.subr.mxu0 0.0
    %4851 = vmatpush2.msra.mxu0 0.0
    %4852 = vmatprep.subr.mxu0 0.0
    %4853 = vmatpush2.msra.mxu0 0.0
    %4854 = vmatprep.subr.mxu0 0.0
    %4855 = vmatpush2.msra.mxu0 0.0
    %4856 = vmatprep.mubr.f32.mxu0 0.0
    %4857 = vmatmul.mubr.f32.gmra.mxu0 %v4784
    %v4858 = vpop.f32.mrf.mxu0
    %v4859 = vadd.f32 0.0, %v4858
    %v4860 = vpop.f32.mrf.mxu0
    %v4861 = vadd.f32 0.0, %v4860
    %4862 = vdwg.mxu0
    %4863 = vmatprep.subr.mxu0 %v858
    %4864 = vmatpush1.msra.mxu0 %v857
    %4865 = vmatprep.subr.mxu0 %v854
    %4866 = vmatpush1.msra.mxu0 %v853
    %4867 = vmatprep.subr.mxu0 %v850
    %4868 = vmatpush1.msra.mxu0 %v849
    %4869 = vmatprep.subr.mxu0 %v846
    %4870 = vmatpush1.msra.mxu0 %v845
    %4871 = vmatprep.subr.mxu0 %v842
    %4872 = vmatpush1.msra.mxu0 %v841
    %4873 = vmatprep.subr.mxu0 %v838
    %4874 = vmatpush1.msra.mxu0 %v837
    %4875 = vmatprep.subr.mxu0 %v834
    %4876 = vmatpush1.msra.mxu0 %v833
    %4877 = vmatprep.subr.mxu0 %v830
    %4878 = vmatpush1.msra.mxu0 %v829
    %4879 = vmatprep.subr.mxu0 %v826
    %4880 = vmatpush1.msra.mxu0 %v825
    %4881 = vmatprep.subr.mxu0 %v822
    %4882 = vmatpush1.msra.mxu0 %v821
    %4883 = vmatprep.subr.mxu0 %v818
    %4884 = vmatpush1.msra.mxu0 %v817
    %4885 = vmatprep.subr.mxu0 %v814
    %4886 = vmatpush1.msra.mxu0 %v813
    %4887 = vmatprep.subr.mxu0 %v810
    %4888 = vmatpush1.msra.mxu0 %v809
    %4889 = vmatprep.subr.mxu0 %v806
    %4890 = vmatpush1.msra.mxu0 %v805
    %4891 = vmatprep.subr.mxu0 %v802
    %4892 = vmatpush1.msra.mxu0 %v801
    %4893 = vmatprep.subr.mxu0 %v798
    %4894 = vmatpush1.msra.mxu0 %v797
    %4895 = vmatprep.subr.mxu0 0.0
    %4896 = vmatpush2.msra.mxu0 0.0
    %4897 = vmatprep.subr.mxu0 0.0
    %4898 = vmatpush2.msra.mxu0 0.0
    %4899 = vmatprep.subr.mxu0 0.0
    %4900 = vmatpush2.msra.mxu0 0.0
    %4901 = vmatprep.subr.mxu0 0.0
    %4902 = vmatpush2.msra.mxu0 0.0
    %4903 = vmatprep.subr.mxu0 0.0
    %4904 = vmatpush2.msra.mxu0 0.0
    %4905 = vmatprep.subr.mxu0 0.0
    %4906 = vmatpush2.msra.mxu0 0.0
    %4907 = vmatprep.subr.mxu0 0.0
    %4908 = vmatpush2.msra.mxu0 0.0
    %4909 = vmatprep.subr.mxu0 0.0
    %4910 = vmatpush2.msra.mxu0 0.0
    %4911 = vmatprep.subr.mxu0 0.0
    %4912 = vmatpush2.msra.mxu0 0.0
    %4913 = vmatprep.subr.mxu0 0.0
    %4914 = vmatpush2.msra.mxu0 0.0
    %4915 = vmatprep.subr.mxu0 0.0
    %4916 = vmatpush2.msra.mxu0 0.0
    %4917 = vmatprep.subr.mxu0 0.0
    %4918 = vmatpush2.msra.mxu0 0.0
    %4919 = vmatprep.subr.mxu0 0.0
    %4920 = vmatpush2.msra.mxu0 0.0
    %4921 = vmatprep.subr.mxu0 0.0
    %4922 = vmatpush2.msra.mxu0 0.0
    %4923 = vmatprep.subr.mxu0 0.0
    %4924 = vmatpush2.msra.mxu0 0.0
    %4925 = vmatprep.subr.mxu0 0.0
    %4926 = vmatpush2.msra.mxu0 0.0
    %4927 = vmatprep.mubr.f32.mxu0 0.0
    %4928 = vmatmul.mubr.f32.gmra.mxu0 %v4784
    %v4929 = vpop.f32.mrf.mxu0
    %v4930 = vadd.f32 0.0, %v4929
    %v4931 = vpop.f32.mrf.mxu0
    %v4932 = vadd.f32 0.0, %v4931
    %4933 = vdwg.mxu0
    %v4934 = vadd.f32 %v4788, %v4859
    %v4935 = vadd.f32 %v4789, %v4861
    %v4936 = vadd.f32 %v4790, %v4930
    %v4937 = vadd.f32 %v4791, %v4932
    %v4938 = vmul.f32 %v4934, 0.5
    %v4939 = vtanh.pop %v4938
    %v4940 = vmul.f32 %v4939, 0.5
    %v4941 = vadd.f32 %v4940, 0.5
    %v4942 = vmul.f32 %v4935, 0.5
    %v4943 = vtanh.pop %v4942
    %v4944 = vmul.f32 %v4943, 0.5
    %v4945 = vadd.f32 %v4944, 0.5
    %v4946 = vtanh.pop %v4936
    %v4947 = vmul.f32 %v4937, 0.5
    %v4948 = vtanh.pop %v4947
    %v4949 = vmul.f32 %v4948, 0.5
    %v4950 = vadd.f32 %v4949, 0.5
    %v4951 = vmul.f32 %v4782, %v4941
    %v4952 = vmul.f32 %v4945, %v4946
    %v4953 = vadd.f32 %v4951, %v4952
    %v4954 = vtanh.pop %v4953
    %v4955 = vmul.f32 %v4950, %v4954
    %s4956 = smul.u32 25, 4
    %s4957 = smul.addr %s4956, 8
    %s4958 = scalar_lea.vmem [#allocation2], %s4957
    %v4959 = vld [vmem:[%s4958] sm:$0xff]
    %v4960 = vld [vmem:[%s4958 + $0x8] sm:$0xff]
    %v4961 = vld [vmem:[%s4958 + $0x10] sm:$0xff]
    %v4962 = vld [vmem:[%s4958 + $0x18] sm:$0xff]
    %4963 = vmatprep.subr.mxu0 %v856
    %4964 = vmatpush1.msra.mxu0 %v855
    %4965 = vmatprep.subr.mxu0 %v852
    %4966 = vmatpush1.msra.mxu0 %v851
    %4967 = vmatprep.subr.mxu0 %v848
    %4968 = vmatpush1.msra.mxu0 %v847
    %4969 = vmatprep.subr.mxu0 %v844
    %4970 = vmatpush1.msra.mxu0 %v843
    %4971 = vmatprep.subr.mxu0 %v840
    %4972 = vmatpush1.msra.mxu0 %v839
    %4973 = vmatprep.subr.mxu0 %v836
    %4974 = vmatpush1.msra.mxu0 %v835
    %4975 = vmatprep.subr.mxu0 %v832
    %4976 = vmatpush1.msra.mxu0 %v831
    %4977 = vmatprep.subr.mxu0 %v828
    %4978 = vmatpush1.msra.mxu0 %v827
    %4979 = vmatprep.subr.mxu0 %v824
    %4980 = vmatpush1.msra.mxu0 %v823
    %4981 = vmatprep.subr.mxu0 %v820
    %4982 = vmatpush1.msra.mxu0 %v819
    %4983 = vmatprep.subr.mxu0 %v816
    %4984 = vmatpush1.msra.mxu0 %v815
    %4985 = vmatprep.subr.mxu0 %v812
    %4986 = vmatpush1.msra.mxu0 %v811
    %4987 = vmatprep.subr.mxu0 %v808
    %4988 = vmatpush1.msra.mxu0 %v807
    %4989 = vmatprep.subr.mxu0 %v804
    %4990 = vmatpush1.msra.mxu0 %v803
    %4991 = vmatprep.subr.mxu0 %v800
    %4992 = vmatpush1.msra.mxu0 %v799
    %4993 = vmatprep.subr.mxu0 %v796
    %4994 = vmatpush1.msra.mxu0 %v795
    %4995 = vmatprep.subr.mxu0 0.0
    %4996 = vmatpush2.msra.mxu0 0.0
    %4997 = vmatprep.subr.mxu0 0.0
    %4998 = vmatpush2.msra.mxu0 0.0
    %4999 = vmatprep.subr.mxu0 0.0
    %5000 = vmatpush2.msra.mxu0 0.0
    %5001 = vmatprep.subr.mxu0 0.0
    %5002 = vmatpush2.msra.mxu0 0.0
    %5003 = vmatprep.subr.mxu0 0.0
    %5004 = vmatpush2.msra.mxu0 0.0
    %5005 = vmatprep.subr.mxu0 0.0
    %5006 = vmatpush2.msra.mxu0 0.0
    %5007 = vmatprep.subr.mxu0 0.0
    %5008 = vmatpush2.msra.mxu0 0.0
    %5009 = vmatprep.subr.mxu0 0.0
    %5010 = vmatpush2.msra.mxu0 0.0
    %5011 = vmatprep.subr.mxu0 0.0
    %5012 = vmatpush2.msra.mxu0 0.0
    %5013 = vmatprep.subr.mxu0 0.0
    %5014 = vmatpush2.msra.mxu0 0.0
    %5015 = vmatprep.subr.mxu0 0.0
    %5016 = vmatpush2.msra.mxu0 0.0
    %5017 = vmatprep.subr.mxu0 0.0
    %5018 = vmatpush2.msra.mxu0 0.0
    %5019 = vmatprep.subr.mxu0 0.0
    %5020 = vmatpush2.msra.mxu0 0.0
    %5021 = vmatprep.subr.mxu0 0.0
    %5022 = vmatpush2.msra.mxu0 0.0
    %5023 = vmatprep.subr.mxu0 0.0
    %5024 = vmatpush2.msra.mxu0 0.0
    %5025 = vmatprep.subr.mxu0 0.0
    %5026 = vmatpush2.msra.mxu0 0.0
    %5027 = vmatprep.mubr.f32.mxu0 0.0
    %5028 = vmatmul.mubr.f32.gmra.mxu0 %v4955
    %v5029 = vpop.f32.mrf.mxu0
    %v5030 = vadd.f32 0.0, %v5029
    %v5031 = vpop.f32.mrf.mxu0
    %v5032 = vadd.f32 0.0, %v5031
    %5033 = vdwg.mxu0
    %5034 = vmatprep.subr.mxu0 %v858
    %5035 = vmatpush1.msra.mxu0 %v857
    %5036 = vmatprep.subr.mxu0 %v854
    %5037 = vmatpush1.msra.mxu0 %v853
    %5038 = vmatprep.subr.mxu0 %v850
    %5039 = vmatpush1.msra.mxu0 %v849
    %5040 = vmatprep.subr.mxu0 %v846
    %5041 = vmatpush1.msra.mxu0 %v845
    %5042 = vmatprep.subr.mxu0 %v842
    %5043 = vmatpush1.msra.mxu0 %v841
    %5044 = vmatprep.subr.mxu0 %v838
    %5045 = vmatpush1.msra.mxu0 %v837
    %5046 = vmatprep.subr.mxu0 %v834
    %5047 = vmatpush1.msra.mxu0 %v833
    %5048 = vmatprep.subr.mxu0 %v830
    %5049 = vmatpush1.msra.mxu0 %v829
    %5050 = vmatprep.subr.mxu0 %v826
    %5051 = vmatpush1.msra.mxu0 %v825
    %5052 = vmatprep.subr.mxu0 %v822
    %5053 = vmatpush1.msra.mxu0 %v821
    %5054 = vmatprep.subr.mxu0 %v818
    %5055 = vmatpush1.msra.mxu0 %v817
    %5056 = vmatprep.subr.mxu0 %v814
    %5057 = vmatpush1.msra.mxu0 %v813
    %5058 = vmatprep.subr.mxu0 %v810
    %5059 = vmatpush1.msra.mxu0 %v809
    %5060 = vmatprep.subr.mxu0 %v806
    %5061 = vmatpush1.msra.mxu0 %v805
    %5062 = vmatprep.subr.mxu0 %v802
    %5063 = vmatpush1.msra.mxu0 %v801
    %5064 = vmatprep.subr.mxu0 %v798
    %5065 = vmatpush1.msra.mxu0 %v797
    %5066 = vmatprep.subr.mxu0 0.0
    %5067 = vmatpush2.msra.mxu0 0.0
    %5068 = vmatprep.subr.mxu0 0.0
    %5069 = vmatpush2.msra.mxu0 0.0
    %5070 = vmatprep.subr.mxu0 0.0
    %5071 = vmatpush2.msra.mxu0 0.0
    %5072 = vmatprep.subr.mxu0 0.0
    %5073 = vmatpush2.msra.mxu0 0.0
    %5074 = vmatprep.subr.mxu0 0.0
    %5075 = vmatpush2.msra.mxu0 0.0
    %5076 = vmatprep.subr.mxu0 0.0
    %5077 = vmatpush2.msra.mxu0 0.0
    %5078 = vmatprep.subr.mxu0 0.0
    %5079 = vmatpush2.msra.mxu0 0.0
    %5080 = vmatprep.subr.mxu0 0.0
    %5081 = vmatpush2.msra.mxu0 0.0
    %5082 = vmatprep.subr.mxu0 0.0
    %5083 = vmatpush2.msra.mxu0 0.0
    %5084 = vmatprep.subr.mxu0 0.0
    %5085 = vmatpush2.msra.mxu0 0.0
    %5086 = vmatprep.subr.mxu0 0.0
    %5087 = vmatpush2.msra.mxu0 0.0
    %5088 = vmatprep.subr.mxu0 0.0
    %5089 = vmatpush2.msra.mxu0 0.0
    %5090 = vmatprep.subr.mxu0 0.0
    %5091 = vmatpush2.msra.mxu0 0.0
    %5092 = vmatprep.subr.mxu0 0.0
    %5093 = vmatpush2.msra.mxu0 0.0
    %5094 = vmatprep.subr.mxu0 0.0
    %5095 = vmatpush2.msra.mxu0 0.0
    %5096 = vmatprep.subr.mxu0 0.0
    %5097 = vmatpush2.msra.mxu0 0.0
    %5098 = vmatprep.mubr.f32.mxu0 0.0
    %5099 = vmatmul.mubr.f32.gmra.mxu0 %v4955
    %v5100 = vpop.f32.mrf.mxu0
    %v5101 = vadd.f32 0.0, %v5100
    %v5102 = vpop.f32.mrf.mxu0
    %v5103 = vadd.f32 0.0, %v5102
    %5104 = vdwg.mxu0
    %v5105 = vadd.f32 %v4959, %v5030
    %v5106 = vadd.f32 %v4960, %v5032
    %v5107 = vadd.f32 %v4961, %v5101
    %v5108 = vadd.f32 %v4962, %v5103
    %v5109 = vmul.f32 %v5105, 0.5
    %v5110 = vtanh.pop %v5109
    %v5111 = vmul.f32 %v5110, 0.5
    %v5112 = vadd.f32 %v5111, 0.5
    %v5113 = vmul.f32 %v5106, 0.5
    %v5114 = vtanh.pop %v5113
    %v5115 = vmul.f32 %v5114, 0.5
    %v5116 = vadd.f32 %v5115, 0.5
    %v5117 = vtanh.pop %v5107
    %v5118 = vmul.f32 %v5108, 0.5
    %v5119 = vtanh.pop %v5118
    %v5120 = vmul.f32 %v5119, 0.5
    %v5121 = vadd.f32 %v5120, 0.5
    %v5122 = vmul.f32 %v4953, %v5112
    %v5123 = vmul.f32 %v5116, %v5117
    %v5124 = vadd.f32 %v5122, %v5123
    %v5125 = vtanh.pop %v5124
    %v5126 = vmul.f32 %v5121, %v5125
    %s5127 = smul.u32 26, 4
    %s5128 = smul.addr %s5127, 8
    %s5129 = scalar_lea.vmem [#allocation2], %s5128
    %v5130 = vld [vmem:[%s5129] sm:$0xff]
    %v5131 = vld [vmem:[%s5129 + $0x8] sm:$0xff]
    %v5132 = vld [vmem:[%s5129 + $0x10] sm:$0xff]
    %v5133 = vld [vmem:[%s5129 + $0x18] sm:$0xff]
    %5134 = vmatprep.subr.mxu0 %v856
    %5135 = vmatpush1.msra.mxu0 %v855
    %5136 = vmatprep.subr.mxu0 %v852
    %5137 = vmatpush1.msra.mxu0 %v851
    %5138 = vmatprep.subr.mxu0 %v848
    %5139 = vmatpush1.msra.mxu0 %v847
    %5140 = vmatprep.subr.mxu0 %v844
    %5141 = vmatpush1.msra.mxu0 %v843
    %5142 = vmatprep.subr.mxu0 %v840
    %5143 = vmatpush1.msra.mxu0 %v839
    %5144 = vmatprep.subr.mxu0 %v836
    %5145 = vmatpush1.msra.mxu0 %v835
    %5146 = vmatprep.subr.mxu0 %v832
    %5147 = vmatpush1.msra.mxu0 %v831
    %5148 = vmatprep.subr.mxu0 %v828
    %5149 = vmatpush1.msra.mxu0 %v827
    %5150 = vmatprep.subr.mxu0 %v824
    %5151 = vmatpush1.msra.mxu0 %v823
    %5152 = vmatprep.subr.mxu0 %v820
    %5153 = vmatpush1.msra.mxu0 %v819
    %5154 = vmatprep.subr.mxu0 %v816
    %5155 = vmatpush1.msra.mxu0 %v815
    %5156 = vmatprep.subr.mxu0 %v812
    %5157 = vmatpush1.msra.mxu0 %v811
    %5158 = vmatprep.subr.mxu0 %v808
    %5159 = vmatpush1.msra.mxu0 %v807
    %5160 = vmatprep.subr.mxu0 %v804
    %5161 = vmatpush1.msra.mxu0 %v803
    %5162 = vmatprep.subr.mxu0 %v800
    %5163 = vmatpush1.msra.mxu0 %v799
    %5164 = vmatprep.subr.mxu0 %v796
    %5165 = vmatpush1.msra.mxu0 %v795
    %5166 = vmatprep.subr.mxu0 0.0
    %5167 = vmatpush2.msra.mxu0 0.0
    %5168 = vmatprep.subr.mxu0 0.0
    %5169 = vmatpush2.msra.mxu0 0.0
    %5170 = vmatprep.subr.mxu0 0.0
    %5171 = vmatpush2.msra.mxu0 0.0
    %5172 = vmatprep.subr.mxu0 0.0
    %5173 = vmatpush2.msra.mxu0 0.0
    %5174 = vmatprep.subr.mxu0 0.0
    %5175 = vmatpush2.msra.mxu0 0.0
    %5176 = vmatprep.subr.mxu0 0.0
    %5177 = vmatpush2.msra.mxu0 0.0
    %5178 = vmatprep.subr.mxu0 0.0
    %5179 = vmatpush2.msra.mxu0 0.0
    %5180 = vmatprep.subr.mxu0 0.0
    %5181 = vmatpush2.msra.mxu0 0.0
    %5182 = vmatprep.subr.mxu0 0.0
    %5183 = vmatpush2.msra.mxu0 0.0
    %5184 = vmatprep.subr.mxu0 0.0
    %5185 = vmatpush2.msra.mxu0 0.0
    %5186 = vmatprep.subr.mxu0 0.0
    %5187 = vmatpush2.msra.mxu0 0.0
    %5188 = vmatprep.subr.mxu0 0.0
    %5189 = vmatpush2.msra.mxu0 0.0
    %5190 = vmatprep.subr.mxu0 0.0
    %5191 = vmatpush2.msra.mxu0 0.0
    %5192 = vmatprep.subr.mxu0 0.0
    %5193 = vmatpush2.msra.mxu0 0.0
    %5194 = vmatprep.subr.mxu0 0.0
    %5195 = vmatpush2.msra.mxu0 0.0
    %5196 = vmatprep.subr.mxu0 0.0
    %5197 = vmatpush2.msra.mxu0 0.0
    %5198 = vmatprep.mubr.f32.mxu0 0.0
    %5199 = vmatmul.mubr.f32.gmra.mxu0 %v5126
    %v5200 = vpop.f32.mrf.mxu0
    %v5201 = vadd.f32 0.0, %v5200
    %v5202 = vpop.f32.mrf.mxu0
    %v5203 = vadd.f32 0.0, %v5202
    %5204 = vdwg.mxu0
    %5205 = vmatprep.subr.mxu0 %v858
    %5206 = vmatpush1.msra.mxu0 %v857
    %5207 = vmatprep.subr.mxu0 %v854
    %5208 = vmatpush1.msra.mxu0 %v853
    %5209 = vmatprep.subr.mxu0 %v850
    %5210 = vmatpush1.msra.mxu0 %v849
    %5211 = vmatprep.subr.mxu0 %v846
    %5212 = vmatpush1.msra.mxu0 %v845
    %5213 = vmatprep.subr.mxu0 %v842
    %5214 = vmatpush1.msra.mxu0 %v841
    %5215 = vmatprep.subr.mxu0 %v838
    %5216 = vmatpush1.msra.mxu0 %v837
    %5217 = vmatprep.subr.mxu0 %v834
    %5218 = vmatpush1.msra.mxu0 %v833
    %5219 = vmatprep.subr.mxu0 %v830
    %5220 = vmatpush1.msra.mxu0 %v829
    %5221 = vmatprep.subr.mxu0 %v826
    %5222 = vmatpush1.msra.mxu0 %v825
    %5223 = vmatprep.subr.mxu0 %v822
    %5224 = vmatpush1.msra.mxu0 %v821
    %5225 = vmatprep.subr.mxu0 %v818
    %5226 = vmatpush1.msra.mxu0 %v817
    %5227 = vmatprep.subr.mxu0 %v814
    %5228 = vmatpush1.msra.mxu0 %v813
    %5229 = vmatprep.subr.mxu0 %v810
    %5230 = vmatpush1.msra.mxu0 %v809
    %5231 = vmatprep.subr.mxu0 %v806
    %5232 = vmatpush1.msra.mxu0 %v805
    %5233 = vmatprep.subr.mxu0 %v802
    %5234 = vmatpush1.msra.mxu0 %v801
    %5235 = vmatprep.subr.mxu0 %v798
    %5236 = vmatpush1.msra.mxu0 %v797
    %5237 = vmatprep.subr.mxu0 0.0
    %5238 = vmatpush2.msra.mxu0 0.0
    %5239 = vmatprep.subr.mxu0 0.0
    %5240 = vmatpush2.msra.mxu0 0.0
    %5241 = vmatprep.subr.mxu0 0.0
    %5242 = vmatpush2.msra.mxu0 0.0
    %5243 = vmatprep.subr.mxu0 0.0
    %5244 = vmatpush2.msra.mxu0 0.0
    %5245 = vmatprep.subr.mxu0 0.0
    %5246 = vmatpush2.msra.mxu0 0.0
    %5247 = vmatprep.subr.mxu0 0.0
    %5248 = vmatpush2.msra.mxu0 0.0
    %5249 = vmatprep.subr.mxu0 0.0
    %5250 = vmatpush2.msra.mxu0 0.0
    %5251 = vmatprep.subr.mxu0 0.0
    %5252 = vmatpush2.msra.mxu0 0.0
    %5253 = vmatprep.subr.mxu0 0.0
    %5254 = vmatpush2.msra.mxu0 0.0
    %5255 = vmatprep.subr.mxu0 0.0
    %5256 = vmatpush2.msra.mxu0 0.0
    %5257 = vmatprep.subr.mxu0 0.0
    %5258 = vmatpush2.msra.mxu0 0.0
    %5259 = vmatprep.subr.mxu0 0.0
    %5260 = vmatpush2.msra.mxu0 0.0
    %5261 = vmatprep.subr.mxu0 0.0
    %5262 = vmatpush2.msra.mxu0 0.0
    %5263 = vmatprep.subr.mxu0 0.0
    %5264 = vmatpush2.msra.mxu0 0.0
    %5265 = vmatprep.subr.mxu0 0.0
    %5266 = vmatpush2.msra.mxu0 0.0
    %5267 = vmatprep.subr.mxu0 0.0
    %5268 = vmatpush2.msra.mxu0 0.0
    %5269 = vmatprep.mubr.f32.mxu0 0.0
    %5270 = vmatmul.mubr.f32.gmra.mxu0 %v5126
    %v5271 = vpop.f32.mrf.mxu0
    %v5272 = vadd.f32 0.0, %v5271
    %v5273 = vpop.f32.mrf.mxu0
    %v5274 = vadd.f32 0.0, %v5273
    %5275 = vdwg.mxu0
    %v5276 = vadd.f32 %v5130, %v5201
    %v5277 = vadd.f32 %v5131, %v5203
    %v5278 = vadd.f32 %v5132, %v5272
    %v5279 = vadd.f32 %v5133, %v5274
    %v5280 = vmul.f32 %v5276, 0.5
    %v5281 = vtanh.pop %v5280
    %v5282 = vmul.f32 %v5281, 0.5
    %v5283 = vadd.f32 %v5282, 0.5
    %v5284 = vmul.f32 %v5277, 0.5
    %v5285 = vtanh.pop %v5284
    %v5286 = vmul.f32 %v5285, 0.5
    %v5287 = vadd.f32 %v5286, 0.5
    %v5288 = vtanh.pop %v5278
    %v5289 = vmul.f32 %v5279, 0.5
    %v5290 = vtanh.pop %v5289
    %v5291 = vmul.f32 %v5290, 0.5
    %v5292 = vadd.f32 %v5291, 0.5
    %v5293 = vmul.f32 %v5124, %v5283
    %v5294 = vmul.f32 %v5287, %v5288
    %v5295 = vadd.f32 %v5293, %v5294
    %v5296 = vtanh.pop %v5295
    %v5297 = vmul.f32 %v5292, %v5296
    %s5298 = smul.u32 27, 4
    %s5299 = smul.addr %s5298, 8
    %s5300 = scalar_lea.vmem [#allocation2], %s5299
    %v5301 = vld [vmem:[%s5300] sm:$0xff]
    %v5302 = vld [vmem:[%s5300 + $0x8] sm:$0xff]
    %v5303 = vld [vmem:[%s5300 + $0x10] sm:$0xff]
    %v5304 = vld [vmem:[%s5300 + $0x18] sm:$0xff]
    %5305 = vmatprep.subr.mxu0 %v856
    %5306 = vmatpush1.msra.mxu0 %v855
    %5307 = vmatprep.subr.mxu0 %v852
    %5308 = vmatpush1.msra.mxu0 %v851
    %5309 = vmatprep.subr.mxu0 %v848
    %5310 = vmatpush1.msra.mxu0 %v847
    %5311 = vmatprep.subr.mxu0 %v844
    %5312 = vmatpush1.msra.mxu0 %v843
    %5313 = vmatprep.subr.mxu0 %v840
    %5314 = vmatpush1.msra.mxu0 %v839
    %5315 = vmatprep.subr.mxu0 %v836
    %5316 = vmatpush1.msra.mxu0 %v835
    %5317 = vmatprep.subr.mxu0 %v832
    %5318 = vmatpush1.msra.mxu0 %v831
    %5319 = vmatprep.subr.mxu0 %v828
    %5320 = vmatpush1.msra.mxu0 %v827
    %5321 = vmatprep.subr.mxu0 %v824
    %5322 = vmatpush1.msra.mxu0 %v823
    %5323 = vmatprep.subr.mxu0 %v820
    %5324 = vmatpush1.msra.mxu0 %v819
    %5325 = vmatprep.subr.mxu0 %v816
    %5326 = vmatpush1.msra.mxu0 %v815
    %5327 = vmatprep.subr.mxu0 %v812
    %5328 = vmatpush1.msra.mxu0 %v811
    %5329 = vmatprep.subr.mxu0 %v808
    %5330 = vmatpush1.msra.mxu0 %v807
    %5331 = vmatprep.subr.mxu0 %v804
    %5332 = vmatpush1.msra.mxu0 %v803
    %5333 = vmatprep.subr.mxu0 %v800
    %5334 = vmatpush1.msra.mxu0 %v799
    %5335 = vmatprep.subr.mxu0 %v796
    %5336 = vmatpush1.msra.mxu0 %v795
    %5337 = vmatprep.subr.mxu0 0.0
    %5338 = vmatpush2.msra.mxu0 0.0
    %5339 = vmatprep.subr.mxu0 0.0
    %5340 = vmatpush2.msra.mxu0 0.0
    %5341 = vmatprep.subr.mxu0 0.0
    %5342 = vmatpush2.msra.mxu0 0.0
    %5343 = vmatprep.subr.mxu0 0.0
    %5344 = vmatpush2.msra.mxu0 0.0
    %5345 = vmatprep.subr.mxu0 0.0
    %5346 = vmatpush2.msra.mxu0 0.0
    %5347 = vmatprep.subr.mxu0 0.0
    %5348 = vmatpush2.msra.mxu0 0.0
    %5349 = vmatprep.subr.mxu0 0.0
    %5350 = vmatpush2.msra.mxu0 0.0
    %5351 = vmatprep.subr.mxu0 0.0
    %5352 = vmatpush2.msra.mxu0 0.0
    %5353 = vmatprep.subr.mxu0 0.0
    %5354 = vmatpush2.msra.mxu0 0.0
    %5355 = vmatprep.subr.mxu0 0.0
    %5356 = vmatpush2.msra.mxu0 0.0
    %5357 = vmatprep.subr.mxu0 0.0
    %5358 = vmatpush2.msra.mxu0 0.0
    %5359 = vmatprep.subr.mxu0 0.0
    %5360 = vmatpush2.msra.mxu0 0.0
    %5361 = vmatprep.subr.mxu0 0.0
    %5362 = vmatpush2.msra.mxu0 0.0
    %5363 = vmatprep.subr.mxu0 0.0
    %5364 = vmatpush2.msra.mxu0 0.0
    %5365 = vmatprep.subr.mxu0 0.0
    %5366 = vmatpush2.msra.mxu0 0.0
    %5367 = vmatprep.subr.mxu0 0.0
    %5368 = vmatpush2.msra.mxu0 0.0
    %5369 = vmatprep.mubr.f32.mxu0 0.0
    %5370 = vmatmul.mubr.f32.gmra.mxu0 %v5297
    %v5371 = vpop.f32.mrf.mxu0
    %v5372 = vadd.f32 0.0, %v5371
    %v5373 = vpop.f32.mrf.mxu0
    %v5374 = vadd.f32 0.0, %v5373
    %5375 = vdwg.mxu0
    %5376 = vmatprep.subr.mxu0 %v858
    %5377 = vmatpush1.msra.mxu0 %v857
    %5378 = vmatprep.subr.mxu0 %v854
    %5379 = vmatpush1.msra.mxu0 %v853
    %5380 = vmatprep.subr.mxu0 %v850
    %5381 = vmatpush1.msra.mxu0 %v849
    %5382 = vmatprep.subr.mxu0 %v846
    %5383 = vmatpush1.msra.mxu0 %v845
    %5384 = vmatprep.subr.mxu0 %v842
    %5385 = vmatpush1.msra.mxu0 %v841
    %5386 = vmatprep.subr.mxu0 %v838
    %5387 = vmatpush1.msra.mxu0 %v837
    %5388 = vmatprep.subr.mxu0 %v834
    %5389 = vmatpush1.msra.mxu0 %v833
    %5390 = vmatprep.subr.mxu0 %v830
    %5391 = vmatpush1.msra.mxu0 %v829
    %5392 = vmatprep.subr.mxu0 %v826
    %5393 = vmatpush1.msra.mxu0 %v825
    %5394 = vmatprep.subr.mxu0 %v822
    %5395 = vmatpush1.msra.mxu0 %v821
    %5396 = vmatprep.subr.mxu0 %v818
    %5397 = vmatpush1.msra.mxu0 %v817
    %5398 = vmatprep.subr.mxu0 %v814
    %5399 = vmatpush1.msra.mxu0 %v813
    %5400 = vmatprep.subr.mxu0 %v810
    %5401 = vmatpush1.msra.mxu0 %v809
    %5402 = vmatprep.subr.mxu0 %v806
    %5403 = vmatpush1.msra.mxu0 %v805
    %5404 = vmatprep.subr.mxu0 %v802
    %5405 = vmatpush1.msra.mxu0 %v801
    %5406 = vmatprep.subr.mxu0 %v798
    %5407 = vmatpush1.msra.mxu0 %v797
    %5408 = vmatprep.subr.mxu0 0.0
    %5409 = vmatpush2.msra.mxu0 0.0
    %5410 = vmatprep.subr.mxu0 0.0
    %5411 = vmatpush2.msra.mxu0 0.0
    %5412 = vmatprep.subr.mxu0 0.0
    %5413 = vmatpush2.msra.mxu0 0.0
    %5414 = vmatprep.subr.mxu0 0.0
    %5415 = vmatpush2.msra.mxu0 0.0
    %5416 = vmatprep.subr.mxu0 0.0
    %5417 = vmatpush2.msra.mxu0 0.0
    %5418 = vmatprep.subr.mxu0 0.0
    %5419 = vmatpush2.msra.mxu0 0.0
    %5420 = vmatprep.subr.mxu0 0.0
    %5421 = vmatpush2.msra.mxu0 0.0
    %5422 = vmatprep.subr.mxu0 0.0
    %5423 = vmatpush2.msra.mxu0 0.0
    %5424 = vmatprep.subr.mxu0 0.0
    %5425 = vmatpush2.msra.mxu0 0.0
    %5426 = vmatprep.subr.mxu0 0.0
    %5427 = vmatpush2.msra.mxu0 0.0
    %5428 = vmatprep.subr.mxu0 0.0
    %5429 = vmatpush2.msra.mxu0 0.0
    %5430 = vmatprep.subr.mxu0 0.0
    %5431 = vmatpush2.msra.mxu0 0.0
    %5432 = vmatprep.subr.mxu0 0.0
    %5433 = vmatpush2.msra.mxu0 0.0
    %5434 = vmatprep.subr.mxu0 0.0
    %5435 = vmatpush2.msra.mxu0 0.0
    %5436 = vmatprep.subr.mxu0 0.0
    %5437 = vmatpush2.msra.mxu0 0.0
    %5438 = vmatprep.subr.mxu0 0.0
    %5439 = vmatpush2.msra.mxu0 0.0
    %5440 = vmatprep.mubr.f32.mxu0 0.0
    %5441 = vmatmul.mubr.f32.gmra.mxu0 %v5297
    %v5442 = vpop.f32.mrf.mxu0
    %v5443 = vadd.f32 0.0, %v5442
    %v5444 = vpop.f32.mrf.mxu0
    %v5445 = vadd.f32 0.0, %v5444
    %5446 = vdwg.mxu0
    %v5447 = vadd.f32 %v5301, %v5372
    %v5448 = vadd.f32 %v5302, %v5374
    %v5449 = vadd.f32 %v5303, %v5443
    %v5450 = vadd.f32 %v5304, %v5445
    %v5451 = vmul.f32 %v5447, 0.5
    %v5452 = vtanh.pop %v5451
    %v5453 = vmul.f32 %v5452, 0.5
    %v5454 = vadd.f32 %v5453, 0.5
    %v5455 = vmul.f32 %v5448, 0.5
    %v5456 = vtanh.pop %v5455
    %v5457 = vmul.f32 %v5456, 0.5
    %v5458 = vadd.f32 %v5457, 0.5
    %v5459 = vtanh.pop %v5449
    %v5460 = vmul.f32 %v5450, 0.5
    %v5461 = vtanh.pop %v5460
    %v5462 = vmul.f32 %v5461, 0.5
    %v5463 = vadd.f32 %v5462, 0.5
    %v5464 = vmul.f32 %v5295, %v5454
    %v5465 = vmul.f32 %v5458, %v5459
    %v5466 = vadd.f32 %v5464, %v5465
    %v5467 = vtanh.pop %v5466
    %v5468 = vmul.f32 %v5463, %v5467
    %5469 = vst [vmem:[%s4] sm:$0xff] %v5468
    // Predicated region
    $region22: #{lstm_forward.1} parent=1 // pred_check
      _
    $region23: #{lstm_forward.1} parent=1 // pred_check_branch
      %5471 = sbr.rel (0) target = $region25
    $region24: #{lstm_forward.1} parent=1 // pred_region
      _
    $region25: #{lstm_forward.1} parent=1 // pred_fallthru
      _
    // Predicated region
    $region26: #{lstm_forward.1} parent=1 // pred_check
      _
    $region27: #{lstm_forward.1} parent=1 // pred_check_branch
      %5473 = sbr.rel (0) target = $region29
    $region28: #{lstm_forward.1} parent=1 // pred_region
      _
    $region29: #{lstm_forward.1} parent=1 // pred_fallthru
      _
    %5474 = vsyncpa [#allocation4], 1

</llo_original>
